<compile_context>
chip_gen: v5e
topology: v5e:2x2
jax: 0.10.0
libtpu: 0.0.40
codegen_flags: <defaults>
</compile_context>

<pallas_src>
import jax
import jax.numpy as jnp
from jax.experimental import pallas as pl
from jax.experimental.pallas import tpu as pltpu

EPS = 1e-6


def _prompt_kernel(x_ref, w_ref, gamma_ref, betab_ref, o_ref):
    # x_ref:     (S, Bt, D)  token-major slab of Bt batch elements
    # w_ref:     (S, 1, 1)   downsample weight per token
    # gamma_ref: (1, D)      LayerNorm scale
    # betab_ref: (1, D)      beta * sum(w) + bias   (affine shift, pre-folded)
    # o_ref:     (Bt, D)
    x = x_ref[...].astype(jnp.float32)                         # (S, Bt, D)
    inv_d = 1.0 / x.shape[-1]

    # LayerNorm statistics over D (lane axis), single fused pass.
    ex = jnp.sum(x, axis=-1, keepdims=True) * inv_d            # (S, Bt, 1)
    ex2 = jnp.sum(x * x, axis=-1, keepdims=True) * inv_d       # (S, Bt, 1)
    var = jnp.maximum(ex2 - ex * ex, 0.0)

    # Fold the token weight w[s] into the per-token 1/std; the Linear(257->1)
    # over tokens then becomes a plain sum over the leading axis (pure VPU,
    # no M=1 MXU matmul).  (S,1,1) broadcasts against (S,Bt,1).
    wstd = jax.lax.rsqrt(var + EPS) * w_ref[...]               # (S, Bt, 1)
    zsum = jnp.sum((x - ex) * wstd, axis=0)                    # (Bt, D)

    # out = gamma * sum_s w[s]*xn[s]  +  (beta * sum(w) + bias)
    o_ref[...] = (zsum * gamma_ref[...] + betab_ref[...]).astype(o_ref.dtype)


def _choose_batch_tile(B, S, D, itemsize):
    """How many batch elements each grid step processes.

    Constraints:
      * block second-to-last dim must be a multiple of 8 or equal B (TPU
        sublane rule); last dim is kept at full D.
      * keep the double-buffered padded input block a few MiB (v7x only has
        64 MiB VMEM / 32 MiB default scoped limit; LN intermediates also live
        there).
      * prefer >= 2 grid steps so the "parallel" batch axis can be sharded
        across the two v7x TensorCores (megacore) and DMA overlaps compute.
    """
    budget = 8 * 1024 * 1024                      # bytes per padded x buffer
    d_pad = -(-D // 128) * 128

    def fits(b):
        b_pad = -(-b // 8) * 8
        return S * b_pad * d_pad * itemsize <= budget

    divs = [b for b in range(8, B, 8) if B % b == 0]
    good = [b for b in divs if fits(b)]
    if fits(B):
        good.append(B)
    if good:
        multi = [b for b in good if -(-B // b) >= 2]
        return max(multi) if multi else max(good)
    # No exact-divisor tile fits the budget: use a multiple-of-8 tile with a
    # cdiv grid (Pallas masks the out-of-range rows of the ragged last block).
    b = 8
    while b * 2 <= B and fits(b * 2):
        b *= 2
    return b


def prompt_generator_forward(x, gamma, beta, w, bias):
    """x: (S, B, D), S in {257, 258}.  Returns (1, B, D) in x.dtype.

    gamma/beta: LayerNorm affine (D elements); w: (1, 257); bias: 1 element.
    Accepts bf16 or f32 x; LayerNorm math is always f32 inside the kernel.
    """
    S_in, B, D = x.shape
    assert S_in in (257, 258), "Prompt_Generator expects 257 (or 258) tokens"

    w_vec = jnp.asarray(w, jnp.float32).reshape(-1)            # (257,)
    if S_in != 257:
        # torch.cat drops token index 1; instead of copying x, weight it by 0.
        w_vec = jnp.concatenate(
            [w_vec[:1], jnp.zeros((S_in - 257,), jnp.float32), w_vec[1:]])

    bt = _choose_batch_tile(B, S_in, D, x.dtype.itemsize)
    grid = (pl.cdiv(B, bt),)

    # Tiny parameter prep (O(S) / O(D) only; no full-tensor copies of x).
    w_3d = w_vec.reshape(S_in, 1, 1)
    gamma_r = jnp.asarray(gamma, jnp.float32).reshape(1, D)
    beta_eff = (jnp.asarray(beta, jnp.float32).reshape(1, D) * jnp.sum(w_vec)
                + jnp.asarray(bias, jnp.float32).reshape(-1)[0])

    out_bd = pl.pallas_call(
        _prompt_kernel,
        out_shape=jax.ShapeDtypeStruct((B, D), x.dtype),
        grid=grid,
        in_specs=[
            pl.BlockSpec((S_in, bt, D), lambda j: (0, j, 0)),  # x, original layout
            pl.BlockSpec((S_in, 1, 1), lambda j: (0, 0, 0)),   # token weights
            pl.BlockSpec((1, D), lambda j: (0, 0)),            # gamma
            pl.BlockSpec((1, D), lambda j: (0, 0)),            # beta*sum(w)+bias
        ],
        out_specs=pl.BlockSpec((bt, D), lambda j: (j, 0)),
        compiler_params=pltpu.CompilerParams(
            dimension_semantics=("parallel",),
            vmem_limit_bytes=32 * 1024 * 1024),
    )(x, w_3d, gamma_r, beta_eff)

    return out_bd[None]                                        # (1, B, D)


def reference_forward(x, gamma, beta, w, bias):
    """Pure-JAX mirror of the PyTorch forward, for correctness checking."""
    if x.shape[0] != 257:
        x = jnp.concatenate([x[:1], x[2:]], axis=0)
    mean = jnp.mean(x, axis=-1, keepdims=True)
    var = jnp.mean((x - mean) ** 2, axis=-1, keepdims=True)
    y = (x - mean) / jnp.sqrt(var + EPS)
    y = y * gamma.reshape(1, 1, -1) + beta.reshape(1, 1, -1)    # (257, B, D)
    trans = jnp.transpose(y, (1, 2, 0))                          # (B, D, 257)
    prompt = jnp.einsum('bds,os->bdo', trans, w,
                        precision=jax.lax.Precision.HIGHEST) + bias.reshape(-1)
    return jnp.transpose(prompt, (2, 0, 1))                      # (1, B, D)


if __name__ == "__main__":
    D_MODEL = 32   # n_embd / d_model
    BATCH = 2
    SEQ = 257      # CLS + 16x16 patches

    key = jax.random.PRNGKey(0)
    k_x, k_x2, k_g, k_b, k_w, k_bias = jax.random.split(key, 6)

    # Module zero-inits the linear layer; use small random values so the
    # kernel computes something non-trivial.
    gamma = (1.0 + 0.02 * jax.random.normal(k_g, (D_MODEL,))).astype(jnp.float32)
    beta = (0.02 * jax.random.normal(k_b, (D_MODEL,))).astype(jnp.float32)
    w = (0.02 * jax.random.normal(k_w, (1, SEQ))).astype(jnp.float32)   # (out=1, in=257)
    bias = (0.1 * jax.random.normal(k_bias, (1,))).astype(jnp.float32)

    fwd = jax.jit(prompt_generator_forward)

    # Path 1: x.shape[0] == 257
    x257 = jax.random.normal(k_x, (SEQ, BATCH, D_MODEL), dtype=jnp.float32)
    out257 = jax.block_until_ready(fwd(x257, gamma, beta, w, bias))
    ref257 = reference_forward(x257, gamma, beta, w, bias)
    assert out257.shape == (1, BATCH, D_MODEL)
    assert jnp.allclose(out257, ref257, atol=1e-5, rtol=1e-5)

    # Path 2: x.shape[0] != 257 (258 tokens; token index 1 is dropped)
    x258 = jax.random.normal(k_x2, (SEQ + 1, BATCH, D_MODEL), dtype=jnp.float32)
    out258 = jax.block_until_ready(fwd(x258, gamma, beta, w, bias))
    ref258 = reference_forward(x258, gamma, beta, w, bias)
    assert out258.shape == (1, BATCH, D_MODEL)
    assert jnp.allclose(out258, ref258, atol=1e-5, rtol=1e-5)

    print("KERNEL_OK")
</pallas_src>

<mosaic_0001>
module attributes {stable_mosaic.version = 11 : i64} {
  func.func @_prompt_kernel(%arg0: i32, %arg1: memref<257x2x32xf32, #tpu.memory_space<vmem>>, %arg2: memref<257x1x1xf32, #tpu.memory_space<vmem>>, %arg3: memref<1x32xf32, #tpu.memory_space<vmem>>, %arg4: memref<1x32xf32, #tpu.memory_space<vmem>>, %arg5: memref<2x32xf32, #tpu.memory_space<vmem>>) attributes {dimension_semantics = [#tpu.dimension_semantics<parallel>], iteration_bounds = array<i64: 1>, scalar_prefetch = 0 : i64, scratch_operands = 0 : i64, tpu.core_type = #tpu.core_type<tc>, window_params = [{transform_indices = @transform_0, window_bounds = array<i64: 257, 2, 32>}, {pipeline_mode = #tpu.pipeline_mode<synchronous>, transform_indices = @transform_1, window_bounds = array<i64: 257, 1, 1>}, {pipeline_mode = #tpu.pipeline_mode<synchronous>, transform_indices = @transform_2, window_bounds = array<i64: 1, 32>}, {pipeline_mode = #tpu.pipeline_mode<synchronous>, transform_indices = @transform_3, window_bounds = array<i64: 1, 32>}, {transform_indices = @transform_4, window_bounds = array<i64: 2, 32>}]} {
    %c0 = arith.constant 0 : index
    %c0_0 = arith.constant 0 : index
    %c0_1 = arith.constant 0 : index
    %0 = vector.load %arg1[%c0, %c0_0, %c0_1] : memref<257x2x32xf32, #tpu.memory_space<vmem>>, vector<257x2x32xf32>
    %cst = arith.constant dense<0.000000e+00> : vector<257x2xf32>
    %1 = vector.multi_reduction <add>, %0, %cst [2] : vector<257x2x32xf32> to vector<257x2xf32>
    %2 = vector.shape_cast %1 : vector<257x2xf32> to vector<257x2x1xf32>
    %cst_2 = arith.constant 3.125000e-02 : f32
    %3 = vector.broadcast %cst_2 : f32 to vector<257x2x1xf32>
    %4 = arith.mulf %2, %3 : vector<257x2x1xf32>
    %5 = arith.mulf %0, %0 : vector<257x2x32xf32>
    %cst_3 = arith.constant dense<0.000000e+00> : vector<257x2xf32>
    %6 = vector.multi_reduction <add>, %5, %cst_3 [2] : vector<257x2x32xf32> to vector<257x2xf32>
    %7 = vector.shape_cast %6 : vector<257x2xf32> to vector<257x2x1xf32>
    %cst_4 = arith.constant 3.125000e-02 : f32
    %8 = vector.broadcast %cst_4 : f32 to vector<257x2x1xf32>
    %9 = arith.mulf %7, %8 : vector<257x2x1xf32>
    %10 = arith.mulf %4, %4 : vector<257x2x1xf32>
    %11 = arith.subf %9, %10 : vector<257x2x1xf32>
    %cst_5 = arith.constant 0.000000e+00 : f32
    %12 = vector.broadcast %cst_5 : f32 to vector<257x2x1xf32>
    %13 = arith.maximumf %11, %12 : vector<257x2x1xf32>
    %cst_6 = arith.constant 9.99999997E-7 : f32
    %14 = vector.broadcast %cst_6 : f32 to vector<257x2x1xf32>
    %15 = arith.addf %13, %14 : vector<257x2x1xf32>
    %16 = math.rsqrt %15 : vector<257x2x1xf32>
    %c0_7 = arith.constant 0 : index
    %c0_8 = arith.constant 0 : index
    %c0_9 = arith.constant 0 : index
    %17 = vector.load %arg2[%c0_7, %c0_8, %c0_9] : memref<257x1x1xf32, #tpu.memory_space<vmem>>, vector<257x1x1xf32>
    %18 = vector.broadcast %17 : vector<257x1x1xf32> to vector<257x2x1xf32>
    %19 = arith.mulf %16, %18 : vector<257x2x1xf32>
    %20 = vector.broadcast %4 : vector<257x2x1xf32> to vector<257x2x32xf32>
    %21 = arith.subf %0, %20 : vector<257x2x32xf32>
    %22 = vector.broadcast %19 : vector<257x2x1xf32> to vector<257x2x32xf32>
    %23 = arith.mulf %21, %22 : vector<257x2x32xf32>
    %cst_10 = arith.constant dense<0.000000e+00> : vector<2x32xf32>
    %24 = vector.multi_reduction <add>, %23, %cst_10 [0] : vector<257x2x32xf32> to vector<2x32xf32>
    %c0_11 = arith.constant 0 : index
    %c0_12 = arith.constant 0 : index
    %25 = vector.load %arg3[%c0_11, %c0_12] : memref<1x32xf32, #tpu.memory_space<vmem>>, vector<1x32xf32>
    %26 = vector.broadcast %25 : vector<1x32xf32> to vector<2x32xf32>
    %27 = arith.mulf %24, %26 : vector<2x32xf32>
    %c0_13 = arith.constant 0 : index
    %c0_14 = arith.constant 0 : index
    %28 = vector.load %arg4[%c0_13, %c0_14] : memref<1x32xf32, #tpu.memory_space<vmem>>, vector<1x32xf32>
    %29 = vector.broadcast %28 : vector<1x32xf32> to vector<2x32xf32>
    %30 = arith.addf %27, %29 : vector<2x32xf32>
    %c0_15 = arith.constant 0 : index
    %c0_16 = arith.constant 0 : index
    %31 = vector.load %arg5[%c0_15, %c0_16] : memref<2x32xf32, #tpu.memory_space<vmem>>, vector<2x32xf32>
    tpu.vector_store %arg5[%c0_15, %c0_16], %30 {strides = array<i32>} : memref<2x32xf32, #tpu.memory_space<vmem>>, vector<2x32xf32>,
    return
  }
  func.func @transform_0(%arg0: i32) -> (i32, i32, i32) {
    %c0_i32 = arith.constant 0 : i32
    %c0_i32_0 = arith.constant 0 : i32
    %c0_i32_1 = arith.constant 0 : i32
    return %c0_i32, %arg0, %c0_i32_0 : i32, i32, i32
  }
  func.func @transform_1(%arg0: i32) -> (i32, i32, i32) {
    %c0_i32 = arith.constant 0 : i32
    %c0_i32_0 = arith.constant 0 : i32
    %c0_i32_1 = arith.constant 0 : i32
    %c0_i32_2 = arith.constant 0 : i32
    return %c0_i32, %c0_i32_0, %c0_i32_1 : i32, i32, i32
  }
  func.func @transform_2(%arg0: i32) -> (i32, i32) {
    %c0_i32 = arith.constant 0 : i32
    %c0_i32_0 = arith.constant 0 : i32
    %c0_i32_1 = arith.constant 0 : i32
    return %c0_i32, %c0_i32_0 : i32, i32
  }
  func.func @transform_3(%arg0: i32) -> (i32, i32) {
    %c0_i32 = arith.constant 0 : i32
    %c0_i32_0 = arith.constant 0 : i32
    %c0_i32_1 = arith.constant 0 : i32
    return %c0_i32, %c0_i32_0 : i32, i32
  }
  func.func @transform_4(%arg0: i32) -> (i32, i32) {
    %c0_i32 = arith.constant 0 : i32
    %c0_i32_0 = arith.constant 0 : i32
    return %arg0, %c0_i32 : i32, i32
  }
}

</mosaic_0001>

<llo_original>
// kernel: prompt_generator_forward.1
$region0: #{prompt_generator_forward.1}
  #allocation0 [shape = 'u32[]', space=smem, size = 0x4, offset = 0x4, fixed_abs, tag = 'smem constant byte address 0x4 - core index']
  #allocation1 [shape = 'u32[72,128]{1,0:T(1,128)}', space=vmem, size = 0x9000, scoped, tag = 'internal scratch']
  %s0 = inlined_call_operand.vmem [shape: f32[257,2,32], index: 0, kind: input, shape index: {}]
  %s1 = inlined_call_operand.vmem [shape: f32[257,1,1], index: 1, kind: input, shape index: {}]
  %s2 = inlined_call_operand.vmem [shape: f32[1,32], index: 2, kind: input, shape index: {}]
  %s3 = inlined_call_operand.vmem [shape: f32[1,32], index: 3, kind: input, shape index: {}]
  %s4 = inlined_call_operand.hbm [shape: f32[2,32], index: 4, kind: output, shape index: {}]
  %s5 = sld [smem:[#allocation0]]
  $region26: #{prompt_generator_forward.1} parent=0
    _
  %s7 = ssub.s32 1, %s5
  %s8 = scalar_select 0, %s7, %s5
  $region1: #{prompt_generator_forward.1} parent=0
    #allocation2 [shape = 'u8[1024]{0}', space=vmem, size = 0x400, scoped, tag = 'output window, operand 0, single buffered']
    #allocation3 [shape = 's32[1]{0}', space=sflag, size = 0x4, scoped, tag = 'scoped memory for prompt_generator_forward.1']
    %9 = vsyncpa [#allocation3], 0
    // Predicated region
    $region2: #{prompt_generator_forward.1} parent=1 // pred_check
      _
    $region3: #{prompt_generator_forward.1} parent=1 // pred_check_branch
      %11 = sbr.rel (0) target = $region5
    $region4: #{prompt_generator_forward.1} parent=1 // pred_region
      _
    $region5: #{prompt_generator_forward.1} parent=1 // pred_fallthru
      _
    // Predicated region
    $region6: #{prompt_generator_forward.1} parent=1 // pred_check
      _
    $region7: #{prompt_generator_forward.1} parent=1 // pred_check_branch
      %13 = sbr.rel (0) target = $region9
    $region8: #{prompt_generator_forward.1} parent=1 // pred_region
      _
    $region9: #{prompt_generator_forward.1} parent=1 // pred_fallthru
      _
    // Predicated region
    $region10: #{prompt_generator_forward.1} parent=1 // pred_check
      _
    $region11: #{prompt_generator_forward.1} parent=1 // pred_check_branch
      %15 = sbr.rel (0) target = $region13
    $region12: #{prompt_generator_forward.1} parent=1 // pred_region
      _
    $region13: #{prompt_generator_forward.1} parent=1 // pred_fallthru
      _
    // Predicated region
    $region14: #{prompt_generator_forward.1} parent=1 // pred_check
      _
    $region15: #{prompt_generator_forward.1} parent=1 // pred_check_branch
      %17 = sbr.rel (0) target = $region17
    $region16: #{prompt_generator_forward.1} parent=1 // pred_region
      _
    $region17: #{prompt_generator_forward.1} parent=1 // pred_fallthru
      _
    %v18 = vld [vmem:[%s0] sm:$0x3]
    %v19 = vld [vmem:[%s0 + $0x2] sm:$0x3]
    %v20 = vld [vmem:[%s0 + $0x4] sm:$0x3]
    %v21 = vld [vmem:[%s0 + $0x6] sm:$0x3]
    %v22 = vld [vmem:[%s0 + $0x8] sm:$0x3]
    %v23 = vld [vmem:[%s0 + $0xa] sm:$0x3]
    %v24 = vld [vmem:[%s0 + $0xc] sm:$0x3]
    %v25 = vld [vmem:[%s0 + $0xe] sm:$0x3]
    %v26 = vld [vmem:[%s0 + $0x10] sm:$0x3]
    %v27 = vld [vmem:[%s0 + $0x12] sm:$0x3]
    %v28 = vld [vmem:[%s0 + $0x14] sm:$0x3]
    %v29 = vld [vmem:[%s0 + $0x16] sm:$0x3]
    %v30 = vld [vmem:[%s0 + $0x18] sm:$0x3]
    %v31 = vld [vmem:[%s0 + $0x1a] sm:$0x3]
    %v32 = vld [vmem:[%s0 + $0x1c] sm:$0x3]
    %v33 = vld [vmem:[%s0 + $0x1e] sm:$0x3]
    %v34 = vld [vmem:[%s0 + $0x20] sm:$0x3]
    %v35 = vld [vmem:[%s0 + $0x22] sm:$0x3]
    %v36 = vld [vmem:[%s0 + $0x24] sm:$0x3]
    %v37 = vld [vmem:[%s0 + $0x26] sm:$0x3]
    %v38 = vld [vmem:[%s0 + $0x28] sm:$0x3]
    %v39 = vld [vmem:[%s0 + $0x2a] sm:$0x3]
    %v40 = vld [vmem:[%s0 + $0x2c] sm:$0x3]
    %v41 = vld [vmem:[%s0 + $0x2e] sm:$0x3]
    %v42 = vld [vmem:[%s0 + $0x30] sm:$0x3]
    %v43 = vld [vmem:[%s0 + $0x32] sm:$0x3]
    %v44 = vld [vmem:[%s0 + $0x34] sm:$0x3]
    %v45 = vld [vmem:[%s0 + $0x36] sm:$0x3]
    %v46 = vld [vmem:[%s0 + $0x38] sm:$0x3]
    %v47 = vld [vmem:[%s0 + $0x3a] sm:$0x3]
    %v48 = vld [vmem:[%s0 + $0x3c] sm:$0x3]
    %v49 = vld [vmem:[%s0 + $0x3e] sm:$0x3]
    %v50 = vld [vmem:[%s0 + $0x40] sm:$0x3]
    %v51 = vld [vmem:[%s0 + $0x42] sm:$0x3]
    %v52 = vld [vmem:[%s0 + $0x44] sm:$0x3]
    %v53 = vld [vmem:[%s0 + $0x46] sm:$0x3]
    %v54 = vld [vmem:[%s0 + $0x48] sm:$0x3]
    %v55 = vld [vmem:[%s0 + $0x4a] sm:$0x3]
    %v56 = vld [vmem:[%s0 + $0x4c] sm:$0x3]
    %v57 = vld [vmem:[%s0 + $0x4e] sm:$0x3]
    %v58 = vld [vmem:[%s0 + $0x50] sm:$0x3]
    %v59 = vld [vmem:[%s0 + $0x52] sm:$0x3]
    %v60 = vld [vmem:[%s0 + $0x54] sm:$0x3]
    %v61 = vld [vmem:[%s0 + $0x56] sm:$0x3]
    %v62 = vld [vmem:[%s0 + $0x58] sm:$0x3]
    %v63 = vld [vmem:[%s0 + $0x5a] sm:$0x3]
    %v64 = vld [vmem:[%s0 + $0x5c] sm:$0x3]
    %v65 = vld [vmem:[%s0 + $0x5e] sm:$0x3]
    %v66 = vld [vmem:[%s0 + $0x60] sm:$0x3]
    %v67 = vld [vmem:[%s0 + $0x62] sm:$0x3]
    %v68 = vld [vmem:[%s0 + $0x64] sm:$0x3]
    %v69 = vld [vmem:[%s0 + $0x66] sm:$0x3]
    %v70 = vld [vmem:[%s0 + $0x68] sm:$0x3]
    %v71 = vld [vmem:[%s0 + $0x6a] sm:$0x3]
    %v72 = vld [vmem:[%s0 + $0x6c] sm:$0x3]
    %v73 = vld [vmem:[%s0 + $0x6e] sm:$0x3]
    %v74 = vld [vmem:[%s0 + $0x70] sm:$0x3]
    %v75 = vld [vmem:[%s0 + $0x72] sm:$0x3]
    %v76 = vld [vmem:[%s0 + $0x74] sm:$0x3]
    %v77 = vld [vmem:[%s0 + $0x76] sm:$0x3]
    %v78 = vld [vmem:[%s0 + $0x78] sm:$0x3]
    %v79 = vld [vmem:[%s0 + $0x7a] sm:$0x3]
    %v80 = vld [vmem:[%s0 + $0x7c] sm:$0x3]
    %v81 = vld [vmem:[%s0 + $0x7e] sm:$0x3]
    %v82 = vld [vmem:[%s0 + $0x80] sm:$0x3]
    %v83 = vld [vmem:[%s0 + $0x82] sm:$0x3]
    %v84 = vld [vmem:[%s0 + $0x84] sm:$0x3]
    %v85 = vld [vmem:[%s0 + $0x86] sm:$0x3]
    %v86 = vld [vmem:[%s0 + $0x88] sm:$0x3]
    %v87 = vld [vmem:[%s0 + $0x8a] sm:$0x3]
    %v88 = vld [vmem:[%s0 + $0x8c] sm:$0x3]
    %v89 = vld [vmem:[%s0 + $0x8e] sm:$0x3]
    %v90 = vld [vmem:[%s0 + $0x90] sm:$0x3]
    %v91 = vld [vmem:[%s0 + $0x92] sm:$0x3]
    %v92 = vld [vmem:[%s0 + $0x94] sm:$0x3]
    %v93 = vld [vmem:[%s0 + $0x96] sm:$0x3]
    %v94 = vld [vmem:[%s0 + $0x98] sm:$0x3]
    %v95 = vld [vmem:[%s0 + $0x9a] sm:$0x3]
    %v96 = vld [vmem:[%s0 + $0x9c] sm:$0x3]
    %v97 = vld [vmem:[%s0 + $0x9e] sm:$0x3]
    %v98 = vld [vmem:[%s0 + $0xa0] sm:$0x3]
    %v99 = vld [vmem:[%s0 + $0xa2] sm:$0x3]
    %v100 = vld [vmem:[%s0 + $0xa4] sm:$0x3]
    %v101 = vld [vmem:[%s0 + $0xa6] sm:$0x3]
    %v102 = vld [vmem:[%s0 + $0xa8] sm:$0x3]
    %v103 = vld [vmem:[%s0 + $0xaa] sm:$0x3]
    %v104 = vld [vmem:[%s0 + $0xac] sm:$0x3]
    %v105 = vld [vmem:[%s0 + $0xae] sm:$0x3]
    %v106 = vld [vmem:[%s0 + $0xb0] sm:$0x3]
    %v107 = vld [vmem:[%s0 + $0xb2] sm:$0x3]
    %v108 = vld [vmem:[%s0 + $0xb4] sm:$0x3]
    %v109 = vld [vmem:[%s0 + $0xb6] sm:$0x3]
    %v110 = vld [vmem:[%s0 + $0xb8] sm:$0x3]
    %v111 = vld [vmem:[%s0 + $0xba] sm:$0x3]
    %v112 = vld [vmem:[%s0 + $0xbc] sm:$0x3]
    %v113 = vld [vmem:[%s0 + $0xbe] sm:$0x3]
    %v114 = vld [vmem:[%s0 + $0xc0] sm:$0x3]
    %v115 = vld [vmem:[%s0 + $0xc2] sm:$0x3]
    %v116 = vld [vmem:[%s0 + $0xc4] sm:$0x3]
    %v117 = vld [vmem:[%s0 + $0xc6] sm:$0x3]
    %v118 = vld [vmem:[%s0 + $0xc8] sm:$0x3]
    %v119 = vld [vmem:[%s0 + $0xca] sm:$0x3]
    %v120 = vld [vmem:[%s0 + $0xcc] sm:$0x3]
    %v121 = vld [vmem:[%s0 + $0xce] sm:$0x3]
    %v122 = vld [vmem:[%s0 + $0xd0] sm:$0x3]
    %v123 = vld [vmem:[%s0 + $0xd2] sm:$0x3]
    %v124 = vld [vmem:[%s0 + $0xd4] sm:$0x3]
    %v125 = vld [vmem:[%s0 + $0xd6] sm:$0x3]
    %v126 = vld [vmem:[%s0 + $0xd8] sm:$0x3]
    %v127 = vld [vmem:[%s0 + $0xda] sm:$0x3]
    %v128 = vld [vmem:[%s0 + $0xdc] sm:$0x3]
    %v129 = vld [vmem:[%s0 + $0xde] sm:$0x3]
    %v130 = vld [vmem:[%s0 + $0xe0] sm:$0x3]
    %v131 = vld [vmem:[%s0 + $0xe2] sm:$0x3]
    %v132 = vld [vmem:[%s0 + $0xe4] sm:$0x3]
    %v133 = vld [vmem:[%s0 + $0xe6] sm:$0x3]
    %v134 = vld [vmem:[%s0 + $0xe8] sm:$0x3]
    %v135 = vld [vmem:[%s0 + $0xea] sm:$0x3]
    %v136 = vld [vmem:[%s0 + $0xec] sm:$0x3]
    %v137 = vld [vmem:[%s0 + $0xee] sm:$0x3]
    %v138 = vld [vmem:[%s0 + $0xf0] sm:$0x3]
    %v139 = vld [vmem:[%s0 + $0xf2] sm:$0x3]
    %v140 = vld [vmem:[%s0 + $0xf4] sm:$0x3]
    %v141 = vld [vmem:[%s0 + $0xf6] sm:$0x3]
    %v142 = vld [vmem:[%s0 + $0xf8] sm:$0x3]
    %v143 = vld [vmem:[%s0 + $0xfa] sm:$0x3]
    %v144 = vld [vmem:[%s0 + $0xfc] sm:$0x3]
    %v145 = vld [vmem:[%s0 + $0xfe] sm:$0x3]
    %v146 = vld [vmem:[%s0 + $0x100] sm:$0x3]
    %v147 = vld [vmem:[%s0 + $0x102] sm:$0x3]
    %v148 = vld [vmem:[%s0 + $0x104] sm:$0x3]
    %v149 = vld [vmem:[%s0 + $0x106] sm:$0x3]
    %v150 = vld [vmem:[%s0 + $0x108] sm:$0x3]
    %v151 = vld [vmem:[%s0 + $0x10a] sm:$0x3]
    %v152 = vld [vmem:[%s0 + $0x10c] sm:$0x3]
    %v153 = vld [vmem:[%s0 + $0x10e] sm:$0x3]
    %v154 = vld [vmem:[%s0 + $0x110] sm:$0x3]
    %v155 = vld [vmem:[%s0 + $0x112] sm:$0x3]
    %v156 = vld [vmem:[%s0 + $0x114] sm:$0x3]
    %v157 = vld [vmem:[%s0 + $0x116] sm:$0x3]
    %v158 = vld [vmem:[%s0 + $0x118] sm:$0x3]
    %v159 = vld [vmem:[%s0 + $0x11a] sm:$0x3]
    %v160 = vld [vmem:[%s0 + $0x11c] sm:$0x3]
    %v161 = vld [vmem:[%s0 + $0x11e] sm:$0x3]
    %v162 = vld [vmem:[%s0 + $0x120] sm:$0x3]
    %v163 = vld [vmem:[%s0 + $0x122] sm:$0x3]
    %v164 = vld [vmem:[%s0 + $0x124] sm:$0x3]
    %v165 = vld [vmem:[%s0 + $0x126] sm:$0x3]
    %v166 = vld [vmem:[%s0 + $0x128] sm:$0x3]
    %v167 = vld [vmem:[%s0 + $0x12a] sm:$0x3]
    %v168 = vld [vmem:[%s0 + $0x12c] sm:$0x3]
    %v169 = vld [vmem:[%s0 + $0x12e] sm:$0x3]
    %v170 = vld [vmem:[%s0 + $0x130] sm:$0x3]
    %v171 = vld [vmem:[%s0 + $0x132] sm:$0x3]
    %v172 = vld [vmem:[%s0 + $0x134] sm:$0x3]
    %v173 = vld [vmem:[%s0 + $0x136] sm:$0x3]
    %v174 = vld [vmem:[%s0 + $0x138] sm:$0x3]
    %v175 = vld [vmem:[%s0 + $0x13a] sm:$0x3]
    %v176 = vld [vmem:[%s0 + $0x13c] sm:$0x3]
    %v177 = vld [vmem:[%s0 + $0x13e] sm:$0x3]
    %v178 = vld [vmem:[%s0 + $0x140] sm:$0x3]
    %v179 = vld [vmem:[%s0 + $0x142] sm:$0x3]
    %v180 = vld [vmem:[%s0 + $0x144] sm:$0x3]
    %v181 = vld [vmem:[%s0 + $0x146] sm:$0x3]
    %v182 = vld [vmem:[%s0 + $0x148] sm:$0x3]
    %v183 = vld [vmem:[%s0 + $0x14a] sm:$0x3]
    %v184 = vld [vmem:[%s0 + $0x14c] sm:$0x3]
    %v185 = vld [vmem:[%s0 + $0x14e] sm:$0x3]
    %v186 = vld [vmem:[%s0 + $0x150] sm:$0x3]
    %v187 = vld [vmem:[%s0 + $0x152] sm:$0x3]
    %v188 = vld [vmem:[%s0 + $0x154] sm:$0x3]
    %v189 = vld [vmem:[%s0 + $0x156] sm:$0x3]
    %v190 = vld [vmem:[%s0 + $0x158] sm:$0x3]
    %v191 = vld [vmem:[%s0 + $0x15a] sm:$0x3]
    %v192 = vld [vmem:[%s0 + $0x15c] sm:$0x3]
    %v193 = vld [vmem:[%s0 + $0x15e] sm:$0x3]
    %v194 = vld [vmem:[%s0 + $0x160] sm:$0x3]
    %v195 = vld [vmem:[%s0 + $0x162] sm:$0x3]
    %v196 = vld [vmem:[%s0 + $0x164] sm:$0x3]
    %v197 = vld [vmem:[%s0 + $0x166] sm:$0x3]
    %v198 = vld [vmem:[%s0 + $0x168] sm:$0x3]
    %v199 = vld [vmem:[%s0 + $0x16a] sm:$0x3]
    %v200 = vld [vmem:[%s0 + $0x16c] sm:$0x3]
    %v201 = vld [vmem:[%s0 + $0x16e] sm:$0x3]
    %v202 = vld [vmem:[%s0 + $0x170] sm:$0x3]
    %v203 = vld [vmem:[%s0 + $0x172] sm:$0x3]
    %v204 = vld [vmem:[%s0 + $0x174] sm:$0x3]
    %v205 = vld [vmem:[%s0 + $0x176] sm:$0x3]
    %v206 = vld [vmem:[%s0 + $0x178] sm:$0x3]
    %v207 = vld [vmem:[%s0 + $0x17a] sm:$0x3]
    %v208 = vld [vmem:[%s0 + $0x17c] sm:$0x3]
    %v209 = vld [vmem:[%s0 + $0x17e] sm:$0x3]
    %v210 = vld [vmem:[%s0 + $0x180] sm:$0x3]
    %v211 = vld [vmem:[%s0 + $0x182] sm:$0x3]
    %v212 = vld [vmem:[%s0 + $0x184] sm:$0x3]
    %v213 = vld [vmem:[%s0 + $0x186] sm:$0x3]
    %v214 = vld [vmem:[%s0 + $0x188] sm:$0x3]
    %v215 = vld [vmem:[%s0 + $0x18a] sm:$0x3]
    %v216 = vld [vmem:[%s0 + $0x18c] sm:$0x3]
    %v217 = vld [vmem:[%s0 + $0x18e] sm:$0x3]
    %v218 = vld [vmem:[%s0 + $0x190] sm:$0x3]
    %v219 = vld [vmem:[%s0 + $0x192] sm:$0x3]
    %v220 = vld [vmem:[%s0 + $0x194] sm:$0x3]
    %v221 = vld [vmem:[%s0 + $0x196] sm:$0x3]
    %v222 = vld [vmem:[%s0 + $0x198] sm:$0x3]
    %v223 = vld [vmem:[%s0 + $0x19a] sm:$0x3]
    %v224 = vld [vmem:[%s0 + $0x19c] sm:$0x3]
    %v225 = vld [vmem:[%s0 + $0x19e] sm:$0x3]
    %v226 = vld [vmem:[%s0 + $0x1a0] sm:$0x3]
    %v227 = vld [vmem:[%s0 + $0x1a2] sm:$0x3]
    %v228 = vld [vmem:[%s0 + $0x1a4] sm:$0x3]
    %v229 = vld [vmem:[%s0 + $0x1a6] sm:$0x3]
    %v230 = vld [vmem:[%s0 + $0x1a8] sm:$0x3]
    %v231 = vld [vmem:[%s0 + $0x1aa] sm:$0x3]
    %v232 = vld [vmem:[%s0 + $0x1ac] sm:$0x3]
    %v233 = vld [vmem:[%s0 + $0x1ae] sm:$0x3]
    %v234 = vld [vmem:[%s0 + $0x1b0] sm:$0x3]
    %v235 = vld [vmem:[%s0 + $0x1b2] sm:$0x3]
    %v236 = vld [vmem:[%s0 + $0x1b4] sm:$0x3]
    %v237 = vld [vmem:[%s0 + $0x1b6] sm:$0x3]
    %v238 = vld [vmem:[%s0 + $0x1b8] sm:$0x3]
    %v239 = vld [vmem:[%s0 + $0x1ba] sm:$0x3]
    %v240 = vld [vmem:[%s0 + $0x1bc] sm:$0x3]
    %v241 = vld [vmem:[%s0 + $0x1be] sm:$0x3]
    %v242 = vld [vmem:[%s0 + $0x1c0] sm:$0x3]
    %v243 = vld [vmem:[%s0 + $0x1c2] sm:$0x3]
    %v244 = vld [vmem:[%s0 + $0x1c4] sm:$0x3]
    %v245 = vld [vmem:[%s0 + $0x1c6] sm:$0x3]
    %v246 = vld [vmem:[%s0 + $0x1c8] sm:$0x3]
    %v247 = vld [vmem:[%s0 + $0x1ca] sm:$0x3]
    %v248 = vld [vmem:[%s0 + $0x1cc] sm:$0x3]
    %v249 = vld [vmem:[%s0 + $0x1ce] sm:$0x3]
    %v250 = vld [vmem:[%s0 + $0x1d0] sm:$0x3]
    %v251 = vld [vmem:[%s0 + $0x1d2] sm:$0x3]
    %v252 = vld [vmem:[%s0 + $0x1d4] sm:$0x3]
    %v253 = vld [vmem:[%s0 + $0x1d6] sm:$0x3]
    %v254 = vld [vmem:[%s0 + $0x1d8] sm:$0x3]
    %v255 = vld [vmem:[%s0 + $0x1da] sm:$0x3]
    %v256 = vld [vmem:[%s0 + $0x1dc] sm:$0x3]
    %v257 = vld [vmem:[%s0 + $0x1de] sm:$0x3]
    %v258 = vld [vmem:[%s0 + $0x1e0] sm:$0x3]
    %v259 = vld [vmem:[%s0 + $0x1e2] sm:$0x3]
    %v260 = vld [vmem:[%s0 + $0x1e4] sm:$0x3]
    %v261 = vld [vmem:[%s0 + $0x1e6] sm:$0x3]
    %v262 = vld [vmem:[%s0 + $0x1e8] sm:$0x3]
    %v263 = vld [vmem:[%s0 + $0x1ea] sm:$0x3]
    %v264 = vld [vmem:[%s0 + $0x1ec] sm:$0x3]
    %v265 = vld [vmem:[%s0 + $0x1ee] sm:$0x3]
    %v266 = vld [vmem:[%s0 + $0x1f0] sm:$0x3]
    %v267 = vld [vmem:[%s0 + $0x1f2] sm:$0x3]
    %v268 = vld [vmem:[%s0 + $0x1f4] sm:$0x3]
    %v269 = vld [vmem:[%s0 + $0x1f6] sm:$0x3]
    %v270 = vld [vmem:[%s0 + $0x1f8] sm:$0x3]
    %v271 = vld [vmem:[%s0 + $0x1fa] sm:$0x3]
    %v272 = vld [vmem:[%s0 + $0x1fc] sm:$0x3]
    %v273 = vld [vmem:[%s0 + $0x1fe] sm:$0x3]
    %v274 = vld [vmem:[%s0 + $0x200] sm:$0x3]
    %vm275 = vcmask 254976
    %v276 = vsel %vm275, %v18, 0.0
    %277 = vadd.xlane.f32.xlu0 %v276
    %v278 = vpop.xlane.xlu0 %277
    %v279 = vsel %vm275, %v19, 0.0
    %280 = vadd.xlane.f32.xlu0 %v279
    %v281 = vpop.xlane.xlu0 %280
    %v282 = vsel %vm275, %v20, 0.0
    %283 = vadd.xlane.f32.xlu0 %v282
    %v284 = vpop.xlane.xlu0 %283
    %v285 = vsel %vm275, %v21, 0.0
    %286 = vadd.xlane.f32.xlu0 %v285
    %v287 = vpop.xlane.xlu0 %286
    %v288 = vsel %vm275, %v22, 0.0
    %289 = vadd.xlane.f32.xlu0 %v288
    %v290 = vpop.xlane.xlu0 %289
    %v291 = vsel %vm275, %v23, 0.0
    %292 = vadd.xlane.f32.xlu0 %v291
    %v293 = vpop.xlane.xlu0 %292
    %v294 = vsel %vm275, %v24, 0.0
    %295 = vadd.xlane.f32.xlu0 %v294
    %v296 = vpop.xlane.xlu0 %295
    %v297 = vsel %vm275, %v25, 0.0
    %298 = vadd.xlane.f32.xlu0 %v297
    %v299 = vpop.xlane.xlu0 %298
    %v300 = vsel %vm275, %v26, 0.0
    %301 = vadd.xlane.f32.xlu0 %v300
    %v302 = vpop.xlane.xlu0 %301
    %v303 = vsel %vm275, %v27, 0.0
    %304 = vadd.xlane.f32.xlu0 %v303
    %v305 = vpop.xlane.xlu0 %304
    %v306 = vsel %vm275, %v28, 0.0
    %307 = vadd.xlane.f32.xlu0 %v306
    %v308 = vpop.xlane.xlu0 %307
    %v309 = vsel %vm275, %v29, 0.0
    %310 = vadd.xlane.f32.xlu0 %v309
    %v311 = vpop.xlane.xlu0 %310
    %v312 = vsel %vm275, %v30, 0.0
    %313 = vadd.xlane.f32.xlu0 %v312
    %v314 = vpop.xlane.xlu0 %313
    %v315 = vsel %vm275, %v31, 0.0
    %316 = vadd.xlane.f32.xlu0 %v315
    %v317 = vpop.xlane.xlu0 %316
    %v318 = vsel %vm275, %v32, 0.0
    %319 = vadd.xlane.f32.xlu0 %v318
    %v320 = vpop.xlane.xlu0 %319
    %v321 = vsel %vm275, %v33, 0.0
    %322 = vadd.xlane.f32.xlu0 %v321
    %v323 = vpop.xlane.xlu0 %322
    %v324 = vsel %vm275, %v34, 0.0
    %325 = vadd.xlane.f32.xlu0 %v324
    %v326 = vpop.xlane.xlu0 %325
    %v327 = vsel %vm275, %v35, 0.0
    %328 = vadd.xlane.f32.xlu0 %v327
    %v329 = vpop.xlane.xlu0 %328
    %v330 = vsel %vm275, %v36, 0.0
    %331 = vadd.xlane.f32.xlu0 %v330
    %v332 = vpop.xlane.xlu0 %331
    %v333 = vsel %vm275, %v37, 0.0
    %334 = vadd.xlane.f32.xlu0 %v333
    %v335 = vpop.xlane.xlu0 %334
    %v336 = vsel %vm275, %v38, 0.0
    %337 = vadd.xlane.f32.xlu0 %v336
    %v338 = vpop.xlane.xlu0 %337
    %v339 = vsel %vm275, %v39, 0.0
    %340 = vadd.xlane.f32.xlu0 %v339
    %v341 = vpop.xlane.xlu0 %340
    %v342 = vsel %vm275, %v40, 0.0
    %343 = vadd.xlane.f32.xlu0 %v342
    %v344 = vpop.xlane.xlu0 %343
    %v345 = vsel %vm275, %v41, 0.0
    %346 = vadd.xlane.f32.xlu0 %v345
    %v347 = vpop.xlane.xlu0 %346
    %v348 = vsel %vm275, %v42, 0.0
    %349 = vadd.xlane.f32.xlu0 %v348
    %v350 = vpop.xlane.xlu0 %349
    %v351 = vsel %vm275, %v43, 0.0
    %352 = vadd.xlane.f32.xlu0 %v351
    %v353 = vpop.xlane.xlu0 %352
    %v354 = vsel %vm275, %v44, 0.0
    %355 = vadd.xlane.f32.xlu0 %v354
    %v356 = vpop.xlane.xlu0 %355
    %v357 = vsel %vm275, %v45, 0.0
    %358 = vadd.xlane.f32.xlu0 %v357
    %v359 = vpop.xlane.xlu0 %358
    %v360 = vsel %vm275, %v46, 0.0
    %361 = vadd.xlane.f32.xlu0 %v360
    %v362 = vpop.xlane.xlu0 %361
    %v363 = vsel %vm275, %v47, 0.0
    %364 = vadd.xlane.f32.xlu0 %v363
    %v365 = vpop.xlane.xlu0 %364
    %v366 = vsel %vm275, %v48, 0.0
    %367 = vadd.xlane.f32.xlu0 %v366
    %v368 = vpop.xlane.xlu0 %367
    %v369 = vsel %vm275, %v49, 0.0
    %370 = vadd.xlane.f32.xlu0 %v369
    %v371 = vpop.xlane.xlu0 %370
    %v372 = vsel %vm275, %v50, 0.0
    %373 = vadd.xlane.f32.xlu0 %v372
    %v374 = vpop.xlane.xlu0 %373
    %v375 = vsel %vm275, %v51, 0.0
    %376 = vadd.xlane.f32.xlu0 %v375
    %v377 = vpop.xlane.xlu0 %376
    %v378 = vsel %vm275, %v52, 0.0
    %379 = vadd.xlane.f32.xlu0 %v378
    %v380 = vpop.xlane.xlu0 %379
    %v381 = vsel %vm275, %v53, 0.0
    %382 = vadd.xlane.f32.xlu0 %v381
    %v383 = vpop.xlane.xlu0 %382
    %v384 = vsel %vm275, %v54, 0.0
    %385 = vadd.xlane.f32.xlu0 %v384
    %v386 = vpop.xlane.xlu0 %385
    %v387 = vsel %vm275, %v55, 0.0
    %388 = vadd.xlane.f32.xlu0 %v387
    %v389 = vpop.xlane.xlu0 %388
    %v390 = vsel %vm275, %v56, 0.0
    %391 = vadd.xlane.f32.xlu0 %v390
    %v392 = vpop.xlane.xlu0 %391
    %v393 = vsel %vm275, %v57, 0.0
    %394 = vadd.xlane.f32.xlu0 %v393
    %v395 = vpop.xlane.xlu0 %394
    %v396 = vsel %vm275, %v58, 0.0
    %397 = vadd.xlane.f32.xlu0 %v396
    %v398 = vpop.xlane.xlu0 %397
    %v399 = vsel %vm275, %v59, 0.0
    %400 = vadd.xlane.f32.xlu0 %v399
    %v401 = vpop.xlane.xlu0 %400
    %v402 = vsel %vm275, %v60, 0.0
    %403 = vadd.xlane.f32.xlu0 %v402
    %v404 = vpop.xlane.xlu0 %403
    %v405 = vsel %vm275, %v61, 0.0
    %406 = vadd.xlane.f32.xlu0 %v405
    %v407 = vpop.xlane.xlu0 %406
    %v408 = vsel %vm275, %v62, 0.0
    %409 = vadd.xlane.f32.xlu0 %v408
    %v410 = vpop.xlane.xlu0 %409
    %v411 = vsel %vm275, %v63, 0.0
    %412 = vadd.xlane.f32.xlu0 %v411
    %v413 = vpop.xlane.xlu0 %412
    %v414 = vsel %vm275, %v64, 0.0
    %415 = vadd.xlane.f32.xlu0 %v414
    %v416 = vpop.xlane.xlu0 %415
    %v417 = vsel %vm275, %v65, 0.0
    %418 = vadd.xlane.f32.xlu0 %v417
    %v419 = vpop.xlane.xlu0 %418
    %v420 = vsel %vm275, %v66, 0.0
    %421 = vadd.xlane.f32.xlu0 %v420
    %v422 = vpop.xlane.xlu0 %421
    %v423 = vsel %vm275, %v67, 0.0
    %424 = vadd.xlane.f32.xlu0 %v423
    %v425 = vpop.xlane.xlu0 %424
    %v426 = vsel %vm275, %v68, 0.0
    %427 = vadd.xlane.f32.xlu0 %v426
    %v428 = vpop.xlane.xlu0 %427
    %v429 = vsel %vm275, %v69, 0.0
    %430 = vadd.xlane.f32.xlu0 %v429
    %v431 = vpop.xlane.xlu0 %430
    %v432 = vsel %vm275, %v70, 0.0
    %433 = vadd.xlane.f32.xlu0 %v432
    %v434 = vpop.xlane.xlu0 %433
    %v435 = vsel %vm275, %v71, 0.0
    %436 = vadd.xlane.f32.xlu0 %v435
    %v437 = vpop.xlane.xlu0 %436
    %v438 = vsel %vm275, %v72, 0.0
    %439 = vadd.xlane.f32.xlu0 %v438
    %v440 = vpop.xlane.xlu0 %439
    %v441 = vsel %vm275, %v73, 0.0
    %442 = vadd.xlane.f32.xlu0 %v441
    %v443 = vpop.xlane.xlu0 %442
    %v444 = vsel %vm275, %v74, 0.0
    %445 = vadd.xlane.f32.xlu0 %v444
    %v446 = vpop.xlane.xlu0 %445
    %v447 = vsel %vm275, %v75, 0.0
    %448 = vadd.xlane.f32.xlu0 %v447
    %v449 = vpop.xlane.xlu0 %448
    %v450 = vsel %vm275, %v76, 0.0
    %451 = vadd.xlane.f32.xlu0 %v450
    %v452 = vpop.xlane.xlu0 %451
    %v453 = vsel %vm275, %v77, 0.0
    %454 = vadd.xlane.f32.xlu0 %v453
    %v455 = vpop.xlane.xlu0 %454
    %v456 = vsel %vm275, %v78, 0.0
    %457 = vadd.xlane.f32.xlu0 %v456
    %v458 = vpop.xlane.xlu0 %457
    %v459 = vsel %vm275, %v79, 0.0
    %460 = vadd.xlane.f32.xlu0 %v459
    %v461 = vpop.xlane.xlu0 %460
    %v462 = vsel %vm275, %v80, 0.0
    %463 = vadd.xlane.f32.xlu0 %v462
    %v464 = vpop.xlane.xlu0 %463
    %v465 = vsel %vm275, %v81, 0.0
    %466 = vadd.xlane.f32.xlu0 %v465
    %v467 = vpop.xlane.xlu0 %466
    %v468 = vsel %vm275, %v82, 0.0
    %469 = vadd.xlane.f32.xlu0 %v468
    %v470 = vpop.xlane.xlu0 %469
    %v471 = vsel %vm275, %v83, 0.0
    %472 = vadd.xlane.f32.xlu0 %v471
    %v473 = vpop.xlane.xlu0 %472
    %v474 = vsel %vm275, %v84, 0.0
    %475 = vadd.xlane.f32.xlu0 %v474
    %v476 = vpop.xlane.xlu0 %475
    %v477 = vsel %vm275, %v85, 0.0
    %478 = vadd.xlane.f32.xlu0 %v477
    %v479 = vpop.xlane.xlu0 %478
    %v480 = vsel %vm275, %v86, 0.0
    %481 = vadd.xlane.f32.xlu0 %v480
    %v482 = vpop.xlane.xlu0 %481
    %v483 = vsel %vm275, %v87, 0.0
    %484 = vadd.xlane.f32.xlu0 %v483
    %v485 = vpop.xlane.xlu0 %484
    %v486 = vsel %vm275, %v88, 0.0
    %487 = vadd.xlane.f32.xlu0 %v486
    %v488 = vpop.xlane.xlu0 %487
    %v489 = vsel %vm275, %v89, 0.0
    %490 = vadd.xlane.f32.xlu0 %v489
    %v491 = vpop.xlane.xlu0 %490
    %v492 = vsel %vm275, %v90, 0.0
    %493 = vadd.xlane.f32.xlu0 %v492
    %v494 = vpop.xlane.xlu0 %493
    %v495 = vsel %vm275, %v91, 0.0
    %496 = vadd.xlane.f32.xlu0 %v495
    %v497 = vpop.xlane.xlu0 %496
    %v498 = vsel %vm275, %v92, 0.0
    %499 = vadd.xlane.f32.xlu0 %v498
    %v500 = vpop.xlane.xlu0 %499
    %v501 = vsel %vm275, %v93, 0.0
    %502 = vadd.xlane.f32.xlu0 %v501
    %v503 = vpop.xlane.xlu0 %502
    %v504 = vsel %vm275, %v94, 0.0
    %505 = vadd.xlane.f32.xlu0 %v504
    %v506 = vpop.xlane.xlu0 %505
    %v507 = vsel %vm275, %v95, 0.0
    %508 = vadd.xlane.f32.xlu0 %v507
    %v509 = vpop.xlane.xlu0 %508
    %v510 = vsel %vm275, %v96, 0.0
    %511 = vadd.xlane.f32.xlu0 %v510
    %v512 = vpop.xlane.xlu0 %511
    %v513 = vsel %vm275, %v97, 0.0
    %514 = vadd.xlane.f32.xlu0 %v513
    %v515 = vpop.xlane.xlu0 %514
    %v516 = vsel %vm275, %v98, 0.0
    %517 = vadd.xlane.f32.xlu0 %v516
    %v518 = vpop.xlane.xlu0 %517
    %v519 = vsel %vm275, %v99, 0.0
    %520 = vadd.xlane.f32.xlu0 %v519
    %v521 = vpop.xlane.xlu0 %520
    %v522 = vsel %vm275, %v100, 0.0
    %523 = vadd.xlane.f32.xlu0 %v522
    %v524 = vpop.xlane.xlu0 %523
    %v525 = vsel %vm275, %v101, 0.0
    %526 = vadd.xlane.f32.xlu0 %v525
    %v527 = vpop.xlane.xlu0 %526
    %v528 = vsel %vm275, %v102, 0.0
    %529 = vadd.xlane.f32.xlu0 %v528
    %v530 = vpop.xlane.xlu0 %529
    %v531 = vsel %vm275, %v103, 0.0
    %532 = vadd.xlane.f32.xlu0 %v531
    %v533 = vpop.xlane.xlu0 %532
    %v534 = vsel %vm275, %v104, 0.0
    %535 = vadd.xlane.f32.xlu0 %v534
    %v536 = vpop.xlane.xlu0 %535
    %v537 = vsel %vm275, %v105, 0.0
    %538 = vadd.xlane.f32.xlu0 %v537
    %v539 = vpop.xlane.xlu0 %538
    %v540 = vsel %vm275, %v106, 0.0
    %541 = vadd.xlane.f32.xlu0 %v540
    %v542 = vpop.xlane.xlu0 %541
    %v543 = vsel %vm275, %v107, 0.0
    %544 = vadd.xlane.f32.xlu0 %v543
    %v545 = vpop.xlane.xlu0 %544
    %v546 = vsel %vm275, %v108, 0.0
    %547 = vadd.xlane.f32.xlu0 %v546
    %v548 = vpop.xlane.xlu0 %547
    %v549 = vsel %vm275, %v109, 0.0
    %550 = vadd.xlane.f32.xlu0 %v549
    %v551 = vpop.xlane.xlu0 %550
    %v552 = vsel %vm275, %v110, 0.0
    %553 = vadd.xlane.f32.xlu0 %v552
    %v554 = vpop.xlane.xlu0 %553
    %v555 = vsel %vm275, %v111, 0.0
    %556 = vadd.xlane.f32.xlu0 %v555
    %v557 = vpop.xlane.xlu0 %556
    %v558 = vsel %vm275, %v112, 0.0
    %559 = vadd.xlane.f32.xlu0 %v558
    %v560 = vpop.xlane.xlu0 %559
    %v561 = vsel %vm275, %v113, 0.0
    %562 = vadd.xlane.f32.xlu0 %v561
    %v563 = vpop.xlane.xlu0 %562
    %v564 = vsel %vm275, %v114, 0.0
    %565 = vadd.xlane.f32.xlu0 %v564
    %v566 = vpop.xlane.xlu0 %565
    %v567 = vsel %vm275, %v115, 0.0
    %568 = vadd.xlane.f32.xlu0 %v567
    %v569 = vpop.xlane.xlu0 %568
    %v570 = vsel %vm275, %v116, 0.0
    %571 = vadd.xlane.f32.xlu0 %v570
    %v572 = vpop.xlane.xlu0 %571
    %v573 = vsel %vm275, %v117, 0.0
    %574 = vadd.xlane.f32.xlu0 %v573
    %v575 = vpop.xlane.xlu0 %574
    %v576 = vsel %vm275, %v118, 0.0
    %577 = vadd.xlane.f32.xlu0 %v576
    %v578 = vpop.xlane.xlu0 %577
    %v579 = vsel %vm275, %v119, 0.0
    %580 = vadd.xlane.f32.xlu0 %v579
    %v581 = vpop.xlane.xlu0 %580
    %v582 = vsel %vm275, %v120, 0.0
    %583 = vadd.xlane.f32.xlu0 %v582
    %v584 = vpop.xlane.xlu0 %583
    %v585 = vsel %vm275, %v121, 0.0
    %586 = vadd.xlane.f32.xlu0 %v585
    %v587 = vpop.xlane.xlu0 %586
    %v588 = vsel %vm275, %v122, 0.0
    %589 = vadd.xlane.f32.xlu0 %v588
    %v590 = vpop.xlane.xlu0 %589
    %v591 = vsel %vm275, %v123, 0.0
    %592 = vadd.xlane.f32.xlu0 %v591
    %v593 = vpop.xlane.xlu0 %592
    %v594 = vsel %vm275, %v124, 0.0
    %595 = vadd.xlane.f32.xlu0 %v594
    %v596 = vpop.xlane.xlu0 %595
    %v597 = vsel %vm275, %v125, 0.0
    %598 = vadd.xlane.f32.xlu0 %v597
    %v599 = vpop.xlane.xlu0 %598
    %v600 = vsel %vm275, %v126, 0.0
    %601 = vadd.xlane.f32.xlu0 %v600
    %v602 = vpop.xlane.xlu0 %601
    %v603 = vsel %vm275, %v127, 0.0
    %604 = vadd.xlane.f32.xlu0 %v603
    %v605 = vpop.xlane.xlu0 %604
    %v606 = vsel %vm275, %v128, 0.0
    %607 = vadd.xlane.f32.xlu0 %v606
    %v608 = vpop.xlane.xlu0 %607
    %v609 = vsel %vm275, %v129, 0.0
    %610 = vadd.xlane.f32.xlu0 %v609
    %v611 = vpop.xlane.xlu0 %610
    %v612 = vsel %vm275, %v130, 0.0
    %613 = vadd.xlane.f32.xlu0 %v612
    %v614 = vpop.xlane.xlu0 %613
    %v615 = vsel %vm275, %v131, 0.0
    %616 = vadd.xlane.f32.xlu0 %v615
    %v617 = vpop.xlane.xlu0 %616
    %v618 = vsel %vm275, %v132, 0.0
    %619 = vadd.xlane.f32.xlu0 %v618
    %v620 = vpop.xlane.xlu0 %619
    %v621 = vsel %vm275, %v133, 0.0
    %622 = vadd.xlane.f32.xlu0 %v621
    %v623 = vpop.xlane.xlu0 %622
    %v624 = vsel %vm275, %v134, 0.0
    %625 = vadd.xlane.f32.xlu0 %v624
    %v626 = vpop.xlane.xlu0 %625
    %v627 = vsel %vm275, %v135, 0.0
    %628 = vadd.xlane.f32.xlu0 %v627
    %v629 = vpop.xlane.xlu0 %628
    %v630 = vsel %vm275, %v136, 0.0
    %631 = vadd.xlane.f32.xlu0 %v630
    %v632 = vpop.xlane.xlu0 %631
    %v633 = vsel %vm275, %v137, 0.0
    %634 = vadd.xlane.f32.xlu0 %v633
    %v635 = vpop.xlane.xlu0 %634
    %v636 = vsel %vm275, %v138, 0.0
    %637 = vadd.xlane.f32.xlu0 %v636
    %v638 = vpop.xlane.xlu0 %637
    %v639 = vsel %vm275, %v139, 0.0
    %640 = vadd.xlane.f32.xlu0 %v639
    %v641 = vpop.xlane.xlu0 %640
    %v642 = vsel %vm275, %v140, 0.0
    %643 = vadd.xlane.f32.xlu0 %v642
    %v644 = vpop.xlane.xlu0 %643
    %v645 = vsel %vm275, %v141, 0.0
    %646 = vadd.xlane.f32.xlu0 %v645
    %v647 = vpop.xlane.xlu0 %646
    %v648 = vsel %vm275, %v142, 0.0
    %649 = vadd.xlane.f32.xlu0 %v648
    %v650 = vpop.xlane.xlu0 %649
    %v651 = vsel %vm275, %v143, 0.0
    %652 = vadd.xlane.f32.xlu0 %v651
    %v653 = vpop.xlane.xlu0 %652
    %v654 = vsel %vm275, %v144, 0.0
    %655 = vadd.xlane.f32.xlu0 %v654
    %v656 = vpop.xlane.xlu0 %655
    %v657 = vsel %vm275, %v145, 0.0
    %658 = vadd.xlane.f32.xlu0 %v657
    %v659 = vpop.xlane.xlu0 %658
    %v660 = vsel %vm275, %v146, 0.0
    %661 = vadd.xlane.f32.xlu0 %v660
    %v662 = vpop.xlane.xlu0 %661
    %v663 = vsel %vm275, %v147, 0.0
    %664 = vadd.xlane.f32.xlu0 %v663
    %v665 = vpop.xlane.xlu0 %664
    %v666 = vsel %vm275, %v148, 0.0
    %667 = vadd.xlane.f32.xlu0 %v666
    %v668 = vpop.xlane.xlu0 %667
    %v669 = vsel %vm275, %v149, 0.0
    %670 = vadd.xlane.f32.xlu0 %v669
    %v671 = vpop.xlane.xlu0 %670
    %v672 = vsel %vm275, %v150, 0.0
    %673 = vadd.xlane.f32.xlu0 %v672
    %v674 = vpop.xlane.xlu0 %673
    %v675 = vsel %vm275, %v151, 0.0
    %676 = vadd.xlane.f32.xlu0 %v675
    %v677 = vpop.xlane.xlu0 %676
    %v678 = vsel %vm275, %v152, 0.0
    %679 = vadd.xlane.f32.xlu0 %v678
    %v680 = vpop.xlane.xlu0 %679
    %v681 = vsel %vm275, %v153, 0.0
    %682 = vadd.xlane.f32.xlu0 %v681
    %v683 = vpop.xlane.xlu0 %682
    %v684 = vsel %vm275, %v154, 0.0
    %685 = vadd.xlane.f32.xlu0 %v684
    %v686 = vpop.xlane.xlu0 %685
    %v687 = vsel %vm275, %v155, 0.0
    %688 = vadd.xlane.f32.xlu0 %v687
    %v689 = vpop.xlane.xlu0 %688
    %v690 = vsel %vm275, %v156, 0.0
    %691 = vadd.xlane.f32.xlu0 %v690
    %v692 = vpop.xlane.xlu0 %691
    %v693 = vsel %vm275, %v157, 0.0
    %694 = vadd.xlane.f32.xlu0 %v693
    %v695 = vpop.xlane.xlu0 %694
    %v696 = vsel %vm275, %v158, 0.0
    %697 = vadd.xlane.f32.xlu0 %v696
    %v698 = vpop.xlane.xlu0 %697
    %v699 = vsel %vm275, %v159, 0.0
    %700 = vadd.xlane.f32.xlu0 %v699
    %v701 = vpop.xlane.xlu0 %700
    %v702 = vsel %vm275, %v160, 0.0
    %703 = vadd.xlane.f32.xlu0 %v702
    %v704 = vpop.xlane.xlu0 %703
    %v705 = vsel %vm275, %v161, 0.0
    %706 = vadd.xlane.f32.xlu0 %v705
    %v707 = vpop.xlane.xlu0 %706
    %v708 = vsel %vm275, %v162, 0.0
    %709 = vadd.xlane.f32.xlu0 %v708
    %v710 = vpop.xlane.xlu0 %709
    %v711 = vsel %vm275, %v163, 0.0
    %712 = vadd.xlane.f32.xlu0 %v711
    %v713 = vpop.xlane.xlu0 %712
    %v714 = vsel %vm275, %v164, 0.0
    %715 = vadd.xlane.f32.xlu0 %v714
    %v716 = vpop.xlane.xlu0 %715
    %v717 = vsel %vm275, %v165, 0.0
    %718 = vadd.xlane.f32.xlu0 %v717
    %v719 = vpop.xlane.xlu0 %718
    %v720 = vsel %vm275, %v166, 0.0
    %721 = vadd.xlane.f32.xlu0 %v720
    %v722 = vpop.xlane.xlu0 %721
    %v723 = vsel %vm275, %v167, 0.0
    %724 = vadd.xlane.f32.xlu0 %v723
    %v725 = vpop.xlane.xlu0 %724
    %v726 = vsel %vm275, %v168, 0.0
    %727 = vadd.xlane.f32.xlu0 %v726
    %v728 = vpop.xlane.xlu0 %727
    %v729 = vsel %vm275, %v169, 0.0
    %730 = vadd.xlane.f32.xlu0 %v729
    %v731 = vpop.xlane.xlu0 %730
    %v732 = vsel %vm275, %v170, 0.0
    %733 = vadd.xlane.f32.xlu0 %v732
    %v734 = vpop.xlane.xlu0 %733
    %v735 = vsel %vm275, %v171, 0.0
    %736 = vadd.xlane.f32.xlu0 %v735
    %v737 = vpop.xlane.xlu0 %736
    %v738 = vsel %vm275, %v172, 0.0
    %739 = vadd.xlane.f32.xlu0 %v738
    %v740 = vpop.xlane.xlu0 %739
    %v741 = vsel %vm275, %v173, 0.0
    %742 = vadd.xlane.f32.xlu0 %v741
    %v743 = vpop.xlane.xlu0 %742
    %v744 = vsel %vm275, %v174, 0.0
    %745 = vadd.xlane.f32.xlu0 %v744
    %v746 = vpop.xlane.xlu0 %745
    %v747 = vsel %vm275, %v175, 0.0
    %748 = vadd.xlane.f32.xlu0 %v747
    %v749 = vpop.xlane.xlu0 %748
    %v750 = vsel %vm275, %v176, 0.0
    %751 = vadd.xlane.f32.xlu0 %v750
    %v752 = vpop.xlane.xlu0 %751
    %v753 = vsel %vm275, %v177, 0.0
    %754 = vadd.xlane.f32.xlu0 %v753
    %v755 = vpop.xlane.xlu0 %754
    %v756 = vsel %vm275, %v178, 0.0
    %757 = vadd.xlane.f32.xlu0 %v756
    %v758 = vpop.xlane.xlu0 %757
    %v759 = vsel %vm275, %v179, 0.0
    %760 = vadd.xlane.f32.xlu0 %v759
    %v761 = vpop.xlane.xlu0 %760
    %v762 = vsel %vm275, %v180, 0.0
    %763 = vadd.xlane.f32.xlu0 %v762
    %v764 = vpop.xlane.xlu0 %763
    %v765 = vsel %vm275, %v181, 0.0
    %766 = vadd.xlane.f32.xlu0 %v765
    %v767 = vpop.xlane.xlu0 %766
    %v768 = vsel %vm275, %v182, 0.0
    %769 = vadd.xlane.f32.xlu0 %v768
    %v770 = vpop.xlane.xlu0 %769
    %v771 = vsel %vm275, %v183, 0.0
    %772 = vadd.xlane.f32.xlu0 %v771
    %v773 = vpop.xlane.xlu0 %772
    %v774 = vsel %vm275, %v184, 0.0
    %775 = vadd.xlane.f32.xlu0 %v774
    %v776 = vpop.xlane.xlu0 %775
    %v777 = vsel %vm275, %v185, 0.0
    %778 = vadd.xlane.f32.xlu0 %v777
    %v779 = vpop.xlane.xlu0 %778
    %v780 = vsel %vm275, %v186, 0.0
    %781 = vadd.xlane.f32.xlu0 %v780
    %v782 = vpop.xlane.xlu0 %781
    %v783 = vsel %vm275, %v187, 0.0
    %784 = vadd.xlane.f32.xlu0 %v783
    %v785 = vpop.xlane.xlu0 %784
    %v786 = vsel %vm275, %v188, 0.0
    %787 = vadd.xlane.f32.xlu0 %v786
    %v788 = vpop.xlane.xlu0 %787
    %v789 = vsel %vm275, %v189, 0.0
    %790 = vadd.xlane.f32.xlu0 %v789
    %v791 = vpop.xlane.xlu0 %790
    %v792 = vsel %vm275, %v190, 0.0
    %793 = vadd.xlane.f32.xlu0 %v792
    %v794 = vpop.xlane.xlu0 %793
    %v795 = vsel %vm275, %v191, 0.0
    %796 = vadd.xlane.f32.xlu0 %v795
    %v797 = vpop.xlane.xlu0 %796
    %v798 = vsel %vm275, %v192, 0.0
    %799 = vadd.xlane.f32.xlu0 %v798
    %v800 = vpop.xlane.xlu0 %799
    %v801 = vsel %vm275, %v193, 0.0
    %802 = vadd.xlane.f32.xlu0 %v801
    %v803 = vpop.xlane.xlu0 %802
    %v804 = vsel %vm275, %v194, 0.0
    %805 = vadd.xlane.f32.xlu0 %v804
    %v806 = vpop.xlane.xlu0 %805
    %v807 = vsel %vm275, %v195, 0.0
    %808 = vadd.xlane.f32.xlu0 %v807
    %v809 = vpop.xlane.xlu0 %808
    %v810 = vsel %vm275, %v196, 0.0
    %811 = vadd.xlane.f32.xlu0 %v810
    %v812 = vpop.xlane.xlu0 %811
    %v813 = vsel %vm275, %v197, 0.0
    %814 = vadd.xlane.f32.xlu0 %v813
    %v815 = vpop.xlane.xlu0 %814
    %v816 = vsel %vm275, %v198, 0.0
    %817 = vadd.xlane.f32.xlu0 %v816
    %v818 = vpop.xlane.xlu0 %817
    %v819 = vsel %vm275, %v199, 0.0
    %820 = vadd.xlane.f32.xlu0 %v819
    %v821 = vpop.xlane.xlu0 %820
    %v822 = vsel %vm275, %v200, 0.0
    %823 = vadd.xlane.f32.xlu0 %v822
    %v824 = vpop.xlane.xlu0 %823
    %v825 = vsel %vm275, %v201, 0.0
    %826 = vadd.xlane.f32.xlu0 %v825
    %v827 = vpop.xlane.xlu0 %826
    %v828 = vsel %vm275, %v202, 0.0
    %829 = vadd.xlane.f32.xlu0 %v828
    %v830 = vpop.xlane.xlu0 %829
    %v831 = vsel %vm275, %v203, 0.0
    %832 = vadd.xlane.f32.xlu0 %v831
    %v833 = vpop.xlane.xlu0 %832
    %v834 = vsel %vm275, %v204, 0.0
    %835 = vadd.xlane.f32.xlu0 %v834
    %v836 = vpop.xlane.xlu0 %835
    %v837 = vsel %vm275, %v205, 0.0
    %838 = vadd.xlane.f32.xlu0 %v837
    %v839 = vpop.xlane.xlu0 %838
    %v840 = vsel %vm275, %v206, 0.0
    %841 = vadd.xlane.f32.xlu0 %v840
    %v842 = vpop.xlane.xlu0 %841
    %v843 = vsel %vm275, %v207, 0.0
    %844 = vadd.xlane.f32.xlu0 %v843
    %v845 = vpop.xlane.xlu0 %844
    %v846 = vsel %vm275, %v208, 0.0
    %847 = vadd.xlane.f32.xlu0 %v846
    %v848 = vpop.xlane.xlu0 %847
    %v849 = vsel %vm275, %v209, 0.0
    %850 = vadd.xlane.f32.xlu0 %v849
    %v851 = vpop.xlane.xlu0 %850
    %v852 = vsel %vm275, %v210, 0.0
    %853 = vadd.xlane.f32.xlu0 %v852
    %v854 = vpop.xlane.xlu0 %853
    %v855 = vsel %vm275, %v211, 0.0
    %856 = vadd.xlane.f32.xlu0 %v855
    %v857 = vpop.xlane.xlu0 %856
    %v858 = vsel %vm275, %v212, 0.0
    %859 = vadd.xlane.f32.xlu0 %v858
    %v860 = vpop.xlane.xlu0 %859
    %v861 = vsel %vm275, %v213, 0.0
    %862 = vadd.xlane.f32.xlu0 %v861
    %v863 = vpop.xlane.xlu0 %862
    %v864 = vsel %vm275, %v214, 0.0
    %865 = vadd.xlane.f32.xlu0 %v864
    %v866 = vpop.xlane.xlu0 %865
    %v867 = vsel %vm275, %v215, 0.0
    %868 = vadd.xlane.f32.xlu0 %v867
    %v869 = vpop.xlane.xlu0 %868
    %v870 = vsel %vm275, %v216, 0.0
    %871 = vadd.xlane.f32.xlu0 %v870
    %v872 = vpop.xlane.xlu0 %871
    %v873 = vsel %vm275, %v217, 0.0
    %874 = vadd.xlane.f32.xlu0 %v873
    %v875 = vpop.xlane.xlu0 %874
    %v876 = vsel %vm275, %v218, 0.0
    %877 = vadd.xlane.f32.xlu0 %v876
    %v878 = vpop.xlane.xlu0 %877
    %v879 = vsel %vm275, %v219, 0.0
    %880 = vadd.xlane.f32.xlu0 %v879
    %v881 = vpop.xlane.xlu0 %880
    %v882 = vsel %vm275, %v220, 0.0
    %883 = vadd.xlane.f32.xlu0 %v882
    %v884 = vpop.xlane.xlu0 %883
    %v885 = vsel %vm275, %v221, 0.0
    %886 = vadd.xlane.f32.xlu0 %v885
    %v887 = vpop.xlane.xlu0 %886
    %v888 = vsel %vm275, %v222, 0.0
    %889 = vadd.xlane.f32.xlu0 %v888
    %v890 = vpop.xlane.xlu0 %889
    %v891 = vsel %vm275, %v223, 0.0
    %892 = vadd.xlane.f32.xlu0 %v891
    %v893 = vpop.xlane.xlu0 %892
    %v894 = vsel %vm275, %v224, 0.0
    %895 = vadd.xlane.f32.xlu0 %v894
    %v896 = vpop.xlane.xlu0 %895
    %v897 = vsel %vm275, %v225, 0.0
    %898 = vadd.xlane.f32.xlu0 %v897
    %v899 = vpop.xlane.xlu0 %898
    %v900 = vsel %vm275, %v226, 0.0
    %901 = vadd.xlane.f32.xlu0 %v900
    %v902 = vpop.xlane.xlu0 %901
    %v903 = vsel %vm275, %v227, 0.0
    %904 = vadd.xlane.f32.xlu0 %v903
    %v905 = vpop.xlane.xlu0 %904
    %v906 = vsel %vm275, %v228, 0.0
    %907 = vadd.xlane.f32.xlu0 %v906
    %v908 = vpop.xlane.xlu0 %907
    %v909 = vsel %vm275, %v229, 0.0
    %910 = vadd.xlane.f32.xlu0 %v909
    %v911 = vpop.xlane.xlu0 %910
    %v912 = vsel %vm275, %v230, 0.0
    %913 = vadd.xlane.f32.xlu0 %v912
    %v914 = vpop.xlane.xlu0 %913
    %v915 = vsel %vm275, %v231, 0.0
    %916 = vadd.xlane.f32.xlu0 %v915
    %v917 = vpop.xlane.xlu0 %916
    %v918 = vsel %vm275, %v232, 0.0
    %919 = vadd.xlane.f32.xlu0 %v918
    %v920 = vpop.xlane.xlu0 %919
    %v921 = vsel %vm275, %v233, 0.0
    %922 = vadd.xlane.f32.xlu0 %v921
    %v923 = vpop.xlane.xlu0 %922
    %v924 = vsel %vm275, %v234, 0.0
    %925 = vadd.xlane.f32.xlu0 %v924
    %v926 = vpop.xlane.xlu0 %925
    %v927 = vsel %vm275, %v235, 0.0
    %928 = vadd.xlane.f32.xlu0 %v927
    %v929 = vpop.xlane.xlu0 %928
    %v930 = vsel %vm275, %v236, 0.0
    %931 = vadd.xlane.f32.xlu0 %v930
    %v932 = vpop.xlane.xlu0 %931
    %v933 = vsel %vm275, %v237, 0.0
    %934 = vadd.xlane.f32.xlu0 %v933
    %v935 = vpop.xlane.xlu0 %934
    %v936 = vsel %vm275, %v238, 0.0
    %937 = vadd.xlane.f32.xlu0 %v936
    %v938 = vpop.xlane.xlu0 %937
    %v939 = vsel %vm275, %v239, 0.0
    %940 = vadd.xlane.f32.xlu0 %v939
    %v941 = vpop.xlane.xlu0 %940
    %v942 = vsel %vm275, %v240, 0.0
    %943 = vadd.xlane.f32.xlu0 %v942
    %v944 = vpop.xlane.xlu0 %943
    %v945 = vsel %vm275, %v241, 0.0
    %946 = vadd.xlane.f32.xlu0 %v945
    %v947 = vpop.xlane.xlu0 %946
    %v948 = vsel %vm275, %v242, 0.0
    %949 = vadd.xlane.f32.xlu0 %v948
    %v950 = vpop.xlane.xlu0 %949
    %v951 = vsel %vm275, %v243, 0.0
    %952 = vadd.xlane.f32.xlu0 %v951
    %v953 = vpop.xlane.xlu0 %952
    %v954 = vsel %vm275, %v244, 0.0
    %955 = vadd.xlane.f32.xlu0 %v954
    %v956 = vpop.xlane.xlu0 %955
    %v957 = vsel %vm275, %v245, 0.0
    %958 = vadd.xlane.f32.xlu0 %v957
    %v959 = vpop.xlane.xlu0 %958
    %v960 = vsel %vm275, %v246, 0.0
    %961 = vadd.xlane.f32.xlu0 %v960
    %v962 = vpop.xlane.xlu0 %961
    %v963 = vsel %vm275, %v247, 0.0
    %964 = vadd.xlane.f32.xlu0 %v963
    %v965 = vpop.xlane.xlu0 %964
    %v966 = vsel %vm275, %v248, 0.0
    %967 = vadd.xlane.f32.xlu0 %v966
    %v968 = vpop.xlane.xlu0 %967
    %v969 = vsel %vm275, %v249, 0.0
    %970 = vadd.xlane.f32.xlu0 %v969
    %v971 = vpop.xlane.xlu0 %970
    %v972 = vsel %vm275, %v250, 0.0
    %973 = vadd.xlane.f32.xlu0 %v972
    %v974 = vpop.xlane.xlu0 %973
    %v975 = vsel %vm275, %v251, 0.0
    %976 = vadd.xlane.f32.xlu0 %v975
    %v977 = vpop.xlane.xlu0 %976
    %v978 = vsel %vm275, %v252, 0.0
    %979 = vadd.xlane.f32.xlu0 %v978
    %v980 = vpop.xlane.xlu0 %979
    %v981 = vsel %vm275, %v253, 0.0
    %982 = vadd.xlane.f32.xlu0 %v981
    %v983 = vpop.xlane.xlu0 %982
    %v984 = vsel %vm275, %v254, 0.0
    %985 = vadd.xlane.f32.xlu0 %v984
    %v986 = vpop.xlane.xlu0 %985
    %v987 = vsel %vm275, %v255, 0.0
    %988 = vadd.xlane.f32.xlu0 %v987
    %v989 = vpop.xlane.xlu0 %988
    %v990 = vsel %vm275, %v256, 0.0
    %991 = vadd.xlane.f32.xlu0 %v990
    %v992 = vpop.xlane.xlu0 %991
    %v993 = vsel %vm275, %v257, 0.0
    %994 = vadd.xlane.f32.xlu0 %v993
    %v995 = vpop.xlane.xlu0 %994
    %v996 = vsel %vm275, %v258, 0.0
    %997 = vadd.xlane.f32.xlu0 %v996
    %v998 = vpop.xlane.xlu0 %997
    %v999 = vsel %vm275, %v259, 0.0
    %1000 = vadd.xlane.f32.xlu0 %v999
    %v1001 = vpop.xlane.xlu0 %1000
    %v1002 = vsel %vm275, %v260, 0.0
    %1003 = vadd.xlane.f32.xlu0 %v1002
    %v1004 = vpop.xlane.xlu0 %1003
    %v1005 = vsel %vm275, %v261, 0.0
    %1006 = vadd.xlane.f32.xlu0 %v1005
    %v1007 = vpop.xlane.xlu0 %1006
    %v1008 = vsel %vm275, %v262, 0.0
    %1009 = vadd.xlane.f32.xlu0 %v1008
    %v1010 = vpop.xlane.xlu0 %1009
    %v1011 = vsel %vm275, %v263, 0.0
    %1012 = vadd.xlane.f32.xlu0 %v1011
    %v1013 = vpop.xlane.xlu0 %1012
    %v1014 = vsel %vm275, %v264, 0.0
    %1015 = vadd.xlane.f32.xlu0 %v1014
    %v1016 = vpop.xlane.xlu0 %1015
    %v1017 = vsel %vm275, %v265, 0.0
    %1018 = vadd.xlane.f32.xlu0 %v1017
    %v1019 = vpop.xlane.xlu0 %1018
    %v1020 = vsel %vm275, %v266, 0.0
    %1021 = vadd.xlane.f32.xlu0 %v1020
    %v1022 = vpop.xlane.xlu0 %1021
    %v1023 = vsel %vm275, %v267, 0.0
    %1024 = vadd.xlane.f32.xlu0 %v1023
    %v1025 = vpop.xlane.xlu0 %1024
    %v1026 = vsel %vm275, %v268, 0.0
    %1027 = vadd.xlane.f32.xlu0 %v1026
    %v1028 = vpop.xlane.xlu0 %1027
    %v1029 = vsel %vm275, %v269, 0.0
    %1030 = vadd.xlane.f32.xlu0 %v1029
    %v1031 = vpop.xlane.xlu0 %1030
    %v1032 = vsel %vm275, %v270, 0.0
    %1033 = vadd.xlane.f32.xlu0 %v1032
    %v1034 = vpop.xlane.xlu0 %1033
    %v1035 = vsel %vm275, %v271, 0.0
    %1036 = vadd.xlane.f32.xlu0 %v1035
    %v1037 = vpop.xlane.xlu0 %1036
    %v1038 = vsel %vm275, %v272, 0.0
    %1039 = vadd.xlane.f32.xlu0 %v1038
    %v1040 = vpop.xlane.xlu0 %1039
    %v1041 = vsel %vm275, %v273, 0.0
    %1042 = vadd.xlane.f32.xlu0 %v1041
    %v1043 = vpop.xlane.xlu0 %1042
    %v1044 = vsel %vm275, %v274, 0.0
    %1045 = vadd.xlane.f32.xlu0 %v1044
    %v1046 = vpop.xlane.xlu0 %1045
    %v1047 = vmul.f32 %v278, 0.03125
    %v1048 = vmul.f32 %v281, 0.03125
    %v1049 = vmul.f32 %v284, 0.03125
    %v1050 = vmul.f32 %v287, 0.03125
    %v1051 = vmul.f32 %v290, 0.03125
    %v1052 = vmul.f32 %v293, 0.03125
    %v1053 = vmul.f32 %v296, 0.03125
    %v1054 = vmul.f32 %v299, 0.03125
    %v1055 = vmul.f32 %v302, 0.03125
    %v1056 = vmul.f32 %v305, 0.03125
    %v1057 = vmul.f32 %v308, 0.03125
    %v1058 = vmul.f32 %v311, 0.03125
    %v1059 = vmul.f32 %v314, 0.03125
    %v1060 = vmul.f32 %v317, 0.03125
    %v1061 = vmul.f32 %v320, 0.03125
    %v1062 = vmul.f32 %v323, 0.03125
    %v1063 = vmul.f32 %v326, 0.03125
    %v1064 = vmul.f32 %v329, 0.03125
    %v1065 = vmul.f32 %v332, 0.03125
    %v1066 = vmul.f32 %v335, 0.03125
    %v1067 = vmul.f32 %v338, 0.03125
    %v1068 = vmul.f32 %v341, 0.03125
    %v1069 = vmul.f32 %v344, 0.03125
    %v1070 = vmul.f32 %v347, 0.03125
    %v1071 = vmul.f32 %v350, 0.03125
    %v1072 = vmul.f32 %v353, 0.03125
    %v1073 = vmul.f32 %v356, 0.03125
    %v1074 = vmul.f32 %v359, 0.03125
    %v1075 = vmul.f32 %v362, 0.03125
    %v1076 = vmul.f32 %v365, 0.03125
    %v1077 = vmul.f32 %v368, 0.03125
    %v1078 = vmul.f32 %v371, 0.03125
    %v1079 = vmul.f32 %v374, 0.03125
    %v1080 = vmul.f32 %v377, 0.03125
    %v1081 = vmul.f32 %v380, 0.03125
    %v1082 = vmul.f32 %v383, 0.03125
    %v1083 = vmul.f32 %v386, 0.03125
    %v1084 = vmul.f32 %v389, 0.03125
    %v1085 = vmul.f32 %v392, 0.03125
    %v1086 = vmul.f32 %v395, 0.03125
    %v1087 = vmul.f32 %v398, 0.03125
    %v1088 = vmul.f32 %v401, 0.03125
    %v1089 = vmul.f32 %v404, 0.03125
    %v1090 = vmul.f32 %v407, 0.03125
    %v1091 = vmul.f32 %v410, 0.03125
    %v1092 = vmul.f32 %v413, 0.03125
    %v1093 = vmul.f32 %v416, 0.03125
    %v1094 = vmul.f32 %v419, 0.03125
    %v1095 = vmul.f32 %v422, 0.03125
    %v1096 = vmul.f32 %v425, 0.03125
    %v1097 = vmul.f32 %v428, 0.03125
    %v1098 = vmul.f32 %v431, 0.03125
    %v1099 = vmul.f32 %v434, 0.03125
    %v1100 = vmul.f32 %v437, 0.03125
    %v1101 = vmul.f32 %v440, 0.03125
    %v1102 = vmul.f32 %v443, 0.03125
    %v1103 = vmul.f32 %v446, 0.03125
    %v1104 = vmul.f32 %v449, 0.03125
    %v1105 = vmul.f32 %v452, 0.03125
    %v1106 = vmul.f32 %v455, 0.03125
    %v1107 = vmul.f32 %v458, 0.03125
    %v1108 = vmul.f32 %v461, 0.03125
    %v1109 = vmul.f32 %v464, 0.03125
    %v1110 = vmul.f32 %v467, 0.03125
    %v1111 = vmul.f32 %v470, 0.03125
    %v1112 = vmul.f32 %v473, 0.03125
    %v1113 = vmul.f32 %v476, 0.03125
    %v1114 = vmul.f32 %v479, 0.03125
    %v1115 = vmul.f32 %v482, 0.03125
    %v1116 = vmul.f32 %v485, 0.03125
    %v1117 = vmul.f32 %v488, 0.03125
    %v1118 = vmul.f32 %v491, 0.03125
    %v1119 = vmul.f32 %v494, 0.03125
    %v1120 = vmul.f32 %v497, 0.03125
    %v1121 = vmul.f32 %v500, 0.03125
    %v1122 = vmul.f32 %v503, 0.03125
    %v1123 = vmul.f32 %v506, 0.03125
    %v1124 = vmul.f32 %v509, 0.03125
    %v1125 = vmul.f32 %v512, 0.03125
    %v1126 = vmul.f32 %v515, 0.03125
    %v1127 = vmul.f32 %v518, 0.03125
    %v1128 = vmul.f32 %v521, 0.03125
    %v1129 = vmul.f32 %v524, 0.03125
    %v1130 = vmul.f32 %v527, 0.03125
    %v1131 = vmul.f32 %v530, 0.03125
    %v1132 = vmul.f32 %v533, 0.03125
    %v1133 = vmul.f32 %v536, 0.03125
    %v1134 = vmul.f32 %v539, 0.03125
    %v1135 = vmul.f32 %v542, 0.03125
    %v1136 = vmul.f32 %v545, 0.03125
    %v1137 = vmul.f32 %v548, 0.03125
    %v1138 = vmul.f32 %v551, 0.03125
    %v1139 = vmul.f32 %v554, 0.03125
    %v1140 = vmul.f32 %v557, 0.03125
    %v1141 = vmul.f32 %v560, 0.03125
    %v1142 = vmul.f32 %v563, 0.03125
    %v1143 = vmul.f32 %v566, 0.03125
    %v1144 = vmul.f32 %v569, 0.03125
    %v1145 = vmul.f32 %v572, 0.03125
    %v1146 = vmul.f32 %v575, 0.03125
    %v1147 = vmul.f32 %v578, 0.03125
    %v1148 = vmul.f32 %v581, 0.03125
    %v1149 = vmul.f32 %v584, 0.03125
    %v1150 = vmul.f32 %v587, 0.03125
    %v1151 = vmul.f32 %v590, 0.03125
    %v1152 = vmul.f32 %v593, 0.03125
    %v1153 = vmul.f32 %v596, 0.03125
    %v1154 = vmul.f32 %v599, 0.03125
    %v1155 = vmul.f32 %v602, 0.03125
    %v1156 = vmul.f32 %v605, 0.03125
    %v1157 = vmul.f32 %v608, 0.03125
    %v1158 = vmul.f32 %v611, 0.03125
    %v1159 = vmul.f32 %v614, 0.03125
    %v1160 = vmul.f32 %v617, 0.03125
    %v1161 = vmul.f32 %v620, 0.03125
    %v1162 = vmul.f32 %v623, 0.03125
    %v1163 = vmul.f32 %v626, 0.03125
    %v1164 = vmul.f32 %v629, 0.03125
    %v1165 = vmul.f32 %v632, 0.03125
    %v1166 = vmul.f32 %v635, 0.03125
    %v1167 = vmul.f32 %v638, 0.03125
    %v1168 = vmul.f32 %v641, 0.03125
    %v1169 = vmul.f32 %v644, 0.03125
    %v1170 = vmul.f32 %v647, 0.03125
    %v1171 = vmul.f32 %v650, 0.03125
    %v1172 = vmul.f32 %v653, 0.03125
    %v1173 = vmul.f32 %v656, 0.03125
    %v1174 = vmul.f32 %v659, 0.03125
    %v1175 = vmul.f32 %v662, 0.03125
    %v1176 = vmul.f32 %v665, 0.03125
    %v1177 = vmul.f32 %v668, 0.03125
    %v1178 = vmul.f32 %v671, 0.03125
    %v1179 = vmul.f32 %v674, 0.03125
    %v1180 = vmul.f32 %v677, 0.03125
    %v1181 = vmul.f32 %v680, 0.03125
    %v1182 = vmul.f32 %v683, 0.03125
    %v1183 = vmul.f32 %v686, 0.03125
    %v1184 = vmul.f32 %v689, 0.03125
    %v1185 = vmul.f32 %v692, 0.03125
    %v1186 = vmul.f32 %v695, 0.03125
    %v1187 = vmul.f32 %v698, 0.03125
    %v1188 = vmul.f32 %v701, 0.03125
    %v1189 = vmul.f32 %v704, 0.03125
    %v1190 = vmul.f32 %v707, 0.03125
    %v1191 = vmul.f32 %v710, 0.03125
    %v1192 = vmul.f32 %v713, 0.03125
    %v1193 = vmul.f32 %v716, 0.03125
    %v1194 = vmul.f32 %v719, 0.03125
    %v1195 = vmul.f32 %v722, 0.03125
    %v1196 = vmul.f32 %v725, 0.03125
    %v1197 = vmul.f32 %v728, 0.03125
    %v1198 = vmul.f32 %v731, 0.03125
    %v1199 = vmul.f32 %v734, 0.03125
    %v1200 = vmul.f32 %v737, 0.03125
    %v1201 = vmul.f32 %v740, 0.03125
    %v1202 = vmul.f32 %v743, 0.03125
    %v1203 = vmul.f32 %v746, 0.03125
    %v1204 = vmul.f32 %v749, 0.03125
    %v1205 = vmul.f32 %v752, 0.03125
    %v1206 = vmul.f32 %v755, 0.03125
    %v1207 = vmul.f32 %v758, 0.03125
    %v1208 = vmul.f32 %v761, 0.03125
    %v1209 = vmul.f32 %v764, 0.03125
    %v1210 = vmul.f32 %v767, 0.03125
    %v1211 = vmul.f32 %v770, 0.03125
    %v1212 = vmul.f32 %v773, 0.03125
    %v1213 = vmul.f32 %v776, 0.03125
    %v1214 = vmul.f32 %v779, 0.03125
    %v1215 = vmul.f32 %v782, 0.03125
    %v1216 = vmul.f32 %v785, 0.03125
    %v1217 = vmul.f32 %v788, 0.03125
    %v1218 = vmul.f32 %v791, 0.03125
    %v1219 = vmul.f32 %v794, 0.03125
    %v1220 = vmul.f32 %v797, 0.03125
    %v1221 = vmul.f32 %v800, 0.03125
    %v1222 = vmul.f32 %v803, 0.03125
    %v1223 = vmul.f32 %v806, 0.03125
    %v1224 = vmul.f32 %v809, 0.03125
    %v1225 = vmul.f32 %v812, 0.03125
    %v1226 = vmul.f32 %v815, 0.03125
    %v1227 = vmul.f32 %v818, 0.03125
    %v1228 = vmul.f32 %v821, 0.03125
    %v1229 = vmul.f32 %v824, 0.03125
    %v1230 = vmul.f32 %v827, 0.03125
    %v1231 = vmul.f32 %v830, 0.03125
    %v1232 = vmul.f32 %v833, 0.03125
    %v1233 = vmul.f32 %v836, 0.03125
    %v1234 = vmul.f32 %v839, 0.03125
    %v1235 = vmul.f32 %v842, 0.03125
    %v1236 = vmul.f32 %v845, 0.03125
    %v1237 = vmul.f32 %v848, 0.03125
    %v1238 = vmul.f32 %v851, 0.03125
    %v1239 = vmul.f32 %v854, 0.03125
    %v1240 = vmul.f32 %v857, 0.03125
    %v1241 = vmul.f32 %v860, 0.03125
    %v1242 = vmul.f32 %v863, 0.03125
    %v1243 = vmul.f32 %v866, 0.03125
    %v1244 = vmul.f32 %v869, 0.03125
    %v1245 = vmul.f32 %v872, 0.03125
    %v1246 = vmul.f32 %v875, 0.03125
    %v1247 = vmul.f32 %v878, 0.03125
    %v1248 = vmul.f32 %v881, 0.03125
    %v1249 = vmul.f32 %v884, 0.03125
    %v1250 = vmul.f32 %v887, 0.03125
    %v1251 = vmul.f32 %v890, 0.03125
    %v1252 = vmul.f32 %v893, 0.03125
    %v1253 = vmul.f32 %v896, 0.03125
    %v1254 = vmul.f32 %v899, 0.03125
    %v1255 = vmul.f32 %v902, 0.03125
    %v1256 = vmul.f32 %v905, 0.03125
    %v1257 = vmul.f32 %v908, 0.03125
    %v1258 = vmul.f32 %v911, 0.03125
    %v1259 = vmul.f32 %v914, 0.03125
    %v1260 = vmul.f32 %v917, 0.03125
    %v1261 = vmul.f32 %v920, 0.03125
    %v1262 = vmul.f32 %v923, 0.03125
    %v1263 = vmul.f32 %v926, 0.03125
    %v1264 = vmul.f32 %v929, 0.03125
    %v1265 = vmul.f32 %v932, 0.03125
    %v1266 = vmul.f32 %v935, 0.03125
    %v1267 = vmul.f32 %v938, 0.03125
    %v1268 = vmul.f32 %v941, 0.03125
    %v1269 = vmul.f32 %v944, 0.03125
    %v1270 = vmul.f32 %v947, 0.03125
    %v1271 = vmul.f32 %v950, 0.03125
    %v1272 = vmul.f32 %v953, 0.03125
    %v1273 = vmul.f32 %v956, 0.03125
    %v1274 = vmul.f32 %v959, 0.03125
    %v1275 = vmul.f32 %v962, 0.03125
    %v1276 = vmul.f32 %v965, 0.03125
    %v1277 = vmul.f32 %v968, 0.03125
    %v1278 = vmul.f32 %v971, 0.03125
    %v1279 = vmul.f32 %v974, 0.03125
    %v1280 = vmul.f32 %v977, 0.03125
    %v1281 = vmul.f32 %v980, 0.03125
    %v1282 = vmul.f32 %v983, 0.03125
    %v1283 = vmul.f32 %v986, 0.03125
    %v1284 = vmul.f32 %v989, 0.03125
    %v1285 = vmul.f32 %v992, 0.03125
    %v1286 = vmul.f32 %v995, 0.03125
    %v1287 = vmul.f32 %v998, 0.03125
    %v1288 = vmul.f32 %v1001, 0.03125
    %v1289 = vmul.f32 %v1004, 0.03125
    %v1290 = vmul.f32 %v1007, 0.03125
    %v1291 = vmul.f32 %v1010, 0.03125
    %v1292 = vmul.f32 %v1013, 0.03125
    %v1293 = vmul.f32 %v1016, 0.03125
    %v1294 = vmul.f32 %v1019, 0.03125
    %v1295 = vmul.f32 %v1022, 0.03125
    %v1296 = vmul.f32 %v1025, 0.03125
    %v1297 = vmul.f32 %v1028, 0.03125
    %v1298 = vmul.f32 %v1031, 0.03125
    %v1299 = vmul.f32 %v1034, 0.03125
    %v1300 = vmul.f32 %v1037, 0.03125
    %v1301 = vmul.f32 %v1040, 0.03125
    %v1302 = vmul.f32 %v1043, 0.03125
    %v1303 = vmul.f32 %v1046, 0.03125
    %v1304 = vmul.f32 %v18, %v18
    %v1305 = vmul.f32 %v19, %v19
    %v1306 = vmul.f32 %v20, %v20
    %v1307 = vmul.f32 %v21, %v21
    %v1308 = vmul.f32 %v22, %v22
    %v1309 = vmul.f32 %v23, %v23
    %v1310 = vmul.f32 %v24, %v24
    %v1311 = vmul.f32 %v25, %v25
    %v1312 = vmul.f32 %v26, %v26
    %v1313 = vmul.f32 %v27, %v27
    %v1314 = vmul.f32 %v28, %v28
    %v1315 = vmul.f32 %v29, %v29
    %v1316 = vmul.f32 %v30, %v30
    %v1317 = vmul.f32 %v31, %v31
    %v1318 = vmul.f32 %v32, %v32
    %v1319 = vmul.f32 %v33, %v33
    %v1320 = vmul.f32 %v34, %v34
    %v1321 = vmul.f32 %v35, %v35
    %v1322 = vmul.f32 %v36, %v36
    %v1323 = vmul.f32 %v37, %v37
    %v1324 = vmul.f32 %v38, %v38
    %v1325 = vmul.f32 %v39, %v39
    %v1326 = vmul.f32 %v40, %v40
    %v1327 = vmul.f32 %v41, %v41
    %v1328 = vmul.f32 %v42, %v42
    %v1329 = vmul.f32 %v43, %v43
    %v1330 = vmul.f32 %v44, %v44
    %v1331 = vmul.f32 %v45, %v45
    %v1332 = vmul.f32 %v46, %v46
    %v1333 = vmul.f32 %v47, %v47
    %v1334 = vmul.f32 %v48, %v48
    %v1335 = vmul.f32 %v49, %v49
    %v1336 = vmul.f32 %v50, %v50
    %v1337 = vmul.f32 %v51, %v51
    %v1338 = vmul.f32 %v52, %v52
    %v1339 = vmul.f32 %v53, %v53
    %v1340 = vmul.f32 %v54, %v54
    %v1341 = vmul.f32 %v55, %v55
    %v1342 = vmul.f32 %v56, %v56
    %v1343 = vmul.f32 %v57, %v57
    %v1344 = vmul.f32 %v58, %v58
    %v1345 = vmul.f32 %v59, %v59
    %v1346 = vmul.f32 %v60, %v60
    %v1347 = vmul.f32 %v61, %v61
    %v1348 = vmul.f32 %v62, %v62
    %v1349 = vmul.f32 %v63, %v63
    %v1350 = vmul.f32 %v64, %v64
    %v1351 = vmul.f32 %v65, %v65
    %v1352 = vmul.f32 %v66, %v66
    %v1353 = vmul.f32 %v67, %v67
    %v1354 = vmul.f32 %v68, %v68
    %v1355 = vmul.f32 %v69, %v69
    %v1356 = vmul.f32 %v70, %v70
    %v1357 = vmul.f32 %v71, %v71
    %v1358 = vmul.f32 %v72, %v72
    %v1359 = vmul.f32 %v73, %v73
    %v1360 = vmul.f32 %v74, %v74
    %v1361 = vmul.f32 %v75, %v75
    %v1362 = vmul.f32 %v76, %v76
    %v1363 = vmul.f32 %v77, %v77
    %v1364 = vmul.f32 %v78, %v78
    %v1365 = vmul.f32 %v79, %v79
    %v1366 = vmul.f32 %v80, %v80
    %v1367 = vmul.f32 %v81, %v81
    %v1368 = vmul.f32 %v82, %v82
    %v1369 = vmul.f32 %v83, %v83
    %v1370 = vmul.f32 %v84, %v84
    %v1371 = vmul.f32 %v85, %v85
    %v1372 = vmul.f32 %v86, %v86
    %v1373 = vmul.f32 %v87, %v87
    %v1374 = vmul.f32 %v88, %v88
    %v1375 = vmul.f32 %v89, %v89
    %v1376 = vmul.f32 %v90, %v90
    %v1377 = vmul.f32 %v91, %v91
    %v1378 = vmul.f32 %v92, %v92
    %v1379 = vmul.f32 %v93, %v93
    %v1380 = vmul.f32 %v94, %v94
    %v1381 = vmul.f32 %v95, %v95
    %v1382 = vmul.f32 %v96, %v96
    %v1383 = vmul.f32 %v97, %v97
    %v1384 = vmul.f32 %v98, %v98
    %v1385 = vmul.f32 %v99, %v99
    %v1386 = vmul.f32 %v100, %v100
    %v1387 = vmul.f32 %v101, %v101
    %v1388 = vmul.f32 %v102, %v102
    %v1389 = vmul.f32 %v103, %v103
    %v1390 = vmul.f32 %v104, %v104
    %v1391 = vmul.f32 %v105, %v105
    %v1392 = vmul.f32 %v106, %v106
    %v1393 = vmul.f32 %v107, %v107
    %v1394 = vmul.f32 %v108, %v108
    %v1395 = vmul.f32 %v109, %v109
    %v1396 = vmul.f32 %v110, %v110
    %v1397 = vmul.f32 %v111, %v111
    %v1398 = vmul.f32 %v112, %v112
    %v1399 = vmul.f32 %v113, %v113
    %v1400 = vmul.f32 %v114, %v114
    %v1401 = vmul.f32 %v115, %v115
    %v1402 = vmul.f32 %v116, %v116
    %v1403 = vmul.f32 %v117, %v117
    %v1404 = vmul.f32 %v118, %v118
    %v1405 = vmul.f32 %v119, %v119
    %v1406 = vmul.f32 %v120, %v120
    %v1407 = vmul.f32 %v121, %v121
    %v1408 = vmul.f32 %v122, %v122
    %v1409 = vmul.f32 %v123, %v123
    %v1410 = vmul.f32 %v124, %v124
    %v1411 = vmul.f32 %v125, %v125
    %v1412 = vmul.f32 %v126, %v126
    %v1413 = vmul.f32 %v127, %v127
    %v1414 = vmul.f32 %v128, %v128
    %v1415 = vmul.f32 %v129, %v129
    %v1416 = vmul.f32 %v130, %v130
    %v1417 = vmul.f32 %v131, %v131
    %v1418 = vmul.f32 %v132, %v132
    %v1419 = vmul.f32 %v133, %v133
    %v1420 = vmul.f32 %v134, %v134
    %v1421 = vmul.f32 %v135, %v135
    %v1422 = vmul.f32 %v136, %v136
    %v1423 = vmul.f32 %v137, %v137
    %v1424 = vmul.f32 %v138, %v138
    %v1425 = vmul.f32 %v139, %v139
    %v1426 = vmul.f32 %v140, %v140
    %v1427 = vmul.f32 %v141, %v141
    %v1428 = vmul.f32 %v142, %v142
    %v1429 = vmul.f32 %v143, %v143
    %v1430 = vmul.f32 %v144, %v144
    %v1431 = vmul.f32 %v145, %v145
    %v1432 = vmul.f32 %v146, %v146
    %v1433 = vmul.f32 %v147, %v147
    %v1434 = vmul.f32 %v148, %v148
    %v1435 = vmul.f32 %v149, %v149
    %v1436 = vmul.f32 %v150, %v150
    %v1437 = vmul.f32 %v151, %v151
    %v1438 = vmul.f32 %v152, %v152
    %v1439 = vmul.f32 %v153, %v153
    %v1440 = vmul.f32 %v154, %v154
    %v1441 = vmul.f32 %v155, %v155
    %v1442 = vmul.f32 %v156, %v156
    %v1443 = vmul.f32 %v157, %v157
    %v1444 = vmul.f32 %v158, %v158
    %v1445 = vmul.f32 %v159, %v159
    %v1446 = vmul.f32 %v160, %v160
    %v1447 = vmul.f32 %v161, %v161
    %v1448 = vmul.f32 %v162, %v162
    %v1449 = vmul.f32 %v163, %v163
    %v1450 = vmul.f32 %v164, %v164
    %v1451 = vmul.f32 %v165, %v165
    %v1452 = vmul.f32 %v166, %v166
    %v1453 = vmul.f32 %v167, %v167
    %v1454 = vmul.f32 %v168, %v168
    %v1455 = vmul.f32 %v169, %v169
    %v1456 = vmul.f32 %v170, %v170
    %v1457 = vmul.f32 %v171, %v171
    %v1458 = vmul.f32 %v172, %v172
    %v1459 = vmul.f32 %v173, %v173
    %v1460 = vmul.f32 %v174, %v174
    %v1461 = vmul.f32 %v175, %v175
    %v1462 = vmul.f32 %v176, %v176
    %v1463 = vmul.f32 %v177, %v177
    %v1464 = vmul.f32 %v178, %v178
    %v1465 = vmul.f32 %v179, %v179
    %v1466 = vmul.f32 %v180, %v180
    %v1467 = vmul.f32 %v181, %v181
    %v1468 = vmul.f32 %v182, %v182
    %v1469 = vmul.f32 %v183, %v183
    %v1470 = vmul.f32 %v184, %v184
    %v1471 = vmul.f32 %v185, %v185
    %v1472 = vmul.f32 %v186, %v186
    %v1473 = vmul.f32 %v187, %v187
    %v1474 = vmul.f32 %v188, %v188
    %v1475 = vmul.f32 %v189, %v189
    %v1476 = vmul.f32 %v190, %v190
    %v1477 = vmul.f32 %v191, %v191
    %v1478 = vmul.f32 %v192, %v192
    %v1479 = vmul.f32 %v193, %v193
    %v1480 = vmul.f32 %v194, %v194
    %v1481 = vmul.f32 %v195, %v195
    %v1482 = vmul.f32 %v196, %v196
    %v1483 = vmul.f32 %v197, %v197
    %v1484 = vmul.f32 %v198, %v198
    %v1485 = vmul.f32 %v199, %v199
    %v1486 = vmul.f32 %v200, %v200
    %v1487 = vmul.f32 %v201, %v201
    %v1488 = vmul.f32 %v202, %v202
    %v1489 = vmul.f32 %v203, %v203
    %v1490 = vmul.f32 %v204, %v204
    %v1491 = vmul.f32 %v205, %v205
    %v1492 = vmul.f32 %v206, %v206
    %v1493 = vmul.f32 %v207, %v207
    %v1494 = vmul.f32 %v208, %v208
    %v1495 = vmul.f32 %v209, %v209
    %v1496 = vmul.f32 %v210, %v210
    %v1497 = vmul.f32 %v211, %v211
    %v1498 = vmul.f32 %v212, %v212
    %v1499 = vmul.f32 %v213, %v213
    %v1500 = vmul.f32 %v214, %v214
    %v1501 = vmul.f32 %v215, %v215
    %v1502 = vmul.f32 %v216, %v216
    %v1503 = vmul.f32 %v217, %v217
    %v1504 = vmul.f32 %v218, %v218
    %v1505 = vmul.f32 %v219, %v219
    %v1506 = vmul.f32 %v220, %v220
    %v1507 = vmul.f32 %v221, %v221
    %v1508 = vmul.f32 %v222, %v222
    %v1509 = vmul.f32 %v223, %v223
    %v1510 = vmul.f32 %v224, %v224
    %v1511 = vmul.f32 %v225, %v225
    %v1512 = vmul.f32 %v226, %v226
    %v1513 = vmul.f32 %v227, %v227
    %v1514 = vmul.f32 %v228, %v228
    %v1515 = vmul.f32 %v229, %v229
    %v1516 = vmul.f32 %v230, %v230
    %v1517 = vmul.f32 %v231, %v231
    %v1518 = vmul.f32 %v232, %v232
    %v1519 = vmul.f32 %v233, %v233
    %v1520 = vmul.f32 %v234, %v234
    %v1521 = vmul.f32 %v235, %v235
    %v1522 = vmul.f32 %v236, %v236
    %v1523 = vmul.f32 %v237, %v237
    %v1524 = vmul.f32 %v238, %v238
    %v1525 = vmul.f32 %v239, %v239
    %v1526 = vmul.f32 %v240, %v240
    %v1527 = vmul.f32 %v241, %v241
    %v1528 = vmul.f32 %v242, %v242
    %v1529 = vmul.f32 %v243, %v243
    %v1530 = vmul.f32 %v244, %v244
    %v1531 = vmul.f32 %v245, %v245
    %v1532 = vmul.f32 %v246, %v246
    %v1533 = vmul.f32 %v247, %v247
    %v1534 = vmul.f32 %v248, %v248
    %v1535 = vmul.f32 %v249, %v249
    %v1536 = vmul.f32 %v250, %v250
    %v1537 = vmul.f32 %v251, %v251
    %v1538 = vmul.f32 %v252, %v252
    %v1539 = vmul.f32 %v253, %v253
    %v1540 = vmul.f32 %v254, %v254
    %v1541 = vmul.f32 %v255, %v255
    %v1542 = vmul.f32 %v256, %v256
    %v1543 = vmul.f32 %v257, %v257
    %v1544 = vmul.f32 %v258, %v258
    %v1545 = vmul.f32 %v259, %v259
    %v1546 = vmul.f32 %v260, %v260
    %v1547 = vmul.f32 %v261, %v261
    %v1548 = vmul.f32 %v262, %v262
    %v1549 = vmul.f32 %v263, %v263
    %v1550 = vmul.f32 %v264, %v264
    %v1551 = vmul.f32 %v265, %v265
    %v1552 = vmul.f32 %v266, %v266
    %v1553 = vmul.f32 %v267, %v267
    %v1554 = vmul.f32 %v268, %v268
    %v1555 = vmul.f32 %v269, %v269
    %v1556 = vmul.f32 %v270, %v270
    %v1557 = vmul.f32 %v271, %v271
    %v1558 = vmul.f32 %v272, %v272
    %v1559 = vmul.f32 %v273, %v273
    %v1560 = vmul.f32 %v274, %v274
    %v1561 = vsel %vm275, %v1304, 0.0
    %1562 = vadd.xlane.f32.xlu0 %v1561
    %v1563 = vpop.xlane.xlu0 %1562
    %v1564 = vsel %vm275, %v1305, 0.0
    %1565 = vadd.xlane.f32.xlu0 %v1564
    %v1566 = vpop.xlane.xlu0 %1565
    %v1567 = vsel %vm275, %v1306, 0.0
    %1568 = vadd.xlane.f32.xlu0 %v1567
    %v1569 = vpop.xlane.xlu0 %1568
    %v1570 = vsel %vm275, %v1307, 0.0
    %1571 = vadd.xlane.f32.xlu0 %v1570
    %v1572 = vpop.xlane.xlu0 %1571
    %v1573 = vsel %vm275, %v1308, 0.0
    %1574 = vadd.xlane.f32.xlu0 %v1573
    %v1575 = vpop.xlane.xlu0 %1574
    %v1576 = vsel %vm275, %v1309, 0.0
    %1577 = vadd.xlane.f32.xlu0 %v1576
    %v1578 = vpop.xlane.xlu0 %1577
    %v1579 = vsel %vm275, %v1310, 0.0
    %1580 = vadd.xlane.f32.xlu0 %v1579
    %v1581 = vpop.xlane.xlu0 %1580
    %v1582 = vsel %vm275, %v1311, 0.0
    %1583 = vadd.xlane.f32.xlu0 %v1582
    %v1584 = vpop.xlane.xlu0 %1583
    %v1585 = vsel %vm275, %v1312, 0.0
    %1586 = vadd.xlane.f32.xlu0 %v1585
    %v1587 = vpop.xlane.xlu0 %1586
    %v1588 = vsel %vm275, %v1313, 0.0
    %1589 = vadd.xlane.f32.xlu0 %v1588
    %v1590 = vpop.xlane.xlu0 %1589
    %v1591 = vsel %vm275, %v1314, 0.0
    %1592 = vadd.xlane.f32.xlu0 %v1591
    %v1593 = vpop.xlane.xlu0 %1592
    %v1594 = vsel %vm275, %v1315, 0.0
    %1595 = vadd.xlane.f32.xlu0 %v1594
    %v1596 = vpop.xlane.xlu0 %1595
    %v1597 = vsel %vm275, %v1316, 0.0
    %1598 = vadd.xlane.f32.xlu0 %v1597
    %v1599 = vpop.xlane.xlu0 %1598
    %v1600 = vsel %vm275, %v1317, 0.0
    %1601 = vadd.xlane.f32.xlu0 %v1600
    %v1602 = vpop.xlane.xlu0 %1601
    %v1603 = vsel %vm275, %v1318, 0.0
    %1604 = vadd.xlane.f32.xlu0 %v1603
    %v1605 = vpop.xlane.xlu0 %1604
    %v1606 = vsel %vm275, %v1319, 0.0
    %1607 = vadd.xlane.f32.xlu0 %v1606
    %v1608 = vpop.xlane.xlu0 %1607
    %v1609 = vsel %vm275, %v1320, 0.0
    %1610 = vadd.xlane.f32.xlu0 %v1609
    %v1611 = vpop.xlane.xlu0 %1610
    %v1612 = vsel %vm275, %v1321, 0.0
    %1613 = vadd.xlane.f32.xlu0 %v1612
    %v1614 = vpop.xlane.xlu0 %1613
    %v1615 = vsel %vm275, %v1322, 0.0
    %1616 = vadd.xlane.f32.xlu0 %v1615
    %v1617 = vpop.xlane.xlu0 %1616
    %v1618 = vsel %vm275, %v1323, 0.0
    %1619 = vadd.xlane.f32.xlu0 %v1618
    %v1620 = vpop.xlane.xlu0 %1619
    %v1621 = vsel %vm275, %v1324, 0.0
    %1622 = vadd.xlane.f32.xlu0 %v1621
    %v1623 = vpop.xlane.xlu0 %1622
    %v1624 = vsel %vm275, %v1325, 0.0
    %1625 = vadd.xlane.f32.xlu0 %v1624
    %v1626 = vpop.xlane.xlu0 %1625
    %v1627 = vsel %vm275, %v1326, 0.0
    %1628 = vadd.xlane.f32.xlu0 %v1627
    %v1629 = vpop.xlane.xlu0 %1628
    %v1630 = vsel %vm275, %v1327, 0.0
    %1631 = vadd.xlane.f32.xlu0 %v1630
    %v1632 = vpop.xlane.xlu0 %1631
    %v1633 = vsel %vm275, %v1328, 0.0
    %1634 = vadd.xlane.f32.xlu0 %v1633
    %v1635 = vpop.xlane.xlu0 %1634
    %v1636 = vsel %vm275, %v1329, 0.0
    %1637 = vadd.xlane.f32.xlu0 %v1636
    %v1638 = vpop.xlane.xlu0 %1637
    %v1639 = vsel %vm275, %v1330, 0.0
    %1640 = vadd.xlane.f32.xlu0 %v1639
    %v1641 = vpop.xlane.xlu0 %1640
    %v1642 = vsel %vm275, %v1331, 0.0
    %1643 = vadd.xlane.f32.xlu0 %v1642
    %v1644 = vpop.xlane.xlu0 %1643
    %v1645 = vsel %vm275, %v1332, 0.0
    %1646 = vadd.xlane.f32.xlu0 %v1645
    %v1647 = vpop.xlane.xlu0 %1646
    %v1648 = vsel %vm275, %v1333, 0.0
    %1649 = vadd.xlane.f32.xlu0 %v1648
    %v1650 = vpop.xlane.xlu0 %1649
    %v1651 = vsel %vm275, %v1334, 0.0
    %1652 = vadd.xlane.f32.xlu0 %v1651
    %v1653 = vpop.xlane.xlu0 %1652
    %v1654 = vsel %vm275, %v1335, 0.0
    %1655 = vadd.xlane.f32.xlu0 %v1654
    %v1656 = vpop.xlane.xlu0 %1655
    %v1657 = vsel %vm275, %v1336, 0.0
    %1658 = vadd.xlane.f32.xlu0 %v1657
    %v1659 = vpop.xlane.xlu0 %1658
    %v1660 = vsel %vm275, %v1337, 0.0
    %1661 = vadd.xlane.f32.xlu0 %v1660
    %v1662 = vpop.xlane.xlu0 %1661
    %v1663 = vsel %vm275, %v1338, 0.0
    %1664 = vadd.xlane.f32.xlu0 %v1663
    %v1665 = vpop.xlane.xlu0 %1664
    %v1666 = vsel %vm275, %v1339, 0.0
    %1667 = vadd.xlane.f32.xlu0 %v1666
    %v1668 = vpop.xlane.xlu0 %1667
    %v1669 = vsel %vm275, %v1340, 0.0
    %1670 = vadd.xlane.f32.xlu0 %v1669
    %v1671 = vpop.xlane.xlu0 %1670
    %v1672 = vsel %vm275, %v1341, 0.0
    %1673 = vadd.xlane.f32.xlu0 %v1672
    %v1674 = vpop.xlane.xlu0 %1673
    %v1675 = vsel %vm275, %v1342, 0.0
    %1676 = vadd.xlane.f32.xlu0 %v1675
    %v1677 = vpop.xlane.xlu0 %1676
    %v1678 = vsel %vm275, %v1343, 0.0
    %1679 = vadd.xlane.f32.xlu0 %v1678
    %v1680 = vpop.xlane.xlu0 %1679
    %v1681 = vsel %vm275, %v1344, 0.0
    %1682 = vadd.xlane.f32.xlu0 %v1681
    %v1683 = vpop.xlane.xlu0 %1682
    %v1684 = vsel %vm275, %v1345, 0.0
    %1685 = vadd.xlane.f32.xlu0 %v1684
    %v1686 = vpop.xlane.xlu0 %1685
    %v1687 = vsel %vm275, %v1346, 0.0
    %1688 = vadd.xlane.f32.xlu0 %v1687
    %v1689 = vpop.xlane.xlu0 %1688
    %v1690 = vsel %vm275, %v1347, 0.0
    %1691 = vadd.xlane.f32.xlu0 %v1690
    %v1692 = vpop.xlane.xlu0 %1691
    %v1693 = vsel %vm275, %v1348, 0.0
    %1694 = vadd.xlane.f32.xlu0 %v1693
    %v1695 = vpop.xlane.xlu0 %1694
    %v1696 = vsel %vm275, %v1349, 0.0
    %1697 = vadd.xlane.f32.xlu0 %v1696
    %v1698 = vpop.xlane.xlu0 %1697
    %v1699 = vsel %vm275, %v1350, 0.0
    %1700 = vadd.xlane.f32.xlu0 %v1699
    %v1701 = vpop.xlane.xlu0 %1700
    %v1702 = vsel %vm275, %v1351, 0.0
    %1703 = vadd.xlane.f32.xlu0 %v1702
    %v1704 = vpop.xlane.xlu0 %1703
    %v1705 = vsel %vm275, %v1352, 0.0
    %1706 = vadd.xlane.f32.xlu0 %v1705
    %v1707 = vpop.xlane.xlu0 %1706
    %v1708 = vsel %vm275, %v1353, 0.0
    %1709 = vadd.xlane.f32.xlu0 %v1708
    %v1710 = vpop.xlane.xlu0 %1709
    %v1711 = vsel %vm275, %v1354, 0.0
    %1712 = vadd.xlane.f32.xlu0 %v1711
    %v1713 = vpop.xlane.xlu0 %1712
    %v1714 = vsel %vm275, %v1355, 0.0
    %1715 = vadd.xlane.f32.xlu0 %v1714
    %v1716 = vpop.xlane.xlu0 %1715
    %v1717 = vsel %vm275, %v1356, 0.0
    %1718 = vadd.xlane.f32.xlu0 %v1717
    %v1719 = vpop.xlane.xlu0 %1718
    %v1720 = vsel %vm275, %v1357, 0.0
    %1721 = vadd.xlane.f32.xlu0 %v1720
    %v1722 = vpop.xlane.xlu0 %1721
    %v1723 = vsel %vm275, %v1358, 0.0
    %1724 = vadd.xlane.f32.xlu0 %v1723
    %v1725 = vpop.xlane.xlu0 %1724
    %v1726 = vsel %vm275, %v1359, 0.0
    %1727 = vadd.xlane.f32.xlu0 %v1726
    %v1728 = vpop.xlane.xlu0 %1727
    %v1729 = vsel %vm275, %v1360, 0.0
    %1730 = vadd.xlane.f32.xlu0 %v1729
    %v1731 = vpop.xlane.xlu0 %1730
    %v1732 = vsel %vm275, %v1361, 0.0
    %1733 = vadd.xlane.f32.xlu0 %v1732
    %v1734 = vpop.xlane.xlu0 %1733
    %v1735 = vsel %vm275, %v1362, 0.0
    %1736 = vadd.xlane.f32.xlu0 %v1735
    %v1737 = vpop.xlane.xlu0 %1736
    %v1738 = vsel %vm275, %v1363, 0.0
    %1739 = vadd.xlane.f32.xlu0 %v1738
    %v1740 = vpop.xlane.xlu0 %1739
    %v1741 = vsel %vm275, %v1364, 0.0
    %1742 = vadd.xlane.f32.xlu0 %v1741
    %v1743 = vpop.xlane.xlu0 %1742
    %v1744 = vsel %vm275, %v1365, 0.0
    %1745 = vadd.xlane.f32.xlu0 %v1744
    %v1746 = vpop.xlane.xlu0 %1745
    %v1747 = vsel %vm275, %v1366, 0.0
    %1748 = vadd.xlane.f32.xlu0 %v1747
    %v1749 = vpop.xlane.xlu0 %1748
    %v1750 = vsel %vm275, %v1367, 0.0
    %1751 = vadd.xlane.f32.xlu0 %v1750
    %v1752 = vpop.xlane.xlu0 %1751
    %v1753 = vsel %vm275, %v1368, 0.0
    %1754 = vadd.xlane.f32.xlu0 %v1753
    %v1755 = vpop.xlane.xlu0 %1754
    %v1756 = vsel %vm275, %v1369, 0.0
    %1757 = vadd.xlane.f32.xlu0 %v1756
    %v1758 = vpop.xlane.xlu0 %1757
    %v1759 = vsel %vm275, %v1370, 0.0
    %1760 = vadd.xlane.f32.xlu0 %v1759
    %v1761 = vpop.xlane.xlu0 %1760
    %v1762 = vsel %vm275, %v1371, 0.0
    %1763 = vadd.xlane.f32.xlu0 %v1762
    %v1764 = vpop.xlane.xlu0 %1763
    %v1765 = vsel %vm275, %v1372, 0.0
    %1766 = vadd.xlane.f32.xlu0 %v1765
    %v1767 = vpop.xlane.xlu0 %1766
    %v1768 = vsel %vm275, %v1373, 0.0
    %1769 = vadd.xlane.f32.xlu0 %v1768
    %v1770 = vpop.xlane.xlu0 %1769
    %v1771 = vsel %vm275, %v1374, 0.0
    %1772 = vadd.xlane.f32.xlu0 %v1771
    %v1773 = vpop.xlane.xlu0 %1772
    %v1774 = vsel %vm275, %v1375, 0.0
    %1775 = vadd.xlane.f32.xlu0 %v1774
    %v1776 = vpop.xlane.xlu0 %1775
    %v1777 = vsel %vm275, %v1376, 0.0
    %1778 = vadd.xlane.f32.xlu0 %v1777
    %v1779 = vpop.xlane.xlu0 %1778
    %v1780 = vsel %vm275, %v1377, 0.0
    %1781 = vadd.xlane.f32.xlu0 %v1780
    %v1782 = vpop.xlane.xlu0 %1781
    %v1783 = vsel %vm275, %v1378, 0.0
    %1784 = vadd.xlane.f32.xlu0 %v1783
    %v1785 = vpop.xlane.xlu0 %1784
    %v1786 = vsel %vm275, %v1379, 0.0
    %1787 = vadd.xlane.f32.xlu0 %v1786
    %v1788 = vpop.xlane.xlu0 %1787
    %v1789 = vsel %vm275, %v1380, 0.0
    %1790 = vadd.xlane.f32.xlu0 %v1789
    %v1791 = vpop.xlane.xlu0 %1790
    %v1792 = vsel %vm275, %v1381, 0.0
    %1793 = vadd.xlane.f32.xlu0 %v1792
    %v1794 = vpop.xlane.xlu0 %1793
    %v1795 = vsel %vm275, %v1382, 0.0
    %1796 = vadd.xlane.f32.xlu0 %v1795
    %v1797 = vpop.xlane.xlu0 %1796
    %v1798 = vsel %vm275, %v1383, 0.0
    %1799 = vadd.xlane.f32.xlu0 %v1798
    %v1800 = vpop.xlane.xlu0 %1799
    %v1801 = vsel %vm275, %v1384, 0.0
    %1802 = vadd.xlane.f32.xlu0 %v1801
    %v1803 = vpop.xlane.xlu0 %1802
    %v1804 = vsel %vm275, %v1385, 0.0
    %1805 = vadd.xlane.f32.xlu0 %v1804
    %v1806 = vpop.xlane.xlu0 %1805
    %v1807 = vsel %vm275, %v1386, 0.0
    %1808 = vadd.xlane.f32.xlu0 %v1807
    %v1809 = vpop.xlane.xlu0 %1808
    %v1810 = vsel %vm275, %v1387, 0.0
    %1811 = vadd.xlane.f32.xlu0 %v1810
    %v1812 = vpop.xlane.xlu0 %1811
    %v1813 = vsel %vm275, %v1388, 0.0
    %1814 = vadd.xlane.f32.xlu0 %v1813
    %v1815 = vpop.xlane.xlu0 %1814
    %v1816 = vsel %vm275, %v1389, 0.0
    %1817 = vadd.xlane.f32.xlu0 %v1816
    %v1818 = vpop.xlane.xlu0 %1817
    %v1819 = vsel %vm275, %v1390, 0.0
    %1820 = vadd.xlane.f32.xlu0 %v1819
    %v1821 = vpop.xlane.xlu0 %1820
    %v1822 = vsel %vm275, %v1391, 0.0
    %1823 = vadd.xlane.f32.xlu0 %v1822
    %v1824 = vpop.xlane.xlu0 %1823
    %v1825 = vsel %vm275, %v1392, 0.0
    %1826 = vadd.xlane.f32.xlu0 %v1825
    %v1827 = vpop.xlane.xlu0 %1826
    %v1828 = vsel %vm275, %v1393, 0.0
    %1829 = vadd.xlane.f32.xlu0 %v1828
    %v1830 = vpop.xlane.xlu0 %1829
    %v1831 = vsel %vm275, %v1394, 0.0
    %1832 = vadd.xlane.f32.xlu0 %v1831
    %v1833 = vpop.xlane.xlu0 %1832
    %v1834 = vsel %vm275, %v1395, 0.0
    %1835 = vadd.xlane.f32.xlu0 %v1834
    %v1836 = vpop.xlane.xlu0 %1835
    %v1837 = vsel %vm275, %v1396, 0.0
    %1838 = vadd.xlane.f32.xlu0 %v1837
    %v1839 = vpop.xlane.xlu0 %1838
    %v1840 = vsel %vm275, %v1397, 0.0
    %1841 = vadd.xlane.f32.xlu0 %v1840
    %v1842 = vpop.xlane.xlu0 %1841
    %v1843 = vsel %vm275, %v1398, 0.0
    %1844 = vadd.xlane.f32.xlu0 %v1843
    %v1845 = vpop.xlane.xlu0 %1844
    %v1846 = vsel %vm275, %v1399, 0.0
    %1847 = vadd.xlane.f32.xlu0 %v1846
    %v1848 = vpop.xlane.xlu0 %1847
    %v1849 = vsel %vm275, %v1400, 0.0
    %1850 = vadd.xlane.f32.xlu0 %v1849
    %v1851 = vpop.xlane.xlu0 %1850
    %v1852 = vsel %vm275, %v1401, 0.0
    %1853 = vadd.xlane.f32.xlu0 %v1852
    %v1854 = vpop.xlane.xlu0 %1853
    %v1855 = vsel %vm275, %v1402, 0.0
    %1856 = vadd.xlane.f32.xlu0 %v1855
    %v1857 = vpop.xlane.xlu0 %1856
    %v1858 = vsel %vm275, %v1403, 0.0
    %1859 = vadd.xlane.f32.xlu0 %v1858
    %v1860 = vpop.xlane.xlu0 %1859
    %v1861 = vsel %vm275, %v1404, 0.0
    %1862 = vadd.xlane.f32.xlu0 %v1861
    %v1863 = vpop.xlane.xlu0 %1862
    %v1864 = vsel %vm275, %v1405, 0.0
    %1865 = vadd.xlane.f32.xlu0 %v1864
    %v1866 = vpop.xlane.xlu0 %1865
    %v1867 = vsel %vm275, %v1406, 0.0
    %1868 = vadd.xlane.f32.xlu0 %v1867
    %v1869 = vpop.xlane.xlu0 %1868
    %v1870 = vsel %vm275, %v1407, 0.0
    %1871 = vadd.xlane.f32.xlu0 %v1870
    %v1872 = vpop.xlane.xlu0 %1871
    %v1873 = vsel %vm275, %v1408, 0.0
    %1874 = vadd.xlane.f32.xlu0 %v1873
    %v1875 = vpop.xlane.xlu0 %1874
    %v1876 = vsel %vm275, %v1409, 0.0
    %1877 = vadd.xlane.f32.xlu0 %v1876
    %v1878 = vpop.xlane.xlu0 %1877
    %v1879 = vsel %vm275, %v1410, 0.0
    %1880 = vadd.xlane.f32.xlu0 %v1879
    %v1881 = vpop.xlane.xlu0 %1880
    %v1882 = vsel %vm275, %v1411, 0.0
    %1883 = vadd.xlane.f32.xlu0 %v1882
    %v1884 = vpop.xlane.xlu0 %1883
    %v1885 = vsel %vm275, %v1412, 0.0
    %1886 = vadd.xlane.f32.xlu0 %v1885
    %v1887 = vpop.xlane.xlu0 %1886
    %v1888 = vsel %vm275, %v1413, 0.0
    %1889 = vadd.xlane.f32.xlu0 %v1888
    %v1890 = vpop.xlane.xlu0 %1889
    %v1891 = vsel %vm275, %v1414, 0.0
    %1892 = vadd.xlane.f32.xlu0 %v1891
    %v1893 = vpop.xlane.xlu0 %1892
    %v1894 = vsel %vm275, %v1415, 0.0
    %1895 = vadd.xlane.f32.xlu0 %v1894
    %v1896 = vpop.xlane.xlu0 %1895
    %v1897 = vsel %vm275, %v1416, 0.0
    %1898 = vadd.xlane.f32.xlu0 %v1897
    %v1899 = vpop.xlane.xlu0 %1898
    %v1900 = vsel %vm275, %v1417, 0.0
    %1901 = vadd.xlane.f32.xlu0 %v1900
    %v1902 = vpop.xlane.xlu0 %1901
    %v1903 = vsel %vm275, %v1418, 0.0
    %1904 = vadd.xlane.f32.xlu0 %v1903
    %v1905 = vpop.xlane.xlu0 %1904
    %v1906 = vsel %vm275, %v1419, 0.0
    %1907 = vadd.xlane.f32.xlu0 %v1906
    %v1908 = vpop.xlane.xlu0 %1907
    %v1909 = vsel %vm275, %v1420, 0.0
    %1910 = vadd.xlane.f32.xlu0 %v1909
    %v1911 = vpop.xlane.xlu0 %1910
    %v1912 = vsel %vm275, %v1421, 0.0
    %1913 = vadd.xlane.f32.xlu0 %v1912
    %v1914 = vpop.xlane.xlu0 %1913
    %v1915 = vsel %vm275, %v1422, 0.0
    %1916 = vadd.xlane.f32.xlu0 %v1915
    %v1917 = vpop.xlane.xlu0 %1916
    %v1918 = vsel %vm275, %v1423, 0.0
    %1919 = vadd.xlane.f32.xlu0 %v1918
    %v1920 = vpop.xlane.xlu0 %1919
    %v1921 = vsel %vm275, %v1424, 0.0
    %1922 = vadd.xlane.f32.xlu0 %v1921
    %v1923 = vpop.xlane.xlu0 %1922
    %v1924 = vsel %vm275, %v1425, 0.0
    %1925 = vadd.xlane.f32.xlu0 %v1924
    %v1926 = vpop.xlane.xlu0 %1925
    %v1927 = vsel %vm275, %v1426, 0.0
    %1928 = vadd.xlane.f32.xlu0 %v1927
    %v1929 = vpop.xlane.xlu0 %1928
    %v1930 = vsel %vm275, %v1427, 0.0
    %1931 = vadd.xlane.f32.xlu0 %v1930
    %v1932 = vpop.xlane.xlu0 %1931
    %v1933 = vsel %vm275, %v1428, 0.0
    %1934 = vadd.xlane.f32.xlu0 %v1933
    %v1935 = vpop.xlane.xlu0 %1934
    %v1936 = vsel %vm275, %v1429, 0.0
    %1937 = vadd.xlane.f32.xlu0 %v1936
    %v1938 = vpop.xlane.xlu0 %1937
    %v1939 = vsel %vm275, %v1430, 0.0
    %1940 = vadd.xlane.f32.xlu0 %v1939
    %v1941 = vpop.xlane.xlu0 %1940
    %v1942 = vsel %vm275, %v1431, 0.0
    %1943 = vadd.xlane.f32.xlu0 %v1942
    %v1944 = vpop.xlane.xlu0 %1943
    %v1945 = vsel %vm275, %v1432, 0.0
    %1946 = vadd.xlane.f32.xlu0 %v1945
    %v1947 = vpop.xlane.xlu0 %1946
    %v1948 = vsel %vm275, %v1433, 0.0
    %1949 = vadd.xlane.f32.xlu0 %v1948
    %v1950 = vpop.xlane.xlu0 %1949
    %v1951 = vsel %vm275, %v1434, 0.0
    %1952 = vadd.xlane.f32.xlu0 %v1951
    %v1953 = vpop.xlane.xlu0 %1952
    %v1954 = vsel %vm275, %v1435, 0.0
    %1955 = vadd.xlane.f32.xlu0 %v1954
    %v1956 = vpop.xlane.xlu0 %1955
    %v1957 = vsel %vm275, %v1436, 0.0
    %1958 = vadd.xlane.f32.xlu0 %v1957
    %v1959 = vpop.xlane.xlu0 %1958
    %v1960 = vsel %vm275, %v1437, 0.0
    %1961 = vadd.xlane.f32.xlu0 %v1960
    %v1962 = vpop.xlane.xlu0 %1961
    %v1963 = vsel %vm275, %v1438, 0.0
    %1964 = vadd.xlane.f32.xlu0 %v1963
    %v1965 = vpop.xlane.xlu0 %1964
    %v1966 = vsel %vm275, %v1439, 0.0
    %1967 = vadd.xlane.f32.xlu0 %v1966
    %v1968 = vpop.xlane.xlu0 %1967
    %v1969 = vsel %vm275, %v1440, 0.0
    %1970 = vadd.xlane.f32.xlu0 %v1969
    %v1971 = vpop.xlane.xlu0 %1970
    %v1972 = vsel %vm275, %v1441, 0.0
    %1973 = vadd.xlane.f32.xlu0 %v1972
    %v1974 = vpop.xlane.xlu0 %1973
    %v1975 = vsel %vm275, %v1442, 0.0
    %1976 = vadd.xlane.f32.xlu0 %v1975
    %v1977 = vpop.xlane.xlu0 %1976
    %v1978 = vsel %vm275, %v1443, 0.0
    %1979 = vadd.xlane.f32.xlu0 %v1978
    %v1980 = vpop.xlane.xlu0 %1979
    %v1981 = vsel %vm275, %v1444, 0.0
    %1982 = vadd.xlane.f32.xlu0 %v1981
    %v1983 = vpop.xlane.xlu0 %1982
    %v1984 = vsel %vm275, %v1445, 0.0
    %1985 = vadd.xlane.f32.xlu0 %v1984
    %v1986 = vpop.xlane.xlu0 %1985
    %v1987 = vsel %vm275, %v1446, 0.0
    %1988 = vadd.xlane.f32.xlu0 %v1987
    %v1989 = vpop.xlane.xlu0 %1988
    %v1990 = vsel %vm275, %v1447, 0.0
    %1991 = vadd.xlane.f32.xlu0 %v1990
    %v1992 = vpop.xlane.xlu0 %1991
    %v1993 = vsel %vm275, %v1448, 0.0
    %1994 = vadd.xlane.f32.xlu0 %v1993
    %v1995 = vpop.xlane.xlu0 %1994
    %v1996 = vsel %vm275, %v1449, 0.0
    %1997 = vadd.xlane.f32.xlu0 %v1996
    %v1998 = vpop.xlane.xlu0 %1997
    %v1999 = vsel %vm275, %v1450, 0.0
    %2000 = vadd.xlane.f32.xlu0 %v1999
    %v2001 = vpop.xlane.xlu0 %2000
    %v2002 = vsel %vm275, %v1451, 0.0
    %2003 = vadd.xlane.f32.xlu0 %v2002
    %v2004 = vpop.xlane.xlu0 %2003
    %v2005 = vsel %vm275, %v1452, 0.0
    %2006 = vadd.xlane.f32.xlu0 %v2005
    %v2007 = vpop.xlane.xlu0 %2006
    %v2008 = vsel %vm275, %v1453, 0.0
    %2009 = vadd.xlane.f32.xlu0 %v2008
    %v2010 = vpop.xlane.xlu0 %2009
    %v2011 = vsel %vm275, %v1454, 0.0
    %2012 = vadd.xlane.f32.xlu0 %v2011
    %v2013 = vpop.xlane.xlu0 %2012
    %v2014 = vsel %vm275, %v1455, 0.0
    %2015 = vadd.xlane.f32.xlu0 %v2014
    %v2016 = vpop.xlane.xlu0 %2015
    %v2017 = vsel %vm275, %v1456, 0.0
    %2018 = vadd.xlane.f32.xlu0 %v2017
    %v2019 = vpop.xlane.xlu0 %2018
    %v2020 = vsel %vm275, %v1457, 0.0
    %2021 = vadd.xlane.f32.xlu0 %v2020
    %v2022 = vpop.xlane.xlu0 %2021
    %v2023 = vsel %vm275, %v1458, 0.0
    %2024 = vadd.xlane.f32.xlu0 %v2023
    %v2025 = vpop.xlane.xlu0 %2024
    %v2026 = vsel %vm275, %v1459, 0.0
    %2027 = vadd.xlane.f32.xlu0 %v2026
    %v2028 = vpop.xlane.xlu0 %2027
    %v2029 = vsel %vm275, %v1460, 0.0
    %2030 = vadd.xlane.f32.xlu0 %v2029
    %v2031 = vpop.xlane.xlu0 %2030
    %v2032 = vsel %vm275, %v1461, 0.0
    %2033 = vadd.xlane.f32.xlu0 %v2032
    %v2034 = vpop.xlane.xlu0 %2033
    %v2035 = vsel %vm275, %v1462, 0.0
    %2036 = vadd.xlane.f32.xlu0 %v2035
    %v2037 = vpop.xlane.xlu0 %2036
    %v2038 = vsel %vm275, %v1463, 0.0
    %2039 = vadd.xlane.f32.xlu0 %v2038
    %v2040 = vpop.xlane.xlu0 %2039
    %v2041 = vsel %vm275, %v1464, 0.0
    %2042 = vadd.xlane.f32.xlu0 %v2041
    %v2043 = vpop.xlane.xlu0 %2042
    %v2044 = vsel %vm275, %v1465, 0.0
    %2045 = vadd.xlane.f32.xlu0 %v2044
    %v2046 = vpop.xlane.xlu0 %2045
    %v2047 = vsel %vm275, %v1466, 0.0
    %2048 = vadd.xlane.f32.xlu0 %v2047
    %v2049 = vpop.xlane.xlu0 %2048
    %v2050 = vsel %vm275, %v1467, 0.0
    %2051 = vadd.xlane.f32.xlu0 %v2050
    %v2052 = vpop.xlane.xlu0 %2051
    %v2053 = vsel %vm275, %v1468, 0.0
    %2054 = vadd.xlane.f32.xlu0 %v2053
    %v2055 = vpop.xlane.xlu0 %2054
    %v2056 = vsel %vm275, %v1469, 0.0
    %2057 = vadd.xlane.f32.xlu0 %v2056
    %v2058 = vpop.xlane.xlu0 %2057
    %v2059 = vsel %vm275, %v1470, 0.0
    %2060 = vadd.xlane.f32.xlu0 %v2059
    %v2061 = vpop.xlane.xlu0 %2060
    %v2062 = vsel %vm275, %v1471, 0.0
    %2063 = vadd.xlane.f32.xlu0 %v2062
    %v2064 = vpop.xlane.xlu0 %2063
    %v2065 = vsel %vm275, %v1472, 0.0
    %2066 = vadd.xlane.f32.xlu0 %v2065
    %v2067 = vpop.xlane.xlu0 %2066
    %v2068 = vsel %vm275, %v1473, 0.0
    %2069 = vadd.xlane.f32.xlu0 %v2068
    %v2070 = vpop.xlane.xlu0 %2069
    %v2071 = vsel %vm275, %v1474, 0.0
    %2072 = vadd.xlane.f32.xlu0 %v2071
    %v2073 = vpop.xlane.xlu0 %2072
    %v2074 = vsel %vm275, %v1475, 0.0
    %2075 = vadd.xlane.f32.xlu0 %v2074
    %v2076 = vpop.xlane.xlu0 %2075
    %v2077 = vsel %vm275, %v1476, 0.0
    %2078 = vadd.xlane.f32.xlu0 %v2077
    %v2079 = vpop.xlane.xlu0 %2078
    %v2080 = vsel %vm275, %v1477, 0.0
    %2081 = vadd.xlane.f32.xlu0 %v2080
    %v2082 = vpop.xlane.xlu0 %2081
    %v2083 = vsel %vm275, %v1478, 0.0
    %2084 = vadd.xlane.f32.xlu0 %v2083
    %v2085 = vpop.xlane.xlu0 %2084
    %v2086 = vsel %vm275, %v1479, 0.0
    %2087 = vadd.xlane.f32.xlu0 %v2086
    %v2088 = vpop.xlane.xlu0 %2087
    %v2089 = vsel %vm275, %v1480, 0.0
    %2090 = vadd.xlane.f32.xlu0 %v2089
    %v2091 = vpop.xlane.xlu0 %2090
    %v2092 = vsel %vm275, %v1481, 0.0
    %2093 = vadd.xlane.f32.xlu0 %v2092
    %v2094 = vpop.xlane.xlu0 %2093
    %v2095 = vsel %vm275, %v1482, 0.0
    %2096 = vadd.xlane.f32.xlu0 %v2095
    %v2097 = vpop.xlane.xlu0 %2096
    %v2098 = vsel %vm275, %v1483, 0.0
    %2099 = vadd.xlane.f32.xlu0 %v2098
    %v2100 = vpop.xlane.xlu0 %2099
    %v2101 = vsel %vm275, %v1484, 0.0
    %2102 = vadd.xlane.f32.xlu0 %v2101
    %v2103 = vpop.xlane.xlu0 %2102
    %v2104 = vsel %vm275, %v1485, 0.0
    %2105 = vadd.xlane.f32.xlu0 %v2104
    %v2106 = vpop.xlane.xlu0 %2105
    %v2107 = vsel %vm275, %v1486, 0.0
    %2108 = vadd.xlane.f32.xlu0 %v2107
    %v2109 = vpop.xlane.xlu0 %2108
    %v2110 = vsel %vm275, %v1487, 0.0
    %2111 = vadd.xlane.f32.xlu0 %v2110
    %v2112 = vpop.xlane.xlu0 %2111
    %v2113 = vsel %vm275, %v1488, 0.0
    %2114 = vadd.xlane.f32.xlu0 %v2113
    %v2115 = vpop.xlane.xlu0 %2114
    %v2116 = vsel %vm275, %v1489, 0.0
    %2117 = vadd.xlane.f32.xlu0 %v2116
    %v2118 = vpop.xlane.xlu0 %2117
    %v2119 = vsel %vm275, %v1490, 0.0
    %2120 = vadd.xlane.f32.xlu0 %v2119
    %v2121 = vpop.xlane.xlu0 %2120
    %v2122 = vsel %vm275, %v1491, 0.0
    %2123 = vadd.xlane.f32.xlu0 %v2122
    %v2124 = vpop.xlane.xlu0 %2123
    %v2125 = vsel %vm275, %v1492, 0.0
    %2126 = vadd.xlane.f32.xlu0 %v2125
    %v2127 = vpop.xlane.xlu0 %2126
    %v2128 = vsel %vm275, %v1493, 0.0
    %2129 = vadd.xlane.f32.xlu0 %v2128
    %v2130 = vpop.xlane.xlu0 %2129
    %v2131 = vsel %vm275, %v1494, 0.0
    %2132 = vadd.xlane.f32.xlu0 %v2131
    %v2133 = vpop.xlane.xlu0 %2132
    %v2134 = vsel %vm275, %v1495, 0.0
    %2135 = vadd.xlane.f32.xlu0 %v2134
    %v2136 = vpop.xlane.xlu0 %2135
    %v2137 = vsel %vm275, %v1496, 0.0
    %2138 = vadd.xlane.f32.xlu0 %v2137
    %v2139 = vpop.xlane.xlu0 %2138
    %v2140 = vsel %vm275, %v1497, 0.0
    %2141 = vadd.xlane.f32.xlu0 %v2140
    %v2142 = vpop.xlane.xlu0 %2141
    %v2143 = vsel %vm275, %v1498, 0.0
    %2144 = vadd.xlane.f32.xlu0 %v2143
    %v2145 = vpop.xlane.xlu0 %2144
    %v2146 = vsel %vm275, %v1499, 0.0
    %2147 = vadd.xlane.f32.xlu0 %v2146
    %v2148 = vpop.xlane.xlu0 %2147
    %v2149 = vsel %vm275, %v1500, 0.0
    %2150 = vadd.xlane.f32.xlu0 %v2149
    %v2151 = vpop.xlane.xlu0 %2150
    %v2152 = vsel %vm275, %v1501, 0.0
    %2153 = vadd.xlane.f32.xlu0 %v2152
    %v2154 = vpop.xlane.xlu0 %2153
    %v2155 = vsel %vm275, %v1502, 0.0
    %2156 = vadd.xlane.f32.xlu0 %v2155
    %v2157 = vpop.xlane.xlu0 %2156
    %v2158 = vsel %vm275, %v1503, 0.0
    %2159 = vadd.xlane.f32.xlu0 %v2158
    %v2160 = vpop.xlane.xlu0 %2159
    %v2161 = vsel %vm275, %v1504, 0.0
    %2162 = vadd.xlane.f32.xlu0 %v2161
    %v2163 = vpop.xlane.xlu0 %2162
    %v2164 = vsel %vm275, %v1505, 0.0
    %2165 = vadd.xlane.f32.xlu0 %v2164
    %v2166 = vpop.xlane.xlu0 %2165
    %v2167 = vsel %vm275, %v1506, 0.0
    %2168 = vadd.xlane.f32.xlu0 %v2167
    %v2169 = vpop.xlane.xlu0 %2168
    %v2170 = vsel %vm275, %v1507, 0.0
    %2171 = vadd.xlane.f32.xlu0 %v2170
    %v2172 = vpop.xlane.xlu0 %2171
    %v2173 = vsel %vm275, %v1508, 0.0
    %2174 = vadd.xlane.f32.xlu0 %v2173
    %v2175 = vpop.xlane.xlu0 %2174
    %v2176 = vsel %vm275, %v1509, 0.0
    %2177 = vadd.xlane.f32.xlu0 %v2176
    %v2178 = vpop.xlane.xlu0 %2177
    %v2179 = vsel %vm275, %v1510, 0.0
    %2180 = vadd.xlane.f32.xlu0 %v2179
    %v2181 = vpop.xlane.xlu0 %2180
    %v2182 = vsel %vm275, %v1511, 0.0
    %2183 = vadd.xlane.f32.xlu0 %v2182
    %v2184 = vpop.xlane.xlu0 %2183
    %v2185 = vsel %vm275, %v1512, 0.0
    %2186 = vadd.xlane.f32.xlu0 %v2185
    %v2187 = vpop.xlane.xlu0 %2186
    %v2188 = vsel %vm275, %v1513, 0.0
    %2189 = vadd.xlane.f32.xlu0 %v2188
    %v2190 = vpop.xlane.xlu0 %2189
    %v2191 = vsel %vm275, %v1514, 0.0
    %2192 = vadd.xlane.f32.xlu0 %v2191
    %v2193 = vpop.xlane.xlu0 %2192
    %v2194 = vsel %vm275, %v1515, 0.0
    %2195 = vadd.xlane.f32.xlu0 %v2194
    %v2196 = vpop.xlane.xlu0 %2195
    %v2197 = vsel %vm275, %v1516, 0.0
    %2198 = vadd.xlane.f32.xlu0 %v2197
    %v2199 = vpop.xlane.xlu0 %2198
    %v2200 = vsel %vm275, %v1517, 0.0
    %2201 = vadd.xlane.f32.xlu0 %v2200
    %v2202 = vpop.xlane.xlu0 %2201
    %v2203 = vsel %vm275, %v1518, 0.0
    %2204 = vadd.xlane.f32.xlu0 %v2203
    %v2205 = vpop.xlane.xlu0 %2204
    %v2206 = vsel %vm275, %v1519, 0.0
    %2207 = vadd.xlane.f32.xlu0 %v2206
    %v2208 = vpop.xlane.xlu0 %2207
    %v2209 = vsel %vm275, %v1520, 0.0
    %2210 = vadd.xlane.f32.xlu0 %v2209
    %v2211 = vpop.xlane.xlu0 %2210
    %v2212 = vsel %vm275, %v1521, 0.0
    %2213 = vadd.xlane.f32.xlu0 %v2212
    %v2214 = vpop.xlane.xlu0 %2213
    %v2215 = vsel %vm275, %v1522, 0.0
    %2216 = vadd.xlane.f32.xlu0 %v2215
    %v2217 = vpop.xlane.xlu0 %2216
    %v2218 = vsel %vm275, %v1523, 0.0
    %2219 = vadd.xlane.f32.xlu0 %v2218
    %v2220 = vpop.xlane.xlu0 %2219
    %v2221 = vsel %vm275, %v1524, 0.0
    %2222 = vadd.xlane.f32.xlu0 %v2221
    %v2223 = vpop.xlane.xlu0 %2222
    %v2224 = vsel %vm275, %v1525, 0.0
    %2225 = vadd.xlane.f32.xlu0 %v2224
    %v2226 = vpop.xlane.xlu0 %2225
    %v2227 = vsel %vm275, %v1526, 0.0
    %2228 = vadd.xlane.f32.xlu0 %v2227
    %v2229 = vpop.xlane.xlu0 %2228
    %v2230 = vsel %vm275, %v1527, 0.0
    %2231 = vadd.xlane.f32.xlu0 %v2230
    %v2232 = vpop.xlane.xlu0 %2231
    %v2233 = vsel %vm275, %v1528, 0.0
    %2234 = vadd.xlane.f32.xlu0 %v2233
    %v2235 = vpop.xlane.xlu0 %2234
    %v2236 = vsel %vm275, %v1529, 0.0
    %2237 = vadd.xlane.f32.xlu0 %v2236
    %v2238 = vpop.xlane.xlu0 %2237
    %v2239 = vsel %vm275, %v1530, 0.0
    %2240 = vadd.xlane.f32.xlu0 %v2239
    %v2241 = vpop.xlane.xlu0 %2240
    %v2242 = vsel %vm275, %v1531, 0.0
    %2243 = vadd.xlane.f32.xlu0 %v2242
    %v2244 = vpop.xlane.xlu0 %2243
    %v2245 = vsel %vm275, %v1532, 0.0
    %2246 = vadd.xlane.f32.xlu0 %v2245
    %v2247 = vpop.xlane.xlu0 %2246
    %v2248 = vsel %vm275, %v1533, 0.0
    %2249 = vadd.xlane.f32.xlu0 %v2248
    %v2250 = vpop.xlane.xlu0 %2249
    %v2251 = vsel %vm275, %v1534, 0.0
    %2252 = vadd.xlane.f32.xlu0 %v2251
    %v2253 = vpop.xlane.xlu0 %2252
    %v2254 = vsel %vm275, %v1535, 0.0
    %2255 = vadd.xlane.f32.xlu0 %v2254
    %v2256 = vpop.xlane.xlu0 %2255
    %v2257 = vsel %vm275, %v1536, 0.0
    %2258 = vadd.xlane.f32.xlu0 %v2257
    %v2259 = vpop.xlane.xlu0 %2258
    %v2260 = vsel %vm275, %v1537, 0.0
    %2261 = vadd.xlane.f32.xlu0 %v2260
    %v2262 = vpop.xlane.xlu0 %2261
    %v2263 = vsel %vm275, %v1538, 0.0
    %2264 = vadd.xlane.f32.xlu0 %v2263
    %v2265 = vpop.xlane.xlu0 %2264
    %v2266 = vsel %vm275, %v1539, 0.0
    %2267 = vadd.xlane.f32.xlu0 %v2266
    %v2268 = vpop.xlane.xlu0 %2267
    %v2269 = vsel %vm275, %v1540, 0.0
    %2270 = vadd.xlane.f32.xlu0 %v2269
    %v2271 = vpop.xlane.xlu0 %2270
    %v2272 = vsel %vm275, %v1541, 0.0
    %2273 = vadd.xlane.f32.xlu0 %v2272
    %v2274 = vpop.xlane.xlu0 %2273
    %v2275 = vsel %vm275, %v1542, 0.0
    %2276 = vadd.xlane.f32.xlu0 %v2275
    %v2277 = vpop.xlane.xlu0 %2276
    %v2278 = vsel %vm275, %v1543, 0.0
    %2279 = vadd.xlane.f32.xlu0 %v2278
    %v2280 = vpop.xlane.xlu0 %2279
    %v2281 = vsel %vm275, %v1544, 0.0
    %2282 = vadd.xlane.f32.xlu0 %v2281
    %v2283 = vpop.xlane.xlu0 %2282
    %v2284 = vsel %vm275, %v1545, 0.0
    %2285 = vadd.xlane.f32.xlu0 %v2284
    %v2286 = vpop.xlane.xlu0 %2285
    %v2287 = vsel %vm275, %v1546, 0.0
    %2288 = vadd.xlane.f32.xlu0 %v2287
    %v2289 = vpop.xlane.xlu0 %2288
    %v2290 = vsel %vm275, %v1547, 0.0
    %2291 = vadd.xlane.f32.xlu0 %v2290
    %v2292 = vpop.xlane.xlu0 %2291
    %v2293 = vsel %vm275, %v1548, 0.0
    %2294 = vadd.xlane.f32.xlu0 %v2293
    %v2295 = vpop.xlane.xlu0 %2294
    %v2296 = vsel %vm275, %v1549, 0.0
    %2297 = vadd.xlane.f32.xlu0 %v2296
    %v2298 = vpop.xlane.xlu0 %2297
    %v2299 = vsel %vm275, %v1550, 0.0
    %2300 = vadd.xlane.f32.xlu0 %v2299
    %v2301 = vpop.xlane.xlu0 %2300
    %v2302 = vsel %vm275, %v1551, 0.0
    %2303 = vadd.xlane.f32.xlu0 %v2302
    %v2304 = vpop.xlane.xlu0 %2303
    %v2305 = vsel %vm275, %v1552, 0.0
    %2306 = vadd.xlane.f32.xlu0 %v2305
    %v2307 = vpop.xlane.xlu0 %2306
    %v2308 = vsel %vm275, %v1553, 0.0
    %2309 = vadd.xlane.f32.xlu0 %v2308
    %v2310 = vpop.xlane.xlu0 %2309
    %v2311 = vsel %vm275, %v1554, 0.0
    %2312 = vadd.xlane.f32.xlu0 %v2311
    %v2313 = vpop.xlane.xlu0 %2312
    %v2314 = vsel %vm275, %v1555, 0.0
    %2315 = vadd.xlane.f32.xlu0 %v2314
    %v2316 = vpop.xlane.xlu0 %2315
    %v2317 = vsel %vm275, %v1556, 0.0
    %2318 = vadd.xlane.f32.xlu0 %v2317
    %v2319 = vpop.xlane.xlu0 %2318
    %v2320 = vsel %vm275, %v1557, 0.0
    %2321 = vadd.xlane.f32.xlu0 %v2320
    %v2322 = vpop.xlane.xlu0 %2321
    %v2323 = vsel %vm275, %v1558, 0.0
    %2324 = vadd.xlane.f32.xlu0 %v2323
    %v2325 = vpop.xlane.xlu0 %2324
    %v2326 = vsel %vm275, %v1559, 0.0
    %2327 = vadd.xlane.f32.xlu0 %v2326
    %v2328 = vpop.xlane.xlu0 %2327
    %v2329 = vsel %vm275, %v1560, 0.0
    %2330 = vadd.xlane.f32.xlu0 %v2329
    %v2331 = vpop.xlane.xlu0 %2330
    %v2332 = vmul.f32 %v1563, 0.03125
    %v2333 = vmul.f32 %v1566, 0.03125
    %v2334 = vmul.f32 %v1569, 0.03125
    %v2335 = vmul.f32 %v1572, 0.03125
    %v2336 = vmul.f32 %v1575, 0.03125
    %v2337 = vmul.f32 %v1578, 0.03125
    %v2338 = vmul.f32 %v1581, 0.03125
    %v2339 = vmul.f32 %v1584, 0.03125
    %v2340 = vmul.f32 %v1587, 0.03125
    %v2341 = vmul.f32 %v1590, 0.03125
    %v2342 = vmul.f32 %v1593, 0.03125
    %v2343 = vmul.f32 %v1596, 0.03125
    %v2344 = vmul.f32 %v1599, 0.03125
    %v2345 = vmul.f32 %v1602, 0.03125
    %v2346 = vmul.f32 %v1605, 0.03125
    %v2347 = vmul.f32 %v1608, 0.03125
    %v2348 = vmul.f32 %v1611, 0.03125
    %v2349 = vmul.f32 %v1614, 0.03125
    %v2350 = vmul.f32 %v1617, 0.03125
    %v2351 = vmul.f32 %v1620, 0.03125
    %v2352 = vmul.f32 %v1623, 0.03125
    %v2353 = vmul.f32 %v1626, 0.03125
    %v2354 = vmul.f32 %v1629, 0.03125
    %v2355 = vmul.f32 %v1632, 0.03125
    %v2356 = vmul.f32 %v1635, 0.03125
    %v2357 = vmul.f32 %v1638, 0.03125
    %v2358 = vmul.f32 %v1641, 0.03125
    %v2359 = vmul.f32 %v1644, 0.03125
    %v2360 = vmul.f32 %v1647, 0.03125
    %v2361 = vmul.f32 %v1650, 0.03125
    %v2362 = vmul.f32 %v1653, 0.03125
    %v2363 = vmul.f32 %v1656, 0.03125
    %v2364 = vmul.f32 %v1659, 0.03125
    %v2365 = vmul.f32 %v1662, 0.03125
    %v2366 = vmul.f32 %v1665, 0.03125
    %v2367 = vmul.f32 %v1668, 0.03125
    %v2368 = vmul.f32 %v1671, 0.03125
    %v2369 = vmul.f32 %v1674, 0.03125
    %v2370 = vmul.f32 %v1677, 0.03125
    %v2371 = vmul.f32 %v1680, 0.03125
    %v2372 = vmul.f32 %v1683, 0.03125
    %v2373 = vmul.f32 %v1686, 0.03125
    %v2374 = vmul.f32 %v1689, 0.03125
    %v2375 = vmul.f32 %v1692, 0.03125
    %v2376 = vmul.f32 %v1695, 0.03125
    %v2377 = vmul.f32 %v1698, 0.03125
    %v2378 = vmul.f32 %v1701, 0.03125
    %v2379 = vmul.f32 %v1704, 0.03125
    %v2380 = vmul.f32 %v1707, 0.03125
    %v2381 = vmul.f32 %v1710, 0.03125
    %v2382 = vmul.f32 %v1713, 0.03125
    %v2383 = vmul.f32 %v1716, 0.03125
    %v2384 = vmul.f32 %v1719, 0.03125
    %v2385 = vmul.f32 %v1722, 0.03125
    %v2386 = vmul.f32 %v1725, 0.03125
    %v2387 = vmul.f32 %v1728, 0.03125
    %v2388 = vmul.f32 %v1731, 0.03125
    %v2389 = vmul.f32 %v1734, 0.03125
    %v2390 = vmul.f32 %v1737, 0.03125
    %v2391 = vmul.f32 %v1740, 0.03125
    %v2392 = vmul.f32 %v1743, 0.03125
    %v2393 = vmul.f32 %v1746, 0.03125
    %v2394 = vmul.f32 %v1749, 0.03125
    %v2395 = vmul.f32 %v1752, 0.03125
    %v2396 = vmul.f32 %v1755, 0.03125
    %v2397 = vmul.f32 %v1758, 0.03125
    %v2398 = vmul.f32 %v1761, 0.03125
    %v2399 = vmul.f32 %v1764, 0.03125
    %v2400 = vmul.f32 %v1767, 0.03125
    %v2401 = vmul.f32 %v1770, 0.03125
    %v2402 = vmul.f32 %v1773, 0.03125
    %v2403 = vmul.f32 %v1776, 0.03125
    %v2404 = vmul.f32 %v1779, 0.03125
    %v2405 = vmul.f32 %v1782, 0.03125
    %v2406 = vmul.f32 %v1785, 0.03125
    %v2407 = vmul.f32 %v1788, 0.03125
    %v2408 = vmul.f32 %v1791, 0.03125
    %v2409 = vmul.f32 %v1794, 0.03125
    %v2410 = vmul.f32 %v1797, 0.03125
    %v2411 = vmul.f32 %v1800, 0.03125
    %v2412 = vmul.f32 %v1803, 0.03125
    %v2413 = vmul.f32 %v1806, 0.03125
    %v2414 = vmul.f32 %v1809, 0.03125
    %v2415 = vmul.f32 %v1812, 0.03125
    %v2416 = vmul.f32 %v1815, 0.03125
    %v2417 = vmul.f32 %v1818, 0.03125
    %v2418 = vmul.f32 %v1821, 0.03125
    %v2419 = vmul.f32 %v1824, 0.03125
    %v2420 = vmul.f32 %v1827, 0.03125
    %v2421 = vmul.f32 %v1830, 0.03125
    %v2422 = vmul.f32 %v1833, 0.03125
    %v2423 = vmul.f32 %v1836, 0.03125
    %v2424 = vmul.f32 %v1839, 0.03125
    %v2425 = vmul.f32 %v1842, 0.03125
    %v2426 = vmul.f32 %v1845, 0.03125
    %v2427 = vmul.f32 %v1848, 0.03125
    %v2428 = vmul.f32 %v1851, 0.03125
    %v2429 = vmul.f32 %v1854, 0.03125
    %v2430 = vmul.f32 %v1857, 0.03125
    %v2431 = vmul.f32 %v1860, 0.03125
    %v2432 = vmul.f32 %v1863, 0.03125
    %v2433 = vmul.f32 %v1866, 0.03125
    %v2434 = vmul.f32 %v1869, 0.03125
    %v2435 = vmul.f32 %v1872, 0.03125
    %v2436 = vmul.f32 %v1875, 0.03125
    %v2437 = vmul.f32 %v1878, 0.03125
    %v2438 = vmul.f32 %v1881, 0.03125
    %v2439 = vmul.f32 %v1884, 0.03125
    %v2440 = vmul.f32 %v1887, 0.03125
    %v2441 = vmul.f32 %v1890, 0.03125
    %v2442 = vmul.f32 %v1893, 0.03125
    %v2443 = vmul.f32 %v1896, 0.03125
    %v2444 = vmul.f32 %v1899, 0.03125
    %v2445 = vmul.f32 %v1902, 0.03125
    %v2446 = vmul.f32 %v1905, 0.03125
    %v2447 = vmul.f32 %v1908, 0.03125
    %v2448 = vmul.f32 %v1911, 0.03125
    %v2449 = vmul.f32 %v1914, 0.03125
    %v2450 = vmul.f32 %v1917, 0.03125
    %v2451 = vmul.f32 %v1920, 0.03125
    %v2452 = vmul.f32 %v1923, 0.03125
    %v2453 = vmul.f32 %v1926, 0.03125
    %v2454 = vmul.f32 %v1929, 0.03125
    %v2455 = vmul.f32 %v1932, 0.03125
    %v2456 = vmul.f32 %v1935, 0.03125
    %v2457 = vmul.f32 %v1938, 0.03125
    %v2458 = vmul.f32 %v1941, 0.03125
    %v2459 = vmul.f32 %v1944, 0.03125
    %v2460 = vmul.f32 %v1947, 0.03125
    %v2461 = vmul.f32 %v1950, 0.03125
    %v2462 = vmul.f32 %v1953, 0.03125
    %v2463 = vmul.f32 %v1956, 0.03125
    %v2464 = vmul.f32 %v1959, 0.03125
    %v2465 = vmul.f32 %v1962, 0.03125
    %v2466 = vmul.f32 %v1965, 0.03125
    %v2467 = vmul.f32 %v1968, 0.03125
    %v2468 = vmul.f32 %v1971, 0.03125
    %v2469 = vmul.f32 %v1974, 0.03125
    %v2470 = vmul.f32 %v1977, 0.03125
    %v2471 = vmul.f32 %v1980, 0.03125
    %v2472 = vmul.f32 %v1983, 0.03125
    %v2473 = vmul.f32 %v1986, 0.03125
    %v2474 = vmul.f32 %v1989, 0.03125
    %v2475 = vmul.f32 %v1992, 0.03125
    %v2476 = vmul.f32 %v1995, 0.03125
    %v2477 = vmul.f32 %v1998, 0.03125
    %v2478 = vmul.f32 %v2001, 0.03125
    %v2479 = vmul.f32 %v2004, 0.03125
    %v2480 = vmul.f32 %v2007, 0.03125
    %v2481 = vmul.f32 %v2010, 0.03125
    %v2482 = vmul.f32 %v2013, 0.03125
    %v2483 = vmul.f32 %v2016, 0.03125
    %v2484 = vmul.f32 %v2019, 0.03125
    %v2485 = vmul.f32 %v2022, 0.03125
    %v2486 = vmul.f32 %v2025, 0.03125
    %v2487 = vmul.f32 %v2028, 0.03125
    %v2488 = vmul.f32 %v2031, 0.03125
    %v2489 = vmul.f32 %v2034, 0.03125
    %v2490 = vmul.f32 %v2037, 0.03125
    %v2491 = vmul.f32 %v2040, 0.03125
    %v2492 = vmul.f32 %v2043, 0.03125
    %v2493 = vmul.f32 %v2046, 0.03125
    %v2494 = vmul.f32 %v2049, 0.03125
    %v2495 = vmul.f32 %v2052, 0.03125
    %v2496 = vmul.f32 %v2055, 0.03125
    %v2497 = vmul.f32 %v2058, 0.03125
    %v2498 = vmul.f32 %v2061, 0.03125
    %v2499 = vmul.f32 %v2064, 0.03125
    %v2500 = vmul.f32 %v2067, 0.03125
    %v2501 = vmul.f32 %v2070, 0.03125
    %v2502 = vmul.f32 %v2073, 0.03125
    %v2503 = vmul.f32 %v2076, 0.03125
    %v2504 = vmul.f32 %v2079, 0.03125
    %v2505 = vmul.f32 %v2082, 0.03125
    %v2506 = vmul.f32 %v2085, 0.03125
    %v2507 = vmul.f32 %v2088, 0.03125
    %v2508 = vmul.f32 %v2091, 0.03125
    %v2509 = vmul.f32 %v2094, 0.03125
    %v2510 = vmul.f32 %v2097, 0.03125
    %v2511 = vmul.f32 %v2100, 0.03125
    %v2512 = vmul.f32 %v2103, 0.03125
    %v2513 = vmul.f32 %v2106, 0.03125
    %v2514 = vmul.f32 %v2109, 0.03125
    %v2515 = vmul.f32 %v2112, 0.03125
    %v2516 = vmul.f32 %v2115, 0.03125
    %v2517 = vmul.f32 %v2118, 0.03125
    %v2518 = vmul.f32 %v2121, 0.03125
    %v2519 = vmul.f32 %v2124, 0.03125
    %v2520 = vmul.f32 %v2127, 0.03125
    %v2521 = vmul.f32 %v2130, 0.03125
    %v2522 = vmul.f32 %v2133, 0.03125
    %v2523 = vmul.f32 %v2136, 0.03125
    %v2524 = vmul.f32 %v2139, 0.03125
    %v2525 = vmul.f32 %v2142, 0.03125
    %v2526 = vmul.f32 %v2145, 0.03125
    %v2527 = vmul.f32 %v2148, 0.03125
    %v2528 = vmul.f32 %v2151, 0.03125
    %v2529 = vmul.f32 %v2154, 0.03125
    %v2530 = vmul.f32 %v2157, 0.03125
    %v2531 = vmul.f32 %v2160, 0.03125
    %v2532 = vmul.f32 %v2163, 0.03125
    %v2533 = vmul.f32 %v2166, 0.03125
    %v2534 = vmul.f32 %v2169, 0.03125
    %v2535 = vmul.f32 %v2172, 0.03125
    %v2536 = vmul.f32 %v2175, 0.03125
    %v2537 = vmul.f32 %v2178, 0.03125
    %v2538 = vmul.f32 %v2181, 0.03125
    %v2539 = vmul.f32 %v2184, 0.03125
    %v2540 = vmul.f32 %v2187, 0.03125
    %v2541 = vmul.f32 %v2190, 0.03125
    %v2542 = vmul.f32 %v2193, 0.03125
    %v2543 = vmul.f32 %v2196, 0.03125
    %v2544 = vmul.f32 %v2199, 0.03125
    %v2545 = vmul.f32 %v2202, 0.03125
    %v2546 = vmul.f32 %v2205, 0.03125
    %v2547 = vmul.f32 %v2208, 0.03125
    %v2548 = vmul.f32 %v2211, 0.03125
    %v2549 = vmul.f32 %v2214, 0.03125
    %v2550 = vmul.f32 %v2217, 0.03125
    %v2551 = vmul.f32 %v2220, 0.03125
    %v2552 = vmul.f32 %v2223, 0.03125
    %v2553 = vmul.f32 %v2226, 0.03125
    %v2554 = vmul.f32 %v2229, 0.03125
    %v2555 = vmul.f32 %v2232, 0.03125
    %v2556 = vmul.f32 %v2235, 0.03125
    %v2557 = vmul.f32 %v2238, 0.03125
    %v2558 = vmul.f32 %v2241, 0.03125
    %v2559 = vmul.f32 %v2244, 0.03125
    %v2560 = vmul.f32 %v2247, 0.03125
    %v2561 = vmul.f32 %v2250, 0.03125
    %v2562 = vmul.f32 %v2253, 0.03125
    %v2563 = vmul.f32 %v2256, 0.03125
    %v2564 = vmul.f32 %v2259, 0.03125
    %v2565 = vmul.f32 %v2262, 0.03125
    %v2566 = vmul.f32 %v2265, 0.03125
    %v2567 = vmul.f32 %v2268, 0.03125
    %v2568 = vmul.f32 %v2271, 0.03125
    %v2569 = vmul.f32 %v2274, 0.03125
    %v2570 = vmul.f32 %v2277, 0.03125
    %v2571 = vmul.f32 %v2280, 0.03125
    %v2572 = vmul.f32 %v2283, 0.03125
    %v2573 = vmul.f32 %v2286, 0.03125
    %v2574 = vmul.f32 %v2289, 0.03125
    %v2575 = vmul.f32 %v2292, 0.03125
    %v2576 = vmul.f32 %v2295, 0.03125
    %v2577 = vmul.f32 %v2298, 0.03125
    %v2578 = vmul.f32 %v2301, 0.03125
    %v2579 = vmul.f32 %v2304, 0.03125
    %v2580 = vmul.f32 %v2307, 0.03125
    %v2581 = vmul.f32 %v2310, 0.03125
    %v2582 = vmul.f32 %v2313, 0.03125
    %v2583 = vmul.f32 %v2316, 0.03125
    %v2584 = vmul.f32 %v2319, 0.03125
    %v2585 = vmul.f32 %v2322, 0.03125
    %v2586 = vmul.f32 %v2325, 0.03125
    %v2587 = vmul.f32 %v2328, 0.03125
    %v2588 = vmul.f32 %v2331, 0.03125
    %v2589 = vmul.f32 %v1047, %v1047
    %v2590 = vmul.f32 %v1048, %v1048
    %v2591 = vmul.f32 %v1049, %v1049
    %v2592 = vmul.f32 %v1050, %v1050
    %v2593 = vmul.f32 %v1051, %v1051
    %v2594 = vmul.f32 %v1052, %v1052
    %v2595 = vmul.f32 %v1053, %v1053
    %v2596 = vmul.f32 %v1054, %v1054
    %v2597 = vmul.f32 %v1055, %v1055
    %v2598 = vmul.f32 %v1056, %v1056
    %v2599 = vmul.f32 %v1057, %v1057
    %v2600 = vmul.f32 %v1058, %v1058
    %v2601 = vmul.f32 %v1059, %v1059
    %v2602 = vmul.f32 %v1060, %v1060
    %v2603 = vmul.f32 %v1061, %v1061
    %v2604 = vmul.f32 %v1062, %v1062
    %v2605 = vmul.f32 %v1063, %v1063
    %v2606 = vmul.f32 %v1064, %v1064
    %v2607 = vmul.f32 %v1065, %v1065
    %v2608 = vmul.f32 %v1066, %v1066
    %v2609 = vmul.f32 %v1067, %v1067
    %v2610 = vmul.f32 %v1068, %v1068
    %v2611 = vmul.f32 %v1069, %v1069
    %v2612 = vmul.f32 %v1070, %v1070
    %v2613 = vmul.f32 %v1071, %v1071
    %v2614 = vmul.f32 %v1072, %v1072
    %v2615 = vmul.f32 %v1073, %v1073
    %v2616 = vmul.f32 %v1074, %v1074
    %v2617 = vmul.f32 %v1075, %v1075
    %v2618 = vmul.f32 %v1076, %v1076
    %v2619 = vmul.f32 %v1077, %v1077
    %v2620 = vmul.f32 %v1078, %v1078
    %v2621 = vmul.f32 %v1079, %v1079
    %v2622 = vmul.f32 %v1080, %v1080
    %v2623 = vmul.f32 %v1081, %v1081
    %v2624 = vmul.f32 %v1082, %v1082
    %v2625 = vmul.f32 %v1083, %v1083
    %v2626 = vmul.f32 %v1084, %v1084
    %v2627 = vmul.f32 %v1085, %v1085
    %v2628 = vmul.f32 %v1086, %v1086
    %v2629 = vmul.f32 %v1087, %v1087
    %v2630 = vmul.f32 %v1088, %v1088
    %v2631 = vmul.f32 %v1089, %v1089
    %v2632 = vmul.f32 %v1090, %v1090
    %v2633 = vmul.f32 %v1091, %v1091
    %v2634 = vmul.f32 %v1092, %v1092
    %v2635 = vmul.f32 %v1093, %v1093
    %v2636 = vmul.f32 %v1094, %v1094
    %v2637 = vmul.f32 %v1095, %v1095
    %v2638 = vmul.f32 %v1096, %v1096
    %v2639 = vmul.f32 %v1097, %v1097
    %v2640 = vmul.f32 %v1098, %v1098
    %v2641 = vmul.f32 %v1099, %v1099
    %v2642 = vmul.f32 %v1100, %v1100
    %v2643 = vmul.f32 %v1101, %v1101
    %v2644 = vmul.f32 %v1102, %v1102
    %v2645 = vmul.f32 %v1103, %v1103
    %v2646 = vmul.f32 %v1104, %v1104
    %v2647 = vmul.f32 %v1105, %v1105
    %v2648 = vmul.f32 %v1106, %v1106
    %v2649 = vmul.f32 %v1107, %v1107
    %v2650 = vmul.f32 %v1108, %v1108
    %v2651 = vmul.f32 %v1109, %v1109
    %v2652 = vmul.f32 %v1110, %v1110
    %v2653 = vmul.f32 %v1111, %v1111
    %v2654 = vmul.f32 %v1112, %v1112
    %v2655 = vmul.f32 %v1113, %v1113
    %v2656 = vmul.f32 %v1114, %v1114
    %v2657 = vmul.f32 %v1115, %v1115
    %v2658 = vmul.f32 %v1116, %v1116
    %v2659 = vmul.f32 %v1117, %v1117
    %v2660 = vmul.f32 %v1118, %v1118
    %v2661 = vmul.f32 %v1119, %v1119
    %v2662 = vmul.f32 %v1120, %v1120
    %v2663 = vmul.f32 %v1121, %v1121
    %v2664 = vmul.f32 %v1122, %v1122
    %v2665 = vmul.f32 %v1123, %v1123
    %v2666 = vmul.f32 %v1124, %v1124
    %v2667 = vmul.f32 %v1125, %v1125
    %v2668 = vmul.f32 %v1126, %v1126
    %v2669 = vmul.f32 %v1127, %v1127
    %v2670 = vmul.f32 %v1128, %v1128
    %v2671 = vmul.f32 %v1129, %v1129
    %v2672 = vmul.f32 %v1130, %v1130
    %v2673 = vmul.f32 %v1131, %v1131
    %v2674 = vmul.f32 %v1132, %v1132
    %v2675 = vmul.f32 %v1133, %v1133
    %v2676 = vmul.f32 %v1134, %v1134
    %v2677 = vmul.f32 %v1135, %v1135
    %v2678 = vmul.f32 %v1136, %v1136
    %v2679 = vmul.f32 %v1137, %v1137
    %v2680 = vmul.f32 %v1138, %v1138
    %v2681 = vmul.f32 %v1139, %v1139
    %v2682 = vmul.f32 %v1140, %v1140
    %v2683 = vmul.f32 %v1141, %v1141
    %v2684 = vmul.f32 %v1142, %v1142
    %v2685 = vmul.f32 %v1143, %v1143
    %v2686 = vmul.f32 %v1144, %v1144
    %v2687 = vmul.f32 %v1145, %v1145
    %v2688 = vmul.f32 %v1146, %v1146
    %v2689 = vmul.f32 %v1147, %v1147
    %v2690 = vmul.f32 %v1148, %v1148
    %v2691 = vmul.f32 %v1149, %v1149
    %v2692 = vmul.f32 %v1150, %v1150
    %v2693 = vmul.f32 %v1151, %v1151
    %v2694 = vmul.f32 %v1152, %v1152
    %v2695 = vmul.f32 %v1153, %v1153
    %v2696 = vmul.f32 %v1154, %v1154
    %v2697 = vmul.f32 %v1155, %v1155
    %v2698 = vmul.f32 %v1156, %v1156
    %v2699 = vmul.f32 %v1157, %v1157
    %v2700 = vmul.f32 %v1158, %v1158
    %v2701 = vmul.f32 %v1159, %v1159
    %v2702 = vmul.f32 %v1160, %v1160
    %v2703 = vmul.f32 %v1161, %v1161
    %v2704 = vmul.f32 %v1162, %v1162
    %v2705 = vmul.f32 %v1163, %v1163
    %v2706 = vmul.f32 %v1164, %v1164
    %v2707 = vmul.f32 %v1165, %v1165
    %v2708 = vmul.f32 %v1166, %v1166
    %v2709 = vmul.f32 %v1167, %v1167
    %v2710 = vmul.f32 %v1168, %v1168
    %v2711 = vmul.f32 %v1169, %v1169
    %v2712 = vmul.f32 %v1170, %v1170
    %v2713 = vmul.f32 %v1171, %v1171
    %v2714 = vmul.f32 %v1172, %v1172
    %v2715 = vmul.f32 %v1173, %v1173
    %v2716 = vmul.f32 %v1174, %v1174
    %v2717 = vmul.f32 %v1175, %v1175
    %v2718 = vmul.f32 %v1176, %v1176
    %v2719 = vmul.f32 %v1177, %v1177
    %v2720 = vmul.f32 %v1178, %v1178
    %v2721 = vmul.f32 %v1179, %v1179
    %v2722 = vmul.f32 %v1180, %v1180
    %v2723 = vmul.f32 %v1181, %v1181
    %v2724 = vmul.f32 %v1182, %v1182
    %v2725 = vmul.f32 %v1183, %v1183
    %v2726 = vmul.f32 %v1184, %v1184
    %v2727 = vmul.f32 %v1185, %v1185
    %v2728 = vmul.f32 %v1186, %v1186
    %v2729 = vmul.f32 %v1187, %v1187
    %v2730 = vmul.f32 %v1188, %v1188
    %v2731 = vmul.f32 %v1189, %v1189
    %v2732 = vmul.f32 %v1190, %v1190
    %v2733 = vmul.f32 %v1191, %v1191
    %v2734 = vmul.f32 %v1192, %v1192
    %v2735 = vmul.f32 %v1193, %v1193
    %v2736 = vmul.f32 %v1194, %v1194
    %v2737 = vmul.f32 %v1195, %v1195
    %v2738 = vmul.f32 %v1196, %v1196
    %v2739 = vmul.f32 %v1197, %v1197
    %v2740 = vmul.f32 %v1198, %v1198
    %v2741 = vmul.f32 %v1199, %v1199
    %v2742 = vmul.f32 %v1200, %v1200
    %v2743 = vmul.f32 %v1201, %v1201
    %v2744 = vmul.f32 %v1202, %v1202
    %v2745 = vmul.f32 %v1203, %v1203
    %v2746 = vmul.f32 %v1204, %v1204
    %v2747 = vmul.f32 %v1205, %v1205
    %v2748 = vmul.f32 %v1206, %v1206
    %v2749 = vmul.f32 %v1207, %v1207
    %v2750 = vmul.f32 %v1208, %v1208
    %v2751 = vmul.f32 %v1209, %v1209
    %v2752 = vmul.f32 %v1210, %v1210
    %v2753 = vmul.f32 %v1211, %v1211
    %v2754 = vmul.f32 %v1212, %v1212
    %v2755 = vmul.f32 %v1213, %v1213
    %v2756 = vmul.f32 %v1214, %v1214
    %v2757 = vmul.f32 %v1215, %v1215
    %v2758 = vmul.f32 %v1216, %v1216
    %v2759 = vmul.f32 %v1217, %v1217
    %v2760 = vmul.f32 %v1218, %v1218
    %v2761 = vmul.f32 %v1219, %v1219
    %v2762 = vmul.f32 %v1220, %v1220
    %v2763 = vmul.f32 %v1221, %v1221
    %v2764 = vmul.f32 %v1222, %v1222
    %v2765 = vmul.f32 %v1223, %v1223
    %v2766 = vmul.f32 %v1224, %v1224
    %v2767 = vmul.f32 %v1225, %v1225
    %v2768 = vmul.f32 %v1226, %v1226
    %v2769 = vmul.f32 %v1227, %v1227
    %v2770 = vmul.f32 %v1228, %v1228
    %v2771 = vmul.f32 %v1229, %v1229
    %v2772 = vmul.f32 %v1230, %v1230
    %v2773 = vmul.f32 %v1231, %v1231
    %v2774 = vmul.f32 %v1232, %v1232
    %v2775 = vmul.f32 %v1233, %v1233
    %v2776 = vmul.f32 %v1234, %v1234
    %v2777 = vmul.f32 %v1235, %v1235
    %v2778 = vmul.f32 %v1236, %v1236
    %v2779 = vmul.f32 %v1237, %v1237
    %v2780 = vmul.f32 %v1238, %v1238
    %v2781 = vmul.f32 %v1239, %v1239
    %v2782 = vmul.f32 %v1240, %v1240
    %v2783 = vmul.f32 %v1241, %v1241
    %v2784 = vmul.f32 %v1242, %v1242
    %v2785 = vmul.f32 %v1243, %v1243
    %v2786 = vmul.f32 %v1244, %v1244
    %v2787 = vmul.f32 %v1245, %v1245
    %v2788 = vmul.f32 %v1246, %v1246
    %v2789 = vmul.f32 %v1247, %v1247
    %v2790 = vmul.f32 %v1248, %v1248
    %v2791 = vmul.f32 %v1249, %v1249
    %v2792 = vmul.f32 %v1250, %v1250
    %v2793 = vmul.f32 %v1251, %v1251
    %v2794 = vmul.f32 %v1252, %v1252
    %v2795 = vmul.f32 %v1253, %v1253
    %v2796 = vmul.f32 %v1254, %v1254
    %v2797 = vmul.f32 %v1255, %v1255
    %v2798 = vmul.f32 %v1256, %v1256
    %v2799 = vmul.f32 %v1257, %v1257
    %v2800 = vmul.f32 %v1258, %v1258
    %v2801 = vmul.f32 %v1259, %v1259
    %v2802 = vmul.f32 %v1260, %v1260
    %v2803 = vmul.f32 %v1261, %v1261
    %v2804 = vmul.f32 %v1262, %v1262
    %v2805 = vmul.f32 %v1263, %v1263
    %v2806 = vmul.f32 %v1264, %v1264
    %v2807 = vmul.f32 %v1265, %v1265
    %v2808 = vmul.f32 %v1266, %v1266
    %v2809 = vmul.f32 %v1267, %v1267
    %v2810 = vmul.f32 %v1268, %v1268
    %v2811 = vmul.f32 %v1269, %v1269
    %v2812 = vmul.f32 %v1270, %v1270
    %v2813 = vmul.f32 %v1271, %v1271
    %v2814 = vmul.f32 %v1272, %v1272
    %v2815 = vmul.f32 %v1273, %v1273
    %v2816 = vmul.f32 %v1274, %v1274
    %v2817 = vmul.f32 %v1275, %v1275
    %v2818 = vmul.f32 %v1276, %v1276
    %v2819 = vmul.f32 %v1277, %v1277
    %v2820 = vmul.f32 %v1278, %v1278
    %v2821 = vmul.f32 %v1279, %v1279
    %v2822 = vmul.f32 %v1280, %v1280
    %v2823 = vmul.f32 %v1281, %v1281
    %v2824 = vmul.f32 %v1282, %v1282
    %v2825 = vmul.f32 %v1283, %v1283
    %v2826 = vmul.f32 %v1284, %v1284
    %v2827 = vmul.f32 %v1285, %v1285
    %v2828 = vmul.f32 %v1286, %v1286
    %v2829 = vmul.f32 %v1287, %v1287
    %v2830 = vmul.f32 %v1288, %v1288
    %v2831 = vmul.f32 %v1289, %v1289
    %v2832 = vmul.f32 %v1290, %v1290
    %v2833 = vmul.f32 %v1291, %v1291
    %v2834 = vmul.f32 %v1292, %v1292
    %v2835 = vmul.f32 %v1293, %v1293
    %v2836 = vmul.f32 %v1294, %v1294
    %v2837 = vmul.f32 %v1295, %v1295
    %v2838 = vmul.f32 %v1296, %v1296
    %v2839 = vmul.f32 %v1297, %v1297
    %v2840 = vmul.f32 %v1298, %v1298
    %v2841 = vmul.f32 %v1299, %v1299
    %v2842 = vmul.f32 %v1300, %v1300
    %v2843 = vmul.f32 %v1301, %v1301
    %v2844 = vmul.f32 %v1302, %v1302
    %v2845 = vmul.f32 %v1303, %v1303
    %v2846 = vsub.f32 %v2332, %v2589
    %v2847 = vsub.f32 %v2333, %v2590
    %v2848 = vsub.f32 %v2334, %v2591
    %v2849 = vsub.f32 %v2335, %v2592
    %v2850 = vsub.f32 %v2336, %v2593
    %v2851 = vsub.f32 %v2337, %v2594
    %v2852 = vsub.f32 %v2338, %v2595
    %v2853 = vsub.f32 %v2339, %v2596
    %v2854 = vsub.f32 %v2340, %v2597
    %v2855 = vsub.f32 %v2341, %v2598
    %v2856 = vsub.f32 %v2342, %v2599
    %v2857 = vsub.f32 %v2343, %v2600
    %v2858 = vsub.f32 %v2344, %v2601
    %v2859 = vsub.f32 %v2345, %v2602
    %v2860 = vsub.f32 %v2346, %v2603
    %v2861 = vsub.f32 %v2347, %v2604
    %v2862 = vsub.f32 %v2348, %v2605
    %v2863 = vsub.f32 %v2349, %v2606
    %v2864 = vsub.f32 %v2350, %v2607
    %v2865 = vsub.f32 %v2351, %v2608
    %v2866 = vsub.f32 %v2352, %v2609
    %v2867 = vsub.f32 %v2353, %v2610
    %v2868 = vsub.f32 %v2354, %v2611
    %v2869 = vsub.f32 %v2355, %v2612
    %v2870 = vsub.f32 %v2356, %v2613
    %v2871 = vsub.f32 %v2357, %v2614
    %v2872 = vsub.f32 %v2358, %v2615
    %v2873 = vsub.f32 %v2359, %v2616
    %v2874 = vsub.f32 %v2360, %v2617
    %v2875 = vsub.f32 %v2361, %v2618
    %v2876 = vsub.f32 %v2362, %v2619
    %v2877 = vsub.f32 %v2363, %v2620
    %v2878 = vsub.f32 %v2364, %v2621
    %v2879 = vsub.f32 %v2365, %v2622
    %v2880 = vsub.f32 %v2366, %v2623
    %v2881 = vsub.f32 %v2367, %v2624
    %v2882 = vsub.f32 %v2368, %v2625
    %v2883 = vsub.f32 %v2369, %v2626
    %v2884 = vsub.f32 %v2370, %v2627
    %v2885 = vsub.f32 %v2371, %v2628
    %v2886 = vsub.f32 %v2372, %v2629
    %v2887 = vsub.f32 %v2373, %v2630
    %v2888 = vsub.f32 %v2374, %v2631
    %v2889 = vsub.f32 %v2375, %v2632
    %v2890 = vsub.f32 %v2376, %v2633
    %v2891 = vsub.f32 %v2377, %v2634
    %v2892 = vsub.f32 %v2378, %v2635
    %v2893 = vsub.f32 %v2379, %v2636
    %v2894 = vsub.f32 %v2380, %v2637
    %v2895 = vsub.f32 %v2381, %v2638
    %v2896 = vsub.f32 %v2382, %v2639
    %v2897 = vsub.f32 %v2383, %v2640
    %v2898 = vsub.f32 %v2384, %v2641
    %v2899 = vsub.f32 %v2385, %v2642
    %v2900 = vsub.f32 %v2386, %v2643
    %v2901 = vsub.f32 %v2387, %v2644
    %v2902 = vsub.f32 %v2388, %v2645
    %v2903 = vsub.f32 %v2389, %v2646
    %v2904 = vsub.f32 %v2390, %v2647
    %v2905 = vsub.f32 %v2391, %v2648
    %v2906 = vsub.f32 %v2392, %v2649
    %v2907 = vsub.f32 %v2393, %v2650
    %v2908 = vsub.f32 %v2394, %v2651
    %v2909 = vsub.f32 %v2395, %v2652
    %v2910 = vsub.f32 %v2396, %v2653
    %v2911 = vsub.f32 %v2397, %v2654
    %v2912 = vsub.f32 %v2398, %v2655
    %v2913 = vsub.f32 %v2399, %v2656
    %v2914 = vsub.f32 %v2400, %v2657
    %v2915 = vsub.f32 %v2401, %v2658
    %v2916 = vsub.f32 %v2402, %v2659
    %v2917 = vsub.f32 %v2403, %v2660
    %v2918 = vsub.f32 %v2404, %v2661
    %v2919 = vsub.f32 %v2405, %v2662
    %v2920 = vsub.f32 %v2406, %v2663
    %v2921 = vsub.f32 %v2407, %v2664
    %v2922 = vsub.f32 %v2408, %v2665
    %v2923 = vsub.f32 %v2409, %v2666
    %v2924 = vsub.f32 %v2410, %v2667
    %v2925 = vsub.f32 %v2411, %v2668
    %v2926 = vsub.f32 %v2412, %v2669
    %v2927 = vsub.f32 %v2413, %v2670
    %v2928 = vsub.f32 %v2414, %v2671
    %v2929 = vsub.f32 %v2415, %v2672
    %v2930 = vsub.f32 %v2416, %v2673
    %v2931 = vsub.f32 %v2417, %v2674
    %v2932 = vsub.f32 %v2418, %v2675
    %v2933 = vsub.f32 %v2419, %v2676
    %v2934 = vsub.f32 %v2420, %v2677
    %v2935 = vsub.f32 %v2421, %v2678
    %v2936 = vsub.f32 %v2422, %v2679
    %v2937 = vsub.f32 %v2423, %v2680
    %v2938 = vsub.f32 %v2424, %v2681
    %v2939 = vsub.f32 %v2425, %v2682
    %v2940 = vsub.f32 %v2426, %v2683
    %v2941 = vsub.f32 %v2427, %v2684
    %v2942 = vsub.f32 %v2428, %v2685
    %v2943 = vsub.f32 %v2429, %v2686
    %v2944 = vsub.f32 %v2430, %v2687
    %v2945 = vsub.f32 %v2431, %v2688
    %v2946 = vsub.f32 %v2432, %v2689
    %v2947 = vsub.f32 %v2433, %v2690
    %v2948 = vsub.f32 %v2434, %v2691
    %v2949 = vsub.f32 %v2435, %v2692
    %v2950 = vsub.f32 %v2436, %v2693
    %v2951 = vsub.f32 %v2437, %v2694
    %v2952 = vsub.f32 %v2438, %v2695
    %v2953 = vsub.f32 %v2439, %v2696
    %v2954 = vsub.f32 %v2440, %v2697
    %v2955 = vsub.f32 %v2441, %v2698
    %v2956 = vsub.f32 %v2442, %v2699
    %v2957 = vsub.f32 %v2443, %v2700
    %v2958 = vsub.f32 %v2444, %v2701
    %v2959 = vsub.f32 %v2445, %v2702
    %v2960 = vsub.f32 %v2446, %v2703
    %v2961 = vsub.f32 %v2447, %v2704
    %v2962 = vsub.f32 %v2448, %v2705
    %v2963 = vsub.f32 %v2449, %v2706
    %v2964 = vsub.f32 %v2450, %v2707
    %v2965 = vsub.f32 %v2451, %v2708
    %v2966 = vsub.f32 %v2452, %v2709
    %v2967 = vsub.f32 %v2453, %v2710
    %v2968 = vsub.f32 %v2454, %v2711
    %v2969 = vsub.f32 %v2455, %v2712
    %v2970 = vsub.f32 %v2456, %v2713
    %v2971 = vsub.f32 %v2457, %v2714
    %v2972 = vsub.f32 %v2458, %v2715
    %v2973 = vsub.f32 %v2459, %v2716
    %v2974 = vsub.f32 %v2460, %v2717
    %v2975 = vsub.f32 %v2461, %v2718
    %v2976 = vsub.f32 %v2462, %v2719
    %v2977 = vsub.f32 %v2463, %v2720
    %v2978 = vsub.f32 %v2464, %v2721
    %v2979 = vsub.f32 %v2465, %v2722
    %v2980 = vsub.f32 %v2466, %v2723
    %v2981 = vsub.f32 %v2467, %v2724
    %v2982 = vsub.f32 %v2468, %v2725
    %v2983 = vsub.f32 %v2469, %v2726
    %v2984 = vsub.f32 %v2470, %v2727
    %v2985 = vsub.f32 %v2471, %v2728
    %v2986 = vsub.f32 %v2472, %v2729
    %v2987 = vsub.f32 %v2473, %v2730
    %v2988 = vsub.f32 %v2474, %v2731
    %v2989 = vsub.f32 %v2475, %v2732
    %v2990 = vsub.f32 %v2476, %v2733
    %v2991 = vsub.f32 %v2477, %v2734
    %v2992 = vsub.f32 %v2478, %v2735
    %v2993 = vsub.f32 %v2479, %v2736
    %v2994 = vsub.f32 %v2480, %v2737
    %v2995 = vsub.f32 %v2481, %v2738
    %v2996 = vsub.f32 %v2482, %v2739
    %v2997 = vsub.f32 %v2483, %v2740
    %v2998 = vsub.f32 %v2484, %v2741
    %v2999 = vsub.f32 %v2485, %v2742
    %v3000 = vsub.f32 %v2486, %v2743
    %v3001 = vsub.f32 %v2487, %v2744
    %v3002 = vsub.f32 %v2488, %v2745
    %v3003 = vsub.f32 %v2489, %v2746
    %v3004 = vsub.f32 %v2490, %v2747
    %v3005 = vsub.f32 %v2491, %v2748
    %v3006 = vsub.f32 %v2492, %v2749
    %v3007 = vsub.f32 %v2493, %v2750
    %v3008 = vsub.f32 %v2494, %v2751
    %v3009 = vsub.f32 %v2495, %v2752
    %v3010 = vsub.f32 %v2496, %v2753
    %v3011 = vsub.f32 %v2497, %v2754
    %v3012 = vsub.f32 %v2498, %v2755
    %v3013 = vsub.f32 %v2499, %v2756
    %v3014 = vsub.f32 %v2500, %v2757
    %v3015 = vsub.f32 %v2501, %v2758
    %v3016 = vsub.f32 %v2502, %v2759
    %v3017 = vsub.f32 %v2503, %v2760
    %v3018 = vsub.f32 %v2504, %v2761
    %v3019 = vsub.f32 %v2505, %v2762
    %v3020 = vsub.f32 %v2506, %v2763
    %v3021 = vsub.f32 %v2507, %v2764
    %v3022 = vsub.f32 %v2508, %v2765
    %v3023 = vsub.f32 %v2509, %v2766
    %v3024 = vsub.f32 %v2510, %v2767
    %v3025 = vsub.f32 %v2511, %v2768
    %v3026 = vsub.f32 %v2512, %v2769
    %v3027 = vsub.f32 %v2513, %v2770
    %v3028 = vsub.f32 %v2514, %v2771
    %v3029 = vsub.f32 %v2515, %v2772
    %v3030 = vsub.f32 %v2516, %v2773
    %v3031 = vsub.f32 %v2517, %v2774
    %v3032 = vsub.f32 %v2518, %v2775
    %v3033 = vsub.f32 %v2519, %v2776
    %v3034 = vsub.f32 %v2520, %v2777
    %v3035 = vsub.f32 %v2521, %v2778
    %v3036 = vsub.f32 %v2522, %v2779
    %v3037 = vsub.f32 %v2523, %v2780
    %v3038 = vsub.f32 %v2524, %v2781
    %v3039 = vsub.f32 %v2525, %v2782
    %v3040 = vsub.f32 %v2526, %v2783
    %v3041 = vsub.f32 %v2527, %v2784
    %v3042 = vsub.f32 %v2528, %v2785
    %v3043 = vsub.f32 %v2529, %v2786
    %v3044 = vsub.f32 %v2530, %v2787
    %v3045 = vsub.f32 %v2531, %v2788
    %v3046 = vsub.f32 %v2532, %v2789
    %v3047 = vsub.f32 %v2533, %v2790
    %v3048 = vsub.f32 %v2534, %v2791
    %v3049 = vsub.f32 %v2535, %v2792
    %v3050 = vsub.f32 %v2536, %v2793
    %v3051 = vsub.f32 %v2537, %v2794
    %v3052 = vsub.f32 %v2538, %v2795
    %v3053 = vsub.f32 %v2539, %v2796
    %v3054 = vsub.f32 %v2540, %v2797
    %v3055 = vsub.f32 %v2541, %v2798
    %v3056 = vsub.f32 %v2542, %v2799
    %v3057 = vsub.f32 %v2543, %v2800
    %v3058 = vsub.f32 %v2544, %v2801
    %v3059 = vsub.f32 %v2545, %v2802
    %v3060 = vsub.f32 %v2546, %v2803
    %v3061 = vsub.f32 %v2547, %v2804
    %v3062 = vsub.f32 %v2548, %v2805
    %v3063 = vsub.f32 %v2549, %v2806
    %v3064 = vsub.f32 %v2550, %v2807
    %v3065 = vsub.f32 %v2551, %v2808
    %v3066 = vsub.f32 %v2552, %v2809
    %v3067 = vsub.f32 %v2553, %v2810
    %v3068 = vsub.f32 %v2554, %v2811
    %v3069 = vsub.f32 %v2555, %v2812
    %v3070 = vsub.f32 %v2556, %v2813
    %v3071 = vsub.f32 %v2557, %v2814
    %v3072 = vsub.f32 %v2558, %v2815
    %v3073 = vsub.f32 %v2559, %v2816
    %v3074 = vsub.f32 %v2560, %v2817
    %v3075 = vsub.f32 %v2561, %v2818
    %v3076 = vsub.f32 %v2562, %v2819
    %v3077 = vsub.f32 %v2563, %v2820
    %v3078 = vsub.f32 %v2564, %v2821
    %v3079 = vsub.f32 %v2565, %v2822
    %v3080 = vsub.f32 %v2566, %v2823
    %v3081 = vsub.f32 %v2567, %v2824
    %v3082 = vsub.f32 %v2568, %v2825
    %v3083 = vsub.f32 %v2569, %v2826
    %v3084 = vsub.f32 %v2570, %v2827
    %v3085 = vsub.f32 %v2571, %v2828
    %v3086 = vsub.f32 %v2572, %v2829
    %v3087 = vsub.f32 %v2573, %v2830
    %v3088 = vsub.f32 %v2574, %v2831
    %v3089 = vsub.f32 %v2575, %v2832
    %v3090 = vsub.f32 %v2576, %v2833
    %v3091 = vsub.f32 %v2577, %v2834
    %v3092 = vsub.f32 %v2578, %v2835
    %v3093 = vsub.f32 %v2579, %v2836
    %v3094 = vsub.f32 %v2580, %v2837
    %v3095 = vsub.f32 %v2581, %v2838
    %v3096 = vsub.f32 %v2582, %v2839
    %v3097 = vsub.f32 %v2583, %v2840
    %v3098 = vsub.f32 %v2584, %v2841
    %v3099 = vsub.f32 %v2585, %v2842
    %v3100 = vsub.f32 %v2586, %v2843
    %v3101 = vsub.f32 %v2587, %v2844
    %v3102 = vsub.f32 %v2588, %v2845
    %v3103 = vmax.f32 %v2846, 0.0
    %v3104 = vmax.f32 %v2847, 0.0
    %v3105 = vmax.f32 %v2848, 0.0
    %v3106 = vmax.f32 %v2849, 0.0
    %v3107 = vmax.f32 %v2850, 0.0
    %v3108 = vmax.f32 %v2851, 0.0
    %v3109 = vmax.f32 %v2852, 0.0
    %v3110 = vmax.f32 %v2853, 0.0
    %v3111 = vmax.f32 %v2854, 0.0
    %v3112 = vmax.f32 %v2855, 0.0
    %v3113 = vmax.f32 %v2856, 0.0
    %v3114 = vmax.f32 %v2857, 0.0
    %v3115 = vmax.f32 %v2858, 0.0
    %v3116 = vmax.f32 %v2859, 0.0
    %v3117 = vmax.f32 %v2860, 0.0
    %v3118 = vmax.f32 %v2861, 0.0
    %v3119 = vmax.f32 %v2862, 0.0
    %v3120 = vmax.f32 %v2863, 0.0
    %v3121 = vmax.f32 %v2864, 0.0
    %v3122 = vmax.f32 %v2865, 0.0
    %v3123 = vmax.f32 %v2866, 0.0
    %v3124 = vmax.f32 %v2867, 0.0
    %v3125 = vmax.f32 %v2868, 0.0
    %v3126 = vmax.f32 %v2869, 0.0
    %v3127 = vmax.f32 %v2870, 0.0
    %v3128 = vmax.f32 %v2871, 0.0
    %v3129 = vmax.f32 %v2872, 0.0
    %v3130 = vmax.f32 %v2873, 0.0
    %v3131 = vmax.f32 %v2874, 0.0
    %v3132 = vmax.f32 %v2875, 0.0
    %v3133 = vmax.f32 %v2876, 0.0
    %v3134 = vmax.f32 %v2877, 0.0
    %v3135 = vmax.f32 %v2878, 0.0
    %v3136 = vmax.f32 %v2879, 0.0
    %v3137 = vmax.f32 %v2880, 0.0
    %v3138 = vmax.f32 %v2881, 0.0
    %v3139 = vmax.f32 %v2882, 0.0
    %v3140 = vmax.f32 %v2883, 0.0
    %v3141 = vmax.f32 %v2884, 0.0
    %v3142 = vmax.f32 %v2885, 0.0
    %v3143 = vmax.f32 %v2886, 0.0
    %v3144 = vmax.f32 %v2887, 0.0
    %v3145 = vmax.f32 %v2888, 0.0
    %v3146 = vmax.f32 %v2889, 0.0
    %v3147 = vmax.f32 %v2890, 0.0
    %v3148 = vmax.f32 %v2891, 0.0
    %v3149 = vmax.f32 %v2892, 0.0
    %v3150 = vmax.f32 %v2893, 0.0
    %v3151 = vmax.f32 %v2894, 0.0
    %v3152 = vmax.f32 %v2895, 0.0
    %v3153 = vmax.f32 %v2896, 0.0
    %v3154 = vmax.f32 %v2897, 0.0
    %v3155 = vmax.f32 %v2898, 0.0
    %v3156 = vmax.f32 %v2899, 0.0
    %v3157 = vmax.f32 %v2900, 0.0
    %v3158 = vmax.f32 %v2901, 0.0
    %v3159 = vmax.f32 %v2902, 0.0
    %v3160 = vmax.f32 %v2903, 0.0
    %v3161 = vmax.f32 %v2904, 0.0
    %v3162 = vmax.f32 %v2905, 0.0
    %v3163 = vmax.f32 %v2906, 0.0
    %v3164 = vmax.f32 %v2907, 0.0
    %v3165 = vmax.f32 %v2908, 0.0
    %v3166 = vmax.f32 %v2909, 0.0
    %v3167 = vmax.f32 %v2910, 0.0
    %v3168 = vmax.f32 %v2911, 0.0
    %v3169 = vmax.f32 %v2912, 0.0
    %v3170 = vmax.f32 %v2913, 0.0
    %v3171 = vmax.f32 %v2914, 0.0
    %v3172 = vmax.f32 %v2915, 0.0
    %v3173 = vmax.f32 %v2916, 0.0
    %v3174 = vmax.f32 %v2917, 0.0
    %v3175 = vmax.f32 %v2918, 0.0
    %v3176 = vmax.f32 %v2919, 0.0
    %v3177 = vmax.f32 %v2920, 0.0
    %v3178 = vmax.f32 %v2921, 0.0
    %v3179 = vmax.f32 %v2922, 0.0
    %v3180 = vmax.f32 %v2923, 0.0
    %v3181 = vmax.f32 %v2924, 0.0
    %v3182 = vmax.f32 %v2925, 0.0
    %v3183 = vmax.f32 %v2926, 0.0
    %v3184 = vmax.f32 %v2927, 0.0
    %v3185 = vmax.f32 %v2928, 0.0
    %v3186 = vmax.f32 %v2929, 0.0
    %v3187 = vmax.f32 %v2930, 0.0
    %v3188 = vmax.f32 %v2931, 0.0
    %v3189 = vmax.f32 %v2932, 0.0
    %v3190 = vmax.f32 %v2933, 0.0
    %v3191 = vmax.f32 %v2934, 0.0
    %v3192 = vmax.f32 %v2935, 0.0
    %v3193 = vmax.f32 %v2936, 0.0
    %v3194 = vmax.f32 %v2937, 0.0
    %v3195 = vmax.f32 %v2938, 0.0
    %v3196 = vmax.f32 %v2939, 0.0
    %v3197 = vmax.f32 %v2940, 0.0
    %v3198 = vmax.f32 %v2941, 0.0
    %v3199 = vmax.f32 %v2942, 0.0
    %v3200 = vmax.f32 %v2943, 0.0
    %v3201 = vmax.f32 %v2944, 0.0
    %v3202 = vmax.f32 %v2945, 0.0
    %v3203 = vmax.f32 %v2946, 0.0
    %v3204 = vmax.f32 %v2947, 0.0
    %v3205 = vmax.f32 %v2948, 0.0
    %v3206 = vmax.f32 %v2949, 0.0
    %v3207 = vmax.f32 %v2950, 0.0
    %v3208 = vmax.f32 %v2951, 0.0
    %v3209 = vmax.f32 %v2952, 0.0
    %v3210 = vmax.f32 %v2953, 0.0
    %v3211 = vmax.f32 %v2954, 0.0
    %v3212 = vmax.f32 %v2955, 0.0
    %v3213 = vmax.f32 %v2956, 0.0
    %v3214 = vmax.f32 %v2957, 0.0
    %v3215 = vmax.f32 %v2958, 0.0
    %v3216 = vmax.f32 %v2959, 0.0
    %v3217 = vmax.f32 %v2960, 0.0
    %v3218 = vmax.f32 %v2961, 0.0
    %v3219 = vmax.f32 %v2962, 0.0
    %v3220 = vmax.f32 %v2963, 0.0
    %v3221 = vmax.f32 %v2964, 0.0
    %v3222 = vmax.f32 %v2965, 0.0
    %v3223 = vmax.f32 %v2966, 0.0
    %v3224 = vmax.f32 %v2967, 0.0
    %v3225 = vmax.f32 %v2968, 0.0
    %v3226 = vmax.f32 %v2969, 0.0
    %v3227 = vmax.f32 %v2970, 0.0
    %v3228 = vmax.f32 %v2971, 0.0
    %v3229 = vmax.f32 %v2972, 0.0
    %v3230 = vmax.f32 %v2973, 0.0
    %v3231 = vmax.f32 %v2974, 0.0
    %v3232 = vmax.f32 %v2975, 0.0
    %v3233 = vmax.f32 %v2976, 0.0
    %v3234 = vmax.f32 %v2977, 0.0
    %v3235 = vmax.f32 %v2978, 0.0
    %v3236 = vmax.f32 %v2979, 0.0
    %v3237 = vmax.f32 %v2980, 0.0
    %v3238 = vmax.f32 %v2981, 0.0
    %v3239 = vmax.f32 %v2982, 0.0
    %v3240 = vmax.f32 %v2983, 0.0
    %v3241 = vmax.f32 %v2984, 0.0
    %v3242 = vmax.f32 %v2985, 0.0
    %v3243 = vmax.f32 %v2986, 0.0
    %v3244 = vmax.f32 %v2987, 0.0
    %v3245 = vmax.f32 %v2988, 0.0
    %v3246 = vmax.f32 %v2989, 0.0
    %v3247 = vmax.f32 %v2990, 0.0
    %v3248 = vmax.f32 %v2991, 0.0
    %v3249 = vmax.f32 %v2992, 0.0
    %v3250 = vmax.f32 %v2993, 0.0
    %v3251 = vmax.f32 %v2994, 0.0
    %v3252 = vmax.f32 %v2995, 0.0
    %v3253 = vmax.f32 %v2996, 0.0
    %v3254 = vmax.f32 %v2997, 0.0
    %v3255 = vmax.f32 %v2998, 0.0
    %v3256 = vmax.f32 %v2999, 0.0
    %v3257 = vmax.f32 %v3000, 0.0
    %v3258 = vmax.f32 %v3001, 0.0
    %v3259 = vmax.f32 %v3002, 0.0
    %v3260 = vmax.f32 %v3003, 0.0
    %v3261 = vmax.f32 %v3004, 0.0
    %v3262 = vmax.f32 %v3005, 0.0
    %v3263 = vmax.f32 %v3006, 0.0
    %v3264 = vmax.f32 %v3007, 0.0
    %v3265 = vmax.f32 %v3008, 0.0
    %v3266 = vmax.f32 %v3009, 0.0
    %v3267 = vmax.f32 %v3010, 0.0
    %v3268 = vmax.f32 %v3011, 0.0
    %v3269 = vmax.f32 %v3012, 0.0
    %v3270 = vmax.f32 %v3013, 0.0
    %v3271 = vmax.f32 %v3014, 0.0
    %v3272 = vmax.f32 %v3015, 0.0
    %v3273 = vmax.f32 %v3016, 0.0
    %v3274 = vmax.f32 %v3017, 0.0
    %v3275 = vmax.f32 %v3018, 0.0
    %v3276 = vmax.f32 %v3019, 0.0
    %v3277 = vmax.f32 %v3020, 0.0
    %v3278 = vmax.f32 %v3021, 0.0
    %v3279 = vmax.f32 %v3022, 0.0
    %v3280 = vmax.f32 %v3023, 0.0
    %v3281 = vmax.f32 %v3024, 0.0
    %v3282 = vmax.f32 %v3025, 0.0
    %v3283 = vmax.f32 %v3026, 0.0
    %v3284 = vmax.f32 %v3027, 0.0
    %v3285 = vmax.f32 %v3028, 0.0
    %v3286 = vmax.f32 %v3029, 0.0
    %v3287 = vmax.f32 %v3030, 0.0
    %v3288 = vmax.f32 %v3031, 0.0
    %v3289 = vmax.f32 %v3032, 0.0
    %v3290 = vmax.f32 %v3033, 0.0
    %v3291 = vmax.f32 %v3034, 0.0
    %v3292 = vmax.f32 %v3035, 0.0
    %v3293 = vmax.f32 %v3036, 0.0
    %v3294 = vmax.f32 %v3037, 0.0
    %v3295 = vmax.f32 %v3038, 0.0
    %v3296 = vmax.f32 %v3039, 0.0
    %v3297 = vmax.f32 %v3040, 0.0
    %v3298 = vmax.f32 %v3041, 0.0
    %v3299 = vmax.f32 %v3042, 0.0
    %v3300 = vmax.f32 %v3043, 0.0
    %v3301 = vmax.f32 %v3044, 0.0
    %v3302 = vmax.f32 %v3045, 0.0
    %v3303 = vmax.f32 %v3046, 0.0
    %v3304 = vmax.f32 %v3047, 0.0
    %v3305 = vmax.f32 %v3048, 0.0
    %v3306 = vmax.f32 %v3049, 0.0
    %v3307 = vmax.f32 %v3050, 0.0
    %v3308 = vmax.f32 %v3051, 0.0
    %v3309 = vmax.f32 %v3052, 0.0
    %v3310 = vmax.f32 %v3053, 0.0
    %v3311 = vmax.f32 %v3054, 0.0
    %v3312 = vmax.f32 %v3055, 0.0
    %v3313 = vmax.f32 %v3056, 0.0
    %v3314 = vmax.f32 %v3057, 0.0
    %v3315 = vmax.f32 %v3058, 0.0
    %v3316 = vmax.f32 %v3059, 0.0
    %v3317 = vmax.f32 %v3060, 0.0
    %v3318 = vmax.f32 %v3061, 0.0
    %v3319 = vmax.f32 %v3062, 0.0
    %v3320 = vmax.f32 %v3063, 0.0
    %v3321 = vmax.f32 %v3064, 0.0
    %v3322 = vmax.f32 %v3065, 0.0
    %v3323 = vmax.f32 %v3066, 0.0
    %v3324 = vmax.f32 %v3067, 0.0
    %v3325 = vmax.f32 %v3068, 0.0
    %v3326 = vmax.f32 %v3069, 0.0
    %v3327 = vmax.f32 %v3070, 0.0
    %v3328 = vmax.f32 %v3071, 0.0
    %v3329 = vmax.f32 %v3072, 0.0
    %v3330 = vmax.f32 %v3073, 0.0
    %v3331 = vmax.f32 %v3074, 0.0
    %v3332 = vmax.f32 %v3075, 0.0
    %v3333 = vmax.f32 %v3076, 0.0
    %v3334 = vmax.f32 %v3077, 0.0
    %v3335 = vmax.f32 %v3078, 0.0
    %v3336 = vmax.f32 %v3079, 0.0
    %v3337 = vmax.f32 %v3080, 0.0
    %v3338 = vmax.f32 %v3081, 0.0
    %v3339 = vmax.f32 %v3082, 0.0
    %v3340 = vmax.f32 %v3083, 0.0
    %v3341 = vmax.f32 %v3084, 0.0
    %v3342 = vmax.f32 %v3085, 0.0
    %v3343 = vmax.f32 %v3086, 0.0
    %v3344 = vmax.f32 %v3087, 0.0
    %v3345 = vmax.f32 %v3088, 0.0
    %v3346 = vmax.f32 %v3089, 0.0
    %v3347 = vmax.f32 %v3090, 0.0
    %v3348 = vmax.f32 %v3091, 0.0
    %v3349 = vmax.f32 %v3092, 0.0
    %v3350 = vmax.f32 %v3093, 0.0
    %v3351 = vmax.f32 %v3094, 0.0
    %v3352 = vmax.f32 %v3095, 0.0
    %v3353 = vmax.f32 %v3096, 0.0
    %v3354 = vmax.f32 %v3097, 0.0
    %v3355 = vmax.f32 %v3098, 0.0
    %v3356 = vmax.f32 %v3099, 0.0
    %v3357 = vmax.f32 %v3100, 0.0
    %v3358 = vmax.f32 %v3101, 0.0
    %v3359 = vmax.f32 %v3102, 0.0
    %v3360 = vadd.f32 %v3103, 1e-06
    %v3361 = vadd.f32 %v3104, 1e-06
    %v3362 = vadd.f32 %v3105, 1e-06
    %v3363 = vadd.f32 %v3106, 1e-06
    %v3364 = vadd.f32 %v3107, 1e-06
    %v3365 = vadd.f32 %v3108, 1e-06
    %v3366 = vadd.f32 %v3109, 1e-06
    %v3367 = vadd.f32 %v3110, 1e-06
    %v3368 = vadd.f32 %v3111, 1e-06
    %v3369 = vadd.f32 %v3112, 1e-06
    %v3370 = vadd.f32 %v3113, 1e-06
    %v3371 = vadd.f32 %v3114, 1e-06
    %v3372 = vadd.f32 %v3115, 1e-06
    %v3373 = vadd.f32 %v3116, 1e-06
    %v3374 = vadd.f32 %v3117, 1e-06
    %v3375 = vadd.f32 %v3118, 1e-06
    %v3376 = vadd.f32 %v3119, 1e-06
    %v3377 = vadd.f32 %v3120, 1e-06
    %v3378 = vadd.f32 %v3121, 1e-06
    %v3379 = vadd.f32 %v3122, 1e-06
    %v3380 = vadd.f32 %v3123, 1e-06
    %v3381 = vadd.f32 %v3124, 1e-06
    %v3382 = vadd.f32 %v3125, 1e-06
    %v3383 = vadd.f32 %v3126, 1e-06
    %v3384 = vadd.f32 %v3127, 1e-06
    %v3385 = vadd.f32 %v3128, 1e-06
    %v3386 = vadd.f32 %v3129, 1e-06
    %v3387 = vadd.f32 %v3130, 1e-06
    %v3388 = vadd.f32 %v3131, 1e-06
    %v3389 = vadd.f32 %v3132, 1e-06
    %v3390 = vadd.f32 %v3133, 1e-06
    %v3391 = vadd.f32 %v3134, 1e-06
    %v3392 = vadd.f32 %v3135, 1e-06
    %v3393 = vadd.f32 %v3136, 1e-06
    %v3394 = vadd.f32 %v3137, 1e-06
    %v3395 = vadd.f32 %v3138, 1e-06
    %v3396 = vadd.f32 %v3139, 1e-06
    %v3397 = vadd.f32 %v3140, 1e-06
    %v3398 = vadd.f32 %v3141, 1e-06
    %v3399 = vadd.f32 %v3142, 1e-06
    %v3400 = vadd.f32 %v3143, 1e-06
    %v3401 = vadd.f32 %v3144, 1e-06
    %v3402 = vadd.f32 %v3145, 1e-06
    %v3403 = vadd.f32 %v3146, 1e-06
    %v3404 = vadd.f32 %v3147, 1e-06
    %v3405 = vadd.f32 %v3148, 1e-06
    %v3406 = vadd.f32 %v3149, 1e-06
    %v3407 = vadd.f32 %v3150, 1e-06
    %v3408 = vadd.f32 %v3151, 1e-06
    %v3409 = vadd.f32 %v3152, 1e-06
    %v3410 = vadd.f32 %v3153, 1e-06
    %v3411 = vadd.f32 %v3154, 1e-06
    %v3412 = vadd.f32 %v3155, 1e-06
    %v3413 = vadd.f32 %v3156, 1e-06
    %v3414 = vadd.f32 %v3157, 1e-06
    %v3415 = vadd.f32 %v3158, 1e-06
    %v3416 = vadd.f32 %v3159, 1e-06
    %v3417 = vadd.f32 %v3160, 1e-06
    %v3418 = vadd.f32 %v3161, 1e-06
    %v3419 = vadd.f32 %v3162, 1e-06
    %v3420 = vadd.f32 %v3163, 1e-06
    %v3421 = vadd.f32 %v3164, 1e-06
    %v3422 = vadd.f32 %v3165, 1e-06
    %v3423 = vadd.f32 %v3166, 1e-06
    %v3424 = vadd.f32 %v3167, 1e-06
    %v3425 = vadd.f32 %v3168, 1e-06
    %v3426 = vadd.f32 %v3169, 1e-06
    %v3427 = vadd.f32 %v3170, 1e-06
    %v3428 = vadd.f32 %v3171, 1e-06
    %v3429 = vadd.f32 %v3172, 1e-06
    %v3430 = vadd.f32 %v3173, 1e-06
    %v3431 = vadd.f32 %v3174, 1e-06
    %v3432 = vadd.f32 %v3175, 1e-06
    %v3433 = vadd.f32 %v3176, 1e-06
    %v3434 = vadd.f32 %v3177, 1e-06
    %v3435 = vadd.f32 %v3178, 1e-06
    %v3436 = vadd.f32 %v3179, 1e-06
    %v3437 = vadd.f32 %v3180, 1e-06
    %v3438 = vadd.f32 %v3181, 1e-06
    %v3439 = vadd.f32 %v3182, 1e-06
    %v3440 = vadd.f32 %v3183, 1e-06
    %v3441 = vadd.f32 %v3184, 1e-06
    %v3442 = vadd.f32 %v3185, 1e-06
    %v3443 = vadd.f32 %v3186, 1e-06
    %v3444 = vadd.f32 %v3187, 1e-06
    %v3445 = vadd.f32 %v3188, 1e-06
    %v3446 = vadd.f32 %v3189, 1e-06
    %v3447 = vadd.f32 %v3190, 1e-06
    %v3448 = vadd.f32 %v3191, 1e-06
    %v3449 = vadd.f32 %v3192, 1e-06
    %v3450 = vadd.f32 %v3193, 1e-06
    %v3451 = vadd.f32 %v3194, 1e-06
    %v3452 = vadd.f32 %v3195, 1e-06
    %v3453 = vadd.f32 %v3196, 1e-06
    %v3454 = vadd.f32 %v3197, 1e-06
    %v3455 = vadd.f32 %v3198, 1e-06
    %v3456 = vadd.f32 %v3199, 1e-06
    %v3457 = vadd.f32 %v3200, 1e-06
    %v3458 = vadd.f32 %v3201, 1e-06
    %v3459 = vadd.f32 %v3202, 1e-06
    %v3460 = vadd.f32 %v3203, 1e-06
    %v3461 = vadd.f32 %v3204, 1e-06
    %v3462 = vadd.f32 %v3205, 1e-06
    %v3463 = vadd.f32 %v3206, 1e-06
    %v3464 = vadd.f32 %v3207, 1e-06
    %v3465 = vadd.f32 %v3208, 1e-06
    %v3466 = vadd.f32 %v3209, 1e-06
    %v3467 = vadd.f32 %v3210, 1e-06
    %v3468 = vadd.f32 %v3211, 1e-06
    %v3469 = vadd.f32 %v3212, 1e-06
    %v3470 = vadd.f32 %v3213, 1e-06
    %v3471 = vadd.f32 %v3214, 1e-06
    %v3472 = vadd.f32 %v3215, 1e-06
    %v3473 = vadd.f32 %v3216, 1e-06
    %v3474 = vadd.f32 %v3217, 1e-06
    %v3475 = vadd.f32 %v3218, 1e-06
    %v3476 = vadd.f32 %v3219, 1e-06
    %v3477 = vadd.f32 %v3220, 1e-06
    %v3478 = vadd.f32 %v3221, 1e-06
    %v3479 = vadd.f32 %v3222, 1e-06
    %v3480 = vadd.f32 %v3223, 1e-06
    %v3481 = vadd.f32 %v3224, 1e-06
    %v3482 = vadd.f32 %v3225, 1e-06
    %v3483 = vadd.f32 %v3226, 1e-06
    %v3484 = vadd.f32 %v3227, 1e-06
    %v3485 = vadd.f32 %v3228, 1e-06
    %v3486 = vadd.f32 %v3229, 1e-06
    %v3487 = vadd.f32 %v3230, 1e-06
    %v3488 = vadd.f32 %v3231, 1e-06
    %v3489 = vadd.f32 %v3232, 1e-06
    %v3490 = vadd.f32 %v3233, 1e-06
    %v3491 = vadd.f32 %v3234, 1e-06
    %v3492 = vadd.f32 %v3235, 1e-06
    %v3493 = vadd.f32 %v3236, 1e-06
    %v3494 = vadd.f32 %v3237, 1e-06
    %v3495 = vadd.f32 %v3238, 1e-06
    %v3496 = vadd.f32 %v3239, 1e-06
    %v3497 = vadd.f32 %v3240, 1e-06
    %v3498 = vadd.f32 %v3241, 1e-06
    %v3499 = vadd.f32 %v3242, 1e-06
    %v3500 = vadd.f32 %v3243, 1e-06
    %v3501 = vadd.f32 %v3244, 1e-06
    %v3502 = vadd.f32 %v3245, 1e-06
    %v3503 = vadd.f32 %v3246, 1e-06
    %v3504 = vadd.f32 %v3247, 1e-06
    %v3505 = vadd.f32 %v3248, 1e-06
    %v3506 = vadd.f32 %v3249, 1e-06
    %v3507 = vadd.f32 %v3250, 1e-06
    %v3508 = vadd.f32 %v3251, 1e-06
    %v3509 = vadd.f32 %v3252, 1e-06
    %v3510 = vadd.f32 %v3253, 1e-06
    %v3511 = vadd.f32 %v3254, 1e-06
    %v3512 = vadd.f32 %v3255, 1e-06
    %v3513 = vadd.f32 %v3256, 1e-06
    %v3514 = vadd.f32 %v3257, 1e-06
    %v3515 = vadd.f32 %v3258, 1e-06
    %v3516 = vadd.f32 %v3259, 1e-06
    %v3517 = vadd.f32 %v3260, 1e-06
    %v3518 = vadd.f32 %v3261, 1e-06
    %v3519 = vadd.f32 %v3262, 1e-06
    %v3520 = vadd.f32 %v3263, 1e-06
    %v3521 = vadd.f32 %v3264, 1e-06
    %v3522 = vadd.f32 %v3265, 1e-06
    %v3523 = vadd.f32 %v3266, 1e-06
    %v3524 = vadd.f32 %v3267, 1e-06
    %v3525 = vadd.f32 %v3268, 1e-06
    %v3526 = vadd.f32 %v3269, 1e-06
    %v3527 = vadd.f32 %v3270, 1e-06
    %v3528 = vadd.f32 %v3271, 1e-06
    %v3529 = vadd.f32 %v3272, 1e-06
    %v3530 = vadd.f32 %v3273, 1e-06
    %v3531 = vadd.f32 %v3274, 1e-06
    %v3532 = vadd.f32 %v3275, 1e-06
    %v3533 = vadd.f32 %v3276, 1e-06
    %v3534 = vadd.f32 %v3277, 1e-06
    %v3535 = vadd.f32 %v3278, 1e-06
    %v3536 = vadd.f32 %v3279, 1e-06
    %v3537 = vadd.f32 %v3280, 1e-06
    %v3538 = vadd.f32 %v3281, 1e-06
    %v3539 = vadd.f32 %v3282, 1e-06
    %v3540 = vadd.f32 %v3283, 1e-06
    %v3541 = vadd.f32 %v3284, 1e-06
    %v3542 = vadd.f32 %v3285, 1e-06
    %v3543 = vadd.f32 %v3286, 1e-06
    %v3544 = vadd.f32 %v3287, 1e-06
    %v3545 = vadd.f32 %v3288, 1e-06
    %v3546 = vadd.f32 %v3289, 1e-06
    %v3547 = vadd.f32 %v3290, 1e-06
    %v3548 = vadd.f32 %v3291, 1e-06
    %v3549 = vadd.f32 %v3292, 1e-06
    %v3550 = vadd.f32 %v3293, 1e-06
    %v3551 = vadd.f32 %v3294, 1e-06
    %v3552 = vadd.f32 %v3295, 1e-06
    %v3553 = vadd.f32 %v3296, 1e-06
    %v3554 = vadd.f32 %v3297, 1e-06
    %v3555 = vadd.f32 %v3298, 1e-06
    %v3556 = vadd.f32 %v3299, 1e-06
    %v3557 = vadd.f32 %v3300, 1e-06
    %v3558 = vadd.f32 %v3301, 1e-06
    %v3559 = vadd.f32 %v3302, 1e-06
    %v3560 = vadd.f32 %v3303, 1e-06
    %v3561 = vadd.f32 %v3304, 1e-06
    %v3562 = vadd.f32 %v3305, 1e-06
    %v3563 = vadd.f32 %v3306, 1e-06
    %v3564 = vadd.f32 %v3307, 1e-06
    %v3565 = vadd.f32 %v3308, 1e-06
    %v3566 = vadd.f32 %v3309, 1e-06
    %v3567 = vadd.f32 %v3310, 1e-06
    %v3568 = vadd.f32 %v3311, 1e-06
    %v3569 = vadd.f32 %v3312, 1e-06
    %v3570 = vadd.f32 %v3313, 1e-06
    %v3571 = vadd.f32 %v3314, 1e-06
    %v3572 = vadd.f32 %v3315, 1e-06
    %v3573 = vadd.f32 %v3316, 1e-06
    %v3574 = vadd.f32 %v3317, 1e-06
    %v3575 = vadd.f32 %v3318, 1e-06
    %v3576 = vadd.f32 %v3319, 1e-06
    %v3577 = vadd.f32 %v3320, 1e-06
    %v3578 = vadd.f32 %v3321, 1e-06
    %v3579 = vadd.f32 %v3322, 1e-06
    %v3580 = vadd.f32 %v3323, 1e-06
    %v3581 = vadd.f32 %v3324, 1e-06
    %v3582 = vadd.f32 %v3325, 1e-06
    %v3583 = vadd.f32 %v3326, 1e-06
    %v3584 = vadd.f32 %v3327, 1e-06
    %v3585 = vadd.f32 %v3328, 1e-06
    %v3586 = vadd.f32 %v3329, 1e-06
    %v3587 = vadd.f32 %v3330, 1e-06
    %v3588 = vadd.f32 %v3331, 1e-06
    %v3589 = vadd.f32 %v3332, 1e-06
    %v3590 = vadd.f32 %v3333, 1e-06
    %v3591 = vadd.f32 %v3334, 1e-06
    %v3592 = vadd.f32 %v3335, 1e-06
    %v3593 = vadd.f32 %v3336, 1e-06
    %v3594 = vadd.f32 %v3337, 1e-06
    %v3595 = vadd.f32 %v3338, 1e-06
    %v3596 = vadd.f32 %v3339, 1e-06
    %v3597 = vadd.f32 %v3340, 1e-06
    %v3598 = vadd.f32 %v3341, 1e-06
    %v3599 = vadd.f32 %v3342, 1e-06
    %v3600 = vadd.f32 %v3343, 1e-06
    %v3601 = vadd.f32 %v3344, 1e-06
    %v3602 = vadd.f32 %v3345, 1e-06
    %v3603 = vadd.f32 %v3346, 1e-06
    %v3604 = vadd.f32 %v3347, 1e-06
    %v3605 = vadd.f32 %v3348, 1e-06
    %v3606 = vadd.f32 %v3349, 1e-06
    %v3607 = vadd.f32 %v3350, 1e-06
    %v3608 = vadd.f32 %v3351, 1e-06
    %v3609 = vadd.f32 %v3352, 1e-06
    %v3610 = vadd.f32 %v3353, 1e-06
    %v3611 = vadd.f32 %v3354, 1e-06
    %v3612 = vadd.f32 %v3355, 1e-06
    %v3613 = vadd.f32 %v3356, 1e-06
    %v3614 = vadd.f32 %v3357, 1e-06
    %v3615 = vadd.f32 %v3358, 1e-06
    %v3616 = vadd.f32 %v3359, 1e-06
    %v3617 = vrsqrt.pop %v3360
    %v3618 = vmul.f32 %v3617, %v3360
    %v3619 = vmul.f32 %v3618, %v3617
    %v3620 = vmul.f32 0.5, %v3619
    %v3621 = vsub.f32 1.5, %v3620
    %v3622 = vmul.f32 %v3617, %v3621
    %vm3623 = vweird.f32 %v3360
    %vm3624 = vweird.f32 %v3617
    %vm3625 = vmor %vm3623, %vm3624
    %v3626 = vsel %vm3625, %v3617, %v3622
    %v3627 = vrsqrt.pop %v3361
    %v3628 = vmul.f32 %v3627, %v3361
    %v3629 = vmul.f32 %v3628, %v3627
    %v3630 = vmul.f32 0.5, %v3629
    %v3631 = vsub.f32 1.5, %v3630
    %v3632 = vmul.f32 %v3627, %v3631
    %vm3633 = vweird.f32 %v3361
    %vm3634 = vweird.f32 %v3627
    %vm3635 = vmor %vm3633, %vm3634
    %v3636 = vsel %vm3635, %v3627, %v3632
    %v3637 = vrsqrt.pop %v3362
    %v3638 = vmul.f32 %v3637, %v3362
    %v3639 = vmul.f32 %v3638, %v3637
    %v3640 = vmul.f32 0.5, %v3639
    %v3641 = vsub.f32 1.5, %v3640
    %v3642 = vmul.f32 %v3637, %v3641
    %vm3643 = vweird.f32 %v3362
    %vm3644 = vweird.f32 %v3637
    %vm3645 = vmor %vm3643, %vm3644
    %v3646 = vsel %vm3645, %v3637, %v3642
    %v3647 = vrsqrt.pop %v3363
    %v3648 = vmul.f32 %v3647, %v3363
    %v3649 = vmul.f32 %v3648, %v3647
    %v3650 = vmul.f32 0.5, %v3649
    %v3651 = vsub.f32 1.5, %v3650
    %v3652 = vmul.f32 %v3647, %v3651
    %vm3653 = vweird.f32 %v3363
    %vm3654 = vweird.f32 %v3647
    %vm3655 = vmor %vm3653, %vm3654
    %v3656 = vsel %vm3655, %v3647, %v3652
    %v3657 = vrsqrt.pop %v3364
    %v3658 = vmul.f32 %v3657, %v3364
    %v3659 = vmul.f32 %v3658, %v3657
    %v3660 = vmul.f32 0.5, %v3659
    %v3661 = vsub.f32 1.5, %v3660
    %v3662 = vmul.f32 %v3657, %v3661
    %vm3663 = vweird.f32 %v3364
    %vm3664 = vweird.f32 %v3657
    %vm3665 = vmor %vm3663, %vm3664
    %v3666 = vsel %vm3665, %v3657, %v3662
    %v3667 = vrsqrt.pop %v3365
    %v3668 = vmul.f32 %v3667, %v3365
    %v3669 = vmul.f32 %v3668, %v3667
    %v3670 = vmul.f32 0.5, %v3669
    %v3671 = vsub.f32 1.5, %v3670
    %v3672 = vmul.f32 %v3667, %v3671
    %vm3673 = vweird.f32 %v3365
    %vm3674 = vweird.f32 %v3667
    %vm3675 = vmor %vm3673, %vm3674
    %v3676 = vsel %vm3675, %v3667, %v3672
    %v3677 = vrsqrt.pop %v3366
    %v3678 = vmul.f32 %v3677, %v3366
    %v3679 = vmul.f32 %v3678, %v3677
    %v3680 = vmul.f32 0.5, %v3679
    %v3681 = vsub.f32 1.5, %v3680
    %v3682 = vmul.f32 %v3677, %v3681
    %vm3683 = vweird.f32 %v3366
    %vm3684 = vweird.f32 %v3677
    %vm3685 = vmor %vm3683, %vm3684
    %v3686 = vsel %vm3685, %v3677, %v3682
    %v3687 = vrsqrt.pop %v3367
    %v3688 = vmul.f32 %v3687, %v3367
    %v3689 = vmul.f32 %v3688, %v3687
    %v3690 = vmul.f32 0.5, %v3689
    %v3691 = vsub.f32 1.5, %v3690
    %v3692 = vmul.f32 %v3687, %v3691
    %vm3693 = vweird.f32 %v3367
    %vm3694 = vweird.f32 %v3687
    %vm3695 = vmor %vm3693, %vm3694
    %v3696 = vsel %vm3695, %v3687, %v3692
    %v3697 = vrsqrt.pop %v3368
    %v3698 = vmul.f32 %v3697, %v3368
    %v3699 = vmul.f32 %v3698, %v3697
    %v3700 = vmul.f32 0.5, %v3699
    %v3701 = vsub.f32 1.5, %v3700
    %v3702 = vmul.f32 %v3697, %v3701
    %vm3703 = vweird.f32 %v3368
    %vm3704 = vweird.f32 %v3697
    %vm3705 = vmor %vm3703, %vm3704
    %v3706 = vsel %vm3705, %v3697, %v3702
    %v3707 = vrsqrt.pop %v3369
    %v3708 = vmul.f32 %v3707, %v3369
    %v3709 = vmul.f32 %v3708, %v3707
    %v3710 = vmul.f32 0.5, %v3709
    %v3711 = vsub.f32 1.5, %v3710
    %v3712 = vmul.f32 %v3707, %v3711
    %vm3713 = vweird.f32 %v3369
    %vm3714 = vweird.f32 %v3707
    %vm3715 = vmor %vm3713, %vm3714
    %v3716 = vsel %vm3715, %v3707, %v3712
    %v3717 = vrsqrt.pop %v3370
    %v3718 = vmul.f32 %v3717, %v3370
    %v3719 = vmul.f32 %v3718, %v3717
    %v3720 = vmul.f32 0.5, %v3719
    %v3721 = vsub.f32 1.5, %v3720
    %v3722 = vmul.f32 %v3717, %v3721
    %vm3723 = vweird.f32 %v3370
    %vm3724 = vweird.f32 %v3717
    %vm3725 = vmor %vm3723, %vm3724
    %v3726 = vsel %vm3725, %v3717, %v3722
    %v3727 = vrsqrt.pop %v3371
    %v3728 = vmul.f32 %v3727, %v3371
    %v3729 = vmul.f32 %v3728, %v3727
    %v3730 = vmul.f32 0.5, %v3729
    %v3731 = vsub.f32 1.5, %v3730
    %v3732 = vmul.f32 %v3727, %v3731
    %vm3733 = vweird.f32 %v3371
    %vm3734 = vweird.f32 %v3727
    %vm3735 = vmor %vm3733, %vm3734
    %v3736 = vsel %vm3735, %v3727, %v3732
    %v3737 = vrsqrt.pop %v3372
    %v3738 = vmul.f32 %v3737, %v3372
    %v3739 = vmul.f32 %v3738, %v3737
    %v3740 = vmul.f32 0.5, %v3739
    %v3741 = vsub.f32 1.5, %v3740
    %v3742 = vmul.f32 %v3737, %v3741
    %vm3743 = vweird.f32 %v3372
    %vm3744 = vweird.f32 %v3737
    %vm3745 = vmor %vm3743, %vm3744
    %v3746 = vsel %vm3745, %v3737, %v3742
    %v3747 = vrsqrt.pop %v3373
    %v3748 = vmul.f32 %v3747, %v3373
    %v3749 = vmul.f32 %v3748, %v3747
    %v3750 = vmul.f32 0.5, %v3749
    %v3751 = vsub.f32 1.5, %v3750
    %v3752 = vmul.f32 %v3747, %v3751
    %vm3753 = vweird.f32 %v3373
    %vm3754 = vweird.f32 %v3747
    %vm3755 = vmor %vm3753, %vm3754
    %v3756 = vsel %vm3755, %v3747, %v3752
    %v3757 = vrsqrt.pop %v3374
    %v3758 = vmul.f32 %v3757, %v3374
    %v3759 = vmul.f32 %v3758, %v3757
    %v3760 = vmul.f32 0.5, %v3759
    %v3761 = vsub.f32 1.5, %v3760
    %v3762 = vmul.f32 %v3757, %v3761
    %vm3763 = vweird.f32 %v3374
    %vm3764 = vweird.f32 %v3757
    %vm3765 = vmor %vm3763, %vm3764
    %v3766 = vsel %vm3765, %v3757, %v3762
    %v3767 = vrsqrt.pop %v3375
    %v3768 = vmul.f32 %v3767, %v3375
    %v3769 = vmul.f32 %v3768, %v3767
    %v3770 = vmul.f32 0.5, %v3769
    %v3771 = vsub.f32 1.5, %v3770
    %v3772 = vmul.f32 %v3767, %v3771
    %vm3773 = vweird.f32 %v3375
    %vm3774 = vweird.f32 %v3767
    %vm3775 = vmor %vm3773, %vm3774
    %v3776 = vsel %vm3775, %v3767, %v3772
    %v3777 = vrsqrt.pop %v3376
    %v3778 = vmul.f32 %v3777, %v3376
    %v3779 = vmul.f32 %v3778, %v3777
    %v3780 = vmul.f32 0.5, %v3779
    %v3781 = vsub.f32 1.5, %v3780
    %v3782 = vmul.f32 %v3777, %v3781
    %vm3783 = vweird.f32 %v3376
    %vm3784 = vweird.f32 %v3777
    %vm3785 = vmor %vm3783, %vm3784
    %v3786 = vsel %vm3785, %v3777, %v3782
    %v3787 = vrsqrt.pop %v3377
    %v3788 = vmul.f32 %v3787, %v3377
    %v3789 = vmul.f32 %v3788, %v3787
    %v3790 = vmul.f32 0.5, %v3789
    %v3791 = vsub.f32 1.5, %v3790
    %v3792 = vmul.f32 %v3787, %v3791
    %vm3793 = vweird.f32 %v3377
    %vm3794 = vweird.f32 %v3787
    %vm3795 = vmor %vm3793, %vm3794
    %v3796 = vsel %vm3795, %v3787, %v3792
    %v3797 = vrsqrt.pop %v3378
    %v3798 = vmul.f32 %v3797, %v3378
    %v3799 = vmul.f32 %v3798, %v3797
    %v3800 = vmul.f32 0.5, %v3799
    %v3801 = vsub.f32 1.5, %v3800
    %v3802 = vmul.f32 %v3797, %v3801
    %vm3803 = vweird.f32 %v3378
    %vm3804 = vweird.f32 %v3797
    %vm3805 = vmor %vm3803, %vm3804
    %v3806 = vsel %vm3805, %v3797, %v3802
    %v3807 = vrsqrt.pop %v3379
    %v3808 = vmul.f32 %v3807, %v3379
    %v3809 = vmul.f32 %v3808, %v3807
    %v3810 = vmul.f32 0.5, %v3809
    %v3811 = vsub.f32 1.5, %v3810
    %v3812 = vmul.f32 %v3807, %v3811
    %vm3813 = vweird.f32 %v3379
    %vm3814 = vweird.f32 %v3807
    %vm3815 = vmor %vm3813, %vm3814
    %v3816 = vsel %vm3815, %v3807, %v3812
    %v3817 = vrsqrt.pop %v3380
    %v3818 = vmul.f32 %v3817, %v3380
    %v3819 = vmul.f32 %v3818, %v3817
    %v3820 = vmul.f32 0.5, %v3819
    %v3821 = vsub.f32 1.5, %v3820
    %v3822 = vmul.f32 %v3817, %v3821
    %vm3823 = vweird.f32 %v3380
    %vm3824 = vweird.f32 %v3817
    %vm3825 = vmor %vm3823, %vm3824
    %v3826 = vsel %vm3825, %v3817, %v3822
    %v3827 = vrsqrt.pop %v3381
    %v3828 = vmul.f32 %v3827, %v3381
    %v3829 = vmul.f32 %v3828, %v3827
    %v3830 = vmul.f32 0.5, %v3829
    %v3831 = vsub.f32 1.5, %v3830
    %v3832 = vmul.f32 %v3827, %v3831
    %vm3833 = vweird.f32 %v3381
    %vm3834 = vweird.f32 %v3827
    %vm3835 = vmor %vm3833, %vm3834
    %v3836 = vsel %vm3835, %v3827, %v3832
    %v3837 = vrsqrt.pop %v3382
    %v3838 = vmul.f32 %v3837, %v3382
    %v3839 = vmul.f32 %v3838, %v3837
    %v3840 = vmul.f32 0.5, %v3839
    %v3841 = vsub.f32 1.5, %v3840
    %v3842 = vmul.f32 %v3837, %v3841
    %vm3843 = vweird.f32 %v3382
    %vm3844 = vweird.f32 %v3837
    %vm3845 = vmor %vm3843, %vm3844
    %v3846 = vsel %vm3845, %v3837, %v3842
    %v3847 = vrsqrt.pop %v3383
    %v3848 = vmul.f32 %v3847, %v3383
    %v3849 = vmul.f32 %v3848, %v3847
    %v3850 = vmul.f32 0.5, %v3849
    %v3851 = vsub.f32 1.5, %v3850
    %v3852 = vmul.f32 %v3847, %v3851
    %vm3853 = vweird.f32 %v3383
    %vm3854 = vweird.f32 %v3847
    %vm3855 = vmor %vm3853, %vm3854
    %v3856 = vsel %vm3855, %v3847, %v3852
    %v3857 = vrsqrt.pop %v3384
    %v3858 = vmul.f32 %v3857, %v3384
    %v3859 = vmul.f32 %v3858, %v3857
    %v3860 = vmul.f32 0.5, %v3859
    %v3861 = vsub.f32 1.5, %v3860
    %v3862 = vmul.f32 %v3857, %v3861
    %vm3863 = vweird.f32 %v3384
    %vm3864 = vweird.f32 %v3857
    %vm3865 = vmor %vm3863, %vm3864
    %v3866 = vsel %vm3865, %v3857, %v3862
    %v3867 = vrsqrt.pop %v3385
    %v3868 = vmul.f32 %v3867, %v3385
    %v3869 = vmul.f32 %v3868, %v3867
    %v3870 = vmul.f32 0.5, %v3869
    %v3871 = vsub.f32 1.5, %v3870
    %v3872 = vmul.f32 %v3867, %v3871
    %vm3873 = vweird.f32 %v3385
    %vm3874 = vweird.f32 %v3867
    %vm3875 = vmor %vm3873, %vm3874
    %v3876 = vsel %vm3875, %v3867, %v3872
    %v3877 = vrsqrt.pop %v3386
    %v3878 = vmul.f32 %v3877, %v3386
    %v3879 = vmul.f32 %v3878, %v3877
    %v3880 = vmul.f32 0.5, %v3879
    %v3881 = vsub.f32 1.5, %v3880
    %v3882 = vmul.f32 %v3877, %v3881
    %vm3883 = vweird.f32 %v3386
    %vm3884 = vweird.f32 %v3877
    %vm3885 = vmor %vm3883, %vm3884
    %v3886 = vsel %vm3885, %v3877, %v3882
    %v3887 = vrsqrt.pop %v3387
    %v3888 = vmul.f32 %v3887, %v3387
    %v3889 = vmul.f32 %v3888, %v3887
    %v3890 = vmul.f32 0.5, %v3889
    %v3891 = vsub.f32 1.5, %v3890
    %v3892 = vmul.f32 %v3887, %v3891
    %vm3893 = vweird.f32 %v3387
    %vm3894 = vweird.f32 %v3887
    %vm3895 = vmor %vm3893, %vm3894
    %v3896 = vsel %vm3895, %v3887, %v3892
    %v3897 = vrsqrt.pop %v3388
    %v3898 = vmul.f32 %v3897, %v3388
    %v3899 = vmul.f32 %v3898, %v3897
    %v3900 = vmul.f32 0.5, %v3899
    %v3901 = vsub.f32 1.5, %v3900
    %v3902 = vmul.f32 %v3897, %v3901
    %vm3903 = vweird.f32 %v3388
    %vm3904 = vweird.f32 %v3897
    %vm3905 = vmor %vm3903, %vm3904
    %v3906 = vsel %vm3905, %v3897, %v3902
    %v3907 = vrsqrt.pop %v3389
    %v3908 = vmul.f32 %v3907, %v3389
    %v3909 = vmul.f32 %v3908, %v3907
    %v3910 = vmul.f32 0.5, %v3909
    %v3911 = vsub.f32 1.5, %v3910
    %v3912 = vmul.f32 %v3907, %v3911
    %vm3913 = vweird.f32 %v3389
    %vm3914 = vweird.f32 %v3907
    %vm3915 = vmor %vm3913, %vm3914
    %v3916 = vsel %vm3915, %v3907, %v3912
    %v3917 = vrsqrt.pop %v3390
    %v3918 = vmul.f32 %v3917, %v3390
    %v3919 = vmul.f32 %v3918, %v3917
    %v3920 = vmul.f32 0.5, %v3919
    %v3921 = vsub.f32 1.5, %v3920
    %v3922 = vmul.f32 %v3917, %v3921
    %vm3923 = vweird.f32 %v3390
    %vm3924 = vweird.f32 %v3917
    %vm3925 = vmor %vm3923, %vm3924
    %v3926 = vsel %vm3925, %v3917, %v3922
    %v3927 = vrsqrt.pop %v3391
    %v3928 = vmul.f32 %v3927, %v3391
    %v3929 = vmul.f32 %v3928, %v3927
    %v3930 = vmul.f32 0.5, %v3929
    %v3931 = vsub.f32 1.5, %v3930
    %v3932 = vmul.f32 %v3927, %v3931
    %vm3933 = vweird.f32 %v3391
    %vm3934 = vweird.f32 %v3927
    %vm3935 = vmor %vm3933, %vm3934
    %v3936 = vsel %vm3935, %v3927, %v3932
    %v3937 = vrsqrt.pop %v3392
    %v3938 = vmul.f32 %v3937, %v3392
    %v3939 = vmul.f32 %v3938, %v3937
    %v3940 = vmul.f32 0.5, %v3939
    %v3941 = vsub.f32 1.5, %v3940
    %v3942 = vmul.f32 %v3937, %v3941
    %vm3943 = vweird.f32 %v3392
    %vm3944 = vweird.f32 %v3937
    %vm3945 = vmor %vm3943, %vm3944
    %v3946 = vsel %vm3945, %v3937, %v3942
    %v3947 = vrsqrt.pop %v3393
    %v3948 = vmul.f32 %v3947, %v3393
    %v3949 = vmul.f32 %v3948, %v3947
    %v3950 = vmul.f32 0.5, %v3949
    %v3951 = vsub.f32 1.5, %v3950
    %v3952 = vmul.f32 %v3947, %v3951
    %vm3953 = vweird.f32 %v3393
    %vm3954 = vweird.f32 %v3947
    %vm3955 = vmor %vm3953, %vm3954
    %v3956 = vsel %vm3955, %v3947, %v3952
    %v3957 = vrsqrt.pop %v3394
    %v3958 = vmul.f32 %v3957, %v3394
    %v3959 = vmul.f32 %v3958, %v3957
    %v3960 = vmul.f32 0.5, %v3959
    %v3961 = vsub.f32 1.5, %v3960
    %v3962 = vmul.f32 %v3957, %v3961
    %vm3963 = vweird.f32 %v3394
    %vm3964 = vweird.f32 %v3957
    %vm3965 = vmor %vm3963, %vm3964
    %v3966 = vsel %vm3965, %v3957, %v3962
    %v3967 = vrsqrt.pop %v3395
    %v3968 = vmul.f32 %v3967, %v3395
    %v3969 = vmul.f32 %v3968, %v3967
    %v3970 = vmul.f32 0.5, %v3969
    %v3971 = vsub.f32 1.5, %v3970
    %v3972 = vmul.f32 %v3967, %v3971
    %vm3973 = vweird.f32 %v3395
    %vm3974 = vweird.f32 %v3967
    %vm3975 = vmor %vm3973, %vm3974
    %v3976 = vsel %vm3975, %v3967, %v3972
    %v3977 = vrsqrt.pop %v3396
    %v3978 = vmul.f32 %v3977, %v3396
    %v3979 = vmul.f32 %v3978, %v3977
    %v3980 = vmul.f32 0.5, %v3979
    %v3981 = vsub.f32 1.5, %v3980
    %v3982 = vmul.f32 %v3977, %v3981
    %vm3983 = vweird.f32 %v3396
    %vm3984 = vweird.f32 %v3977
    %vm3985 = vmor %vm3983, %vm3984
    %v3986 = vsel %vm3985, %v3977, %v3982
    %v3987 = vrsqrt.pop %v3397
    %v3988 = vmul.f32 %v3987, %v3397
    %v3989 = vmul.f32 %v3988, %v3987
    %v3990 = vmul.f32 0.5, %v3989
    %v3991 = vsub.f32 1.5, %v3990
    %v3992 = vmul.f32 %v3987, %v3991
    %vm3993 = vweird.f32 %v3397
    %vm3994 = vweird.f32 %v3987
    %vm3995 = vmor %vm3993, %vm3994
    %v3996 = vsel %vm3995, %v3987, %v3992
    %v3997 = vrsqrt.pop %v3398
    %v3998 = vmul.f32 %v3997, %v3398
    %v3999 = vmul.f32 %v3998, %v3997
    %v4000 = vmul.f32 0.5, %v3999
    %v4001 = vsub.f32 1.5, %v4000
    %v4002 = vmul.f32 %v3997, %v4001
    %vm4003 = vweird.f32 %v3398
    %vm4004 = vweird.f32 %v3997
    %vm4005 = vmor %vm4003, %vm4004
    %v4006 = vsel %vm4005, %v3997, %v4002
    %v4007 = vrsqrt.pop %v3399
    %v4008 = vmul.f32 %v4007, %v3399
    %v4009 = vmul.f32 %v4008, %v4007
    %v4010 = vmul.f32 0.5, %v4009
    %v4011 = vsub.f32 1.5, %v4010
    %v4012 = vmul.f32 %v4007, %v4011
    %vm4013 = vweird.f32 %v3399
    %vm4014 = vweird.f32 %v4007
    %vm4015 = vmor %vm4013, %vm4014
    %v4016 = vsel %vm4015, %v4007, %v4012
    %v4017 = vrsqrt.pop %v3400
    %v4018 = vmul.f32 %v4017, %v3400
    %v4019 = vmul.f32 %v4018, %v4017
    %v4020 = vmul.f32 0.5, %v4019
    %v4021 = vsub.f32 1.5, %v4020
    %v4022 = vmul.f32 %v4017, %v4021
    %vm4023 = vweird.f32 %v3400
    %vm4024 = vweird.f32 %v4017
    %vm4025 = vmor %vm4023, %vm4024
    %v4026 = vsel %vm4025, %v4017, %v4022
    %v4027 = vrsqrt.pop %v3401
    %v4028 = vmul.f32 %v4027, %v3401
    %v4029 = vmul.f32 %v4028, %v4027
    %v4030 = vmul.f32 0.5, %v4029
    %v4031 = vsub.f32 1.5, %v4030
    %v4032 = vmul.f32 %v4027, %v4031
    %vm4033 = vweird.f32 %v3401
    %vm4034 = vweird.f32 %v4027
    %vm4035 = vmor %vm4033, %vm4034
    %v4036 = vsel %vm4035, %v4027, %v4032
    %v4037 = vrsqrt.pop %v3402
    %v4038 = vmul.f32 %v4037, %v3402
    %v4039 = vmul.f32 %v4038, %v4037
    %v4040 = vmul.f32 0.5, %v4039
    %v4041 = vsub.f32 1.5, %v4040
    %v4042 = vmul.f32 %v4037, %v4041
    %vm4043 = vweird.f32 %v3402
    %vm4044 = vweird.f32 %v4037
    %vm4045 = vmor %vm4043, %vm4044
    %v4046 = vsel %vm4045, %v4037, %v4042
    %v4047 = vrsqrt.pop %v3403
    %v4048 = vmul.f32 %v4047, %v3403
    %v4049 = vmul.f32 %v4048, %v4047
    %v4050 = vmul.f32 0.5, %v4049
    %v4051 = vsub.f32 1.5, %v4050
    %v4052 = vmul.f32 %v4047, %v4051
    %vm4053 = vweird.f32 %v3403
    %vm4054 = vweird.f32 %v4047
    %vm4055 = vmor %vm4053, %vm4054
    %v4056 = vsel %vm4055, %v4047, %v4052
    %v4057 = vrsqrt.pop %v3404
    %v4058 = vmul.f32 %v4057, %v3404
    %v4059 = vmul.f32 %v4058, %v4057
    %v4060 = vmul.f32 0.5, %v4059
    %v4061 = vsub.f32 1.5, %v4060
    %v4062 = vmul.f32 %v4057, %v4061
    %vm4063 = vweird.f32 %v3404
    %vm4064 = vweird.f32 %v4057
    %vm4065 = vmor %vm4063, %vm4064
    %v4066 = vsel %vm4065, %v4057, %v4062
    %v4067 = vrsqrt.pop %v3405
    %v4068 = vmul.f32 %v4067, %v3405
    %v4069 = vmul.f32 %v4068, %v4067
    %v4070 = vmul.f32 0.5, %v4069
    %v4071 = vsub.f32 1.5, %v4070
    %v4072 = vmul.f32 %v4067, %v4071
    %vm4073 = vweird.f32 %v3405
    %vm4074 = vweird.f32 %v4067
    %vm4075 = vmor %vm4073, %vm4074
    %v4076 = vsel %vm4075, %v4067, %v4072
    %v4077 = vrsqrt.pop %v3406
    %v4078 = vmul.f32 %v4077, %v3406
    %v4079 = vmul.f32 %v4078, %v4077
    %v4080 = vmul.f32 0.5, %v4079
    %v4081 = vsub.f32 1.5, %v4080
    %v4082 = vmul.f32 %v4077, %v4081
    %vm4083 = vweird.f32 %v3406
    %vm4084 = vweird.f32 %v4077
    %vm4085 = vmor %vm4083, %vm4084
    %v4086 = vsel %vm4085, %v4077, %v4082
    %v4087 = vrsqrt.pop %v3407
    %v4088 = vmul.f32 %v4087, %v3407
    %v4089 = vmul.f32 %v4088, %v4087
    %v4090 = vmul.f32 0.5, %v4089
    %v4091 = vsub.f32 1.5, %v4090
    %v4092 = vmul.f32 %v4087, %v4091
    %vm4093 = vweird.f32 %v3407
    %vm4094 = vweird.f32 %v4087
    %vm4095 = vmor %vm4093, %vm4094
    %v4096 = vsel %vm4095, %v4087, %v4092
    %v4097 = vrsqrt.pop %v3408
    %v4098 = vmul.f32 %v4097, %v3408
    %v4099 = vmul.f32 %v4098, %v4097
    %v4100 = vmul.f32 0.5, %v4099
    %v4101 = vsub.f32 1.5, %v4100
    %v4102 = vmul.f32 %v4097, %v4101
    %vm4103 = vweird.f32 %v3408
    %vm4104 = vweird.f32 %v4097
    %vm4105 = vmor %vm4103, %vm4104
    %v4106 = vsel %vm4105, %v4097, %v4102
    %v4107 = vrsqrt.pop %v3409
    %v4108 = vmul.f32 %v4107, %v3409
    %v4109 = vmul.f32 %v4108, %v4107
    %v4110 = vmul.f32 0.5, %v4109
    %v4111 = vsub.f32 1.5, %v4110
    %v4112 = vmul.f32 %v4107, %v4111
    %vm4113 = vweird.f32 %v3409
    %vm4114 = vweird.f32 %v4107
    %vm4115 = vmor %vm4113, %vm4114
    %v4116 = vsel %vm4115, %v4107, %v4112
    %v4117 = vrsqrt.pop %v3410
    %v4118 = vmul.f32 %v4117, %v3410
    %v4119 = vmul.f32 %v4118, %v4117
    %v4120 = vmul.f32 0.5, %v4119
    %v4121 = vsub.f32 1.5, %v4120
    %v4122 = vmul.f32 %v4117, %v4121
    %vm4123 = vweird.f32 %v3410
    %vm4124 = vweird.f32 %v4117
    %vm4125 = vmor %vm4123, %vm4124
    %v4126 = vsel %vm4125, %v4117, %v4122
    %v4127 = vrsqrt.pop %v3411
    %v4128 = vmul.f32 %v4127, %v3411
    %v4129 = vmul.f32 %v4128, %v4127
    %v4130 = vmul.f32 0.5, %v4129
    %v4131 = vsub.f32 1.5, %v4130
    %v4132 = vmul.f32 %v4127, %v4131
    %vm4133 = vweird.f32 %v3411
    %vm4134 = vweird.f32 %v4127
    %vm4135 = vmor %vm4133, %vm4134
    %v4136 = vsel %vm4135, %v4127, %v4132
    %v4137 = vrsqrt.pop %v3412
    %v4138 = vmul.f32 %v4137, %v3412
    %v4139 = vmul.f32 %v4138, %v4137
    %v4140 = vmul.f32 0.5, %v4139
    %v4141 = vsub.f32 1.5, %v4140
    %v4142 = vmul.f32 %v4137, %v4141
    %vm4143 = vweird.f32 %v3412
    %vm4144 = vweird.f32 %v4137
    %vm4145 = vmor %vm4143, %vm4144
    %v4146 = vsel %vm4145, %v4137, %v4142
    %v4147 = vrsqrt.pop %v3413
    %v4148 = vmul.f32 %v4147, %v3413
    %v4149 = vmul.f32 %v4148, %v4147
    %v4150 = vmul.f32 0.5, %v4149
    %v4151 = vsub.f32 1.5, %v4150
    %v4152 = vmul.f32 %v4147, %v4151
    %vm4153 = vweird.f32 %v3413
    %vm4154 = vweird.f32 %v4147
    %vm4155 = vmor %vm4153, %vm4154
    %v4156 = vsel %vm4155, %v4147, %v4152
    %v4157 = vrsqrt.pop %v3414
    %v4158 = vmul.f32 %v4157, %v3414
    %v4159 = vmul.f32 %v4158, %v4157
    %v4160 = vmul.f32 0.5, %v4159
    %v4161 = vsub.f32 1.5, %v4160
    %v4162 = vmul.f32 %v4157, %v4161
    %vm4163 = vweird.f32 %v3414
    %vm4164 = vweird.f32 %v4157
    %vm4165 = vmor %vm4163, %vm4164
    %v4166 = vsel %vm4165, %v4157, %v4162
    %v4167 = vrsqrt.pop %v3415
    %v4168 = vmul.f32 %v4167, %v3415
    %v4169 = vmul.f32 %v4168, %v4167
    %v4170 = vmul.f32 0.5, %v4169
    %v4171 = vsub.f32 1.5, %v4170
    %v4172 = vmul.f32 %v4167, %v4171
    %vm4173 = vweird.f32 %v3415
    %vm4174 = vweird.f32 %v4167
    %vm4175 = vmor %vm4173, %vm4174
    %v4176 = vsel %vm4175, %v4167, %v4172
    %v4177 = vrsqrt.pop %v3416
    %v4178 = vmul.f32 %v4177, %v3416
    %v4179 = vmul.f32 %v4178, %v4177
    %v4180 = vmul.f32 0.5, %v4179
    %v4181 = vsub.f32 1.5, %v4180
    %v4182 = vmul.f32 %v4177, %v4181
    %vm4183 = vweird.f32 %v3416
    %vm4184 = vweird.f32 %v4177
    %vm4185 = vmor %vm4183, %vm4184
    %v4186 = vsel %vm4185, %v4177, %v4182
    %v4187 = vrsqrt.pop %v3417
    %v4188 = vmul.f32 %v4187, %v3417
    %v4189 = vmul.f32 %v4188, %v4187
    %v4190 = vmul.f32 0.5, %v4189
    %v4191 = vsub.f32 1.5, %v4190
    %v4192 = vmul.f32 %v4187, %v4191
    %vm4193 = vweird.f32 %v3417
    %vm4194 = vweird.f32 %v4187
    %vm4195 = vmor %vm4193, %vm4194
    %v4196 = vsel %vm4195, %v4187, %v4192
    %v4197 = vrsqrt.pop %v3418
    %v4198 = vmul.f32 %v4197, %v3418
    %v4199 = vmul.f32 %v4198, %v4197
    %v4200 = vmul.f32 0.5, %v4199
    %v4201 = vsub.f32 1.5, %v4200
    %v4202 = vmul.f32 %v4197, %v4201
    %vm4203 = vweird.f32 %v3418
    %vm4204 = vweird.f32 %v4197
    %vm4205 = vmor %vm4203, %vm4204
    %v4206 = vsel %vm4205, %v4197, %v4202
    %v4207 = vrsqrt.pop %v3419
    %v4208 = vmul.f32 %v4207, %v3419
    %v4209 = vmul.f32 %v4208, %v4207
    %v4210 = vmul.f32 0.5, %v4209
    %v4211 = vsub.f32 1.5, %v4210
    %v4212 = vmul.f32 %v4207, %v4211
    %vm4213 = vweird.f32 %v3419
    %vm4214 = vweird.f32 %v4207
    %vm4215 = vmor %vm4213, %vm4214
    %v4216 = vsel %vm4215, %v4207, %v4212
    %v4217 = vrsqrt.pop %v3420
    %v4218 = vmul.f32 %v4217, %v3420
    %v4219 = vmul.f32 %v4218, %v4217
    %v4220 = vmul.f32 0.5, %v4219
    %v4221 = vsub.f32 1.5, %v4220
    %v4222 = vmul.f32 %v4217, %v4221
    %vm4223 = vweird.f32 %v3420
    %vm4224 = vweird.f32 %v4217
    %vm4225 = vmor %vm4223, %vm4224
    %v4226 = vsel %vm4225, %v4217, %v4222
    %v4227 = vrsqrt.pop %v3421
    %v4228 = vmul.f32 %v4227, %v3421
    %v4229 = vmul.f32 %v4228, %v4227
    %v4230 = vmul.f32 0.5, %v4229
    %v4231 = vsub.f32 1.5, %v4230
    %v4232 = vmul.f32 %v4227, %v4231
    %vm4233 = vweird.f32 %v3421
    %vm4234 = vweird.f32 %v4227
    %vm4235 = vmor %vm4233, %vm4234
    %v4236 = vsel %vm4235, %v4227, %v4232
    %v4237 = vrsqrt.pop %v3422
    %v4238 = vmul.f32 %v4237, %v3422
    %v4239 = vmul.f32 %v4238, %v4237
    %v4240 = vmul.f32 0.5, %v4239
    %v4241 = vsub.f32 1.5, %v4240
    %v4242 = vmul.f32 %v4237, %v4241
    %vm4243 = vweird.f32 %v3422
    %vm4244 = vweird.f32 %v4237
    %vm4245 = vmor %vm4243, %vm4244
    %v4246 = vsel %vm4245, %v4237, %v4242
    %v4247 = vrsqrt.pop %v3423
    %v4248 = vmul.f32 %v4247, %v3423
    %v4249 = vmul.f32 %v4248, %v4247
    %v4250 = vmul.f32 0.5, %v4249
    %v4251 = vsub.f32 1.5, %v4250
    %v4252 = vmul.f32 %v4247, %v4251
    %vm4253 = vweird.f32 %v3423
    %vm4254 = vweird.f32 %v4247
    %vm4255 = vmor %vm4253, %vm4254
    %v4256 = vsel %vm4255, %v4247, %v4252
    %v4257 = vrsqrt.pop %v3424
    %v4258 = vmul.f32 %v4257, %v3424
    %v4259 = vmul.f32 %v4258, %v4257
    %v4260 = vmul.f32 0.5, %v4259
    %v4261 = vsub.f32 1.5, %v4260
    %v4262 = vmul.f32 %v4257, %v4261
    %vm4263 = vweird.f32 %v3424
    %vm4264 = vweird.f32 %v4257
    %vm4265 = vmor %vm4263, %vm4264
    %v4266 = vsel %vm4265, %v4257, %v4262
    %v4267 = vrsqrt.pop %v3425
    %v4268 = vmul.f32 %v4267, %v3425
    %v4269 = vmul.f32 %v4268, %v4267
    %v4270 = vmul.f32 0.5, %v4269
    %v4271 = vsub.f32 1.5, %v4270
    %v4272 = vmul.f32 %v4267, %v4271
    %vm4273 = vweird.f32 %v3425
    %vm4274 = vweird.f32 %v4267
    %vm4275 = vmor %vm4273, %vm4274
    %v4276 = vsel %vm4275, %v4267, %v4272
    %v4277 = vrsqrt.pop %v3426
    %v4278 = vmul.f32 %v4277, %v3426
    %v4279 = vmul.f32 %v4278, %v4277
    %v4280 = vmul.f32 0.5, %v4279
    %v4281 = vsub.f32 1.5, %v4280
    %v4282 = vmul.f32 %v4277, %v4281
    %vm4283 = vweird.f32 %v3426
    %vm4284 = vweird.f32 %v4277
    %vm4285 = vmor %vm4283, %vm4284
    %v4286 = vsel %vm4285, %v4277, %v4282
    %v4287 = vrsqrt.pop %v3427
    %v4288 = vmul.f32 %v4287, %v3427
    %v4289 = vmul.f32 %v4288, %v4287
    %v4290 = vmul.f32 0.5, %v4289
    %v4291 = vsub.f32 1.5, %v4290
    %v4292 = vmul.f32 %v4287, %v4291
    %vm4293 = vweird.f32 %v3427
    %vm4294 = vweird.f32 %v4287
    %vm4295 = vmor %vm4293, %vm4294
    %v4296 = vsel %vm4295, %v4287, %v4292
    %v4297 = vrsqrt.pop %v3428
    %v4298 = vmul.f32 %v4297, %v3428
    %v4299 = vmul.f32 %v4298, %v4297
    %v4300 = vmul.f32 0.5, %v4299
    %v4301 = vsub.f32 1.5, %v4300
    %v4302 = vmul.f32 %v4297, %v4301
    %vm4303 = vweird.f32 %v3428
    %vm4304 = vweird.f32 %v4297
    %vm4305 = vmor %vm4303, %vm4304
    %v4306 = vsel %vm4305, %v4297, %v4302
    %v4307 = vrsqrt.pop %v3429
    %v4308 = vmul.f32 %v4307, %v3429
    %v4309 = vmul.f32 %v4308, %v4307
    %v4310 = vmul.f32 0.5, %v4309
    %v4311 = vsub.f32 1.5, %v4310
    %v4312 = vmul.f32 %v4307, %v4311
    %vm4313 = vweird.f32 %v3429
    %vm4314 = vweird.f32 %v4307
    %vm4315 = vmor %vm4313, %vm4314
    %v4316 = vsel %vm4315, %v4307, %v4312
    %v4317 = vrsqrt.pop %v3430
    %v4318 = vmul.f32 %v4317, %v3430
    %v4319 = vmul.f32 %v4318, %v4317
    %v4320 = vmul.f32 0.5, %v4319
    %v4321 = vsub.f32 1.5, %v4320
    %v4322 = vmul.f32 %v4317, %v4321
    %vm4323 = vweird.f32 %v3430
    %vm4324 = vweird.f32 %v4317
    %vm4325 = vmor %vm4323, %vm4324
    %v4326 = vsel %vm4325, %v4317, %v4322
    %v4327 = vrsqrt.pop %v3431
    %v4328 = vmul.f32 %v4327, %v3431
    %v4329 = vmul.f32 %v4328, %v4327
    %v4330 = vmul.f32 0.5, %v4329
    %v4331 = vsub.f32 1.5, %v4330
    %v4332 = vmul.f32 %v4327, %v4331
    %vm4333 = vweird.f32 %v3431
    %vm4334 = vweird.f32 %v4327
    %vm4335 = vmor %vm4333, %vm4334
    %v4336 = vsel %vm4335, %v4327, %v4332
    %v4337 = vrsqrt.pop %v3432
    %v4338 = vmul.f32 %v4337, %v3432
    %v4339 = vmul.f32 %v4338, %v4337
    %v4340 = vmul.f32 0.5, %v4339
    %v4341 = vsub.f32 1.5, %v4340
    %v4342 = vmul.f32 %v4337, %v4341
    %vm4343 = vweird.f32 %v3432
    %vm4344 = vweird.f32 %v4337
    %vm4345 = vmor %vm4343, %vm4344
    %v4346 = vsel %vm4345, %v4337, %v4342
    %v4347 = vrsqrt.pop %v3433
    %v4348 = vmul.f32 %v4347, %v3433
    %v4349 = vmul.f32 %v4348, %v4347
    %v4350 = vmul.f32 0.5, %v4349
    %v4351 = vsub.f32 1.5, %v4350
    %v4352 = vmul.f32 %v4347, %v4351
    %vm4353 = vweird.f32 %v3433
    %vm4354 = vweird.f32 %v4347
    %vm4355 = vmor %vm4353, %vm4354
    %v4356 = vsel %vm4355, %v4347, %v4352
    %v4357 = vrsqrt.pop %v3434
    %v4358 = vmul.f32 %v4357, %v3434
    %v4359 = vmul.f32 %v4358, %v4357
    %v4360 = vmul.f32 0.5, %v4359
    %v4361 = vsub.f32 1.5, %v4360
    %v4362 = vmul.f32 %v4357, %v4361
    %vm4363 = vweird.f32 %v3434
    %vm4364 = vweird.f32 %v4357
    %vm4365 = vmor %vm4363, %vm4364
    %v4366 = vsel %vm4365, %v4357, %v4362
    %v4367 = vrsqrt.pop %v3435
    %v4368 = vmul.f32 %v4367, %v3435
    %v4369 = vmul.f32 %v4368, %v4367
    %v4370 = vmul.f32 0.5, %v4369
    %v4371 = vsub.f32 1.5, %v4370
    %v4372 = vmul.f32 %v4367, %v4371
    %vm4373 = vweird.f32 %v3435
    %vm4374 = vweird.f32 %v4367
    %vm4375 = vmor %vm4373, %vm4374
    %v4376 = vsel %vm4375, %v4367, %v4372
    %v4377 = vrsqrt.pop %v3436
    %v4378 = vmul.f32 %v4377, %v3436
    %v4379 = vmul.f32 %v4378, %v4377
    %v4380 = vmul.f32 0.5, %v4379
    %v4381 = vsub.f32 1.5, %v4380
    %v4382 = vmul.f32 %v4377, %v4381
    %vm4383 = vweird.f32 %v3436
    %vm4384 = vweird.f32 %v4377
    %vm4385 = vmor %vm4383, %vm4384
    %v4386 = vsel %vm4385, %v4377, %v4382
    %v4387 = vrsqrt.pop %v3437
    %v4388 = vmul.f32 %v4387, %v3437
    %v4389 = vmul.f32 %v4388, %v4387
    %v4390 = vmul.f32 0.5, %v4389
    %v4391 = vsub.f32 1.5, %v4390
    %v4392 = vmul.f32 %v4387, %v4391
    %vm4393 = vweird.f32 %v3437
    %vm4394 = vweird.f32 %v4387
    %vm4395 = vmor %vm4393, %vm4394
    %v4396 = vsel %vm4395, %v4387, %v4392
    %v4397 = vrsqrt.pop %v3438
    %v4398 = vmul.f32 %v4397, %v3438
    %v4399 = vmul.f32 %v4398, %v4397
    %v4400 = vmul.f32 0.5, %v4399
    %v4401 = vsub.f32 1.5, %v4400
    %v4402 = vmul.f32 %v4397, %v4401
    %vm4403 = vweird.f32 %v3438
    %vm4404 = vweird.f32 %v4397
    %vm4405 = vmor %vm4403, %vm4404
    %v4406 = vsel %vm4405, %v4397, %v4402
    %v4407 = vrsqrt.pop %v3439
    %v4408 = vmul.f32 %v4407, %v3439
    %v4409 = vmul.f32 %v4408, %v4407
    %v4410 = vmul.f32 0.5, %v4409
    %v4411 = vsub.f32 1.5, %v4410
    %v4412 = vmul.f32 %v4407, %v4411
    %vm4413 = vweird.f32 %v3439
    %vm4414 = vweird.f32 %v4407
    %vm4415 = vmor %vm4413, %vm4414
    %v4416 = vsel %vm4415, %v4407, %v4412
    %v4417 = vrsqrt.pop %v3440
    %v4418 = vmul.f32 %v4417, %v3440
    %v4419 = vmul.f32 %v4418, %v4417
    %v4420 = vmul.f32 0.5, %v4419
    %v4421 = vsub.f32 1.5, %v4420
    %v4422 = vmul.f32 %v4417, %v4421
    %vm4423 = vweird.f32 %v3440
    %vm4424 = vweird.f32 %v4417
    %vm4425 = vmor %vm4423, %vm4424
    %v4426 = vsel %vm4425, %v4417, %v4422
    %v4427 = vrsqrt.pop %v3441
    %v4428 = vmul.f32 %v4427, %v3441
    %v4429 = vmul.f32 %v4428, %v4427
    %v4430 = vmul.f32 0.5, %v4429
    %v4431 = vsub.f32 1.5, %v4430
    %v4432 = vmul.f32 %v4427, %v4431
    %vm4433 = vweird.f32 %v3441
    %vm4434 = vweird.f32 %v4427
    %vm4435 = vmor %vm4433, %vm4434
    %v4436 = vsel %vm4435, %v4427, %v4432
    %v4437 = vrsqrt.pop %v3442
    %v4438 = vmul.f32 %v4437, %v3442
    %v4439 = vmul.f32 %v4438, %v4437
    %v4440 = vmul.f32 0.5, %v4439
    %v4441 = vsub.f32 1.5, %v4440
    %v4442 = vmul.f32 %v4437, %v4441
    %vm4443 = vweird.f32 %v3442
    %vm4444 = vweird.f32 %v4437
    %vm4445 = vmor %vm4443, %vm4444
    %v4446 = vsel %vm4445, %v4437, %v4442
    %v4447 = vrsqrt.pop %v3443
    %v4448 = vmul.f32 %v4447, %v3443
    %v4449 = vmul.f32 %v4448, %v4447
    %v4450 = vmul.f32 0.5, %v4449
    %v4451 = vsub.f32 1.5, %v4450
    %v4452 = vmul.f32 %v4447, %v4451
    %vm4453 = vweird.f32 %v3443
    %vm4454 = vweird.f32 %v4447
    %vm4455 = vmor %vm4453, %vm4454
    %v4456 = vsel %vm4455, %v4447, %v4452
    %v4457 = vrsqrt.pop %v3444
    %v4458 = vmul.f32 %v4457, %v3444
    %v4459 = vmul.f32 %v4458, %v4457
    %v4460 = vmul.f32 0.5, %v4459
    %v4461 = vsub.f32 1.5, %v4460
    %v4462 = vmul.f32 %v4457, %v4461
    %vm4463 = vweird.f32 %v3444
    %vm4464 = vweird.f32 %v4457
    %vm4465 = vmor %vm4463, %vm4464
    %v4466 = vsel %vm4465, %v4457, %v4462
    %v4467 = vrsqrt.pop %v3445
    %v4468 = vmul.f32 %v4467, %v3445
    %v4469 = vmul.f32 %v4468, %v4467
    %v4470 = vmul.f32 0.5, %v4469
    %v4471 = vsub.f32 1.5, %v4470
    %v4472 = vmul.f32 %v4467, %v4471
    %vm4473 = vweird.f32 %v3445
    %vm4474 = vweird.f32 %v4467
    %vm4475 = vmor %vm4473, %vm4474
    %v4476 = vsel %vm4475, %v4467, %v4472
    %v4477 = vrsqrt.pop %v3446
    %v4478 = vmul.f32 %v4477, %v3446
    %v4479 = vmul.f32 %v4478, %v4477
    %v4480 = vmul.f32 0.5, %v4479
    %v4481 = vsub.f32 1.5, %v4480
    %v4482 = vmul.f32 %v4477, %v4481
    %vm4483 = vweird.f32 %v3446
    %vm4484 = vweird.f32 %v4477
    %vm4485 = vmor %vm4483, %vm4484
    %v4486 = vsel %vm4485, %v4477, %v4482
    %v4487 = vrsqrt.pop %v3447
    %v4488 = vmul.f32 %v4487, %v3447
    %v4489 = vmul.f32 %v4488, %v4487
    %v4490 = vmul.f32 0.5, %v4489
    %v4491 = vsub.f32 1.5, %v4490
    %v4492 = vmul.f32 %v4487, %v4491
    %vm4493 = vweird.f32 %v3447
    %vm4494 = vweird.f32 %v4487
    %vm4495 = vmor %vm4493, %vm4494
    %v4496 = vsel %vm4495, %v4487, %v4492
    %v4497 = vrsqrt.pop %v3448
    %v4498 = vmul.f32 %v4497, %v3448
    %v4499 = vmul.f32 %v4498, %v4497
    %v4500 = vmul.f32 0.5, %v4499
    %v4501 = vsub.f32 1.5, %v4500
    %v4502 = vmul.f32 %v4497, %v4501
    %vm4503 = vweird.f32 %v3448
    %vm4504 = vweird.f32 %v4497
    %vm4505 = vmor %vm4503, %vm4504
    %v4506 = vsel %vm4505, %v4497, %v4502
    %v4507 = vrsqrt.pop %v3449
    %v4508 = vmul.f32 %v4507, %v3449
    %v4509 = vmul.f32 %v4508, %v4507
    %v4510 = vmul.f32 0.5, %v4509
    %v4511 = vsub.f32 1.5, %v4510
    %v4512 = vmul.f32 %v4507, %v4511
    %vm4513 = vweird.f32 %v3449
    %vm4514 = vweird.f32 %v4507
    %vm4515 = vmor %vm4513, %vm4514
    %v4516 = vsel %vm4515, %v4507, %v4512
    %v4517 = vrsqrt.pop %v3450
    %v4518 = vmul.f32 %v4517, %v3450
    %v4519 = vmul.f32 %v4518, %v4517
    %v4520 = vmul.f32 0.5, %v4519
    %v4521 = vsub.f32 1.5, %v4520
    %v4522 = vmul.f32 %v4517, %v4521
    %vm4523 = vweird.f32 %v3450
    %vm4524 = vweird.f32 %v4517
    %vm4525 = vmor %vm4523, %vm4524
    %v4526 = vsel %vm4525, %v4517, %v4522
    %v4527 = vrsqrt.pop %v3451
    %v4528 = vmul.f32 %v4527, %v3451
    %v4529 = vmul.f32 %v4528, %v4527
    %v4530 = vmul.f32 0.5, %v4529
    %v4531 = vsub.f32 1.5, %v4530
    %v4532 = vmul.f32 %v4527, %v4531
    %vm4533 = vweird.f32 %v3451
    %vm4534 = vweird.f32 %v4527
    %vm4535 = vmor %vm4533, %vm4534
    %v4536 = vsel %vm4535, %v4527, %v4532
    %v4537 = vrsqrt.pop %v3452
    %v4538 = vmul.f32 %v4537, %v3452
    %v4539 = vmul.f32 %v4538, %v4537
    %v4540 = vmul.f32 0.5, %v4539
    %v4541 = vsub.f32 1.5, %v4540
    %v4542 = vmul.f32 %v4537, %v4541
    %vm4543 = vweird.f32 %v3452
    %vm4544 = vweird.f32 %v4537
    %vm4545 = vmor %vm4543, %vm4544
    %v4546 = vsel %vm4545, %v4537, %v4542
    %v4547 = vrsqrt.pop %v3453
    %v4548 = vmul.f32 %v4547, %v3453
    %v4549 = vmul.f32 %v4548, %v4547
    %v4550 = vmul.f32 0.5, %v4549
    %v4551 = vsub.f32 1.5, %v4550
    %v4552 = vmul.f32 %v4547, %v4551
    %vm4553 = vweird.f32 %v3453
    %vm4554 = vweird.f32 %v4547
    %vm4555 = vmor %vm4553, %vm4554
    %v4556 = vsel %vm4555, %v4547, %v4552
    %v4557 = vrsqrt.pop %v3454
    %v4558 = vmul.f32 %v4557, %v3454
    %v4559 = vmul.f32 %v4558, %v4557
    %v4560 = vmul.f32 0.5, %v4559
    %v4561 = vsub.f32 1.5, %v4560
    %v4562 = vmul.f32 %v4557, %v4561
    %vm4563 = vweird.f32 %v3454
    %vm4564 = vweird.f32 %v4557
    %vm4565 = vmor %vm4563, %vm4564
    %v4566 = vsel %vm4565, %v4557, %v4562
    %v4567 = vrsqrt.pop %v3455
    %v4568 = vmul.f32 %v4567, %v3455
    %v4569 = vmul.f32 %v4568, %v4567
    %v4570 = vmul.f32 0.5, %v4569
    %v4571 = vsub.f32 1.5, %v4570
    %v4572 = vmul.f32 %v4567, %v4571
    %vm4573 = vweird.f32 %v3455
    %vm4574 = vweird.f32 %v4567
    %vm4575 = vmor %vm4573, %vm4574
    %v4576 = vsel %vm4575, %v4567, %v4572
    %v4577 = vrsqrt.pop %v3456
    %v4578 = vmul.f32 %v4577, %v3456
    %v4579 = vmul.f32 %v4578, %v4577
    %v4580 = vmul.f32 0.5, %v4579
    %v4581 = vsub.f32 1.5, %v4580
    %v4582 = vmul.f32 %v4577, %v4581
    %vm4583 = vweird.f32 %v3456
    %vm4584 = vweird.f32 %v4577
    %vm4585 = vmor %vm4583, %vm4584
    %v4586 = vsel %vm4585, %v4577, %v4582
    %v4587 = vrsqrt.pop %v3457
    %v4588 = vmul.f32 %v4587, %v3457
    %v4589 = vmul.f32 %v4588, %v4587
    %v4590 = vmul.f32 0.5, %v4589
    %v4591 = vsub.f32 1.5, %v4590
    %v4592 = vmul.f32 %v4587, %v4591
    %vm4593 = vweird.f32 %v3457
    %vm4594 = vweird.f32 %v4587
    %vm4595 = vmor %vm4593, %vm4594
    %v4596 = vsel %vm4595, %v4587, %v4592
    %v4597 = vrsqrt.pop %v3458
    %v4598 = vmul.f32 %v4597, %v3458
    %v4599 = vmul.f32 %v4598, %v4597
    %v4600 = vmul.f32 0.5, %v4599
    %v4601 = vsub.f32 1.5, %v4600
    %v4602 = vmul.f32 %v4597, %v4601
    %vm4603 = vweird.f32 %v3458
    %vm4604 = vweird.f32 %v4597
    %vm4605 = vmor %vm4603, %vm4604
    %v4606 = vsel %vm4605, %v4597, %v4602
    %v4607 = vrsqrt.pop %v3459
    %v4608 = vmul.f32 %v4607, %v3459
    %v4609 = vmul.f32 %v4608, %v4607
    %v4610 = vmul.f32 0.5, %v4609
    %v4611 = vsub.f32 1.5, %v4610
    %v4612 = vmul.f32 %v4607, %v4611
    %vm4613 = vweird.f32 %v3459
    %vm4614 = vweird.f32 %v4607
    %vm4615 = vmor %vm4613, %vm4614
    %v4616 = vsel %vm4615, %v4607, %v4612
    %v4617 = vrsqrt.pop %v3460
    %v4618 = vmul.f32 %v4617, %v3460
    %v4619 = vmul.f32 %v4618, %v4617
    %v4620 = vmul.f32 0.5, %v4619
    %v4621 = vsub.f32 1.5, %v4620
    %v4622 = vmul.f32 %v4617, %v4621
    %vm4623 = vweird.f32 %v3460
    %vm4624 = vweird.f32 %v4617
    %vm4625 = vmor %vm4623, %vm4624
    %v4626 = vsel %vm4625, %v4617, %v4622
    %v4627 = vrsqrt.pop %v3461
    %v4628 = vmul.f32 %v4627, %v3461
    %v4629 = vmul.f32 %v4628, %v4627
    %v4630 = vmul.f32 0.5, %v4629
    %v4631 = vsub.f32 1.5, %v4630
    %v4632 = vmul.f32 %v4627, %v4631
    %vm4633 = vweird.f32 %v3461
    %vm4634 = vweird.f32 %v4627
    %vm4635 = vmor %vm4633, %vm4634
    %v4636 = vsel %vm4635, %v4627, %v4632
    %v4637 = vrsqrt.pop %v3462
    %v4638 = vmul.f32 %v4637, %v3462
    %v4639 = vmul.f32 %v4638, %v4637
    %v4640 = vmul.f32 0.5, %v4639
    %v4641 = vsub.f32 1.5, %v4640
    %v4642 = vmul.f32 %v4637, %v4641
    %vm4643 = vweird.f32 %v3462
    %vm4644 = vweird.f32 %v4637
    %vm4645 = vmor %vm4643, %vm4644
    %v4646 = vsel %vm4645, %v4637, %v4642
    %v4647 = vrsqrt.pop %v3463
    %v4648 = vmul.f32 %v4647, %v3463
    %v4649 = vmul.f32 %v4648, %v4647
    %v4650 = vmul.f32 0.5, %v4649
    %v4651 = vsub.f32 1.5, %v4650
    %v4652 = vmul.f32 %v4647, %v4651
    %vm4653 = vweird.f32 %v3463
    %vm4654 = vweird.f32 %v4647
    %vm4655 = vmor %vm4653, %vm4654
    %v4656 = vsel %vm4655, %v4647, %v4652
    %v4657 = vrsqrt.pop %v3464
    %v4658 = vmul.f32 %v4657, %v3464
    %v4659 = vmul.f32 %v4658, %v4657
    %v4660 = vmul.f32 0.5, %v4659
    %v4661 = vsub.f32 1.5, %v4660
    %v4662 = vmul.f32 %v4657, %v4661
    %vm4663 = vweird.f32 %v3464
    %vm4664 = vweird.f32 %v4657
    %vm4665 = vmor %vm4663, %vm4664
    %v4666 = vsel %vm4665, %v4657, %v4662
    %v4667 = vrsqrt.pop %v3465
    %v4668 = vmul.f32 %v4667, %v3465
    %v4669 = vmul.f32 %v4668, %v4667
    %v4670 = vmul.f32 0.5, %v4669
    %v4671 = vsub.f32 1.5, %v4670
    %v4672 = vmul.f32 %v4667, %v4671
    %vm4673 = vweird.f32 %v3465
    %vm4674 = vweird.f32 %v4667
    %vm4675 = vmor %vm4673, %vm4674
    %v4676 = vsel %vm4675, %v4667, %v4672
    %v4677 = vrsqrt.pop %v3466
    %v4678 = vmul.f32 %v4677, %v3466
    %v4679 = vmul.f32 %v4678, %v4677
    %v4680 = vmul.f32 0.5, %v4679
    %v4681 = vsub.f32 1.5, %v4680
    %v4682 = vmul.f32 %v4677, %v4681
    %vm4683 = vweird.f32 %v3466
    %vm4684 = vweird.f32 %v4677
    %vm4685 = vmor %vm4683, %vm4684
    %v4686 = vsel %vm4685, %v4677, %v4682
    %v4687 = vrsqrt.pop %v3467
    %v4688 = vmul.f32 %v4687, %v3467
    %v4689 = vmul.f32 %v4688, %v4687
    %v4690 = vmul.f32 0.5, %v4689
    %v4691 = vsub.f32 1.5, %v4690
    %v4692 = vmul.f32 %v4687, %v4691
    %vm4693 = vweird.f32 %v3467
    %vm4694 = vweird.f32 %v4687
    %vm4695 = vmor %vm4693, %vm4694
    %v4696 = vsel %vm4695, %v4687, %v4692
    %v4697 = vrsqrt.pop %v3468
    %v4698 = vmul.f32 %v4697, %v3468
    %v4699 = vmul.f32 %v4698, %v4697
    %v4700 = vmul.f32 0.5, %v4699
    %v4701 = vsub.f32 1.5, %v4700
    %v4702 = vmul.f32 %v4697, %v4701
    %vm4703 = vweird.f32 %v3468
    %vm4704 = vweird.f32 %v4697
    %vm4705 = vmor %vm4703, %vm4704
    %v4706 = vsel %vm4705, %v4697, %v4702
    %v4707 = vrsqrt.pop %v3469
    %v4708 = vmul.f32 %v4707, %v3469
    %v4709 = vmul.f32 %v4708, %v4707
    %v4710 = vmul.f32 0.5, %v4709
    %v4711 = vsub.f32 1.5, %v4710
    %v4712 = vmul.f32 %v4707, %v4711
    %vm4713 = vweird.f32 %v3469
    %vm4714 = vweird.f32 %v4707
    %vm4715 = vmor %vm4713, %vm4714
    %v4716 = vsel %vm4715, %v4707, %v4712
    %v4717 = vrsqrt.pop %v3470
    %v4718 = vmul.f32 %v4717, %v3470
    %v4719 = vmul.f32 %v4718, %v4717
    %v4720 = vmul.f32 0.5, %v4719
    %v4721 = vsub.f32 1.5, %v4720
    %v4722 = vmul.f32 %v4717, %v4721
    %vm4723 = vweird.f32 %v3470
    %vm4724 = vweird.f32 %v4717
    %vm4725 = vmor %vm4723, %vm4724
    %v4726 = vsel %vm4725, %v4717, %v4722
    %v4727 = vrsqrt.pop %v3471
    %v4728 = vmul.f32 %v4727, %v3471
    %v4729 = vmul.f32 %v4728, %v4727
    %v4730 = vmul.f32 0.5, %v4729
    %v4731 = vsub.f32 1.5, %v4730
    %v4732 = vmul.f32 %v4727, %v4731
    %vm4733 = vweird.f32 %v3471
    %vm4734 = vweird.f32 %v4727
    %vm4735 = vmor %vm4733, %vm4734
    %v4736 = vsel %vm4735, %v4727, %v4732
    %v4737 = vrsqrt.pop %v3472
    %v4738 = vmul.f32 %v4737, %v3472
    %v4739 = vmul.f32 %v4738, %v4737
    %v4740 = vmul.f32 0.5, %v4739
    %v4741 = vsub.f32 1.5, %v4740
    %v4742 = vmul.f32 %v4737, %v4741
    %vm4743 = vweird.f32 %v3472
    %vm4744 = vweird.f32 %v4737
    %vm4745 = vmor %vm4743, %vm4744
    %v4746 = vsel %vm4745, %v4737, %v4742
    %v4747 = vrsqrt.pop %v3473
    %v4748 = vmul.f32 %v4747, %v3473
    %v4749 = vmul.f32 %v4748, %v4747
    %v4750 = vmul.f32 0.5, %v4749
    %v4751 = vsub.f32 1.5, %v4750
    %v4752 = vmul.f32 %v4747, %v4751
    %vm4753 = vweird.f32 %v3473
    %vm4754 = vweird.f32 %v4747
    %vm4755 = vmor %vm4753, %vm4754
    %v4756 = vsel %vm4755, %v4747, %v4752
    %v4757 = vrsqrt.pop %v3474
    %v4758 = vmul.f32 %v4757, %v3474
    %v4759 = vmul.f32 %v4758, %v4757
    %v4760 = vmul.f32 0.5, %v4759
    %v4761 = vsub.f32 1.5, %v4760
    %v4762 = vmul.f32 %v4757, %v4761
    %vm4763 = vweird.f32 %v3474
    %vm4764 = vweird.f32 %v4757
    %vm4765 = vmor %vm4763, %vm4764
    %v4766 = vsel %vm4765, %v4757, %v4762
    %v4767 = vrsqrt.pop %v3475
    %v4768 = vmul.f32 %v4767, %v3475
    %v4769 = vmul.f32 %v4768, %v4767
    %v4770 = vmul.f32 0.5, %v4769
    %v4771 = vsub.f32 1.5, %v4770
    %v4772 = vmul.f32 %v4767, %v4771
    %vm4773 = vweird.f32 %v3475
    %vm4774 = vweird.f32 %v4767
    %vm4775 = vmor %vm4773, %vm4774
    %v4776 = vsel %vm4775, %v4767, %v4772
    %v4777 = vrsqrt.pop %v3476
    %v4778 = vmul.f32 %v4777, %v3476
    %v4779 = vmul.f32 %v4778, %v4777
    %v4780 = vmul.f32 0.5, %v4779
    %v4781 = vsub.f32 1.5, %v4780
    %v4782 = vmul.f32 %v4777, %v4781
    %vm4783 = vweird.f32 %v3476
    %vm4784 = vweird.f32 %v4777
    %vm4785 = vmor %vm4783, %vm4784
    %v4786 = vsel %vm4785, %v4777, %v4782
    %v4787 = vrsqrt.pop %v3477
    %v4788 = vmul.f32 %v4787, %v3477
    %v4789 = vmul.f32 %v4788, %v4787
    %v4790 = vmul.f32 0.5, %v4789
    %v4791 = vsub.f32 1.5, %v4790
    %v4792 = vmul.f32 %v4787, %v4791
    %vm4793 = vweird.f32 %v3477
    %vm4794 = vweird.f32 %v4787
    %vm4795 = vmor %vm4793, %vm4794
    %v4796 = vsel %vm4795, %v4787, %v4792
    %v4797 = vrsqrt.pop %v3478
    %v4798 = vmul.f32 %v4797, %v3478
    %v4799 = vmul.f32 %v4798, %v4797
    %v4800 = vmul.f32 0.5, %v4799
    %v4801 = vsub.f32 1.5, %v4800
    %v4802 = vmul.f32 %v4797, %v4801
    %vm4803 = vweird.f32 %v3478
    %vm4804 = vweird.f32 %v4797
    %vm4805 = vmor %vm4803, %vm4804
    %v4806 = vsel %vm4805, %v4797, %v4802
    %v4807 = vrsqrt.pop %v3479
    %v4808 = vmul.f32 %v4807, %v3479
    %v4809 = vmul.f32 %v4808, %v4807
    %v4810 = vmul.f32 0.5, %v4809
    %v4811 = vsub.f32 1.5, %v4810
    %v4812 = vmul.f32 %v4807, %v4811
    %vm4813 = vweird.f32 %v3479
    %vm4814 = vweird.f32 %v4807
    %vm4815 = vmor %vm4813, %vm4814
    %v4816 = vsel %vm4815, %v4807, %v4812
    %v4817 = vrsqrt.pop %v3480
    %v4818 = vmul.f32 %v4817, %v3480
    %v4819 = vmul.f32 %v4818, %v4817
    %v4820 = vmul.f32 0.5, %v4819
    %v4821 = vsub.f32 1.5, %v4820
    %v4822 = vmul.f32 %v4817, %v4821
    %vm4823 = vweird.f32 %v3480
    %vm4824 = vweird.f32 %v4817
    %vm4825 = vmor %vm4823, %vm4824
    %v4826 = vsel %vm4825, %v4817, %v4822
    %v4827 = vrsqrt.pop %v3481
    %v4828 = vmul.f32 %v4827, %v3481
    %v4829 = vmul.f32 %v4828, %v4827
    %v4830 = vmul.f32 0.5, %v4829
    %v4831 = vsub.f32 1.5, %v4830
    %v4832 = vmul.f32 %v4827, %v4831
    %vm4833 = vweird.f32 %v3481
    %vm4834 = vweird.f32 %v4827
    %vm4835 = vmor %vm4833, %vm4834
    %v4836 = vsel %vm4835, %v4827, %v4832
    %v4837 = vrsqrt.pop %v3482
    %v4838 = vmul.f32 %v4837, %v3482
    %v4839 = vmul.f32 %v4838, %v4837
    %v4840 = vmul.f32 0.5, %v4839
    %v4841 = vsub.f32 1.5, %v4840
    %v4842 = vmul.f32 %v4837, %v4841
    %vm4843 = vweird.f32 %v3482
    %vm4844 = vweird.f32 %v4837
    %vm4845 = vmor %vm4843, %vm4844
    %v4846 = vsel %vm4845, %v4837, %v4842
    %v4847 = vrsqrt.pop %v3483
    %v4848 = vmul.f32 %v4847, %v3483
    %v4849 = vmul.f32 %v4848, %v4847
    %v4850 = vmul.f32 0.5, %v4849
    %v4851 = vsub.f32 1.5, %v4850
    %v4852 = vmul.f32 %v4847, %v4851
    %vm4853 = vweird.f32 %v3483
    %vm4854 = vweird.f32 %v4847
    %vm4855 = vmor %vm4853, %vm4854
    %v4856 = vsel %vm4855, %v4847, %v4852
    %v4857 = vrsqrt.pop %v3484
    %v4858 = vmul.f32 %v4857, %v3484
    %v4859 = vmul.f32 %v4858, %v4857
    %v4860 = vmul.f32 0.5, %v4859
    %v4861 = vsub.f32 1.5, %v4860
    %v4862 = vmul.f32 %v4857, %v4861
    %vm4863 = vweird.f32 %v3484
    %vm4864 = vweird.f32 %v4857
    %vm4865 = vmor %vm4863, %vm4864
    %v4866 = vsel %vm4865, %v4857, %v4862
    %v4867 = vrsqrt.pop %v3485
    %v4868 = vmul.f32 %v4867, %v3485
    %v4869 = vmul.f32 %v4868, %v4867
    %v4870 = vmul.f32 0.5, %v4869
    %v4871 = vsub.f32 1.5, %v4870
    %v4872 = vmul.f32 %v4867, %v4871
    %vm4873 = vweird.f32 %v3485
    %vm4874 = vweird.f32 %v4867
    %vm4875 = vmor %vm4873, %vm4874
    %v4876 = vsel %vm4875, %v4867, %v4872
    %v4877 = vrsqrt.pop %v3486
    %v4878 = vmul.f32 %v4877, %v3486
    %v4879 = vmul.f32 %v4878, %v4877
    %v4880 = vmul.f32 0.5, %v4879
    %v4881 = vsub.f32 1.5, %v4880
    %v4882 = vmul.f32 %v4877, %v4881
    %vm4883 = vweird.f32 %v3486
    %vm4884 = vweird.f32 %v4877
    %vm4885 = vmor %vm4883, %vm4884
    %v4886 = vsel %vm4885, %v4877, %v4882
    %v4887 = vrsqrt.pop %v3487
    %v4888 = vmul.f32 %v4887, %v3487
    %v4889 = vmul.f32 %v4888, %v4887
    %v4890 = vmul.f32 0.5, %v4889
    %v4891 = vsub.f32 1.5, %v4890
    %v4892 = vmul.f32 %v4887, %v4891
    %vm4893 = vweird.f32 %v3487
    %vm4894 = vweird.f32 %v4887
    %vm4895 = vmor %vm4893, %vm4894
    %v4896 = vsel %vm4895, %v4887, %v4892
    %v4897 = vrsqrt.pop %v3488
    %v4898 = vmul.f32 %v4897, %v3488
    %v4899 = vmul.f32 %v4898, %v4897
    %v4900 = vmul.f32 0.5, %v4899
    %v4901 = vsub.f32 1.5, %v4900
    %v4902 = vmul.f32 %v4897, %v4901
    %vm4903 = vweird.f32 %v3488
    %vm4904 = vweird.f32 %v4897
    %vm4905 = vmor %vm4903, %vm4904
    %v4906 = vsel %vm4905, %v4897, %v4902
    %v4907 = vrsqrt.pop %v3489
    %v4908 = vmul.f32 %v4907, %v3489
    %v4909 = vmul.f32 %v4908, %v4907
    %v4910 = vmul.f32 0.5, %v4909
    %v4911 = vsub.f32 1.5, %v4910
    %v4912 = vmul.f32 %v4907, %v4911
    %vm4913 = vweird.f32 %v3489
    %vm4914 = vweird.f32 %v4907
    %vm4915 = vmor %vm4913, %vm4914
    %v4916 = vsel %vm4915, %v4907, %v4912
    %v4917 = vrsqrt.pop %v3490
    %v4918 = vmul.f32 %v4917, %v3490
    %v4919 = vmul.f32 %v4918, %v4917
    %v4920 = vmul.f32 0.5, %v4919
    %v4921 = vsub.f32 1.5, %v4920
    %v4922 = vmul.f32 %v4917, %v4921
    %vm4923 = vweird.f32 %v3490
    %vm4924 = vweird.f32 %v4917
    %vm4925 = vmor %vm4923, %vm4924
    %v4926 = vsel %vm4925, %v4917, %v4922
    %v4927 = vrsqrt.pop %v3491
    %v4928 = vmul.f32 %v4927, %v3491
    %v4929 = vmul.f32 %v4928, %v4927
    %v4930 = vmul.f32 0.5, %v4929
    %v4931 = vsub.f32 1.5, %v4930
    %v4932 = vmul.f32 %v4927, %v4931
    %vm4933 = vweird.f32 %v3491
    %vm4934 = vweird.f32 %v4927
    %vm4935 = vmor %vm4933, %vm4934
    %v4936 = vsel %vm4935, %v4927, %v4932
    %v4937 = vrsqrt.pop %v3492
    %v4938 = vmul.f32 %v4937, %v3492
    %v4939 = vmul.f32 %v4938, %v4937
    %v4940 = vmul.f32 0.5, %v4939
    %v4941 = vsub.f32 1.5, %v4940
    %v4942 = vmul.f32 %v4937, %v4941
    %vm4943 = vweird.f32 %v3492
    %vm4944 = vweird.f32 %v4937
    %vm4945 = vmor %vm4943, %vm4944
    %v4946 = vsel %vm4945, %v4937, %v4942
    %v4947 = vrsqrt.pop %v3493
    %v4948 = vmul.f32 %v4947, %v3493
    %v4949 = vmul.f32 %v4948, %v4947
    %v4950 = vmul.f32 0.5, %v4949
    %v4951 = vsub.f32 1.5, %v4950
    %v4952 = vmul.f32 %v4947, %v4951
    %vm4953 = vweird.f32 %v3493
    %vm4954 = vweird.f32 %v4947
    %vm4955 = vmor %vm4953, %vm4954
    %v4956 = vsel %vm4955, %v4947, %v4952
    %v4957 = vrsqrt.pop %v3494
    %v4958 = vmul.f32 %v4957, %v3494
    %v4959 = vmul.f32 %v4958, %v4957
    %v4960 = vmul.f32 0.5, %v4959
    %v4961 = vsub.f32 1.5, %v4960
    %v4962 = vmul.f32 %v4957, %v4961
    %vm4963 = vweird.f32 %v3494
    %vm4964 = vweird.f32 %v4957
    %vm4965 = vmor %vm4963, %vm4964
    %v4966 = vsel %vm4965, %v4957, %v4962
    %v4967 = vrsqrt.pop %v3495
    %v4968 = vmul.f32 %v4967, %v3495
    %v4969 = vmul.f32 %v4968, %v4967
    %v4970 = vmul.f32 0.5, %v4969
    %v4971 = vsub.f32 1.5, %v4970
    %v4972 = vmul.f32 %v4967, %v4971
    %vm4973 = vweird.f32 %v3495
    %vm4974 = vweird.f32 %v4967
    %vm4975 = vmor %vm4973, %vm4974
    %v4976 = vsel %vm4975, %v4967, %v4972
    %v4977 = vrsqrt.pop %v3496
    %v4978 = vmul.f32 %v4977, %v3496
    %v4979 = vmul.f32 %v4978, %v4977
    %v4980 = vmul.f32 0.5, %v4979
    %v4981 = vsub.f32 1.5, %v4980
    %v4982 = vmul.f32 %v4977, %v4981
    %vm4983 = vweird.f32 %v3496
    %vm4984 = vweird.f32 %v4977
    %vm4985 = vmor %vm4983, %vm4984
    %v4986 = vsel %vm4985, %v4977, %v4982
    %v4987 = vrsqrt.pop %v3497
    %v4988 = vmul.f32 %v4987, %v3497
    %v4989 = vmul.f32 %v4988, %v4987
    %v4990 = vmul.f32 0.5, %v4989
    %v4991 = vsub.f32 1.5, %v4990
    %v4992 = vmul.f32 %v4987, %v4991
    %vm4993 = vweird.f32 %v3497
    %vm4994 = vweird.f32 %v4987
    %vm4995 = vmor %vm4993, %vm4994
    %v4996 = vsel %vm4995, %v4987, %v4992
    %v4997 = vrsqrt.pop %v3498
    %v4998 = vmul.f32 %v4997, %v3498
    %v4999 = vmul.f32 %v4998, %v4997
    %v5000 = vmul.f32 0.5, %v4999
    %v5001 = vsub.f32 1.5, %v5000
    %v5002 = vmul.f32 %v4997, %v5001
    %vm5003 = vweird.f32 %v3498
    %vm5004 = vweird.f32 %v4997
    %vm5005 = vmor %vm5003, %vm5004
    %v5006 = vsel %vm5005, %v4997, %v5002
    %v5007 = vrsqrt.pop %v3499
    %v5008 = vmul.f32 %v5007, %v3499
    %v5009 = vmul.f32 %v5008, %v5007
    %v5010 = vmul.f32 0.5, %v5009
    %v5011 = vsub.f32 1.5, %v5010
    %v5012 = vmul.f32 %v5007, %v5011
    %vm5013 = vweird.f32 %v3499
    %vm5014 = vweird.f32 %v5007
    %vm5015 = vmor %vm5013, %vm5014
    %v5016 = vsel %vm5015, %v5007, %v5012
    %v5017 = vrsqrt.pop %v3500
    %v5018 = vmul.f32 %v5017, %v3500
    %v5019 = vmul.f32 %v5018, %v5017
    %v5020 = vmul.f32 0.5, %v5019
    %v5021 = vsub.f32 1.5, %v5020
    %v5022 = vmul.f32 %v5017, %v5021
    %vm5023 = vweird.f32 %v3500
    %vm5024 = vweird.f32 %v5017
    %vm5025 = vmor %vm5023, %vm5024
    %v5026 = vsel %vm5025, %v5017, %v5022
    %v5027 = vrsqrt.pop %v3501
    %v5028 = vmul.f32 %v5027, %v3501
    %v5029 = vmul.f32 %v5028, %v5027
    %v5030 = vmul.f32 0.5, %v5029
    %v5031 = vsub.f32 1.5, %v5030
    %v5032 = vmul.f32 %v5027, %v5031
    %vm5033 = vweird.f32 %v3501
    %vm5034 = vweird.f32 %v5027
    %vm5035 = vmor %vm5033, %vm5034
    %v5036 = vsel %vm5035, %v5027, %v5032
    %v5037 = vrsqrt.pop %v3502
    %v5038 = vmul.f32 %v5037, %v3502
    %v5039 = vmul.f32 %v5038, %v5037
    %v5040 = vmul.f32 0.5, %v5039
    %v5041 = vsub.f32 1.5, %v5040
    %v5042 = vmul.f32 %v5037, %v5041
    %vm5043 = vweird.f32 %v3502
    %vm5044 = vweird.f32 %v5037
    %vm5045 = vmor %vm5043, %vm5044
    %v5046 = vsel %vm5045, %v5037, %v5042
    %v5047 = vrsqrt.pop %v3503
    %v5048 = vmul.f32 %v5047, %v3503
    %v5049 = vmul.f32 %v5048, %v5047
    %v5050 = vmul.f32 0.5, %v5049
    %v5051 = vsub.f32 1.5, %v5050
    %v5052 = vmul.f32 %v5047, %v5051
    %vm5053 = vweird.f32 %v3503
    %vm5054 = vweird.f32 %v5047
    %vm5055 = vmor %vm5053, %vm5054
    %v5056 = vsel %vm5055, %v5047, %v5052
    %v5057 = vrsqrt.pop %v3504
    %v5058 = vmul.f32 %v5057, %v3504
    %v5059 = vmul.f32 %v5058, %v5057
    %v5060 = vmul.f32 0.5, %v5059
    %v5061 = vsub.f32 1.5, %v5060
    %v5062 = vmul.f32 %v5057, %v5061
    %vm5063 = vweird.f32 %v3504
    %vm5064 = vweird.f32 %v5057
    %vm5065 = vmor %vm5063, %vm5064
    %v5066 = vsel %vm5065, %v5057, %v5062
    %v5067 = vrsqrt.pop %v3505
    %v5068 = vmul.f32 %v5067, %v3505
    %v5069 = vmul.f32 %v5068, %v5067
    %v5070 = vmul.f32 0.5, %v5069
    %v5071 = vsub.f32 1.5, %v5070
    %v5072 = vmul.f32 %v5067, %v5071
    %vm5073 = vweird.f32 %v3505
    %vm5074 = vweird.f32 %v5067
    %vm5075 = vmor %vm5073, %vm5074
    %v5076 = vsel %vm5075, %v5067, %v5072
    %v5077 = vrsqrt.pop %v3506
    %v5078 = vmul.f32 %v5077, %v3506
    %v5079 = vmul.f32 %v5078, %v5077
    %v5080 = vmul.f32 0.5, %v5079
    %v5081 = vsub.f32 1.5, %v5080
    %v5082 = vmul.f32 %v5077, %v5081
    %vm5083 = vweird.f32 %v3506
    %vm5084 = vweird.f32 %v5077
    %vm5085 = vmor %vm5083, %vm5084
    %v5086 = vsel %vm5085, %v5077, %v5082
    %v5087 = vrsqrt.pop %v3507
    %v5088 = vmul.f32 %v5087, %v3507
    %v5089 = vmul.f32 %v5088, %v5087
    %v5090 = vmul.f32 0.5, %v5089
    %v5091 = vsub.f32 1.5, %v5090
    %v5092 = vmul.f32 %v5087, %v5091
    %vm5093 = vweird.f32 %v3507
    %vm5094 = vweird.f32 %v5087
    %vm5095 = vmor %vm5093, %vm5094
    %v5096 = vsel %vm5095, %v5087, %v5092
    %v5097 = vrsqrt.pop %v3508
    %v5098 = vmul.f32 %v5097, %v3508
    %v5099 = vmul.f32 %v5098, %v5097
    %v5100 = vmul.f32 0.5, %v5099
    %v5101 = vsub.f32 1.5, %v5100
    %v5102 = vmul.f32 %v5097, %v5101
    %vm5103 = vweird.f32 %v3508
    %vm5104 = vweird.f32 %v5097
    %vm5105 = vmor %vm5103, %vm5104
    %v5106 = vsel %vm5105, %v5097, %v5102
    %v5107 = vrsqrt.pop %v3509
    %v5108 = vmul.f32 %v5107, %v3509
    %v5109 = vmul.f32 %v5108, %v5107
    %v5110 = vmul.f32 0.5, %v5109
    %v5111 = vsub.f32 1.5, %v5110
    %v5112 = vmul.f32 %v5107, %v5111
    %vm5113 = vweird.f32 %v3509
    %vm5114 = vweird.f32 %v5107
    %vm5115 = vmor %vm5113, %vm5114
    %v5116 = vsel %vm5115, %v5107, %v5112
    %v5117 = vrsqrt.pop %v3510
    %v5118 = vmul.f32 %v5117, %v3510
    %v5119 = vmul.f32 %v5118, %v5117
    %v5120 = vmul.f32 0.5, %v5119
    %v5121 = vsub.f32 1.5, %v5120
    %v5122 = vmul.f32 %v5117, %v5121
    %vm5123 = vweird.f32 %v3510
    %vm5124 = vweird.f32 %v5117
    %vm5125 = vmor %vm5123, %vm5124
    %v5126 = vsel %vm5125, %v5117, %v5122
    %v5127 = vrsqrt.pop %v3511
    %v5128 = vmul.f32 %v5127, %v3511
    %v5129 = vmul.f32 %v5128, %v5127
    %v5130 = vmul.f32 0.5, %v5129
    %v5131 = vsub.f32 1.5, %v5130
    %v5132 = vmul.f32 %v5127, %v5131
    %vm5133 = vweird.f32 %v3511
    %vm5134 = vweird.f32 %v5127
    %vm5135 = vmor %vm5133, %vm5134
    %v5136 = vsel %vm5135, %v5127, %v5132
    %v5137 = vrsqrt.pop %v3512
    %v5138 = vmul.f32 %v5137, %v3512
    %v5139 = vmul.f32 %v5138, %v5137
    %v5140 = vmul.f32 0.5, %v5139
    %v5141 = vsub.f32 1.5, %v5140
    %v5142 = vmul.f32 %v5137, %v5141
    %vm5143 = vweird.f32 %v3512
    %vm5144 = vweird.f32 %v5137
    %vm5145 = vmor %vm5143, %vm5144
    %v5146 = vsel %vm5145, %v5137, %v5142
    %v5147 = vrsqrt.pop %v3513
    %v5148 = vmul.f32 %v5147, %v3513
    %v5149 = vmul.f32 %v5148, %v5147
    %v5150 = vmul.f32 0.5, %v5149
    %v5151 = vsub.f32 1.5, %v5150
    %v5152 = vmul.f32 %v5147, %v5151
    %vm5153 = vweird.f32 %v3513
    %vm5154 = vweird.f32 %v5147
    %vm5155 = vmor %vm5153, %vm5154
    %v5156 = vsel %vm5155, %v5147, %v5152
    %v5157 = vrsqrt.pop %v3514
    %v5158 = vmul.f32 %v5157, %v3514
    %v5159 = vmul.f32 %v5158, %v5157
    %v5160 = vmul.f32 0.5, %v5159
    %v5161 = vsub.f32 1.5, %v5160
    %v5162 = vmul.f32 %v5157, %v5161
    %vm5163 = vweird.f32 %v3514
    %vm5164 = vweird.f32 %v5157
    %vm5165 = vmor %vm5163, %vm5164
    %v5166 = vsel %vm5165, %v5157, %v5162
    %v5167 = vrsqrt.pop %v3515
    %v5168 = vmul.f32 %v5167, %v3515
    %v5169 = vmul.f32 %v5168, %v5167
    %v5170 = vmul.f32 0.5, %v5169
    %v5171 = vsub.f32 1.5, %v5170
    %v5172 = vmul.f32 %v5167, %v5171
    %vm5173 = vweird.f32 %v3515
    %vm5174 = vweird.f32 %v5167
    %vm5175 = vmor %vm5173, %vm5174
    %v5176 = vsel %vm5175, %v5167, %v5172
    %v5177 = vrsqrt.pop %v3516
    %v5178 = vmul.f32 %v5177, %v3516
    %v5179 = vmul.f32 %v5178, %v5177
    %v5180 = vmul.f32 0.5, %v5179
    %v5181 = vsub.f32 1.5, %v5180
    %v5182 = vmul.f32 %v5177, %v5181
    %vm5183 = vweird.f32 %v3516
    %vm5184 = vweird.f32 %v5177
    %vm5185 = vmor %vm5183, %vm5184
    %v5186 = vsel %vm5185, %v5177, %v5182
    %v5187 = vrsqrt.pop %v3517
    %v5188 = vmul.f32 %v5187, %v3517
    %v5189 = vmul.f32 %v5188, %v5187
    %v5190 = vmul.f32 0.5, %v5189
    %v5191 = vsub.f32 1.5, %v5190
    %v5192 = vmul.f32 %v5187, %v5191
    %vm5193 = vweird.f32 %v3517
    %vm5194 = vweird.f32 %v5187
    %vm5195 = vmor %vm5193, %vm5194
    %v5196 = vsel %vm5195, %v5187, %v5192
    %v5197 = vrsqrt.pop %v3518
    %v5198 = vmul.f32 %v5197, %v3518
    %v5199 = vmul.f32 %v5198, %v5197
    %v5200 = vmul.f32 0.5, %v5199
    %v5201 = vsub.f32 1.5, %v5200
    %v5202 = vmul.f32 %v5197, %v5201
    %vm5203 = vweird.f32 %v3518
    %vm5204 = vweird.f32 %v5197
    %vm5205 = vmor %vm5203, %vm5204
    %v5206 = vsel %vm5205, %v5197, %v5202
    %v5207 = vrsqrt.pop %v3519
    %v5208 = vmul.f32 %v5207, %v3519
    %v5209 = vmul.f32 %v5208, %v5207
    %v5210 = vmul.f32 0.5, %v5209
    %v5211 = vsub.f32 1.5, %v5210
    %v5212 = vmul.f32 %v5207, %v5211
    %vm5213 = vweird.f32 %v3519
    %vm5214 = vweird.f32 %v5207
    %vm5215 = vmor %vm5213, %vm5214
    %v5216 = vsel %vm5215, %v5207, %v5212
    %v5217 = vrsqrt.pop %v3520
    %v5218 = vmul.f32 %v5217, %v3520
    %v5219 = vmul.f32 %v5218, %v5217
    %v5220 = vmul.f32 0.5, %v5219
    %v5221 = vsub.f32 1.5, %v5220
    %v5222 = vmul.f32 %v5217, %v5221
    %vm5223 = vweird.f32 %v3520
    %vm5224 = vweird.f32 %v5217
    %vm5225 = vmor %vm5223, %vm5224
    %v5226 = vsel %vm5225, %v5217, %v5222
    %v5227 = vrsqrt.pop %v3521
    %v5228 = vmul.f32 %v5227, %v3521
    %v5229 = vmul.f32 %v5228, %v5227
    %v5230 = vmul.f32 0.5, %v5229
    %v5231 = vsub.f32 1.5, %v5230
    %v5232 = vmul.f32 %v5227, %v5231
    %vm5233 = vweird.f32 %v3521
    %vm5234 = vweird.f32 %v5227
    %vm5235 = vmor %vm5233, %vm5234
    %v5236 = vsel %vm5235, %v5227, %v5232
    %v5237 = vrsqrt.pop %v3522
    %v5238 = vmul.f32 %v5237, %v3522
    %v5239 = vmul.f32 %v5238, %v5237
    %v5240 = vmul.f32 0.5, %v5239
    %v5241 = vsub.f32 1.5, %v5240
    %v5242 = vmul.f32 %v5237, %v5241
    %vm5243 = vweird.f32 %v3522
    %vm5244 = vweird.f32 %v5237
    %vm5245 = vmor %vm5243, %vm5244
    %v5246 = vsel %vm5245, %v5237, %v5242
    %v5247 = vrsqrt.pop %v3523
    %v5248 = vmul.f32 %v5247, %v3523
    %v5249 = vmul.f32 %v5248, %v5247
    %v5250 = vmul.f32 0.5, %v5249
    %v5251 = vsub.f32 1.5, %v5250
    %v5252 = vmul.f32 %v5247, %v5251
    %vm5253 = vweird.f32 %v3523
    %vm5254 = vweird.f32 %v5247
    %vm5255 = vmor %vm5253, %vm5254
    %v5256 = vsel %vm5255, %v5247, %v5252
    %v5257 = vrsqrt.pop %v3524
    %v5258 = vmul.f32 %v5257, %v3524
    %v5259 = vmul.f32 %v5258, %v5257
    %v5260 = vmul.f32 0.5, %v5259
    %v5261 = vsub.f32 1.5, %v5260
    %v5262 = vmul.f32 %v5257, %v5261
    %vm5263 = vweird.f32 %v3524
    %vm5264 = vweird.f32 %v5257
    %vm5265 = vmor %vm5263, %vm5264
    %v5266 = vsel %vm5265, %v5257, %v5262
    %v5267 = vrsqrt.pop %v3525
    %v5268 = vmul.f32 %v5267, %v3525
    %v5269 = vmul.f32 %v5268, %v5267
    %v5270 = vmul.f32 0.5, %v5269
    %v5271 = vsub.f32 1.5, %v5270
    %v5272 = vmul.f32 %v5267, %v5271
    %vm5273 = vweird.f32 %v3525
    %vm5274 = vweird.f32 %v5267
    %vm5275 = vmor %vm5273, %vm5274
    %v5276 = vsel %vm5275, %v5267, %v5272
    %v5277 = vrsqrt.pop %v3526
    %v5278 = vmul.f32 %v5277, %v3526
    %v5279 = vmul.f32 %v5278, %v5277
    %v5280 = vmul.f32 0.5, %v5279
    %v5281 = vsub.f32 1.5, %v5280
    %v5282 = vmul.f32 %v5277, %v5281
    %vm5283 = vweird.f32 %v3526
    %vm5284 = vweird.f32 %v5277
    %vm5285 = vmor %vm5283, %vm5284
    %v5286 = vsel %vm5285, %v5277, %v5282
    %v5287 = vrsqrt.pop %v3527
    %v5288 = vmul.f32 %v5287, %v3527
    %v5289 = vmul.f32 %v5288, %v5287
    %v5290 = vmul.f32 0.5, %v5289
    %v5291 = vsub.f32 1.5, %v5290
    %v5292 = vmul.f32 %v5287, %v5291
    %vm5293 = vweird.f32 %v3527
    %vm5294 = vweird.f32 %v5287
    %vm5295 = vmor %vm5293, %vm5294
    %v5296 = vsel %vm5295, %v5287, %v5292
    %v5297 = vrsqrt.pop %v3528
    %v5298 = vmul.f32 %v5297, %v3528
    %v5299 = vmul.f32 %v5298, %v5297
    %v5300 = vmul.f32 0.5, %v5299
    %v5301 = vsub.f32 1.5, %v5300
    %v5302 = vmul.f32 %v5297, %v5301
    %vm5303 = vweird.f32 %v3528
    %vm5304 = vweird.f32 %v5297
    %vm5305 = vmor %vm5303, %vm5304
    %v5306 = vsel %vm5305, %v5297, %v5302
    %v5307 = vrsqrt.pop %v3529
    %v5308 = vmul.f32 %v5307, %v3529
    %v5309 = vmul.f32 %v5308, %v5307
    %v5310 = vmul.f32 0.5, %v5309
    %v5311 = vsub.f32 1.5, %v5310
    %v5312 = vmul.f32 %v5307, %v5311
    %vm5313 = vweird.f32 %v3529
    %vm5314 = vweird.f32 %v5307
    %vm5315 = vmor %vm5313, %vm5314
    %v5316 = vsel %vm5315, %v5307, %v5312
    %v5317 = vrsqrt.pop %v3530
    %v5318 = vmul.f32 %v5317, %v3530
    %v5319 = vmul.f32 %v5318, %v5317
    %v5320 = vmul.f32 0.5, %v5319
    %v5321 = vsub.f32 1.5, %v5320
    %v5322 = vmul.f32 %v5317, %v5321
    %vm5323 = vweird.f32 %v3530
    %vm5324 = vweird.f32 %v5317
    %vm5325 = vmor %vm5323, %vm5324
    %v5326 = vsel %vm5325, %v5317, %v5322
    %v5327 = vrsqrt.pop %v3531
    %v5328 = vmul.f32 %v5327, %v3531
    %v5329 = vmul.f32 %v5328, %v5327
    %v5330 = vmul.f32 0.5, %v5329
    %v5331 = vsub.f32 1.5, %v5330
    %v5332 = vmul.f32 %v5327, %v5331
    %vm5333 = vweird.f32 %v3531
    %vm5334 = vweird.f32 %v5327
    %vm5335 = vmor %vm5333, %vm5334
    %v5336 = vsel %vm5335, %v5327, %v5332
    %v5337 = vrsqrt.pop %v3532
    %v5338 = vmul.f32 %v5337, %v3532
    %v5339 = vmul.f32 %v5338, %v5337
    %v5340 = vmul.f32 0.5, %v5339
    %v5341 = vsub.f32 1.5, %v5340
    %v5342 = vmul.f32 %v5337, %v5341
    %vm5343 = vweird.f32 %v3532
    %vm5344 = vweird.f32 %v5337
    %vm5345 = vmor %vm5343, %vm5344
    %v5346 = vsel %vm5345, %v5337, %v5342
    %v5347 = vrsqrt.pop %v3533
    %v5348 = vmul.f32 %v5347, %v3533
    %v5349 = vmul.f32 %v5348, %v5347
    %v5350 = vmul.f32 0.5, %v5349
    %v5351 = vsub.f32 1.5, %v5350
    %v5352 = vmul.f32 %v5347, %v5351
    %vm5353 = vweird.f32 %v3533
    %vm5354 = vweird.f32 %v5347
    %vm5355 = vmor %vm5353, %vm5354
    %v5356 = vsel %vm5355, %v5347, %v5352
    %v5357 = vrsqrt.pop %v3534
    %v5358 = vmul.f32 %v5357, %v3534
    %v5359 = vmul.f32 %v5358, %v5357
    %v5360 = vmul.f32 0.5, %v5359
    %v5361 = vsub.f32 1.5, %v5360
    %v5362 = vmul.f32 %v5357, %v5361
    %vm5363 = vweird.f32 %v3534
    %vm5364 = vweird.f32 %v5357
    %vm5365 = vmor %vm5363, %vm5364
    %v5366 = vsel %vm5365, %v5357, %v5362
    %v5367 = vrsqrt.pop %v3535
    %v5368 = vmul.f32 %v5367, %v3535
    %v5369 = vmul.f32 %v5368, %v5367
    %v5370 = vmul.f32 0.5, %v5369
    %v5371 = vsub.f32 1.5, %v5370
    %v5372 = vmul.f32 %v5367, %v5371
    %vm5373 = vweird.f32 %v3535
    %vm5374 = vweird.f32 %v5367
    %vm5375 = vmor %vm5373, %vm5374
    %v5376 = vsel %vm5375, %v5367, %v5372
    %v5377 = vrsqrt.pop %v3536
    %v5378 = vmul.f32 %v5377, %v3536
    %v5379 = vmul.f32 %v5378, %v5377
    %v5380 = vmul.f32 0.5, %v5379
    %v5381 = vsub.f32 1.5, %v5380
    %v5382 = vmul.f32 %v5377, %v5381
    %vm5383 = vweird.f32 %v3536
    %vm5384 = vweird.f32 %v5377
    %vm5385 = vmor %vm5383, %vm5384
    %v5386 = vsel %vm5385, %v5377, %v5382
    %v5387 = vrsqrt.pop %v3537
    %v5388 = vmul.f32 %v5387, %v3537
    %v5389 = vmul.f32 %v5388, %v5387
    %v5390 = vmul.f32 0.5, %v5389
    %v5391 = vsub.f32 1.5, %v5390
    %v5392 = vmul.f32 %v5387, %v5391
    %vm5393 = vweird.f32 %v3537
    %vm5394 = vweird.f32 %v5387
    %vm5395 = vmor %vm5393, %vm5394
    %v5396 = vsel %vm5395, %v5387, %v5392
    %v5397 = vrsqrt.pop %v3538
    %v5398 = vmul.f32 %v5397, %v3538
    %v5399 = vmul.f32 %v5398, %v5397
    %v5400 = vmul.f32 0.5, %v5399
    %v5401 = vsub.f32 1.5, %v5400
    %v5402 = vmul.f32 %v5397, %v5401
    %vm5403 = vweird.f32 %v3538
    %vm5404 = vweird.f32 %v5397
    %vm5405 = vmor %vm5403, %vm5404
    %v5406 = vsel %vm5405, %v5397, %v5402
    %v5407 = vrsqrt.pop %v3539
    %v5408 = vmul.f32 %v5407, %v3539
    %v5409 = vmul.f32 %v5408, %v5407
    %v5410 = vmul.f32 0.5, %v5409
    %v5411 = vsub.f32 1.5, %v5410
    %v5412 = vmul.f32 %v5407, %v5411
    %vm5413 = vweird.f32 %v3539
    %vm5414 = vweird.f32 %v5407
    %vm5415 = vmor %vm5413, %vm5414
    %v5416 = vsel %vm5415, %v5407, %v5412
    %v5417 = vrsqrt.pop %v3540
    %v5418 = vmul.f32 %v5417, %v3540
    %v5419 = vmul.f32 %v5418, %v5417
    %v5420 = vmul.f32 0.5, %v5419
    %v5421 = vsub.f32 1.5, %v5420
    %v5422 = vmul.f32 %v5417, %v5421
    %vm5423 = vweird.f32 %v3540
    %vm5424 = vweird.f32 %v5417
    %vm5425 = vmor %vm5423, %vm5424
    %v5426 = vsel %vm5425, %v5417, %v5422
    %v5427 = vrsqrt.pop %v3541
    %v5428 = vmul.f32 %v5427, %v3541
    %v5429 = vmul.f32 %v5428, %v5427
    %v5430 = vmul.f32 0.5, %v5429
    %v5431 = vsub.f32 1.5, %v5430
    %v5432 = vmul.f32 %v5427, %v5431
    %vm5433 = vweird.f32 %v3541
    %vm5434 = vweird.f32 %v5427
    %vm5435 = vmor %vm5433, %vm5434
    %v5436 = vsel %vm5435, %v5427, %v5432
    %v5437 = vrsqrt.pop %v3542
    %v5438 = vmul.f32 %v5437, %v3542
    %v5439 = vmul.f32 %v5438, %v5437
    %v5440 = vmul.f32 0.5, %v5439
    %v5441 = vsub.f32 1.5, %v5440
    %v5442 = vmul.f32 %v5437, %v5441
    %vm5443 = vweird.f32 %v3542
    %vm5444 = vweird.f32 %v5437
    %vm5445 = vmor %vm5443, %vm5444
    %v5446 = vsel %vm5445, %v5437, %v5442
    %v5447 = vrsqrt.pop %v3543
    %v5448 = vmul.f32 %v5447, %v3543
    %v5449 = vmul.f32 %v5448, %v5447
    %v5450 = vmul.f32 0.5, %v5449
    %v5451 = vsub.f32 1.5, %v5450
    %v5452 = vmul.f32 %v5447, %v5451
    %vm5453 = vweird.f32 %v3543
    %vm5454 = vweird.f32 %v5447
    %vm5455 = vmor %vm5453, %vm5454
    %v5456 = vsel %vm5455, %v5447, %v5452
    %v5457 = vrsqrt.pop %v3544
    %v5458 = vmul.f32 %v5457, %v3544
    %v5459 = vmul.f32 %v5458, %v5457
    %v5460 = vmul.f32 0.5, %v5459
    %v5461 = vsub.f32 1.5, %v5460
    %v5462 = vmul.f32 %v5457, %v5461
    %vm5463 = vweird.f32 %v3544
    %vm5464 = vweird.f32 %v5457
    %vm5465 = vmor %vm5463, %vm5464
    %v5466 = vsel %vm5465, %v5457, %v5462
    %v5467 = vrsqrt.pop %v3545
    %v5468 = vmul.f32 %v5467, %v3545
    %v5469 = vmul.f32 %v5468, %v5467
    %v5470 = vmul.f32 0.5, %v5469
    %v5471 = vsub.f32 1.5, %v5470
    %v5472 = vmul.f32 %v5467, %v5471
    %vm5473 = vweird.f32 %v3545
    %vm5474 = vweird.f32 %v5467
    %vm5475 = vmor %vm5473, %vm5474
    %v5476 = vsel %vm5475, %v5467, %v5472
    %v5477 = vrsqrt.pop %v3546
    %v5478 = vmul.f32 %v5477, %v3546
    %v5479 = vmul.f32 %v5478, %v5477
    %v5480 = vmul.f32 0.5, %v5479
    %v5481 = vsub.f32 1.5, %v5480
    %v5482 = vmul.f32 %v5477, %v5481
    %vm5483 = vweird.f32 %v3546
    %vm5484 = vweird.f32 %v5477
    %vm5485 = vmor %vm5483, %vm5484
    %v5486 = vsel %vm5485, %v5477, %v5482
    %v5487 = vrsqrt.pop %v3547
    %v5488 = vmul.f32 %v5487, %v3547
    %v5489 = vmul.f32 %v5488, %v5487
    %v5490 = vmul.f32 0.5, %v5489
    %v5491 = vsub.f32 1.5, %v5490
    %v5492 = vmul.f32 %v5487, %v5491
    %vm5493 = vweird.f32 %v3547
    %vm5494 = vweird.f32 %v5487
    %vm5495 = vmor %vm5493, %vm5494
    %v5496 = vsel %vm5495, %v5487, %v5492
    %v5497 = vrsqrt.pop %v3548
    %v5498 = vmul.f32 %v5497, %v3548
    %v5499 = vmul.f32 %v5498, %v5497
    %v5500 = vmul.f32 0.5, %v5499
    %v5501 = vsub.f32 1.5, %v5500
    %v5502 = vmul.f32 %v5497, %v5501
    %vm5503 = vweird.f32 %v3548
    %vm5504 = vweird.f32 %v5497
    %vm5505 = vmor %vm5503, %vm5504
    %v5506 = vsel %vm5505, %v5497, %v5502
    %v5507 = vrsqrt.pop %v3549
    %v5508 = vmul.f32 %v5507, %v3549
    %v5509 = vmul.f32 %v5508, %v5507
    %v5510 = vmul.f32 0.5, %v5509
    %v5511 = vsub.f32 1.5, %v5510
    %v5512 = vmul.f32 %v5507, %v5511
    %vm5513 = vweird.f32 %v3549
    %vm5514 = vweird.f32 %v5507
    %vm5515 = vmor %vm5513, %vm5514
    %v5516 = vsel %vm5515, %v5507, %v5512
    %v5517 = vrsqrt.pop %v3550
    %v5518 = vmul.f32 %v5517, %v3550
    %v5519 = vmul.f32 %v5518, %v5517
    %v5520 = vmul.f32 0.5, %v5519
    %v5521 = vsub.f32 1.5, %v5520
    %v5522 = vmul.f32 %v5517, %v5521
    %vm5523 = vweird.f32 %v3550
    %vm5524 = vweird.f32 %v5517
    %vm5525 = vmor %vm5523, %vm5524
    %v5526 = vsel %vm5525, %v5517, %v5522
    %v5527 = vrsqrt.pop %v3551
    %v5528 = vmul.f32 %v5527, %v3551
    %v5529 = vmul.f32 %v5528, %v5527
    %v5530 = vmul.f32 0.5, %v5529
    %v5531 = vsub.f32 1.5, %v5530
    %v5532 = vmul.f32 %v5527, %v5531
    %vm5533 = vweird.f32 %v3551
    %vm5534 = vweird.f32 %v5527
    %vm5535 = vmor %vm5533, %vm5534
    %v5536 = vsel %vm5535, %v5527, %v5532
    %v5537 = vrsqrt.pop %v3552
    %v5538 = vmul.f32 %v5537, %v3552
    %v5539 = vmul.f32 %v5538, %v5537
    %v5540 = vmul.f32 0.5, %v5539
    %v5541 = vsub.f32 1.5, %v5540
    %v5542 = vmul.f32 %v5537, %v5541
    %vm5543 = vweird.f32 %v3552
    %vm5544 = vweird.f32 %v5537
    %vm5545 = vmor %vm5543, %vm5544
    %v5546 = vsel %vm5545, %v5537, %v5542
    %v5547 = vrsqrt.pop %v3553
    %v5548 = vmul.f32 %v5547, %v3553
    %v5549 = vmul.f32 %v5548, %v5547
    %v5550 = vmul.f32 0.5, %v5549
    %v5551 = vsub.f32 1.5, %v5550
    %v5552 = vmul.f32 %v5547, %v5551
    %vm5553 = vweird.f32 %v3553
    %vm5554 = vweird.f32 %v5547
    %vm5555 = vmor %vm5553, %vm5554
    %v5556 = vsel %vm5555, %v5547, %v5552
    %v5557 = vrsqrt.pop %v3554
    %v5558 = vmul.f32 %v5557, %v3554
    %v5559 = vmul.f32 %v5558, %v5557
    %v5560 = vmul.f32 0.5, %v5559
    %v5561 = vsub.f32 1.5, %v5560
    %v5562 = vmul.f32 %v5557, %v5561
    %vm5563 = vweird.f32 %v3554
    %vm5564 = vweird.f32 %v5557
    %vm5565 = vmor %vm5563, %vm5564
    %v5566 = vsel %vm5565, %v5557, %v5562
    %v5567 = vrsqrt.pop %v3555
    %v5568 = vmul.f32 %v5567, %v3555
    %v5569 = vmul.f32 %v5568, %v5567
    %v5570 = vmul.f32 0.5, %v5569
    %v5571 = vsub.f32 1.5, %v5570
    %v5572 = vmul.f32 %v5567, %v5571
    %vm5573 = vweird.f32 %v3555
    %vm5574 = vweird.f32 %v5567
    %vm5575 = vmor %vm5573, %vm5574
    %v5576 = vsel %vm5575, %v5567, %v5572
    %v5577 = vrsqrt.pop %v3556
    %v5578 = vmul.f32 %v5577, %v3556
    %v5579 = vmul.f32 %v5578, %v5577
    %v5580 = vmul.f32 0.5, %v5579
    %v5581 = vsub.f32 1.5, %v5580
    %v5582 = vmul.f32 %v5577, %v5581
    %vm5583 = vweird.f32 %v3556
    %vm5584 = vweird.f32 %v5577
    %vm5585 = vmor %vm5583, %vm5584
    %v5586 = vsel %vm5585, %v5577, %v5582
    %v5587 = vrsqrt.pop %v3557
    %v5588 = vmul.f32 %v5587, %v3557
    %v5589 = vmul.f32 %v5588, %v5587
    %v5590 = vmul.f32 0.5, %v5589
    %v5591 = vsub.f32 1.5, %v5590
    %v5592 = vmul.f32 %v5587, %v5591
    %vm5593 = vweird.f32 %v3557
    %vm5594 = vweird.f32 %v5587
    %vm5595 = vmor %vm5593, %vm5594
    %v5596 = vsel %vm5595, %v5587, %v5592
    %v5597 = vrsqrt.pop %v3558
    %v5598 = vmul.f32 %v5597, %v3558
    %v5599 = vmul.f32 %v5598, %v5597
    %v5600 = vmul.f32 0.5, %v5599
    %v5601 = vsub.f32 1.5, %v5600
    %v5602 = vmul.f32 %v5597, %v5601
    %vm5603 = vweird.f32 %v3558
    %vm5604 = vweird.f32 %v5597
    %vm5605 = vmor %vm5603, %vm5604
    %v5606 = vsel %vm5605, %v5597, %v5602
    %v5607 = vrsqrt.pop %v3559
    %v5608 = vmul.f32 %v5607, %v3559
    %v5609 = vmul.f32 %v5608, %v5607
    %v5610 = vmul.f32 0.5, %v5609
    %v5611 = vsub.f32 1.5, %v5610
    %v5612 = vmul.f32 %v5607, %v5611
    %vm5613 = vweird.f32 %v3559
    %vm5614 = vweird.f32 %v5607
    %vm5615 = vmor %vm5613, %vm5614
    %v5616 = vsel %vm5615, %v5607, %v5612
    %v5617 = vrsqrt.pop %v3560
    %v5618 = vmul.f32 %v5617, %v3560
    %v5619 = vmul.f32 %v5618, %v5617
    %v5620 = vmul.f32 0.5, %v5619
    %v5621 = vsub.f32 1.5, %v5620
    %v5622 = vmul.f32 %v5617, %v5621
    %vm5623 = vweird.f32 %v3560
    %vm5624 = vweird.f32 %v5617
    %vm5625 = vmor %vm5623, %vm5624
    %v5626 = vsel %vm5625, %v5617, %v5622
    %v5627 = vrsqrt.pop %v3561
    %v5628 = vmul.f32 %v5627, %v3561
    %v5629 = vmul.f32 %v5628, %v5627
    %v5630 = vmul.f32 0.5, %v5629
    %v5631 = vsub.f32 1.5, %v5630
    %v5632 = vmul.f32 %v5627, %v5631
    %vm5633 = vweird.f32 %v3561
    %vm5634 = vweird.f32 %v5627
    %vm5635 = vmor %vm5633, %vm5634
    %v5636 = vsel %vm5635, %v5627, %v5632
    %v5637 = vrsqrt.pop %v3562
    %v5638 = vmul.f32 %v5637, %v3562
    %v5639 = vmul.f32 %v5638, %v5637
    %v5640 = vmul.f32 0.5, %v5639
    %v5641 = vsub.f32 1.5, %v5640
    %v5642 = vmul.f32 %v5637, %v5641
    %vm5643 = vweird.f32 %v3562
    %vm5644 = vweird.f32 %v5637
    %vm5645 = vmor %vm5643, %vm5644
    %v5646 = vsel %vm5645, %v5637, %v5642
    %v5647 = vrsqrt.pop %v3563
    %v5648 = vmul.f32 %v5647, %v3563
    %v5649 = vmul.f32 %v5648, %v5647
    %v5650 = vmul.f32 0.5, %v5649
    %v5651 = vsub.f32 1.5, %v5650
    %v5652 = vmul.f32 %v5647, %v5651
    %vm5653 = vweird.f32 %v3563
    %vm5654 = vweird.f32 %v5647
    %vm5655 = vmor %vm5653, %vm5654
    %v5656 = vsel %vm5655, %v5647, %v5652
    %v5657 = vrsqrt.pop %v3564
    %v5658 = vmul.f32 %v5657, %v3564
    %v5659 = vmul.f32 %v5658, %v5657
    %v5660 = vmul.f32 0.5, %v5659
    %v5661 = vsub.f32 1.5, %v5660
    %v5662 = vmul.f32 %v5657, %v5661
    %vm5663 = vweird.f32 %v3564
    %vm5664 = vweird.f32 %v5657
    %vm5665 = vmor %vm5663, %vm5664
    %v5666 = vsel %vm5665, %v5657, %v5662
    %v5667 = vrsqrt.pop %v3565
    %v5668 = vmul.f32 %v5667, %v3565
    %v5669 = vmul.f32 %v5668, %v5667
    %v5670 = vmul.f32 0.5, %v5669
    %v5671 = vsub.f32 1.5, %v5670
    %v5672 = vmul.f32 %v5667, %v5671
    %vm5673 = vweird.f32 %v3565
    %vm5674 = vweird.f32 %v5667
    %vm5675 = vmor %vm5673, %vm5674
    %v5676 = vsel %vm5675, %v5667, %v5672
    %v5677 = vrsqrt.pop %v3566
    %v5678 = vmul.f32 %v5677, %v3566
    %v5679 = vmul.f32 %v5678, %v5677
    %v5680 = vmul.f32 0.5, %v5679
    %v5681 = vsub.f32 1.5, %v5680
    %v5682 = vmul.f32 %v5677, %v5681
    %vm5683 = vweird.f32 %v3566
    %vm5684 = vweird.f32 %v5677
    %vm5685 = vmor %vm5683, %vm5684
    %v5686 = vsel %vm5685, %v5677, %v5682
    %v5687 = vrsqrt.pop %v3567
    %v5688 = vmul.f32 %v5687, %v3567
    %v5689 = vmul.f32 %v5688, %v5687
    %v5690 = vmul.f32 0.5, %v5689
    %v5691 = vsub.f32 1.5, %v5690
    %v5692 = vmul.f32 %v5687, %v5691
    %vm5693 = vweird.f32 %v3567
    %vm5694 = vweird.f32 %v5687
    %vm5695 = vmor %vm5693, %vm5694
    %v5696 = vsel %vm5695, %v5687, %v5692
    %v5697 = vrsqrt.pop %v3568
    %v5698 = vmul.f32 %v5697, %v3568
    %v5699 = vmul.f32 %v5698, %v5697
    %v5700 = vmul.f32 0.5, %v5699
    %v5701 = vsub.f32 1.5, %v5700
    %v5702 = vmul.f32 %v5697, %v5701
    %vm5703 = vweird.f32 %v3568
    %vm5704 = vweird.f32 %v5697
    %vm5705 = vmor %vm5703, %vm5704
    %v5706 = vsel %vm5705, %v5697, %v5702
    %v5707 = vrsqrt.pop %v3569
    %v5708 = vmul.f32 %v5707, %v3569
    %v5709 = vmul.f32 %v5708, %v5707
    %v5710 = vmul.f32 0.5, %v5709
    %v5711 = vsub.f32 1.5, %v5710
    %v5712 = vmul.f32 %v5707, %v5711
    %vm5713 = vweird.f32 %v3569
    %vm5714 = vweird.f32 %v5707
    %vm5715 = vmor %vm5713, %vm5714
    %v5716 = vsel %vm5715, %v5707, %v5712
    %v5717 = vrsqrt.pop %v3570
    %v5718 = vmul.f32 %v5717, %v3570
    %v5719 = vmul.f32 %v5718, %v5717
    %v5720 = vmul.f32 0.5, %v5719
    %v5721 = vsub.f32 1.5, %v5720
    %v5722 = vmul.f32 %v5717, %v5721
    %vm5723 = vweird.f32 %v3570
    %vm5724 = vweird.f32 %v5717
    %vm5725 = vmor %vm5723, %vm5724
    %v5726 = vsel %vm5725, %v5717, %v5722
    %v5727 = vrsqrt.pop %v3571
    %v5728 = vmul.f32 %v5727, %v3571
    %v5729 = vmul.f32 %v5728, %v5727
    %v5730 = vmul.f32 0.5, %v5729
    %v5731 = vsub.f32 1.5, %v5730
    %v5732 = vmul.f32 %v5727, %v5731
    %vm5733 = vweird.f32 %v3571
    %vm5734 = vweird.f32 %v5727
    %vm5735 = vmor %vm5733, %vm5734
    %v5736 = vsel %vm5735, %v5727, %v5732
    %v5737 = vrsqrt.pop %v3572
    %v5738 = vmul.f32 %v5737, %v3572
    %v5739 = vmul.f32 %v5738, %v5737
    %v5740 = vmul.f32 0.5, %v5739
    %v5741 = vsub.f32 1.5, %v5740
    %v5742 = vmul.f32 %v5737, %v5741
    %vm5743 = vweird.f32 %v3572
    %vm5744 = vweird.f32 %v5737
    %vm5745 = vmor %vm5743, %vm5744
    %v5746 = vsel %vm5745, %v5737, %v5742
    %v5747 = vrsqrt.pop %v3573
    %v5748 = vmul.f32 %v5747, %v3573
    %v5749 = vmul.f32 %v5748, %v5747
    %v5750 = vmul.f32 0.5, %v5749
    %v5751 = vsub.f32 1.5, %v5750
    %v5752 = vmul.f32 %v5747, %v5751
    %vm5753 = vweird.f32 %v3573
    %vm5754 = vweird.f32 %v5747
    %vm5755 = vmor %vm5753, %vm5754
    %v5756 = vsel %vm5755, %v5747, %v5752
    %v5757 = vrsqrt.pop %v3574
    %v5758 = vmul.f32 %v5757, %v3574
    %v5759 = vmul.f32 %v5758, %v5757
    %v5760 = vmul.f32 0.5, %v5759
    %v5761 = vsub.f32 1.5, %v5760
    %v5762 = vmul.f32 %v5757, %v5761
    %vm5763 = vweird.f32 %v3574
    %vm5764 = vweird.f32 %v5757
    %vm5765 = vmor %vm5763, %vm5764
    %v5766 = vsel %vm5765, %v5757, %v5762
    %v5767 = vrsqrt.pop %v3575
    %v5768 = vmul.f32 %v5767, %v3575
    %v5769 = vmul.f32 %v5768, %v5767
    %v5770 = vmul.f32 0.5, %v5769
    %v5771 = vsub.f32 1.5, %v5770
    %v5772 = vmul.f32 %v5767, %v5771
    %vm5773 = vweird.f32 %v3575
    %vm5774 = vweird.f32 %v5767
    %vm5775 = vmor %vm5773, %vm5774
    %v5776 = vsel %vm5775, %v5767, %v5772
    %v5777 = vrsqrt.pop %v3576
    %v5778 = vmul.f32 %v5777, %v3576
    %v5779 = vmul.f32 %v5778, %v5777
    %v5780 = vmul.f32 0.5, %v5779
    %v5781 = vsub.f32 1.5, %v5780
    %v5782 = vmul.f32 %v5777, %v5781
    %vm5783 = vweird.f32 %v3576
    %vm5784 = vweird.f32 %v5777
    %vm5785 = vmor %vm5783, %vm5784
    %v5786 = vsel %vm5785, %v5777, %v5782
    %v5787 = vrsqrt.pop %v3577
    %v5788 = vmul.f32 %v5787, %v3577
    %v5789 = vmul.f32 %v5788, %v5787
    %v5790 = vmul.f32 0.5, %v5789
    %v5791 = vsub.f32 1.5, %v5790
    %v5792 = vmul.f32 %v5787, %v5791
    %vm5793 = vweird.f32 %v3577
    %vm5794 = vweird.f32 %v5787
    %vm5795 = vmor %vm5793, %vm5794
    %v5796 = vsel %vm5795, %v5787, %v5792
    %v5797 = vrsqrt.pop %v3578
    %v5798 = vmul.f32 %v5797, %v3578
    %v5799 = vmul.f32 %v5798, %v5797
    %v5800 = vmul.f32 0.5, %v5799
    %v5801 = vsub.f32 1.5, %v5800
    %v5802 = vmul.f32 %v5797, %v5801
    %vm5803 = vweird.f32 %v3578
    %vm5804 = vweird.f32 %v5797
    %vm5805 = vmor %vm5803, %vm5804
    %v5806 = vsel %vm5805, %v5797, %v5802
    %v5807 = vrsqrt.pop %v3579
    %v5808 = vmul.f32 %v5807, %v3579
    %v5809 = vmul.f32 %v5808, %v5807
    %v5810 = vmul.f32 0.5, %v5809
    %v5811 = vsub.f32 1.5, %v5810
    %v5812 = vmul.f32 %v5807, %v5811
    %vm5813 = vweird.f32 %v3579
    %vm5814 = vweird.f32 %v5807
    %vm5815 = vmor %vm5813, %vm5814
    %v5816 = vsel %vm5815, %v5807, %v5812
    %v5817 = vrsqrt.pop %v3580
    %v5818 = vmul.f32 %v5817, %v3580
    %v5819 = vmul.f32 %v5818, %v5817
    %v5820 = vmul.f32 0.5, %v5819
    %v5821 = vsub.f32 1.5, %v5820
    %v5822 = vmul.f32 %v5817, %v5821
    %vm5823 = vweird.f32 %v3580
    %vm5824 = vweird.f32 %v5817
    %vm5825 = vmor %vm5823, %vm5824
    %v5826 = vsel %vm5825, %v5817, %v5822
    %v5827 = vrsqrt.pop %v3581
    %v5828 = vmul.f32 %v5827, %v3581
    %v5829 = vmul.f32 %v5828, %v5827
    %v5830 = vmul.f32 0.5, %v5829
    %v5831 = vsub.f32 1.5, %v5830
    %v5832 = vmul.f32 %v5827, %v5831
    %vm5833 = vweird.f32 %v3581
    %vm5834 = vweird.f32 %v5827
    %vm5835 = vmor %vm5833, %vm5834
    %v5836 = vsel %vm5835, %v5827, %v5832
    %v5837 = vrsqrt.pop %v3582
    %v5838 = vmul.f32 %v5837, %v3582
    %v5839 = vmul.f32 %v5838, %v5837
    %v5840 = vmul.f32 0.5, %v5839
    %v5841 = vsub.f32 1.5, %v5840
    %v5842 = vmul.f32 %v5837, %v5841
    %vm5843 = vweird.f32 %v3582
    %vm5844 = vweird.f32 %v5837
    %vm5845 = vmor %vm5843, %vm5844
    %v5846 = vsel %vm5845, %v5837, %v5842
    %v5847 = vrsqrt.pop %v3583
    %v5848 = vmul.f32 %v5847, %v3583
    %v5849 = vmul.f32 %v5848, %v5847
    %v5850 = vmul.f32 0.5, %v5849
    %v5851 = vsub.f32 1.5, %v5850
    %v5852 = vmul.f32 %v5847, %v5851
    %vm5853 = vweird.f32 %v3583
    %vm5854 = vweird.f32 %v5847
    %vm5855 = vmor %vm5853, %vm5854
    %v5856 = vsel %vm5855, %v5847, %v5852
    %v5857 = vrsqrt.pop %v3584
    %v5858 = vmul.f32 %v5857, %v3584
    %v5859 = vmul.f32 %v5858, %v5857
    %v5860 = vmul.f32 0.5, %v5859
    %v5861 = vsub.f32 1.5, %v5860
    %v5862 = vmul.f32 %v5857, %v5861
    %vm5863 = vweird.f32 %v3584
    %vm5864 = vweird.f32 %v5857
    %vm5865 = vmor %vm5863, %vm5864
    %v5866 = vsel %vm5865, %v5857, %v5862
    %v5867 = vrsqrt.pop %v3585
    %v5868 = vmul.f32 %v5867, %v3585
    %v5869 = vmul.f32 %v5868, %v5867
    %v5870 = vmul.f32 0.5, %v5869
    %v5871 = vsub.f32 1.5, %v5870
    %v5872 = vmul.f32 %v5867, %v5871
    %vm5873 = vweird.f32 %v3585
    %vm5874 = vweird.f32 %v5867
    %vm5875 = vmor %vm5873, %vm5874
    %v5876 = vsel %vm5875, %v5867, %v5872
    %v5877 = vrsqrt.pop %v3586
    %v5878 = vmul.f32 %v5877, %v3586
    %v5879 = vmul.f32 %v5878, %v5877
    %v5880 = vmul.f32 0.5, %v5879
    %v5881 = vsub.f32 1.5, %v5880
    %v5882 = vmul.f32 %v5877, %v5881
    %vm5883 = vweird.f32 %v3586
    %vm5884 = vweird.f32 %v5877
    %vm5885 = vmor %vm5883, %vm5884
    %v5886 = vsel %vm5885, %v5877, %v5882
    %v5887 = vrsqrt.pop %v3587
    %v5888 = vmul.f32 %v5887, %v3587
    %v5889 = vmul.f32 %v5888, %v5887
    %v5890 = vmul.f32 0.5, %v5889
    %v5891 = vsub.f32 1.5, %v5890
    %v5892 = vmul.f32 %v5887, %v5891
    %vm5893 = vweird.f32 %v3587
    %vm5894 = vweird.f32 %v5887
    %vm5895 = vmor %vm5893, %vm5894
    %v5896 = vsel %vm5895, %v5887, %v5892
    %v5897 = vrsqrt.pop %v3588
    %v5898 = vmul.f32 %v5897, %v3588
    %v5899 = vmul.f32 %v5898, %v5897
    %v5900 = vmul.f32 0.5, %v5899
    %v5901 = vsub.f32 1.5, %v5900
    %v5902 = vmul.f32 %v5897, %v5901
    %vm5903 = vweird.f32 %v3588
    %vm5904 = vweird.f32 %v5897
    %vm5905 = vmor %vm5903, %vm5904
    %v5906 = vsel %vm5905, %v5897, %v5902
    %v5907 = vrsqrt.pop %v3589
    %v5908 = vmul.f32 %v5907, %v3589
    %v5909 = vmul.f32 %v5908, %v5907
    %v5910 = vmul.f32 0.5, %v5909
    %v5911 = vsub.f32 1.5, %v5910
    %v5912 = vmul.f32 %v5907, %v5911
    %vm5913 = vweird.f32 %v3589
    %vm5914 = vweird.f32 %v5907
    %vm5915 = vmor %vm5913, %vm5914
    %v5916 = vsel %vm5915, %v5907, %v5912
    %v5917 = vrsqrt.pop %v3590
    %v5918 = vmul.f32 %v5917, %v3590
    %v5919 = vmul.f32 %v5918, %v5917
    %v5920 = vmul.f32 0.5, %v5919
    %v5921 = vsub.f32 1.5, %v5920
    %v5922 = vmul.f32 %v5917, %v5921
    %vm5923 = vweird.f32 %v3590
    %vm5924 = vweird.f32 %v5917
    %vm5925 = vmor %vm5923, %vm5924
    %v5926 = vsel %vm5925, %v5917, %v5922
    %v5927 = vrsqrt.pop %v3591
    %v5928 = vmul.f32 %v5927, %v3591
    %v5929 = vmul.f32 %v5928, %v5927
    %v5930 = vmul.f32 0.5, %v5929
    %v5931 = vsub.f32 1.5, %v5930
    %v5932 = vmul.f32 %v5927, %v5931
    %vm5933 = vweird.f32 %v3591
    %vm5934 = vweird.f32 %v5927
    %vm5935 = vmor %vm5933, %vm5934
    %v5936 = vsel %vm5935, %v5927, %v5932
    %v5937 = vrsqrt.pop %v3592
    %v5938 = vmul.f32 %v5937, %v3592
    %v5939 = vmul.f32 %v5938, %v5937
    %v5940 = vmul.f32 0.5, %v5939
    %v5941 = vsub.f32 1.5, %v5940
    %v5942 = vmul.f32 %v5937, %v5941
    %vm5943 = vweird.f32 %v3592
    %vm5944 = vweird.f32 %v5937
    %vm5945 = vmor %vm5943, %vm5944
    %v5946 = vsel %vm5945, %v5937, %v5942
    %v5947 = vrsqrt.pop %v3593
    %v5948 = vmul.f32 %v5947, %v3593
    %v5949 = vmul.f32 %v5948, %v5947
    %v5950 = vmul.f32 0.5, %v5949
    %v5951 = vsub.f32 1.5, %v5950
    %v5952 = vmul.f32 %v5947, %v5951
    %vm5953 = vweird.f32 %v3593
    %vm5954 = vweird.f32 %v5947
    %vm5955 = vmor %vm5953, %vm5954
    %v5956 = vsel %vm5955, %v5947, %v5952
    %v5957 = vrsqrt.pop %v3594
    %v5958 = vmul.f32 %v5957, %v3594
    %v5959 = vmul.f32 %v5958, %v5957
    %v5960 = vmul.f32 0.5, %v5959
    %v5961 = vsub.f32 1.5, %v5960
    %v5962 = vmul.f32 %v5957, %v5961
    %vm5963 = vweird.f32 %v3594
    %vm5964 = vweird.f32 %v5957
    %vm5965 = vmor %vm5963, %vm5964
    %v5966 = vsel %vm5965, %v5957, %v5962
    %v5967 = vrsqrt.pop %v3595
    %v5968 = vmul.f32 %v5967, %v3595
    %v5969 = vmul.f32 %v5968, %v5967
    %v5970 = vmul.f32 0.5, %v5969
    %v5971 = vsub.f32 1.5, %v5970
    %v5972 = vmul.f32 %v5967, %v5971
    %vm5973 = vweird.f32 %v3595
    %vm5974 = vweird.f32 %v5967
    %vm5975 = vmor %vm5973, %vm5974
    %v5976 = vsel %vm5975, %v5967, %v5972
    %v5977 = vrsqrt.pop %v3596
    %v5978 = vmul.f32 %v5977, %v3596
    %v5979 = vmul.f32 %v5978, %v5977
    %v5980 = vmul.f32 0.5, %v5979
    %v5981 = vsub.f32 1.5, %v5980
    %v5982 = vmul.f32 %v5977, %v5981
    %vm5983 = vweird.f32 %v3596
    %vm5984 = vweird.f32 %v5977
    %vm5985 = vmor %vm5983, %vm5984
    %v5986 = vsel %vm5985, %v5977, %v5982
    %v5987 = vrsqrt.pop %v3597
    %v5988 = vmul.f32 %v5987, %v3597
    %v5989 = vmul.f32 %v5988, %v5987
    %v5990 = vmul.f32 0.5, %v5989
    %v5991 = vsub.f32 1.5, %v5990
    %v5992 = vmul.f32 %v5987, %v5991
    %vm5993 = vweird.f32 %v3597
    %vm5994 = vweird.f32 %v5987
    %vm5995 = vmor %vm5993, %vm5994
    %v5996 = vsel %vm5995, %v5987, %v5992
    %v5997 = vrsqrt.pop %v3598
    %v5998 = vmul.f32 %v5997, %v3598
    %v5999 = vmul.f32 %v5998, %v5997
    %v6000 = vmul.f32 0.5, %v5999
    %v6001 = vsub.f32 1.5, %v6000
    %v6002 = vmul.f32 %v5997, %v6001
    %vm6003 = vweird.f32 %v3598
    %vm6004 = vweird.f32 %v5997
    %vm6005 = vmor %vm6003, %vm6004
    %v6006 = vsel %vm6005, %v5997, %v6002
    %v6007 = vrsqrt.pop %v3599
    %v6008 = vmul.f32 %v6007, %v3599
    %v6009 = vmul.f32 %v6008, %v6007
    %v6010 = vmul.f32 0.5, %v6009
    %v6011 = vsub.f32 1.5, %v6010
    %v6012 = vmul.f32 %v6007, %v6011
    %vm6013 = vweird.f32 %v3599
    %vm6014 = vweird.f32 %v6007
    %vm6015 = vmor %vm6013, %vm6014
    %v6016 = vsel %vm6015, %v6007, %v6012
    %v6017 = vrsqrt.pop %v3600
    %v6018 = vmul.f32 %v6017, %v3600
    %v6019 = vmul.f32 %v6018, %v6017
    %v6020 = vmul.f32 0.5, %v6019
    %v6021 = vsub.f32 1.5, %v6020
    %v6022 = vmul.f32 %v6017, %v6021
    %vm6023 = vweird.f32 %v3600
    %vm6024 = vweird.f32 %v6017
    %vm6025 = vmor %vm6023, %vm6024
    %v6026 = vsel %vm6025, %v6017, %v6022
    %v6027 = vrsqrt.pop %v3601
    %v6028 = vmul.f32 %v6027, %v3601
    %v6029 = vmul.f32 %v6028, %v6027
    %v6030 = vmul.f32 0.5, %v6029
    %v6031 = vsub.f32 1.5, %v6030
    %v6032 = vmul.f32 %v6027, %v6031
    %vm6033 = vweird.f32 %v3601
    %vm6034 = vweird.f32 %v6027
    %vm6035 = vmor %vm6033, %vm6034
    %v6036 = vsel %vm6035, %v6027, %v6032
    %v6037 = vrsqrt.pop %v3602
    %v6038 = vmul.f32 %v6037, %v3602
    %v6039 = vmul.f32 %v6038, %v6037
    %v6040 = vmul.f32 0.5, %v6039
    %v6041 = vsub.f32 1.5, %v6040
    %v6042 = vmul.f32 %v6037, %v6041
    %vm6043 = vweird.f32 %v3602
    %vm6044 = vweird.f32 %v6037
    %vm6045 = vmor %vm6043, %vm6044
    %v6046 = vsel %vm6045, %v6037, %v6042
    %v6047 = vrsqrt.pop %v3603
    %v6048 = vmul.f32 %v6047, %v3603
    %v6049 = vmul.f32 %v6048, %v6047
    %v6050 = vmul.f32 0.5, %v6049
    %v6051 = vsub.f32 1.5, %v6050
    %v6052 = vmul.f32 %v6047, %v6051
    %vm6053 = vweird.f32 %v3603
    %vm6054 = vweird.f32 %v6047
    %vm6055 = vmor %vm6053, %vm6054
    %v6056 = vsel %vm6055, %v6047, %v6052
    %v6057 = vrsqrt.pop %v3604
    %v6058 = vmul.f32 %v6057, %v3604
    %v6059 = vmul.f32 %v6058, %v6057
    %v6060 = vmul.f32 0.5, %v6059
    %v6061 = vsub.f32 1.5, %v6060
    %v6062 = vmul.f32 %v6057, %v6061
    %vm6063 = vweird.f32 %v3604
    %vm6064 = vweird.f32 %v6057
    %vm6065 = vmor %vm6063, %vm6064
    %v6066 = vsel %vm6065, %v6057, %v6062
    %v6067 = vrsqrt.pop %v3605
    %v6068 = vmul.f32 %v6067, %v3605
    %v6069 = vmul.f32 %v6068, %v6067
    %v6070 = vmul.f32 0.5, %v6069
    %v6071 = vsub.f32 1.5, %v6070
    %v6072 = vmul.f32 %v6067, %v6071
    %vm6073 = vweird.f32 %v3605
    %vm6074 = vweird.f32 %v6067
    %vm6075 = vmor %vm6073, %vm6074
    %v6076 = vsel %vm6075, %v6067, %v6072
    %v6077 = vrsqrt.pop %v3606
    %v6078 = vmul.f32 %v6077, %v3606
    %v6079 = vmul.f32 %v6078, %v6077
    %v6080 = vmul.f32 0.5, %v6079
    %v6081 = vsub.f32 1.5, %v6080
    %v6082 = vmul.f32 %v6077, %v6081
    %vm6083 = vweird.f32 %v3606
    %vm6084 = vweird.f32 %v6077
    %vm6085 = vmor %vm6083, %vm6084
    %v6086 = vsel %vm6085, %v6077, %v6082
    %v6087 = vrsqrt.pop %v3607
    %v6088 = vmul.f32 %v6087, %v3607
    %v6089 = vmul.f32 %v6088, %v6087
    %v6090 = vmul.f32 0.5, %v6089
    %v6091 = vsub.f32 1.5, %v6090
    %v6092 = vmul.f32 %v6087, %v6091
    %vm6093 = vweird.f32 %v3607
    %vm6094 = vweird.f32 %v6087
    %vm6095 = vmor %vm6093, %vm6094
    %v6096 = vsel %vm6095, %v6087, %v6092
    %v6097 = vrsqrt.pop %v3608
    %v6098 = vmul.f32 %v6097, %v3608
    %v6099 = vmul.f32 %v6098, %v6097
    %v6100 = vmul.f32 0.5, %v6099
    %v6101 = vsub.f32 1.5, %v6100
    %v6102 = vmul.f32 %v6097, %v6101
    %vm6103 = vweird.f32 %v3608
    %vm6104 = vweird.f32 %v6097
    %vm6105 = vmor %vm6103, %vm6104
    %v6106 = vsel %vm6105, %v6097, %v6102
    %v6107 = vrsqrt.pop %v3609
    %v6108 = vmul.f32 %v6107, %v3609
    %v6109 = vmul.f32 %v6108, %v6107
    %v6110 = vmul.f32 0.5, %v6109
    %v6111 = vsub.f32 1.5, %v6110
    %v6112 = vmul.f32 %v6107, %v6111
    %vm6113 = vweird.f32 %v3609
    %vm6114 = vweird.f32 %v6107
    %vm6115 = vmor %vm6113, %vm6114
    %v6116 = vsel %vm6115, %v6107, %v6112
    %v6117 = vrsqrt.pop %v3610
    %v6118 = vmul.f32 %v6117, %v3610
    %v6119 = vmul.f32 %v6118, %v6117
    %v6120 = vmul.f32 0.5, %v6119
    %v6121 = vsub.f32 1.5, %v6120
    %v6122 = vmul.f32 %v6117, %v6121
    %vm6123 = vweird.f32 %v3610
    %vm6124 = vweird.f32 %v6117
    %vm6125 = vmor %vm6123, %vm6124
    %v6126 = vsel %vm6125, %v6117, %v6122
    %v6127 = vrsqrt.pop %v3611
    %v6128 = vmul.f32 %v6127, %v3611
    %v6129 = vmul.f32 %v6128, %v6127
    %v6130 = vmul.f32 0.5, %v6129
    %v6131 = vsub.f32 1.5, %v6130
    %v6132 = vmul.f32 %v6127, %v6131
    %vm6133 = vweird.f32 %v3611
    %vm6134 = vweird.f32 %v6127
    %vm6135 = vmor %vm6133, %vm6134
    %v6136 = vsel %vm6135, %v6127, %v6132
    %v6137 = vrsqrt.pop %v3612
    %v6138 = vmul.f32 %v6137, %v3612
    %v6139 = vmul.f32 %v6138, %v6137
    %v6140 = vmul.f32 0.5, %v6139
    %v6141 = vsub.f32 1.5, %v6140
    %v6142 = vmul.f32 %v6137, %v6141
    %vm6143 = vweird.f32 %v3612
    %vm6144 = vweird.f32 %v6137
    %vm6145 = vmor %vm6143, %vm6144
    %v6146 = vsel %vm6145, %v6137, %v6142
    %v6147 = vrsqrt.pop %v3613
    %v6148 = vmul.f32 %v6147, %v3613
    %v6149 = vmul.f32 %v6148, %v6147
    %v6150 = vmul.f32 0.5, %v6149
    %v6151 = vsub.f32 1.5, %v6150
    %v6152 = vmul.f32 %v6147, %v6151
    %vm6153 = vweird.f32 %v3613
    %vm6154 = vweird.f32 %v6147
    %vm6155 = vmor %vm6153, %vm6154
    %v6156 = vsel %vm6155, %v6147, %v6152
    %v6157 = vrsqrt.pop %v3614
    %v6158 = vmul.f32 %v6157, %v3614
    %v6159 = vmul.f32 %v6158, %v6157
    %v6160 = vmul.f32 0.5, %v6159
    %v6161 = vsub.f32 1.5, %v6160
    %v6162 = vmul.f32 %v6157, %v6161
    %vm6163 = vweird.f32 %v3614
    %vm6164 = vweird.f32 %v6157
    %vm6165 = vmor %vm6163, %vm6164
    %v6166 = vsel %vm6165, %v6157, %v6162
    %v6167 = vrsqrt.pop %v3615
    %v6168 = vmul.f32 %v6167, %v3615
    %v6169 = vmul.f32 %v6168, %v6167
    %v6170 = vmul.f32 0.5, %v6169
    %v6171 = vsub.f32 1.5, %v6170
    %v6172 = vmul.f32 %v6167, %v6171
    %vm6173 = vweird.f32 %v3615
    %vm6174 = vweird.f32 %v6167
    %vm6175 = vmor %vm6173, %vm6174
    %v6176 = vsel %vm6175, %v6167, %v6172
    %v6177 = vrsqrt.pop %v3616
    %v6178 = vmul.f32 %v6177, %v3616
    %v6179 = vmul.f32 %v6178, %v6177
    %v6180 = vmul.f32 0.5, %v6179
    %v6181 = vsub.f32 1.5, %v6180
    %v6182 = vmul.f32 %v6177, %v6181
    %vm6183 = vweird.f32 %v3616
    %vm6184 = vweird.f32 %v6177
    %vm6185 = vmor %vm6183, %vm6184
    %v6186 = vsel %vm6185, %v6177, %v6182
    %v6187 = vld [vmem:[%s1] sm:$0x1]
    %v6188 = vld [vmem:[%s1 + $0x1] sm:$0x1]
    %v6189 = vld [vmem:[%s1 + $0x2] sm:$0x1]
    %v6190 = vld [vmem:[%s1 + $0x3] sm:$0x1]
    %v6191 = vld [vmem:[%s1 + $0x4] sm:$0x1]
    %v6192 = vld [vmem:[%s1 + $0x5] sm:$0x1]
    %v6193 = vld [vmem:[%s1 + $0x6] sm:$0x1]
    %v6194 = vld [vmem:[%s1 + $0x7] sm:$0x1]
    %v6195 = vld [vmem:[%s1 + $0x8] sm:$0x1]
    %v6196 = vld [vmem:[%s1 + $0x9] sm:$0x1]
    %v6197 = vld [vmem:[%s1 + $0xa] sm:$0x1]
    %v6198 = vld [vmem:[%s1 + $0xb] sm:$0x1]
    %v6199 = vld [vmem:[%s1 + $0xc] sm:$0x1]
    %v6200 = vld [vmem:[%s1 + $0xd] sm:$0x1]
    %v6201 = vld [vmem:[%s1 + $0xe] sm:$0x1]
    %v6202 = vld [vmem:[%s1 + $0xf] sm:$0x1]
    %v6203 = vld [vmem:[%s1 + $0x10] sm:$0x1]
    %v6204 = vld [vmem:[%s1 + $0x11] sm:$0x1]
    %v6205 = vld [vmem:[%s1 + $0x12] sm:$0x1]
    %v6206 = vld [vmem:[%s1 + $0x13] sm:$0x1]
    %v6207 = vld [vmem:[%s1 + $0x14] sm:$0x1]
    %v6208 = vld [vmem:[%s1 + $0x15] sm:$0x1]
    %v6209 = vld [vmem:[%s1 + $0x16] sm:$0x1]
    %v6210 = vld [vmem:[%s1 + $0x17] sm:$0x1]
    %v6211 = vld [vmem:[%s1 + $0x18] sm:$0x1]
    %v6212 = vld [vmem:[%s1 + $0x19] sm:$0x1]
    %v6213 = vld [vmem:[%s1 + $0x1a] sm:$0x1]
    %v6214 = vld [vmem:[%s1 + $0x1b] sm:$0x1]
    %v6215 = vld [vmem:[%s1 + $0x1c] sm:$0x1]
    %v6216 = vld [vmem:[%s1 + $0x1d] sm:$0x1]
    %v6217 = vld [vmem:[%s1 + $0x1e] sm:$0x1]
    %v6218 = vld [vmem:[%s1 + $0x1f] sm:$0x1]
    %v6219 = vld [vmem:[%s1 + $0x20] sm:$0x1]
    %v6220 = vld [vmem:[%s1 + $0x21] sm:$0x1]
    %v6221 = vld [vmem:[%s1 + $0x22] sm:$0x1]
    %v6222 = vld [vmem:[%s1 + $0x23] sm:$0x1]
    %v6223 = vld [vmem:[%s1 + $0x24] sm:$0x1]
    %v6224 = vld [vmem:[%s1 + $0x25] sm:$0x1]
    %v6225 = vld [vmem:[%s1 + $0x26] sm:$0x1]
    %v6226 = vld [vmem:[%s1 + $0x27] sm:$0x1]
    %v6227 = vld [vmem:[%s1 + $0x28] sm:$0x1]
    %v6228 = vld [vmem:[%s1 + $0x29] sm:$0x1]
    %v6229 = vld [vmem:[%s1 + $0x2a] sm:$0x1]
    %v6230 = vld [vmem:[%s1 + $0x2b] sm:$0x1]
    %v6231 = vld [vmem:[%s1 + $0x2c] sm:$0x1]
    %v6232 = vld [vmem:[%s1 + $0x2d] sm:$0x1]
    %v6233 = vld [vmem:[%s1 + $0x2e] sm:$0x1]
    %v6234 = vld [vmem:[%s1 + $0x2f] sm:$0x1]
    %v6235 = vld [vmem:[%s1 + $0x30] sm:$0x1]
    %v6236 = vld [vmem:[%s1 + $0x31] sm:$0x1]
    %v6237 = vld [vmem:[%s1 + $0x32] sm:$0x1]
    %v6238 = vld [vmem:[%s1 + $0x33] sm:$0x1]
    %v6239 = vld [vmem:[%s1 + $0x34] sm:$0x1]
    %v6240 = vld [vmem:[%s1 + $0x35] sm:$0x1]
    %v6241 = vld [vmem:[%s1 + $0x36] sm:$0x1]
    %v6242 = vld [vmem:[%s1 + $0x37] sm:$0x1]
    %v6243 = vld [vmem:[%s1 + $0x38] sm:$0x1]
    %v6244 = vld [vmem:[%s1 + $0x39] sm:$0x1]
    %v6245 = vld [vmem:[%s1 + $0x3a] sm:$0x1]
    %v6246 = vld [vmem:[%s1 + $0x3b] sm:$0x1]
    %v6247 = vld [vmem:[%s1 + $0x3c] sm:$0x1]
    %v6248 = vld [vmem:[%s1 + $0x3d] sm:$0x1]
    %v6249 = vld [vmem:[%s1 + $0x3e] sm:$0x1]
    %v6250 = vld [vmem:[%s1 + $0x3f] sm:$0x1]
    %v6251 = vld [vmem:[%s1 + $0x40] sm:$0x1]
    %v6252 = vld [vmem:[%s1 + $0x41] sm:$0x1]
    %v6253 = vld [vmem:[%s1 + $0x42] sm:$0x1]
    %v6254 = vld [vmem:[%s1 + $0x43] sm:$0x1]
    %v6255 = vld [vmem:[%s1 + $0x44] sm:$0x1]
    %v6256 = vld [vmem:[%s1 + $0x45] sm:$0x1]
    %v6257 = vld [vmem:[%s1 + $0x46] sm:$0x1]
    %v6258 = vld [vmem:[%s1 + $0x47] sm:$0x1]
    %v6259 = vld [vmem:[%s1 + $0x48] sm:$0x1]
    %v6260 = vld [vmem:[%s1 + $0x49] sm:$0x1]
    %v6261 = vld [vmem:[%s1 + $0x4a] sm:$0x1]
    %v6262 = vld [vmem:[%s1 + $0x4b] sm:$0x1]
    %v6263 = vld [vmem:[%s1 + $0x4c] sm:$0x1]
    %v6264 = vld [vmem:[%s1 + $0x4d] sm:$0x1]
    %v6265 = vld [vmem:[%s1 + $0x4e] sm:$0x1]
    %v6266 = vld [vmem:[%s1 + $0x4f] sm:$0x1]
    %v6267 = vld [vmem:[%s1 + $0x50] sm:$0x1]
    %v6268 = vld [vmem:[%s1 + $0x51] sm:$0x1]
    %v6269 = vld [vmem:[%s1 + $0x52] sm:$0x1]
    %v6270 = vld [vmem:[%s1 + $0x53] sm:$0x1]
    %v6271 = vld [vmem:[%s1 + $0x54] sm:$0x1]
    %v6272 = vld [vmem:[%s1 + $0x55] sm:$0x1]
    %v6273 = vld [vmem:[%s1 + $0x56] sm:$0x1]
    %v6274 = vld [vmem:[%s1 + $0x57] sm:$0x1]
    %v6275 = vld [vmem:[%s1 + $0x58] sm:$0x1]
    %v6276 = vld [vmem:[%s1 + $0x59] sm:$0x1]
    %v6277 = vld [vmem:[%s1 + $0x5a] sm:$0x1]
    %v6278 = vld [vmem:[%s1 + $0x5b] sm:$0x1]
    %v6279 = vld [vmem:[%s1 + $0x5c] sm:$0x1]
    %v6280 = vld [vmem:[%s1 + $0x5d] sm:$0x1]
    %v6281 = vld [vmem:[%s1 + $0x5e] sm:$0x1]
    %v6282 = vld [vmem:[%s1 + $0x5f] sm:$0x1]
    %v6283 = vld [vmem:[%s1 + $0x60] sm:$0x1]
    %v6284 = vld [vmem:[%s1 + $0x61] sm:$0x1]
    %v6285 = vld [vmem:[%s1 + $0x62] sm:$0x1]
    %v6286 = vld [vmem:[%s1 + $0x63] sm:$0x1]
    %v6287 = vld [vmem:[%s1 + $0x64] sm:$0x1]
    %v6288 = vld [vmem:[%s1 + $0x65] sm:$0x1]
    %v6289 = vld [vmem:[%s1 + $0x66] sm:$0x1]
    %v6290 = vld [vmem:[%s1 + $0x67] sm:$0x1]
    %v6291 = vld [vmem:[%s1 + $0x68] sm:$0x1]
    %v6292 = vld [vmem:[%s1 + $0x69] sm:$0x1]
    %v6293 = vld [vmem:[%s1 + $0x6a] sm:$0x1]
    %v6294 = vld [vmem:[%s1 + $0x6b] sm:$0x1]
    %v6295 = vld [vmem:[%s1 + $0x6c] sm:$0x1]
    %v6296 = vld [vmem:[%s1 + $0x6d] sm:$0x1]
    %v6297 = vld [vmem:[%s1 + $0x6e] sm:$0x1]
    %v6298 = vld [vmem:[%s1 + $0x6f] sm:$0x1]
    %v6299 = vld [vmem:[%s1 + $0x70] sm:$0x1]
    %v6300 = vld [vmem:[%s1 + $0x71] sm:$0x1]
    %v6301 = vld [vmem:[%s1 + $0x72] sm:$0x1]
    %v6302 = vld [vmem:[%s1 + $0x73] sm:$0x1]
    %v6303 = vld [vmem:[%s1 + $0x74] sm:$0x1]
    %v6304 = vld [vmem:[%s1 + $0x75] sm:$0x1]
    %v6305 = vld [vmem:[%s1 + $0x76] sm:$0x1]
    %v6306 = vld [vmem:[%s1 + $0x77] sm:$0x1]
    %v6307 = vld [vmem:[%s1 + $0x78] sm:$0x1]
    %v6308 = vld [vmem:[%s1 + $0x79] sm:$0x1]
    %v6309 = vld [vmem:[%s1 + $0x7a] sm:$0x1]
    %v6310 = vld [vmem:[%s1 + $0x7b] sm:$0x1]
    %v6311 = vld [vmem:[%s1 + $0x7c] sm:$0x1]
    %v6312 = vld [vmem:[%s1 + $0x7d] sm:$0x1]
    %v6313 = vld [vmem:[%s1 + $0x7e] sm:$0x1]
    %v6314 = vld [vmem:[%s1 + $0x7f] sm:$0x1]
    %v6315 = vld [vmem:[%s1 + $0x80] sm:$0x1]
    %v6316 = vld [vmem:[%s1 + $0x81] sm:$0x1]
    %v6317 = vld [vmem:[%s1 + $0x82] sm:$0x1]
    %v6318 = vld [vmem:[%s1 + $0x83] sm:$0x1]
    %v6319 = vld [vmem:[%s1 + $0x84] sm:$0x1]
    %v6320 = vld [vmem:[%s1 + $0x85] sm:$0x1]
    %v6321 = vld [vmem:[%s1 + $0x86] sm:$0x1]
    %v6322 = vld [vmem:[%s1 + $0x87] sm:$0x1]
    %v6323 = vld [vmem:[%s1 + $0x88] sm:$0x1]
    %v6324 = vld [vmem:[%s1 + $0x89] sm:$0x1]
    %v6325 = vld [vmem:[%s1 + $0x8a] sm:$0x1]
    %v6326 = vld [vmem:[%s1 + $0x8b] sm:$0x1]
    %v6327 = vld [vmem:[%s1 + $0x8c] sm:$0x1]
    %v6328 = vld [vmem:[%s1 + $0x8d] sm:$0x1]
    %v6329 = vld [vmem:[%s1 + $0x8e] sm:$0x1]
    %v6330 = vld [vmem:[%s1 + $0x8f] sm:$0x1]
    %v6331 = vld [vmem:[%s1 + $0x90] sm:$0x1]
    %v6332 = vld [vmem:[%s1 + $0x91] sm:$0x1]
    %v6333 = vld [vmem:[%s1 + $0x92] sm:$0x1]
    %v6334 = vld [vmem:[%s1 + $0x93] sm:$0x1]
    %v6335 = vld [vmem:[%s1 + $0x94] sm:$0x1]
    %v6336 = vld [vmem:[%s1 + $0x95] sm:$0x1]
    %v6337 = vld [vmem:[%s1 + $0x96] sm:$0x1]
    %v6338 = vld [vmem:[%s1 + $0x97] sm:$0x1]
    %v6339 = vld [vmem:[%s1 + $0x98] sm:$0x1]
    %v6340 = vld [vmem:[%s1 + $0x99] sm:$0x1]
    %v6341 = vld [vmem:[%s1 + $0x9a] sm:$0x1]
    %v6342 = vld [vmem:[%s1 + $0x9b] sm:$0x1]
    %v6343 = vld [vmem:[%s1 + $0x9c] sm:$0x1]
    %v6344 = vld [vmem:[%s1 + $0x9d] sm:$0x1]
    %v6345 = vld [vmem:[%s1 + $0x9e] sm:$0x1]
    %v6346 = vld [vmem:[%s1 + $0x9f] sm:$0x1]
    %v6347 = vld [vmem:[%s1 + $0xa0] sm:$0x1]
    %v6348 = vld [vmem:[%s1 + $0xa1] sm:$0x1]
    %v6349 = vld [vmem:[%s1 + $0xa2] sm:$0x1]
    %v6350 = vld [vmem:[%s1 + $0xa3] sm:$0x1]
    %v6351 = vld [vmem:[%s1 + $0xa4] sm:$0x1]
    %v6352 = vld [vmem:[%s1 + $0xa5] sm:$0x1]
    %v6353 = vld [vmem:[%s1 + $0xa6] sm:$0x1]
    %v6354 = vld [vmem:[%s1 + $0xa7] sm:$0x1]
    %v6355 = vld [vmem:[%s1 + $0xa8] sm:$0x1]
    %v6356 = vld [vmem:[%s1 + $0xa9] sm:$0x1]
    %v6357 = vld [vmem:[%s1 + $0xaa] sm:$0x1]
    %v6358 = vld [vmem:[%s1 + $0xab] sm:$0x1]
    %v6359 = vld [vmem:[%s1 + $0xac] sm:$0x1]
    %v6360 = vld [vmem:[%s1 + $0xad] sm:$0x1]
    %v6361 = vld [vmem:[%s1 + $0xae] sm:$0x1]
    %v6362 = vld [vmem:[%s1 + $0xaf] sm:$0x1]
    %v6363 = vld [vmem:[%s1 + $0xb0] sm:$0x1]
    %v6364 = vld [vmem:[%s1 + $0xb1] sm:$0x1]
    %v6365 = vld [vmem:[%s1 + $0xb2] sm:$0x1]
    %v6366 = vld [vmem:[%s1 + $0xb3] sm:$0x1]
    %v6367 = vld [vmem:[%s1 + $0xb4] sm:$0x1]
    %v6368 = vld [vmem:[%s1 + $0xb5] sm:$0x1]
    %v6369 = vld [vmem:[%s1 + $0xb6] sm:$0x1]
    %v6370 = vld [vmem:[%s1 + $0xb7] sm:$0x1]
    %v6371 = vld [vmem:[%s1 + $0xb8] sm:$0x1]
    %v6372 = vld [vmem:[%s1 + $0xb9] sm:$0x1]
    %v6373 = vld [vmem:[%s1 + $0xba] sm:$0x1]
    %v6374 = vld [vmem:[%s1 + $0xbb] sm:$0x1]
    %v6375 = vld [vmem:[%s1 + $0xbc] sm:$0x1]
    %v6376 = vld [vmem:[%s1 + $0xbd] sm:$0x1]
    %v6377 = vld [vmem:[%s1 + $0xbe] sm:$0x1]
    %v6378 = vld [vmem:[%s1 + $0xbf] sm:$0x1]
    %v6379 = vld [vmem:[%s1 + $0xc0] sm:$0x1]
    %v6380 = vld [vmem:[%s1 + $0xc1] sm:$0x1]
    %v6381 = vld [vmem:[%s1 + $0xc2] sm:$0x1]
    %v6382 = vld [vmem:[%s1 + $0xc3] sm:$0x1]
    %v6383 = vld [vmem:[%s1 + $0xc4] sm:$0x1]
    %v6384 = vld [vmem:[%s1 + $0xc5] sm:$0x1]
    %v6385 = vld [vmem:[%s1 + $0xc6] sm:$0x1]
    %v6386 = vld [vmem:[%s1 + $0xc7] sm:$0x1]
    %v6387 = vld [vmem:[%s1 + $0xc8] sm:$0x1]
    %v6388 = vld [vmem:[%s1 + $0xc9] sm:$0x1]
    %v6389 = vld [vmem:[%s1 + $0xca] sm:$0x1]
    %v6390 = vld [vmem:[%s1 + $0xcb] sm:$0x1]
    %v6391 = vld [vmem:[%s1 + $0xcc] sm:$0x1]
    %v6392 = vld [vmem:[%s1 + $0xcd] sm:$0x1]
    %v6393 = vld [vmem:[%s1 + $0xce] sm:$0x1]
    %v6394 = vld [vmem:[%s1 + $0xcf] sm:$0x1]
    %v6395 = vld [vmem:[%s1 + $0xd0] sm:$0x1]
    %v6396 = vld [vmem:[%s1 + $0xd1] sm:$0x1]
    %v6397 = vld [vmem:[%s1 + $0xd2] sm:$0x1]
    %v6398 = vld [vmem:[%s1 + $0xd3] sm:$0x1]
    %v6399 = vld [vmem:[%s1 + $0xd4] sm:$0x1]
    %v6400 = vld [vmem:[%s1 + $0xd5] sm:$0x1]
    %v6401 = vld [vmem:[%s1 + $0xd6] sm:$0x1]
    %v6402 = vld [vmem:[%s1 + $0xd7] sm:$0x1]
    %v6403 = vld [vmem:[%s1 + $0xd8] sm:$0x1]
    %v6404 = vld [vmem:[%s1 + $0xd9] sm:$0x1]
    %v6405 = vld [vmem:[%s1 + $0xda] sm:$0x1]
    %v6406 = vld [vmem:[%s1 + $0xdb] sm:$0x1]
    %v6407 = vld [vmem:[%s1 + $0xdc] sm:$0x1]
    %v6408 = vld [vmem:[%s1 + $0xdd] sm:$0x1]
    %v6409 = vld [vmem:[%s1 + $0xde] sm:$0x1]
    %v6410 = vld [vmem:[%s1 + $0xdf] sm:$0x1]
    %v6411 = vld [vmem:[%s1 + $0xe0] sm:$0x1]
    %v6412 = vld [vmem:[%s1 + $0xe1] sm:$0x1]
    %v6413 = vld [vmem:[%s1 + $0xe2] sm:$0x1]
    %v6414 = vld [vmem:[%s1 + $0xe3] sm:$0x1]
    %v6415 = vld [vmem:[%s1 + $0xe4] sm:$0x1]
    %v6416 = vld [vmem:[%s1 + $0xe5] sm:$0x1]
    %v6417 = vld [vmem:[%s1 + $0xe6] sm:$0x1]
    %v6418 = vld [vmem:[%s1 + $0xe7] sm:$0x1]
    %v6419 = vld [vmem:[%s1 + $0xe8] sm:$0x1]
    %v6420 = vld [vmem:[%s1 + $0xe9] sm:$0x1]
    %v6421 = vld [vmem:[%s1 + $0xea] sm:$0x1]
    %v6422 = vld [vmem:[%s1 + $0xeb] sm:$0x1]
    %v6423 = vld [vmem:[%s1 + $0xec] sm:$0x1]
    %v6424 = vld [vmem:[%s1 + $0xed] sm:$0x1]
    %v6425 = vld [vmem:[%s1 + $0xee] sm:$0x1]
    %v6426 = vld [vmem:[%s1 + $0xef] sm:$0x1]
    %v6427 = vld [vmem:[%s1 + $0xf0] sm:$0x1]
    %v6428 = vld [vmem:[%s1 + $0xf1] sm:$0x1]
    %v6429 = vld [vmem:[%s1 + $0xf2] sm:$0x1]
    %v6430 = vld [vmem:[%s1 + $0xf3] sm:$0x1]
    %v6431 = vld [vmem:[%s1 + $0xf4] sm:$0x1]
    %v6432 = vld [vmem:[%s1 + $0xf5] sm:$0x1]
    %v6433 = vld [vmem:[%s1 + $0xf6] sm:$0x1]
    %v6434 = vld [vmem:[%s1 + $0xf7] sm:$0x1]
    %v6435 = vld [vmem:[%s1 + $0xf8] sm:$0x1]
    %v6436 = vld [vmem:[%s1 + $0xf9] sm:$0x1]
    %v6437 = vld [vmem:[%s1 + $0xfa] sm:$0x1]
    %v6438 = vld [vmem:[%s1 + $0xfb] sm:$0x1]
    %v6439 = vld [vmem:[%s1 + $0xfc] sm:$0x1]
    %v6440 = vld [vmem:[%s1 + $0xfd] sm:$0x1]
    %v6441 = vld [vmem:[%s1 + $0xfe] sm:$0x1]
    %v6442 = vld [vmem:[%s1 + $0xff] sm:$0x1]
    %v6443 = vld [vmem:[%s1 + $0x100] sm:$0x1]
    %v6701 = vperm.slane %v6187, 0
    %v6702 = vperm.slane %v6188, 0
    %v6703 = vperm.slane %v6189, 0
    %v6704 = vperm.slane %v6190, 0
    %v6705 = vperm.slane %v6191, 0
    %v6706 = vperm.slane %v6192, 0
    %v6707 = vperm.slane %v6193, 0
    %v6708 = vperm.slane %v6194, 0
    %v6709 = vperm.slane %v6195, 0
    %v6710 = vperm.slane %v6196, 0
    %v6711 = vperm.slane %v6197, 0
    %v6712 = vperm.slane %v6198, 0
    %v6713 = vperm.slane %v6199, 0
    %v6714 = vperm.slane %v6200, 0
    %v6715 = vperm.slane %v6201, 0
    %v6716 = vperm.slane %v6202, 0
    %v6717 = vperm.slane %v6203, 0
    %v6718 = vperm.slane %v6204, 0
    %v6719 = vperm.slane %v6205, 0
    %v6720 = vperm.slane %v6206, 0
    %v6721 = vperm.slane %v6207, 0
    %v6722 = vperm.slane %v6208, 0
    %v6723 = vperm.slane %v6209, 0
    %v6724 = vperm.slane %v6210, 0
    %v6725 = vperm.slane %v6211, 0
    %v6726 = vperm.slane %v6212, 0
    %v6727 = vperm.slane %v6213, 0
    %v6728 = vperm.slane %v6214, 0
    %v6729 = vperm.slane %v6215, 0
    %v6730 = vperm.slane %v6216, 0
    %v6731 = vperm.slane %v6217, 0
    %v6732 = vperm.slane %v6218, 0
    %v6733 = vperm.slane %v6219, 0
    %v6734 = vperm.slane %v6220, 0
    %v6735 = vperm.slane %v6221, 0
    %v6736 = vperm.slane %v6222, 0
    %v6737 = vperm.slane %v6223, 0
    %v6738 = vperm.slane %v6224, 0
    %v6739 = vperm.slane %v6225, 0
    %v6740 = vperm.slane %v6226, 0
    %v6741 = vperm.slane %v6227, 0
    %v6742 = vperm.slane %v6228, 0
    %v6743 = vperm.slane %v6229, 0
    %v6744 = vperm.slane %v6230, 0
    %v6745 = vperm.slane %v6231, 0
    %v6746 = vperm.slane %v6232, 0
    %v6747 = vperm.slane %v6233, 0
    %v6748 = vperm.slane %v6234, 0
    %v6749 = vperm.slane %v6235, 0
    %v6750 = vperm.slane %v6236, 0
    %v6751 = vperm.slane %v6237, 0
    %v6752 = vperm.slane %v6238, 0
    %v6753 = vperm.slane %v6239, 0
    %v6754 = vperm.slane %v6240, 0
    %v6755 = vperm.slane %v6241, 0
    %v6756 = vperm.slane %v6242, 0
    %v6757 = vperm.slane %v6243, 0
    %v6758 = vperm.slane %v6244, 0
    %v6759 = vperm.slane %v6245, 0
    %v6760 = vperm.slane %v6246, 0
    %v6761 = vperm.slane %v6247, 0
    %v6762 = vperm.slane %v6248, 0
    %v6763 = vperm.slane %v6249, 0
    %v6764 = vperm.slane %v6250, 0
    %v6765 = vperm.slane %v6251, 0
    %v6766 = vperm.slane %v6252, 0
    %v6767 = vperm.slane %v6253, 0
    %v6768 = vperm.slane %v6254, 0
    %v6769 = vperm.slane %v6255, 0
    %v6770 = vperm.slane %v6256, 0
    %v6771 = vperm.slane %v6257, 0
    %v6772 = vperm.slane %v6258, 0
    %v6773 = vperm.slane %v6259, 0
    %v6774 = vperm.slane %v6260, 0
    %v6775 = vperm.slane %v6261, 0
    %v6776 = vperm.slane %v6262, 0
    %v6777 = vperm.slane %v6263, 0
    %v6778 = vperm.slane %v6264, 0
    %v6779 = vperm.slane %v6265, 0
    %v6780 = vperm.slane %v6266, 0
    %v6781 = vperm.slane %v6267, 0
    %v6782 = vperm.slane %v6268, 0
    %v6783 = vperm.slane %v6269, 0
    %v6784 = vperm.slane %v6270, 0
    %v6785 = vperm.slane %v6271, 0
    %v6786 = vperm.slane %v6272, 0
    %v6787 = vperm.slane %v6273, 0
    %v6788 = vperm.slane %v6274, 0
    %v6789 = vperm.slane %v6275, 0
    %v6790 = vperm.slane %v6276, 0
    %v6791 = vperm.slane %v6277, 0
    %v6792 = vperm.slane %v6278, 0
    %v6793 = vperm.slane %v6279, 0
    %v6794 = vperm.slane %v6280, 0
    %v6795 = vperm.slane %v6281, 0
    %v6796 = vperm.slane %v6282, 0
    %v6797 = vperm.slane %v6283, 0
    %v6798 = vperm.slane %v6284, 0
    %v6799 = vperm.slane %v6285, 0
    %v6800 = vperm.slane %v6286, 0
    %v6801 = vperm.slane %v6287, 0
    %v6802 = vperm.slane %v6288, 0
    %v6803 = vperm.slane %v6289, 0
    %v6804 = vperm.slane %v6290, 0
    %v6805 = vperm.slane %v6291, 0
    %v6806 = vperm.slane %v6292, 0
    %v6807 = vperm.slane %v6293, 0
    %v6808 = vperm.slane %v6294, 0
    %v6809 = vperm.slane %v6295, 0
    %v6810 = vperm.slane %v6296, 0
    %v6811 = vperm.slane %v6297, 0
    %v6812 = vperm.slane %v6298, 0
    %v6813 = vperm.slane %v6299, 0
    %v6814 = vperm.slane %v6300, 0
    %v6815 = vperm.slane %v6301, 0
    %v6816 = vperm.slane %v6302, 0
    %v6817 = vperm.slane %v6303, 0
    %v6818 = vperm.slane %v6304, 0
    %v6819 = vperm.slane %v6305, 0
    %v6820 = vperm.slane %v6306, 0
    %v6821 = vperm.slane %v6307, 0
    %v6822 = vperm.slane %v6308, 0
    %v6823 = vperm.slane %v6309, 0
    %v6824 = vperm.slane %v6310, 0
    %v6825 = vperm.slane %v6311, 0
    %v6826 = vperm.slane %v6312, 0
    %v6827 = vperm.slane %v6313, 0
    %v6828 = vperm.slane %v6314, 0
    %v6829 = vperm.slane %v6315, 0
    %v6830 = vperm.slane %v6316, 0
    %v6831 = vperm.slane %v6317, 0
    %v6832 = vperm.slane %v6318, 0
    %v6833 = vperm.slane %v6319, 0
    %v6834 = vperm.slane %v6320, 0
    %v6835 = vperm.slane %v6321, 0
    %v6836 = vperm.slane %v6322, 0
    %v6837 = vperm.slane %v6323, 0
    %v6838 = vperm.slane %v6324, 0
    %v6839 = vperm.slane %v6325, 0
    %v6840 = vperm.slane %v6326, 0
    %v6841 = vperm.slane %v6327, 0
    %v6842 = vperm.slane %v6328, 0
    %v6843 = vperm.slane %v6329, 0
    %v6844 = vperm.slane %v6330, 0
    %v6845 = vperm.slane %v6331, 0
    %v6846 = vperm.slane %v6332, 0
    %v6847 = vperm.slane %v6333, 0
    %v6848 = vperm.slane %v6334, 0
    %v6849 = vperm.slane %v6335, 0
    %v6850 = vperm.slane %v6336, 0
    %v6851 = vperm.slane %v6337, 0
    %v6852 = vperm.slane %v6338, 0
    %v6853 = vperm.slane %v6339, 0
    %v6854 = vperm.slane %v6340, 0
    %v6855 = vperm.slane %v6341, 0
    %v6856 = vperm.slane %v6342, 0
    %v6857 = vperm.slane %v6343, 0
    %v6858 = vperm.slane %v6344, 0
    %v6859 = vperm.slane %v6345, 0
    %v6860 = vperm.slane %v6346, 0
    %v6861 = vperm.slane %v6347, 0
    %v6862 = vperm.slane %v6348, 0
    %v6863 = vperm.slane %v6349, 0
    %v6864 = vperm.slane %v6350, 0
    %v6865 = vperm.slane %v6351, 0
    %v6866 = vperm.slane %v6352, 0
    %v6867 = vperm.slane %v6353, 0
    %v6868 = vperm.slane %v6354, 0
    %v6869 = vperm.slane %v6355, 0
    %v6870 = vperm.slane %v6356, 0
    %v6871 = vperm.slane %v6357, 0
    %v6872 = vperm.slane %v6358, 0
    %v6873 = vperm.slane %v6359, 0
    %v6874 = vperm.slane %v6360, 0
    %v6875 = vperm.slane %v6361, 0
    %v6876 = vperm.slane %v6362, 0
    %v6877 = vperm.slane %v6363, 0
    %v6878 = vperm.slane %v6364, 0
    %v6879 = vperm.slane %v6365, 0
    %v6880 = vperm.slane %v6366, 0
    %v6881 = vperm.slane %v6367, 0
    %v6882 = vperm.slane %v6368, 0
    %v6883 = vperm.slane %v6369, 0
    %v6884 = vperm.slane %v6370, 0
    %v6885 = vperm.slane %v6371, 0
    %v6886 = vperm.slane %v6372, 0
    %v6887 = vperm.slane %v6373, 0
    %v6888 = vperm.slane %v6374, 0
    %v6889 = vperm.slane %v6375, 0
    %v6890 = vperm.slane %v6376, 0
    %v6891 = vperm.slane %v6377, 0
    %v6892 = vperm.slane %v6378, 0
    %v6893 = vperm.slane %v6379, 0
    %v6894 = vperm.slane %v6380, 0
    %v6895 = vperm.slane %v6381, 0
    %v6896 = vperm.slane %v6382, 0
    %v6897 = vperm.slane %v6383, 0
    %v6898 = vperm.slane %v6384, 0
    %v6899 = vperm.slane %v6385, 0
    %v6900 = vperm.slane %v6386, 0
    %v6901 = vperm.slane %v6387, 0
    %v6902 = vperm.slane %v6388, 0
    %v6903 = vperm.slane %v6389, 0
    %v6904 = vperm.slane %v6390, 0
    %v6905 = vperm.slane %v6391, 0
    %v6906 = vperm.slane %v6392, 0
    %v6907 = vperm.slane %v6393, 0
    %v6908 = vperm.slane %v6394, 0
    %v6909 = vperm.slane %v6395, 0
    %v6910 = vperm.slane %v6396, 0
    %v6911 = vperm.slane %v6397, 0
    %v6912 = vperm.slane %v6398, 0
    %v6913 = vperm.slane %v6399, 0
    %v6914 = vperm.slane %v6400, 0
    %v6915 = vperm.slane %v6401, 0
    %v6916 = vperm.slane %v6402, 0
    %v6917 = vperm.slane %v6403, 0
    %v6918 = vperm.slane %v6404, 0
    %v6919 = vperm.slane %v6405, 0
    %v6920 = vperm.slane %v6406, 0
    %v6921 = vperm.slane %v6407, 0
    %v6922 = vperm.slane %v6408, 0
    %v6923 = vperm.slane %v6409, 0
    %v6924 = vperm.slane %v6410, 0
    %v6925 = vperm.slane %v6411, 0
    %v6926 = vperm.slane %v6412, 0
    %v6927 = vperm.slane %v6413, 0
    %v6928 = vperm.slane %v6414, 0
    %v6929 = vperm.slane %v6415, 0
    %v6930 = vperm.slane %v6416, 0
    %v6931 = vperm.slane %v6417, 0
    %v6932 = vperm.slane %v6418, 0
    %v6933 = vperm.slane %v6419, 0
    %v6934 = vperm.slane %v6420, 0
    %v6935 = vperm.slane %v6421, 0
    %v6936 = vperm.slane %v6422, 0
    %v6937 = vperm.slane %v6423, 0
    %v6938 = vperm.slane %v6424, 0
    %v6939 = vperm.slane %v6425, 0
    %v6940 = vperm.slane %v6426, 0
    %v6941 = vperm.slane %v6427, 0
    %v6942 = vperm.slane %v6428, 0
    %v6943 = vperm.slane %v6429, 0
    %v6944 = vperm.slane %v6430, 0
    %v6945 = vperm.slane %v6431, 0
    %v6946 = vperm.slane %v6432, 0
    %v6947 = vperm.slane %v6433, 0
    %v6948 = vperm.slane %v6434, 0
    %v6949 = vperm.slane %v6435, 0
    %v6950 = vperm.slane %v6436, 0
    %v6951 = vperm.slane %v6437, 0
    %v6952 = vperm.slane %v6438, 0
    %v6953 = vperm.slane %v6439, 0
    %v6954 = vperm.slane %v6440, 0
    %v6955 = vperm.slane %v6441, 0
    %v6956 = vperm.slane %v6442, 0
    %v6957 = vperm.slane %v6443, 0
    %v7215 = vmul.f32 %v3626, %v6701
    %v7216 = vmul.f32 %v3636, %v6702
    %v7217 = vmul.f32 %v3646, %v6703
    %v7218 = vmul.f32 %v3656, %v6704
    %v7219 = vmul.f32 %v3666, %v6705
    %v7220 = vmul.f32 %v3676, %v6706
    %v7221 = vmul.f32 %v3686, %v6707
    %v7222 = vmul.f32 %v3696, %v6708
    %v7223 = vmul.f32 %v3706, %v6709
    %v7224 = vmul.f32 %v3716, %v6710
    %v7225 = vmul.f32 %v3726, %v6711
    %v7226 = vmul.f32 %v3736, %v6712
    %v7227 = vmul.f32 %v3746, %v6713
    %v7228 = vmul.f32 %v3756, %v6714
    %v7229 = vmul.f32 %v3766, %v6715
    %v7230 = vmul.f32 %v3776, %v6716
    %v7231 = vmul.f32 %v3786, %v6717
    %v7232 = vmul.f32 %v3796, %v6718
    %v7233 = vmul.f32 %v3806, %v6719
    %v7234 = vmul.f32 %v3816, %v6720
    %v7235 = vmul.f32 %v3826, %v6721
    %v7236 = vmul.f32 %v3836, %v6722
    %v7237 = vmul.f32 %v3846, %v6723
    %v7238 = vmul.f32 %v3856, %v6724
    %v7239 = vmul.f32 %v3866, %v6725
    %v7240 = vmul.f32 %v3876, %v6726
    %v7241 = vmul.f32 %v3886, %v6727
    %v7242 = vmul.f32 %v3896, %v6728
    %v7243 = vmul.f32 %v3906, %v6729
    %v7244 = vmul.f32 %v3916, %v6730
    %v7245 = vmul.f32 %v3926, %v6731
    %v7246 = vmul.f32 %v3936, %v6732
    %v7247 = vmul.f32 %v3946, %v6733
    %v7248 = vmul.f32 %v3956, %v6734
    %v7249 = vmul.f32 %v3966, %v6735
    %v7250 = vmul.f32 %v3976, %v6736
    %v7251 = vmul.f32 %v3986, %v6737
    %v7252 = vmul.f32 %v3996, %v6738
    %v7253 = vmul.f32 %v4006, %v6739
    %v7254 = vmul.f32 %v4016, %v6740
    %v7255 = vmul.f32 %v4026, %v6741
    %v7256 = vmul.f32 %v4036, %v6742
    %v7257 = vmul.f32 %v4046, %v6743
    %v7258 = vmul.f32 %v4056, %v6744
    %v7259 = vmul.f32 %v4066, %v6745
    %v7260 = vmul.f32 %v4076, %v6746
    %v7261 = vmul.f32 %v4086, %v6747
    %v7262 = vmul.f32 %v4096, %v6748
    %v7263 = vmul.f32 %v4106, %v6749
    %v7264 = vmul.f32 %v4116, %v6750
    %v7265 = vmul.f32 %v4126, %v6751
    %v7266 = vmul.f32 %v4136, %v6752
    %v7267 = vmul.f32 %v4146, %v6753
    %v7268 = vmul.f32 %v4156, %v6754
    %v7269 = vmul.f32 %v4166, %v6755
    %v7270 = vmul.f32 %v4176, %v6756
    %v7271 = vmul.f32 %v4186, %v6757
    %v7272 = vmul.f32 %v4196, %v6758
    %v7273 = vmul.f32 %v4206, %v6759
    %v7274 = vmul.f32 %v4216, %v6760
    %v7275 = vmul.f32 %v4226, %v6761
    %v7276 = vmul.f32 %v4236, %v6762
    %v7277 = vmul.f32 %v4246, %v6763
    %v7278 = vmul.f32 %v4256, %v6764
    %v7279 = vmul.f32 %v4266, %v6765
    %v7280 = vmul.f32 %v4276, %v6766
    %v7281 = vmul.f32 %v4286, %v6767
    %v7282 = vmul.f32 %v4296, %v6768
    %v7283 = vmul.f32 %v4306, %v6769
    %v7284 = vmul.f32 %v4316, %v6770
    %v7285 = vmul.f32 %v4326, %v6771
    %v7286 = vmul.f32 %v4336, %v6772
    %v7287 = vmul.f32 %v4346, %v6773
    %v7288 = vmul.f32 %v4356, %v6774
    %v7289 = vmul.f32 %v4366, %v6775
    %v7290 = vmul.f32 %v4376, %v6776
    %v7291 = vmul.f32 %v4386, %v6777
    %v7292 = vmul.f32 %v4396, %v6778
    %v7293 = vmul.f32 %v4406, %v6779
    %v7294 = vmul.f32 %v4416, %v6780
    %v7295 = vmul.f32 %v4426, %v6781
    %v7296 = vmul.f32 %v4436, %v6782
    %v7297 = vmul.f32 %v4446, %v6783
    %v7298 = vmul.f32 %v4456, %v6784
    %v7299 = vmul.f32 %v4466, %v6785
    %v7300 = vmul.f32 %v4476, %v6786
    %v7301 = vmul.f32 %v4486, %v6787
    %v7302 = vmul.f32 %v4496, %v6788
    %v7303 = vmul.f32 %v4506, %v6789
    %v7304 = vmul.f32 %v4516, %v6790
    %v7305 = vmul.f32 %v4526, %v6791
    %v7306 = vmul.f32 %v4536, %v6792
    %v7307 = vmul.f32 %v4546, %v6793
    %v7308 = vmul.f32 %v4556, %v6794
    %v7309 = vmul.f32 %v4566, %v6795
    %v7310 = vmul.f32 %v4576, %v6796
    %v7311 = vmul.f32 %v4586, %v6797
    %v7312 = vmul.f32 %v4596, %v6798
    %v7313 = vmul.f32 %v4606, %v6799
    %v7314 = vmul.f32 %v4616, %v6800
    %v7315 = vmul.f32 %v4626, %v6801
    %v7316 = vmul.f32 %v4636, %v6802
    %v7317 = vmul.f32 %v4646, %v6803
    %v7318 = vmul.f32 %v4656, %v6804
    %v7319 = vmul.f32 %v4666, %v6805
    %v7320 = vmul.f32 %v4676, %v6806
    %v7321 = vmul.f32 %v4686, %v6807
    %v7322 = vmul.f32 %v4696, %v6808
    %v7323 = vmul.f32 %v4706, %v6809
    %v7324 = vmul.f32 %v4716, %v6810
    %v7325 = vmul.f32 %v4726, %v6811
    %v7326 = vmul.f32 %v4736, %v6812
    %v7327 = vmul.f32 %v4746, %v6813
    %v7328 = vmul.f32 %v4756, %v6814
    %v7329 = vmul.f32 %v4766, %v6815
    %v7330 = vmul.f32 %v4776, %v6816
    %v7331 = vmul.f32 %v4786, %v6817
    %v7332 = vmul.f32 %v4796, %v6818
    %v7333 = vmul.f32 %v4806, %v6819
    %v7334 = vmul.f32 %v4816, %v6820
    %v7335 = vmul.f32 %v4826, %v6821
    %v7336 = vmul.f32 %v4836, %v6822
    %v7337 = vmul.f32 %v4846, %v6823
    %v7338 = vmul.f32 %v4856, %v6824
    %v7339 = vmul.f32 %v4866, %v6825
    %v7340 = vmul.f32 %v4876, %v6826
    %v7341 = vmul.f32 %v4886, %v6827
    %v7342 = vmul.f32 %v4896, %v6828
    %v7343 = vmul.f32 %v4906, %v6829
    %v7344 = vmul.f32 %v4916, %v6830
    %v7345 = vmul.f32 %v4926, %v6831
    %v7346 = vmul.f32 %v4936, %v6832
    %v7347 = vmul.f32 %v4946, %v6833
    %v7348 = vmul.f32 %v4956, %v6834
    %v7349 = vmul.f32 %v4966, %v6835
    %v7350 = vmul.f32 %v4976, %v6836
    %v7351 = vmul.f32 %v4986, %v6837
    %v7352 = vmul.f32 %v4996, %v6838
    %v7353 = vmul.f32 %v5006, %v6839
    %v7354 = vmul.f32 %v5016, %v6840
    %v7355 = vmul.f32 %v5026, %v6841
    %v7356 = vmul.f32 %v5036, %v6842
    %v7357 = vmul.f32 %v5046, %v6843
    %v7358 = vmul.f32 %v5056, %v6844
    %v7359 = vmul.f32 %v5066, %v6845
    %v7360 = vmul.f32 %v5076, %v6846
    %v7361 = vmul.f32 %v5086, %v6847
    %v7362 = vmul.f32 %v5096, %v6848
    %v7363 = vmul.f32 %v5106, %v6849
    %v7364 = vmul.f32 %v5116, %v6850
    %v7365 = vmul.f32 %v5126, %v6851
    %v7366 = vmul.f32 %v5136, %v6852
    %v7367 = vmul.f32 %v5146, %v6853
    %v7368 = vmul.f32 %v5156, %v6854
    %v7369 = vmul.f32 %v5166, %v6855
    %v7370 = vmul.f32 %v5176, %v6856
    %v7371 = vmul.f32 %v5186, %v6857
    %v7372 = vmul.f32 %v5196, %v6858
    %v7373 = vmul.f32 %v5206, %v6859
    %v7374 = vmul.f32 %v5216, %v6860
    %v7375 = vmul.f32 %v5226, %v6861
    %v7376 = vmul.f32 %v5236, %v6862
    %v7377 = vmul.f32 %v5246, %v6863
    %v7378 = vmul.f32 %v5256, %v6864
    %v7379 = vmul.f32 %v5266, %v6865
    %v7380 = vmul.f32 %v5276, %v6866
    %v7381 = vmul.f32 %v5286, %v6867
    %v7382 = vmul.f32 %v5296, %v6868
    %v7383 = vmul.f32 %v5306, %v6869
    %v7384 = vmul.f32 %v5316, %v6870
    %v7385 = vmul.f32 %v5326, %v6871
    %v7386 = vmul.f32 %v5336, %v6872
    %v7387 = vmul.f32 %v5346, %v6873
    %v7388 = vmul.f32 %v5356, %v6874
    %v7389 = vmul.f32 %v5366, %v6875
    %v7390 = vmul.f32 %v5376, %v6876
    %v7391 = vmul.f32 %v5386, %v6877
    %v7392 = vmul.f32 %v5396, %v6878
    %v7393 = vmul.f32 %v5406, %v6879
    %v7394 = vmul.f32 %v5416, %v6880
    %v7395 = vmul.f32 %v5426, %v6881
    %v7396 = vmul.f32 %v5436, %v6882
    %v7397 = vmul.f32 %v5446, %v6883
    %v7398 = vmul.f32 %v5456, %v6884
    %v7399 = vmul.f32 %v5466, %v6885
    %v7400 = vmul.f32 %v5476, %v6886
    %v7401 = vmul.f32 %v5486, %v6887
    %v7402 = vmul.f32 %v5496, %v6888
    %v7403 = vmul.f32 %v5506, %v6889
    %v7404 = vmul.f32 %v5516, %v6890
    %v7405 = vmul.f32 %v5526, %v6891
    %v7406 = vmul.f32 %v5536, %v6892
    %v7407 = vmul.f32 %v5546, %v6893
    %v7408 = vmul.f32 %v5556, %v6894
    %v7409 = vmul.f32 %v5566, %v6895
    %v7410 = vmul.f32 %v5576, %v6896
    %v7411 = vmul.f32 %v5586, %v6897
    %v7412 = vmul.f32 %v5596, %v6898
    %v7413 = vmul.f32 %v5606, %v6899
    %v7414 = vmul.f32 %v5616, %v6900
    %v7415 = vmul.f32 %v5626, %v6901
    %v7416 = vmul.f32 %v5636, %v6902
    %v7417 = vmul.f32 %v5646, %v6903
    %v7418 = vmul.f32 %v5656, %v6904
    %v7419 = vmul.f32 %v5666, %v6905
    %v7420 = vmul.f32 %v5676, %v6906
    %v7421 = vmul.f32 %v5686, %v6907
    %v7422 = vmul.f32 %v5696, %v6908
    %v7423 = vmul.f32 %v5706, %v6909
    %v7424 = vmul.f32 %v5716, %v6910
    %v7425 = vmul.f32 %v5726, %v6911
    %v7426 = vmul.f32 %v5736, %v6912
    %v7427 = vmul.f32 %v5746, %v6913
    %v7428 = vmul.f32 %v5756, %v6914
    %v7429 = vmul.f32 %v5766, %v6915
    %v7430 = vmul.f32 %v5776, %v6916
    %v7431 = vmul.f32 %v5786, %v6917
    %v7432 = vmul.f32 %v5796, %v6918
    %v7433 = vmul.f32 %v5806, %v6919
    %v7434 = vmul.f32 %v5816, %v6920
    %v7435 = vmul.f32 %v5826, %v6921
    %v7436 = vmul.f32 %v5836, %v6922
    %v7437 = vmul.f32 %v5846, %v6923
    %v7438 = vmul.f32 %v5856, %v6924
    %v7439 = vmul.f32 %v5866, %v6925
    %v7440 = vmul.f32 %v5876, %v6926
    %v7441 = vmul.f32 %v5886, %v6927
    %v7442 = vmul.f32 %v5896, %v6928
    %v7443 = vmul.f32 %v5906, %v6929
    %v7444 = vmul.f32 %v5916, %v6930
    %v7445 = vmul.f32 %v5926, %v6931
    %v7446 = vmul.f32 %v5936, %v6932
    %v7447 = vmul.f32 %v5946, %v6933
    %v7448 = vmul.f32 %v5956, %v6934
    %v7449 = vmul.f32 %v5966, %v6935
    %v7450 = vmul.f32 %v5976, %v6936
    %v7451 = vmul.f32 %v5986, %v6937
    %v7452 = vmul.f32 %v5996, %v6938
    %v7453 = vmul.f32 %v6006, %v6939
    %v7454 = vmul.f32 %v6016, %v6940
    %v7455 = vmul.f32 %v6026, %v6941
    %v7456 = vmul.f32 %v6036, %v6942
    %v7457 = vmul.f32 %v6046, %v6943
    %v7458 = vmul.f32 %v6056, %v6944
    %v7459 = vmul.f32 %v6066, %v6945
    %v7460 = vmul.f32 %v6076, %v6946
    %v7461 = vmul.f32 %v6086, %v6947
    %v7462 = vmul.f32 %v6096, %v6948
    %v7463 = vmul.f32 %v6106, %v6949
    %v7464 = vmul.f32 %v6116, %v6950
    %v7465 = vmul.f32 %v6126, %v6951
    %v7466 = vmul.f32 %v6136, %v6952
    %v7467 = vmul.f32 %v6146, %v6953
    %v7468 = vmul.f32 %v6156, %v6954
    %v7469 = vmul.f32 %v6166, %v6955
    %v7470 = vmul.f32 %v6176, %v6956
    %v7471 = vmul.f32 %v6186, %v6957
    %v7472 = vsub.f32 %v18, %v1047
    %v7473 = vsub.f32 %v19, %v1048
    %v7474 = vsub.f32 %v20, %v1049
    %v7475 = vsub.f32 %v21, %v1050
    %v7476 = vsub.f32 %v22, %v1051
    %v7477 = vsub.f32 %v23, %v1052
    %v7478 = vsub.f32 %v24, %v1053
    %v7479 = vsub.f32 %v25, %v1054
    %v7480 = vsub.f32 %v26, %v1055
    %v7481 = vsub.f32 %v27, %v1056
    %v7482 = vsub.f32 %v28, %v1057
    %v7483 = vsub.f32 %v29, %v1058
    %v7484 = vsub.f32 %v30, %v1059
    %v7485 = vsub.f32 %v31, %v1060
    %v7486 = vsub.f32 %v32, %v1061
    %v7487 = vsub.f32 %v33, %v1062
    %v7488 = vsub.f32 %v34, %v1063
    %v7489 = vsub.f32 %v35, %v1064
    %v7490 = vsub.f32 %v36, %v1065
    %v7491 = vsub.f32 %v37, %v1066
    %v7492 = vsub.f32 %v38, %v1067
    %v7493 = vsub.f32 %v39, %v1068
    %v7494 = vsub.f32 %v40, %v1069
    %v7495 = vsub.f32 %v41, %v1070
    %v7496 = vsub.f32 %v42, %v1071
    %v7497 = vsub.f32 %v43, %v1072
    %v7498 = vsub.f32 %v44, %v1073
    %v7499 = vsub.f32 %v45, %v1074
    %v7500 = vsub.f32 %v46, %v1075
    %v7501 = vsub.f32 %v47, %v1076
    %v7502 = vsub.f32 %v48, %v1077
    %v7503 = vsub.f32 %v49, %v1078
    %v7504 = vsub.f32 %v50, %v1079
    %v7505 = vsub.f32 %v51, %v1080
    %v7506 = vsub.f32 %v52, %v1081
    %v7507 = vsub.f32 %v53, %v1082
    %v7508 = vsub.f32 %v54, %v1083
    %v7509 = vsub.f32 %v55, %v1084
    %v7510 = vsub.f32 %v56, %v1085
    %v7511 = vsub.f32 %v57, %v1086
    %v7512 = vsub.f32 %v58, %v1087
    %v7513 = vsub.f32 %v59, %v1088
    %v7514 = vsub.f32 %v60, %v1089
    %v7515 = vsub.f32 %v61, %v1090
    %v7516 = vsub.f32 %v62, %v1091
    %v7517 = vsub.f32 %v63, %v1092
    %v7518 = vsub.f32 %v64, %v1093
    %v7519 = vsub.f32 %v65, %v1094
    %v7520 = vsub.f32 %v66, %v1095
    %v7521 = vsub.f32 %v67, %v1096
    %v7522 = vsub.f32 %v68, %v1097
    %v7523 = vsub.f32 %v69, %v1098
    %v7524 = vsub.f32 %v70, %v1099
    %v7525 = vsub.f32 %v71, %v1100
    %v7526 = vsub.f32 %v72, %v1101
    %v7527 = vsub.f32 %v73, %v1102
    %v7528 = vsub.f32 %v74, %v1103
    %v7529 = vsub.f32 %v75, %v1104
    %v7530 = vsub.f32 %v76, %v1105
    %v7531 = vsub.f32 %v77, %v1106
    %v7532 = vsub.f32 %v78, %v1107
    %v7533 = vsub.f32 %v79, %v1108
    %v7534 = vsub.f32 %v80, %v1109
    %v7535 = vsub.f32 %v81, %v1110
    %v7536 = vsub.f32 %v82, %v1111
    %v7537 = vsub.f32 %v83, %v1112
    %v7538 = vsub.f32 %v84, %v1113
    %v7539 = vsub.f32 %v85, %v1114
    %v7540 = vsub.f32 %v86, %v1115
    %v7541 = vsub.f32 %v87, %v1116
    %v7542 = vsub.f32 %v88, %v1117
    %v7543 = vsub.f32 %v89, %v1118
    %v7544 = vsub.f32 %v90, %v1119
    %v7545 = vsub.f32 %v91, %v1120
    %v7546 = vsub.f32 %v92, %v1121
    %v7547 = vsub.f32 %v93, %v1122
    %v7548 = vsub.f32 %v94, %v1123
    %v7549 = vsub.f32 %v95, %v1124
    %v7550 = vsub.f32 %v96, %v1125
    %v7551 = vsub.f32 %v97, %v1126
    %v7552 = vsub.f32 %v98, %v1127
    %v7553 = vsub.f32 %v99, %v1128
    %v7554 = vsub.f32 %v100, %v1129
    %v7555 = vsub.f32 %v101, %v1130
    %v7556 = vsub.f32 %v102, %v1131
    %v7557 = vsub.f32 %v103, %v1132
    %v7558 = vsub.f32 %v104, %v1133
    %v7559 = vsub.f32 %v105, %v1134
    %v7560 = vsub.f32 %v106, %v1135
    %v7561 = vsub.f32 %v107, %v1136
    %v7562 = vsub.f32 %v108, %v1137
    %v7563 = vsub.f32 %v109, %v1138
    %v7564 = vsub.f32 %v110, %v1139
    %v7565 = vsub.f32 %v111, %v1140
    %v7566 = vsub.f32 %v112, %v1141
    %v7567 = vsub.f32 %v113, %v1142
    %v7568 = vsub.f32 %v114, %v1143
    %v7569 = vsub.f32 %v115, %v1144
    %v7570 = vsub.f32 %v116, %v1145
    %v7571 = vsub.f32 %v117, %v1146
    %v7572 = vsub.f32 %v118, %v1147
    %v7573 = vsub.f32 %v119, %v1148
    %v7574 = vsub.f32 %v120, %v1149
    %v7575 = vsub.f32 %v121, %v1150
    %v7576 = vsub.f32 %v122, %v1151
    %v7577 = vsub.f32 %v123, %v1152
    %v7578 = vsub.f32 %v124, %v1153
    %v7579 = vsub.f32 %v125, %v1154
    %v7580 = vsub.f32 %v126, %v1155
    %v7581 = vsub.f32 %v127, %v1156
    %v7582 = vsub.f32 %v128, %v1157
    %v7583 = vsub.f32 %v129, %v1158
    %v7584 = vsub.f32 %v130, %v1159
    %v7585 = vsub.f32 %v131, %v1160
    %v7586 = vsub.f32 %v132, %v1161
    %v7587 = vsub.f32 %v133, %v1162
    %v7588 = vsub.f32 %v134, %v1163
    %v7589 = vsub.f32 %v135, %v1164
    %v7590 = vsub.f32 %v136, %v1165
    %v7591 = vsub.f32 %v137, %v1166
    %v7592 = vsub.f32 %v138, %v1167
    %v7593 = vsub.f32 %v139, %v1168
    %v7594 = vsub.f32 %v140, %v1169
    %v7595 = vsub.f32 %v141, %v1170
    %v7596 = vsub.f32 %v142, %v1171
    %v7597 = vsub.f32 %v143, %v1172
    %v7598 = vsub.f32 %v144, %v1173
    %v7599 = vsub.f32 %v145, %v1174
    %v7600 = vsub.f32 %v146, %v1175
    %v7601 = vsub.f32 %v147, %v1176
    %v7602 = vsub.f32 %v148, %v1177
    %v7603 = vsub.f32 %v149, %v1178
    %v7604 = vsub.f32 %v150, %v1179
    %v7605 = vsub.f32 %v151, %v1180
    %v7606 = vsub.f32 %v152, %v1181
    %v7607 = vsub.f32 %v153, %v1182
    %v7608 = vsub.f32 %v154, %v1183
    %v7609 = vsub.f32 %v155, %v1184
    %v7610 = vsub.f32 %v156, %v1185
    %v7611 = vsub.f32 %v157, %v1186
    %v7612 = vsub.f32 %v158, %v1187
    %v7613 = vsub.f32 %v159, %v1188
    %v7614 = vsub.f32 %v160, %v1189
    %v7615 = vsub.f32 %v161, %v1190
    %v7616 = vsub.f32 %v162, %v1191
    %v7617 = vsub.f32 %v163, %v1192
    %v7618 = vsub.f32 %v164, %v1193
    %v7619 = vsub.f32 %v165, %v1194
    %v7620 = vsub.f32 %v166, %v1195
    %v7621 = vsub.f32 %v167, %v1196
    %v7622 = vsub.f32 %v168, %v1197
    %v7623 = vsub.f32 %v169, %v1198
    %v7624 = vsub.f32 %v170, %v1199
    %v7625 = vsub.f32 %v171, %v1200
    %v7626 = vsub.f32 %v172, %v1201
    %v7627 = vsub.f32 %v173, %v1202
    %v7628 = vsub.f32 %v174, %v1203
    %v7629 = vsub.f32 %v175, %v1204
    %v7630 = vsub.f32 %v176, %v1205
    %v7631 = vsub.f32 %v177, %v1206
    %v7632 = vsub.f32 %v178, %v1207
    %v7633 = vsub.f32 %v179, %v1208
    %v7634 = vsub.f32 %v180, %v1209
    %v7635 = vsub.f32 %v181, %v1210
    %v7636 = vsub.f32 %v182, %v1211
    %v7637 = vsub.f32 %v183, %v1212
    %v7638 = vsub.f32 %v184, %v1213
    %v7639 = vsub.f32 %v185, %v1214
    %v7640 = vsub.f32 %v186, %v1215
    %v7641 = vsub.f32 %v187, %v1216
    %v7642 = vsub.f32 %v188, %v1217
    %v7643 = vsub.f32 %v189, %v1218
    %v7644 = vsub.f32 %v190, %v1219
    %v7645 = vsub.f32 %v191, %v1220
    %v7646 = vsub.f32 %v192, %v1221
    %v7647 = vsub.f32 %v193, %v1222
    %v7648 = vsub.f32 %v194, %v1223
    %v7649 = vsub.f32 %v195, %v1224
    %v7650 = vsub.f32 %v196, %v1225
    %v7651 = vsub.f32 %v197, %v1226
    %v7652 = vsub.f32 %v198, %v1227
    %v7653 = vsub.f32 %v199, %v1228
    %v7654 = vsub.f32 %v200, %v1229
    %v7655 = vsub.f32 %v201, %v1230
    %v7656 = vsub.f32 %v202, %v1231
    %v7657 = vsub.f32 %v203, %v1232
    %v7658 = vsub.f32 %v204, %v1233
    %v7659 = vsub.f32 %v205, %v1234
    %v7660 = vsub.f32 %v206, %v1235
    %v7661 = vsub.f32 %v207, %v1236
    %v7662 = vsub.f32 %v208, %v1237
    %v7663 = vsub.f32 %v209, %v1238
    %v7664 = vsub.f32 %v210, %v1239
    %v7665 = vsub.f32 %v211, %v1240
    %v7666 = vsub.f32 %v212, %v1241
    %v7667 = vsub.f32 %v213, %v1242
    %v7668 = vsub.f32 %v214, %v1243
    %v7669 = vsub.f32 %v215, %v1244
    %v7670 = vsub.f32 %v216, %v1245
    %v7671 = vsub.f32 %v217, %v1246
    %v7672 = vsub.f32 %v218, %v1247
    %v7673 = vsub.f32 %v219, %v1248
    %v7674 = vsub.f32 %v220, %v1249
    %v7675 = vsub.f32 %v221, %v1250
    %v7676 = vsub.f32 %v222, %v1251
    %v7677 = vsub.f32 %v223, %v1252
    %v7678 = vsub.f32 %v224, %v1253
    %v7679 = vsub.f32 %v225, %v1254
    %v7680 = vsub.f32 %v226, %v1255
    %v7681 = vsub.f32 %v227, %v1256
    %v7682 = vsub.f32 %v228, %v1257
    %v7683 = vsub.f32 %v229, %v1258
    %v7684 = vsub.f32 %v230, %v1259
    %v7685 = vsub.f32 %v231, %v1260
    %v7686 = vsub.f32 %v232, %v1261
    %v7687 = vsub.f32 %v233, %v1262
    %v7688 = vsub.f32 %v234, %v1263
    %v7689 = vsub.f32 %v235, %v1264
    %v7690 = vsub.f32 %v236, %v1265
    %v7691 = vsub.f32 %v237, %v1266
    %v7692 = vsub.f32 %v238, %v1267
    %v7693 = vsub.f32 %v239, %v1268
    %v7694 = vsub.f32 %v240, %v1269
    %v7695 = vsub.f32 %v241, %v1270
    %v7696 = vsub.f32 %v242, %v1271
    %v7697 = vsub.f32 %v243, %v1272
    %v7698 = vsub.f32 %v244, %v1273
    %v7699 = vsub.f32 %v245, %v1274
    %v7700 = vsub.f32 %v246, %v1275
    %v7701 = vsub.f32 %v247, %v1276
    %v7702 = vsub.f32 %v248, %v1277
    %v7703 = vsub.f32 %v249, %v1278
    %v7704 = vsub.f32 %v250, %v1279
    %v7705 = vsub.f32 %v251, %v1280
    %v7706 = vsub.f32 %v252, %v1281
    %v7707 = vsub.f32 %v253, %v1282
    %v7708 = vsub.f32 %v254, %v1283
    %v7709 = vsub.f32 %v255, %v1284
    %v7710 = vsub.f32 %v256, %v1285
    %v7711 = vsub.f32 %v257, %v1286
    %v7712 = vsub.f32 %v258, %v1287
    %v7713 = vsub.f32 %v259, %v1288
    %v7714 = vsub.f32 %v260, %v1289
    %v7715 = vsub.f32 %v261, %v1290
    %v7716 = vsub.f32 %v262, %v1291
    %v7717 = vsub.f32 %v263, %v1292
    %v7718 = vsub.f32 %v264, %v1293
    %v7719 = vsub.f32 %v265, %v1294
    %v7720 = vsub.f32 %v266, %v1295
    %v7721 = vsub.f32 %v267, %v1296
    %v7722 = vsub.f32 %v268, %v1297
    %v7723 = vsub.f32 %v269, %v1298
    %v7724 = vsub.f32 %v270, %v1299
    %v7725 = vsub.f32 %v271, %v1300
    %v7726 = vsub.f32 %v272, %v1301
    %v7727 = vsub.f32 %v273, %v1302
    %v7728 = vsub.f32 %v274, %v1303
    %7730 = vset.pattern.permute.xlu0 0
    %7731 = vperm.xlu0 %7730, %v7215
    %v7732 = vpop.permute.xlu0 %7731
    %7735 = vset.pattern.permute.xlu0 0
    %7736 = vperm.xlu0 %7735, %v7216
    %v7737 = vpop.permute.xlu0 %7736
    %7740 = vset.pattern.permute.xlu0 0
    %7741 = vperm.xlu0 %7740, %v7217
    %v7742 = vpop.permute.xlu0 %7741
    %7745 = vset.pattern.permute.xlu0 0
    %7746 = vperm.xlu0 %7745, %v7218
    %v7747 = vpop.permute.xlu0 %7746
    %7750 = vset.pattern.permute.xlu0 0
    %7751 = vperm.xlu0 %7750, %v7219
    %v7752 = vpop.permute.xlu0 %7751
    %7755 = vset.pattern.permute.xlu0 0
    %7756 = vperm.xlu0 %7755, %v7220
    %v7757 = vpop.permute.xlu0 %7756
    %7760 = vset.pattern.permute.xlu0 0
    %7761 = vperm.xlu0 %7760, %v7221
    %v7762 = vpop.permute.xlu0 %7761
    %7765 = vset.pattern.permute.xlu0 0
    %7766 = vperm.xlu0 %7765, %v7222
    %v7767 = vpop.permute.xlu0 %7766
    %7770 = vset.pattern.permute.xlu0 0
    %7771 = vperm.xlu0 %7770, %v7223
    %v7772 = vpop.permute.xlu0 %7771
    %7775 = vset.pattern.permute.xlu0 0
    %7776 = vperm.xlu0 %7775, %v7224
    %v7777 = vpop.permute.xlu0 %7776
    %7780 = vset.pattern.permute.xlu0 0
    %7781 = vperm.xlu0 %7780, %v7225
    %v7782 = vpop.permute.xlu0 %7781
    %7785 = vset.pattern.permute.xlu0 0
    %7786 = vperm.xlu0 %7785, %v7226
    %v7787 = vpop.permute.xlu0 %7786
    %7790 = vset.pattern.permute.xlu0 0
    %7791 = vperm.xlu0 %7790, %v7227
    %v7792 = vpop.permute.xlu0 %7791
    %7795 = vset.pattern.permute.xlu0 0
    %7796 = vperm.xlu0 %7795, %v7228
    %v7797 = vpop.permute.xlu0 %7796
    %7800 = vset.pattern.permute.xlu0 0
    %7801 = vperm.xlu0 %7800, %v7229
    %v7802 = vpop.permute.xlu0 %7801
    %7805 = vset.pattern.permute.xlu0 0
    %7806 = vperm.xlu0 %7805, %v7230
    %v7807 = vpop.permute.xlu0 %7806
    %7810 = vset.pattern.permute.xlu0 0
    %7811 = vperm.xlu0 %7810, %v7231
    %v7812 = vpop.permute.xlu0 %7811
    %7815 = vset.pattern.permute.xlu0 0
    %7816 = vperm.xlu0 %7815, %v7232
    %v7817 = vpop.permute.xlu0 %7816
    %7820 = vset.pattern.permute.xlu0 0
    %7821 = vperm.xlu0 %7820, %v7233
    %v7822 = vpop.permute.xlu0 %7821
    %7825 = vset.pattern.permute.xlu0 0
    %7826 = vperm.xlu0 %7825, %v7234
    %v7827 = vpop.permute.xlu0 %7826
    %7830 = vset.pattern.permute.xlu0 0
    %7831 = vperm.xlu0 %7830, %v7235
    %v7832 = vpop.permute.xlu0 %7831
    %7835 = vset.pattern.permute.xlu0 0
    %7836 = vperm.xlu0 %7835, %v7236
    %v7837 = vpop.permute.xlu0 %7836
    %7840 = vset.pattern.permute.xlu0 0
    %7841 = vperm.xlu0 %7840, %v7237
    %v7842 = vpop.permute.xlu0 %7841
    %7845 = vset.pattern.permute.xlu0 0
    %7846 = vperm.xlu0 %7845, %v7238
    %v7847 = vpop.permute.xlu0 %7846
    %7850 = vset.pattern.permute.xlu0 0
    %7851 = vperm.xlu0 %7850, %v7239
    %v7852 = vpop.permute.xlu0 %7851
    %7855 = vset.pattern.permute.xlu0 0
    %7856 = vperm.xlu0 %7855, %v7240
    %v7857 = vpop.permute.xlu0 %7856
    %7860 = vset.pattern.permute.xlu0 0
    %7861 = vperm.xlu0 %7860, %v7241
    %v7862 = vpop.permute.xlu0 %7861
    %7865 = vset.pattern.permute.xlu0 0
    %7866 = vperm.xlu0 %7865, %v7242
    %v7867 = vpop.permute.xlu0 %7866
    %7870 = vset.pattern.permute.xlu0 0
    %7871 = vperm.xlu0 %7870, %v7243
    %v7872 = vpop.permute.xlu0 %7871
    %7875 = vset.pattern.permute.xlu0 0
    %7876 = vperm.xlu0 %7875, %v7244
    %v7877 = vpop.permute.xlu0 %7876
    %7880 = vset.pattern.permute.xlu0 0
    %7881 = vperm.xlu0 %7880, %v7245
    %v7882 = vpop.permute.xlu0 %7881
    %7885 = vset.pattern.permute.xlu0 0
    %7886 = vperm.xlu0 %7885, %v7246
    %v7887 = vpop.permute.xlu0 %7886
    %7890 = vset.pattern.permute.xlu0 0
    %7891 = vperm.xlu0 %7890, %v7247
    %v7892 = vpop.permute.xlu0 %7891
    %7895 = vset.pattern.permute.xlu0 0
    %7896 = vperm.xlu0 %7895, %v7248
    %v7897 = vpop.permute.xlu0 %7896
    %7900 = vset.pattern.permute.xlu0 0
    %7901 = vperm.xlu0 %7900, %v7249
    %v7902 = vpop.permute.xlu0 %7901
    %7905 = vset.pattern.permute.xlu0 0
    %7906 = vperm.xlu0 %7905, %v7250
    %v7907 = vpop.permute.xlu0 %7906
    %7910 = vset.pattern.permute.xlu0 0
    %7911 = vperm.xlu0 %7910, %v7251
    %v7912 = vpop.permute.xlu0 %7911
    %7915 = vset.pattern.permute.xlu0 0
    %7916 = vperm.xlu0 %7915, %v7252
    %v7917 = vpop.permute.xlu0 %7916
    %7920 = vset.pattern.permute.xlu0 0
    %7921 = vperm.xlu0 %7920, %v7253
    %v7922 = vpop.permute.xlu0 %7921
    %7925 = vset.pattern.permute.xlu0 0
    %7926 = vperm.xlu0 %7925, %v7254
    %v7927 = vpop.permute.xlu0 %7926
    %7930 = vset.pattern.permute.xlu0 0
    %7931 = vperm.xlu0 %7930, %v7255
    %v7932 = vpop.permute.xlu0 %7931
    %7935 = vset.pattern.permute.xlu0 0
    %7936 = vperm.xlu0 %7935, %v7256
    %v7937 = vpop.permute.xlu0 %7936
    %7940 = vset.pattern.permute.xlu0 0
    %7941 = vperm.xlu0 %7940, %v7257
    %v7942 = vpop.permute.xlu0 %7941
    %7945 = vset.pattern.permute.xlu0 0
    %7946 = vperm.xlu0 %7945, %v7258
    %v7947 = vpop.permute.xlu0 %7946
    %7950 = vset.pattern.permute.xlu0 0
    %7951 = vperm.xlu0 %7950, %v7259
    %v7952 = vpop.permute.xlu0 %7951
    %7955 = vset.pattern.permute.xlu0 0
    %7956 = vperm.xlu0 %7955, %v7260
    %v7957 = vpop.permute.xlu0 %7956
    %7960 = vset.pattern.permute.xlu0 0
    %7961 = vperm.xlu0 %7960, %v7261
    %v7962 = vpop.permute.xlu0 %7961
    %7965 = vset.pattern.permute.xlu0 0
    %7966 = vperm.xlu0 %7965, %v7262
    %v7967 = vpop.permute.xlu0 %7966
    %7970 = vset.pattern.permute.xlu0 0
    %7971 = vperm.xlu0 %7970, %v7263
    %v7972 = vpop.permute.xlu0 %7971
    %7975 = vset.pattern.permute.xlu0 0
    %7976 = vperm.xlu0 %7975, %v7264
    %v7977 = vpop.permute.xlu0 %7976
    %7980 = vset.pattern.permute.xlu0 0
    %7981 = vperm.xlu0 %7980, %v7265
    %v7982 = vpop.permute.xlu0 %7981
    %7985 = vset.pattern.permute.xlu0 0
    %7986 = vperm.xlu0 %7985, %v7266
    %v7987 = vpop.permute.xlu0 %7986
    %7990 = vset.pattern.permute.xlu0 0
    %7991 = vperm.xlu0 %7990, %v7267
    %v7992 = vpop.permute.xlu0 %7991
    %7995 = vset.pattern.permute.xlu0 0
    %7996 = vperm.xlu0 %7995, %v7268
    %v7997 = vpop.permute.xlu0 %7996
    %8000 = vset.pattern.permute.xlu0 0
    %8001 = vperm.xlu0 %8000, %v7269
    %v8002 = vpop.permute.xlu0 %8001
    %8005 = vset.pattern.permute.xlu0 0
    %8006 = vperm.xlu0 %8005, %v7270
    %v8007 = vpop.permute.xlu0 %8006
    %8010 = vset.pattern.permute.xlu0 0
    %8011 = vperm.xlu0 %8010, %v7271
    %v8012 = vpop.permute.xlu0 %8011
    %8015 = vset.pattern.permute.xlu0 0
    %8016 = vperm.xlu0 %8015, %v7272
    %v8017 = vpop.permute.xlu0 %8016
    %8020 = vset.pattern.permute.xlu0 0
    %8021 = vperm.xlu0 %8020, %v7273
    %v8022 = vpop.permute.xlu0 %8021
    %8025 = vset.pattern.permute.xlu0 0
    %8026 = vperm.xlu0 %8025, %v7274
    %v8027 = vpop.permute.xlu0 %8026
    %8030 = vset.pattern.permute.xlu0 0
    %8031 = vperm.xlu0 %8030, %v7275
    %v8032 = vpop.permute.xlu0 %8031
    %8035 = vset.pattern.permute.xlu0 0
    %8036 = vperm.xlu0 %8035, %v7276
    %v8037 = vpop.permute.xlu0 %8036
    %8040 = vset.pattern.permute.xlu0 0
    %8041 = vperm.xlu0 %8040, %v7277
    %v8042 = vpop.permute.xlu0 %8041
    %8045 = vset.pattern.permute.xlu0 0
    %8046 = vperm.xlu0 %8045, %v7278
    %v8047 = vpop.permute.xlu0 %8046
    %8050 = vset.pattern.permute.xlu0 0
    %8051 = vperm.xlu0 %8050, %v7279
    %v8052 = vpop.permute.xlu0 %8051
    %8055 = vset.pattern.permute.xlu0 0
    %8056 = vperm.xlu0 %8055, %v7280
    %v8057 = vpop.permute.xlu0 %8056
    %8060 = vset.pattern.permute.xlu0 0
    %8061 = vperm.xlu0 %8060, %v7281
    %v8062 = vpop.permute.xlu0 %8061
    %8065 = vset.pattern.permute.xlu0 0
    %8066 = vperm.xlu0 %8065, %v7282
    %v8067 = vpop.permute.xlu0 %8066
    %8070 = vset.pattern.permute.xlu0 0
    %8071 = vperm.xlu0 %8070, %v7283
    %v8072 = vpop.permute.xlu0 %8071
    %8075 = vset.pattern.permute.xlu0 0
    %8076 = vperm.xlu0 %8075, %v7284
    %v8077 = vpop.permute.xlu0 %8076
    %8080 = vset.pattern.permute.xlu0 0
    %8081 = vperm.xlu0 %8080, %v7285
    %v8082 = vpop.permute.xlu0 %8081
    %8085 = vset.pattern.permute.xlu0 0
    %8086 = vperm.xlu0 %8085, %v7286
    %v8087 = vpop.permute.xlu0 %8086
    %8090 = vset.pattern.permute.xlu0 0
    %8091 = vperm.xlu0 %8090, %v7287
    %v8092 = vpop.permute.xlu0 %8091
    %8095 = vset.pattern.permute.xlu0 0
    %8096 = vperm.xlu0 %8095, %v7288
    %v8097 = vpop.permute.xlu0 %8096
    %8100 = vset.pattern.permute.xlu0 0
    %8101 = vperm.xlu0 %8100, %v7289
    %v8102 = vpop.permute.xlu0 %8101
    %8105 = vset.pattern.permute.xlu0 0
    %8106 = vperm.xlu0 %8105, %v7290
    %v8107 = vpop.permute.xlu0 %8106
    %8110 = vset.pattern.permute.xlu0 0
    %8111 = vperm.xlu0 %8110, %v7291
    %v8112 = vpop.permute.xlu0 %8111
    %8115 = vset.pattern.permute.xlu0 0
    %8116 = vperm.xlu0 %8115, %v7292
    %v8117 = vpop.permute.xlu0 %8116
    %8120 = vset.pattern.permute.xlu0 0
    %8121 = vperm.xlu0 %8120, %v7293
    %v8122 = vpop.permute.xlu0 %8121
    %8125 = vset.pattern.permute.xlu0 0
    %8126 = vperm.xlu0 %8125, %v7294
    %v8127 = vpop.permute.xlu0 %8126
    %8130 = vset.pattern.permute.xlu0 0
    %8131 = vperm.xlu0 %8130, %v7295
    %v8132 = vpop.permute.xlu0 %8131
    %8135 = vset.pattern.permute.xlu0 0
    %8136 = vperm.xlu0 %8135, %v7296
    %v8137 = vpop.permute.xlu0 %8136
    %8140 = vset.pattern.permute.xlu0 0
    %8141 = vperm.xlu0 %8140, %v7297
    %v8142 = vpop.permute.xlu0 %8141
    %8145 = vset.pattern.permute.xlu0 0
    %8146 = vperm.xlu0 %8145, %v7298
    %v8147 = vpop.permute.xlu0 %8146
    %8150 = vset.pattern.permute.xlu0 0
    %8151 = vperm.xlu0 %8150, %v7299
    %v8152 = vpop.permute.xlu0 %8151
    %8155 = vset.pattern.permute.xlu0 0
    %8156 = vperm.xlu0 %8155, %v7300
    %v8157 = vpop.permute.xlu0 %8156
    %8160 = vset.pattern.permute.xlu0 0
    %8161 = vperm.xlu0 %8160, %v7301
    %v8162 = vpop.permute.xlu0 %8161
    %8165 = vset.pattern.permute.xlu0 0
    %8166 = vperm.xlu0 %8165, %v7302
    %v8167 = vpop.permute.xlu0 %8166
    %8170 = vset.pattern.permute.xlu0 0
    %8171 = vperm.xlu0 %8170, %v7303
    %v8172 = vpop.permute.xlu0 %8171
    %8175 = vset.pattern.permute.xlu0 0
    %8176 = vperm.xlu0 %8175, %v7304
    %v8177 = vpop.permute.xlu0 %8176
    %8180 = vset.pattern.permute.xlu0 0
    %8181 = vperm.xlu0 %8180, %v7305
    %v8182 = vpop.permute.xlu0 %8181
    %8185 = vset.pattern.permute.xlu0 0
    %8186 = vperm.xlu0 %8185, %v7306
    %v8187 = vpop.permute.xlu0 %8186
    %8190 = vset.pattern.permute.xlu0 0
    %8191 = vperm.xlu0 %8190, %v7307
    %v8192 = vpop.permute.xlu0 %8191
    %8195 = vset.pattern.permute.xlu0 0
    %8196 = vperm.xlu0 %8195, %v7308
    %v8197 = vpop.permute.xlu0 %8196
    %8200 = vset.pattern.permute.xlu0 0
    %8201 = vperm.xlu0 %8200, %v7309
    %v8202 = vpop.permute.xlu0 %8201
    %8205 = vset.pattern.permute.xlu0 0
    %8206 = vperm.xlu0 %8205, %v7310
    %v8207 = vpop.permute.xlu0 %8206
    %8210 = vset.pattern.permute.xlu0 0
    %8211 = vperm.xlu0 %8210, %v7311
    %v8212 = vpop.permute.xlu0 %8211
    %8215 = vset.pattern.permute.xlu0 0
    %8216 = vperm.xlu0 %8215, %v7312
    %v8217 = vpop.permute.xlu0 %8216
    %8220 = vset.pattern.permute.xlu0 0
    %8221 = vperm.xlu0 %8220, %v7313
    %v8222 = vpop.permute.xlu0 %8221
    %8225 = vset.pattern.permute.xlu0 0
    %8226 = vperm.xlu0 %8225, %v7314
    %v8227 = vpop.permute.xlu0 %8226
    %8230 = vset.pattern.permute.xlu0 0
    %8231 = vperm.xlu0 %8230, %v7315
    %v8232 = vpop.permute.xlu0 %8231
    %8235 = vset.pattern.permute.xlu0 0
    %8236 = vperm.xlu0 %8235, %v7316
    %v8237 = vpop.permute.xlu0 %8236
    %8240 = vset.pattern.permute.xlu0 0
    %8241 = vperm.xlu0 %8240, %v7317
    %v8242 = vpop.permute.xlu0 %8241
    %8245 = vset.pattern.permute.xlu0 0
    %8246 = vperm.xlu0 %8245, %v7318
    %v8247 = vpop.permute.xlu0 %8246
    %8250 = vset.pattern.permute.xlu0 0
    %8251 = vperm.xlu0 %8250, %v7319
    %v8252 = vpop.permute.xlu0 %8251
    %8255 = vset.pattern.permute.xlu0 0
    %8256 = vperm.xlu0 %8255, %v7320
    %v8257 = vpop.permute.xlu0 %8256
    %8260 = vset.pattern.permute.xlu0 0
    %8261 = vperm.xlu0 %8260, %v7321
    %v8262 = vpop.permute.xlu0 %8261
    %8265 = vset.pattern.permute.xlu0 0
    %8266 = vperm.xlu0 %8265, %v7322
    %v8267 = vpop.permute.xlu0 %8266
    %8270 = vset.pattern.permute.xlu0 0
    %8271 = vperm.xlu0 %8270, %v7323
    %v8272 = vpop.permute.xlu0 %8271
    %8275 = vset.pattern.permute.xlu0 0
    %8276 = vperm.xlu0 %8275, %v7324
    %v8277 = vpop.permute.xlu0 %8276
    %8280 = vset.pattern.permute.xlu0 0
    %8281 = vperm.xlu0 %8280, %v7325
    %v8282 = vpop.permute.xlu0 %8281
    %8285 = vset.pattern.permute.xlu0 0
    %8286 = vperm.xlu0 %8285, %v7326
    %v8287 = vpop.permute.xlu0 %8286
    %8290 = vset.pattern.permute.xlu0 0
    %8291 = vperm.xlu0 %8290, %v7327
    %v8292 = vpop.permute.xlu0 %8291
    %8295 = vset.pattern.permute.xlu0 0
    %8296 = vperm.xlu0 %8295, %v7328
    %v8297 = vpop.permute.xlu0 %8296
    %8300 = vset.pattern.permute.xlu0 0
    %8301 = vperm.xlu0 %8300, %v7329
    %v8302 = vpop.permute.xlu0 %8301
    %8305 = vset.pattern.permute.xlu0 0
    %8306 = vperm.xlu0 %8305, %v7330
    %v8307 = vpop.permute.xlu0 %8306
    %8310 = vset.pattern.permute.xlu0 0
    %8311 = vperm.xlu0 %8310, %v7331
    %v8312 = vpop.permute.xlu0 %8311
    %8315 = vset.pattern.permute.xlu0 0
    %8316 = vperm.xlu0 %8315, %v7332
    %v8317 = vpop.permute.xlu0 %8316
    %8320 = vset.pattern.permute.xlu0 0
    %8321 = vperm.xlu0 %8320, %v7333
    %v8322 = vpop.permute.xlu0 %8321
    %8325 = vset.pattern.permute.xlu0 0
    %8326 = vperm.xlu0 %8325, %v7334
    %v8327 = vpop.permute.xlu0 %8326
    %8330 = vset.pattern.permute.xlu0 0
    %8331 = vperm.xlu0 %8330, %v7335
    %v8332 = vpop.permute.xlu0 %8331
    %8335 = vset.pattern.permute.xlu0 0
    %8336 = vperm.xlu0 %8335, %v7336
    %v8337 = vpop.permute.xlu0 %8336
    %8340 = vset.pattern.permute.xlu0 0
    %8341 = vperm.xlu0 %8340, %v7337
    %v8342 = vpop.permute.xlu0 %8341
    %8345 = vset.pattern.permute.xlu0 0
    %8346 = vperm.xlu0 %8345, %v7338
    %v8347 = vpop.permute.xlu0 %8346
    %8350 = vset.pattern.permute.xlu0 0
    %8351 = vperm.xlu0 %8350, %v7339
    %v8352 = vpop.permute.xlu0 %8351
    %8355 = vset.pattern.permute.xlu0 0
    %8356 = vperm.xlu0 %8355, %v7340
    %v8357 = vpop.permute.xlu0 %8356
    %8360 = vset.pattern.permute.xlu0 0
    %8361 = vperm.xlu0 %8360, %v7341
    %v8362 = vpop.permute.xlu0 %8361
    %8365 = vset.pattern.permute.xlu0 0
    %8366 = vperm.xlu0 %8365, %v7342
    %v8367 = vpop.permute.xlu0 %8366
    %8370 = vset.pattern.permute.xlu0 0
    %8371 = vperm.xlu0 %8370, %v7343
    %v8372 = vpop.permute.xlu0 %8371
    %8375 = vset.pattern.permute.xlu0 0
    %8376 = vperm.xlu0 %8375, %v7344
    %v8377 = vpop.permute.xlu0 %8376
    %8380 = vset.pattern.permute.xlu0 0
    %8381 = vperm.xlu0 %8380, %v7345
    %v8382 = vpop.permute.xlu0 %8381
    %8385 = vset.pattern.permute.xlu0 0
    %8386 = vperm.xlu0 %8385, %v7346
    %v8387 = vpop.permute.xlu0 %8386
    %8390 = vset.pattern.permute.xlu0 0
    %8391 = vperm.xlu0 %8390, %v7347
    %v8392 = vpop.permute.xlu0 %8391
    %8395 = vset.pattern.permute.xlu0 0
    %8396 = vperm.xlu0 %8395, %v7348
    %v8397 = vpop.permute.xlu0 %8396
    %8400 = vset.pattern.permute.xlu0 0
    %8401 = vperm.xlu0 %8400, %v7349
    %v8402 = vpop.permute.xlu0 %8401
    %8405 = vset.pattern.permute.xlu0 0
    %8406 = vperm.xlu0 %8405, %v7350
    %v8407 = vpop.permute.xlu0 %8406
    %8410 = vset.pattern.permute.xlu0 0
    %8411 = vperm.xlu0 %8410, %v7351
    %v8412 = vpop.permute.xlu0 %8411
    %8415 = vset.pattern.permute.xlu0 0
    %8416 = vperm.xlu0 %8415, %v7352
    %v8417 = vpop.permute.xlu0 %8416
    %8420 = vset.pattern.permute.xlu0 0
    %8421 = vperm.xlu0 %8420, %v7353
    %v8422 = vpop.permute.xlu0 %8421
    %8425 = vset.pattern.permute.xlu0 0
    %8426 = vperm.xlu0 %8425, %v7354
    %v8427 = vpop.permute.xlu0 %8426
    %8430 = vset.pattern.permute.xlu0 0
    %8431 = vperm.xlu0 %8430, %v7355
    %v8432 = vpop.permute.xlu0 %8431
    %8435 = vset.pattern.permute.xlu0 0
    %8436 = vperm.xlu0 %8435, %v7356
    %v8437 = vpop.permute.xlu0 %8436
    %8440 = vset.pattern.permute.xlu0 0
    %8441 = vperm.xlu0 %8440, %v7357
    %v8442 = vpop.permute.xlu0 %8441
    %8445 = vset.pattern.permute.xlu0 0
    %8446 = vperm.xlu0 %8445, %v7358
    %v8447 = vpop.permute.xlu0 %8446
    %8450 = vset.pattern.permute.xlu0 0
    %8451 = vperm.xlu0 %8450, %v7359
    %v8452 = vpop.permute.xlu0 %8451
    %8455 = vset.pattern.permute.xlu0 0
    %8456 = vperm.xlu0 %8455, %v7360
    %v8457 = vpop.permute.xlu0 %8456
    %8460 = vset.pattern.permute.xlu0 0
    %8461 = vperm.xlu0 %8460, %v7361
    %v8462 = vpop.permute.xlu0 %8461
    %8465 = vset.pattern.permute.xlu0 0
    %8466 = vperm.xlu0 %8465, %v7362
    %v8467 = vpop.permute.xlu0 %8466
    %8470 = vset.pattern.permute.xlu0 0
    %8471 = vperm.xlu0 %8470, %v7363
    %v8472 = vpop.permute.xlu0 %8471
    %8475 = vset.pattern.permute.xlu0 0
    %8476 = vperm.xlu0 %8475, %v7364
    %v8477 = vpop.permute.xlu0 %8476
    %8480 = vset.pattern.permute.xlu0 0
    %8481 = vperm.xlu0 %8480, %v7365
    %v8482 = vpop.permute.xlu0 %8481
    %8485 = vset.pattern.permute.xlu0 0
    %8486 = vperm.xlu0 %8485, %v7366
    %v8487 = vpop.permute.xlu0 %8486
    %8490 = vset.pattern.permute.xlu0 0
    %8491 = vperm.xlu0 %8490, %v7367
    %v8492 = vpop.permute.xlu0 %8491
    %8495 = vset.pattern.permute.xlu0 0
    %8496 = vperm.xlu0 %8495, %v7368
    %v8497 = vpop.permute.xlu0 %8496
    %8500 = vset.pattern.permute.xlu0 0
    %8501 = vperm.xlu0 %8500, %v7369
    %v8502 = vpop.permute.xlu0 %8501
    %8505 = vset.pattern.permute.xlu0 0
    %8506 = vperm.xlu0 %8505, %v7370
    %v8507 = vpop.permute.xlu0 %8506
    %8510 = vset.pattern.permute.xlu0 0
    %8511 = vperm.xlu0 %8510, %v7371
    %v8512 = vpop.permute.xlu0 %8511
    %8515 = vset.pattern.permute.xlu0 0
    %8516 = vperm.xlu0 %8515, %v7372
    %v8517 = vpop.permute.xlu0 %8516
    %8520 = vset.pattern.permute.xlu0 0
    %8521 = vperm.xlu0 %8520, %v7373
    %v8522 = vpop.permute.xlu0 %8521
    %8525 = vset.pattern.permute.xlu0 0
    %8526 = vperm.xlu0 %8525, %v7374
    %v8527 = vpop.permute.xlu0 %8526
    %8530 = vset.pattern.permute.xlu0 0
    %8531 = vperm.xlu0 %8530, %v7375
    %v8532 = vpop.permute.xlu0 %8531
    %8535 = vset.pattern.permute.xlu0 0
    %8536 = vperm.xlu0 %8535, %v7376
    %v8537 = vpop.permute.xlu0 %8536
    %8540 = vset.pattern.permute.xlu0 0
    %8541 = vperm.xlu0 %8540, %v7377
    %v8542 = vpop.permute.xlu0 %8541
    %8545 = vset.pattern.permute.xlu0 0
    %8546 = vperm.xlu0 %8545, %v7378
    %v8547 = vpop.permute.xlu0 %8546
    %8550 = vset.pattern.permute.xlu0 0
    %8551 = vperm.xlu0 %8550, %v7379
    %v8552 = vpop.permute.xlu0 %8551
    %8555 = vset.pattern.permute.xlu0 0
    %8556 = vperm.xlu0 %8555, %v7380
    %v8557 = vpop.permute.xlu0 %8556
    %8560 = vset.pattern.permute.xlu0 0
    %8561 = vperm.xlu0 %8560, %v7381
    %v8562 = vpop.permute.xlu0 %8561
    %8565 = vset.pattern.permute.xlu0 0
    %8566 = vperm.xlu0 %8565, %v7382
    %v8567 = vpop.permute.xlu0 %8566
    %8570 = vset.pattern.permute.xlu0 0
    %8571 = vperm.xlu0 %8570, %v7383
    %v8572 = vpop.permute.xlu0 %8571
    %8575 = vset.pattern.permute.xlu0 0
    %8576 = vperm.xlu0 %8575, %v7384
    %v8577 = vpop.permute.xlu0 %8576
    %8580 = vset.pattern.permute.xlu0 0
    %8581 = vperm.xlu0 %8580, %v7385
    %v8582 = vpop.permute.xlu0 %8581
    %8585 = vset.pattern.permute.xlu0 0
    %8586 = vperm.xlu0 %8585, %v7386
    %v8587 = vpop.permute.xlu0 %8586
    %8590 = vset.pattern.permute.xlu0 0
    %8591 = vperm.xlu0 %8590, %v7387
    %v8592 = vpop.permute.xlu0 %8591
    %8595 = vset.pattern.permute.xlu0 0
    %8596 = vperm.xlu0 %8595, %v7388
    %v8597 = vpop.permute.xlu0 %8596
    %8600 = vset.pattern.permute.xlu0 0
    %8601 = vperm.xlu0 %8600, %v7389
    %v8602 = vpop.permute.xlu0 %8601
    %8605 = vset.pattern.permute.xlu0 0
    %8606 = vperm.xlu0 %8605, %v7390
    %v8607 = vpop.permute.xlu0 %8606
    %8610 = vset.pattern.permute.xlu0 0
    %8611 = vperm.xlu0 %8610, %v7391
    %v8612 = vpop.permute.xlu0 %8611
    %8615 = vset.pattern.permute.xlu0 0
    %8616 = vperm.xlu0 %8615, %v7392
    %v8617 = vpop.permute.xlu0 %8616
    %8620 = vset.pattern.permute.xlu0 0
    %8621 = vperm.xlu0 %8620, %v7393
    %v8622 = vpop.permute.xlu0 %8621
    %8625 = vset.pattern.permute.xlu0 0
    %8626 = vperm.xlu0 %8625, %v7394
    %v8627 = vpop.permute.xlu0 %8626
    %8630 = vset.pattern.permute.xlu0 0
    %8631 = vperm.xlu0 %8630, %v7395
    %v8632 = vpop.permute.xlu0 %8631
    %8635 = vset.pattern.permute.xlu0 0
    %8636 = vperm.xlu0 %8635, %v7396
    %v8637 = vpop.permute.xlu0 %8636
    %8640 = vset.pattern.permute.xlu0 0
    %8641 = vperm.xlu0 %8640, %v7397
    %v8642 = vpop.permute.xlu0 %8641
    %8645 = vset.pattern.permute.xlu0 0
    %8646 = vperm.xlu0 %8645, %v7398
    %v8647 = vpop.permute.xlu0 %8646
    %8650 = vset.pattern.permute.xlu0 0
    %8651 = vperm.xlu0 %8650, %v7399
    %v8652 = vpop.permute.xlu0 %8651
    %8655 = vset.pattern.permute.xlu0 0
    %8656 = vperm.xlu0 %8655, %v7400
    %v8657 = vpop.permute.xlu0 %8656
    %8660 = vset.pattern.permute.xlu0 0
    %8661 = vperm.xlu0 %8660, %v7401
    %v8662 = vpop.permute.xlu0 %8661
    %8665 = vset.pattern.permute.xlu0 0
    %8666 = vperm.xlu0 %8665, %v7402
    %v8667 = vpop.permute.xlu0 %8666
    %8670 = vset.pattern.permute.xlu0 0
    %8671 = vperm.xlu0 %8670, %v7403
    %v8672 = vpop.permute.xlu0 %8671
    %8675 = vset.pattern.permute.xlu0 0
    %8676 = vperm.xlu0 %8675, %v7404
    %v8677 = vpop.permute.xlu0 %8676
    %8680 = vset.pattern.permute.xlu0 0
    %8681 = vperm.xlu0 %8680, %v7405
    %v8682 = vpop.permute.xlu0 %8681
    %8685 = vset.pattern.permute.xlu0 0
    %8686 = vperm.xlu0 %8685, %v7406
    %v8687 = vpop.permute.xlu0 %8686
    %8690 = vset.pattern.permute.xlu0 0
    %8691 = vperm.xlu0 %8690, %v7407
    %v8692 = vpop.permute.xlu0 %8691
    %8695 = vset.pattern.permute.xlu0 0
    %8696 = vperm.xlu0 %8695, %v7408
    %v8697 = vpop.permute.xlu0 %8696
    %8700 = vset.pattern.permute.xlu0 0
    %8701 = vperm.xlu0 %8700, %v7409
    %v8702 = vpop.permute.xlu0 %8701
    %8705 = vset.pattern.permute.xlu0 0
    %8706 = vperm.xlu0 %8705, %v7410
    %v8707 = vpop.permute.xlu0 %8706
    %8710 = vset.pattern.permute.xlu0 0
    %8711 = vperm.xlu0 %8710, %v7411
    %v8712 = vpop.permute.xlu0 %8711
    %8715 = vset.pattern.permute.xlu0 0
    %8716 = vperm.xlu0 %8715, %v7412
    %v8717 = vpop.permute.xlu0 %8716
    %8720 = vset.pattern.permute.xlu0 0
    %8721 = vperm.xlu0 %8720, %v7413
    %v8722 = vpop.permute.xlu0 %8721
    %8725 = vset.pattern.permute.xlu0 0
    %8726 = vperm.xlu0 %8725, %v7414
    %v8727 = vpop.permute.xlu0 %8726
    %8730 = vset.pattern.permute.xlu0 0
    %8731 = vperm.xlu0 %8730, %v7415
    %v8732 = vpop.permute.xlu0 %8731
    %8735 = vset.pattern.permute.xlu0 0
    %8736 = vperm.xlu0 %8735, %v7416
    %v8737 = vpop.permute.xlu0 %8736
    %8740 = vset.pattern.permute.xlu0 0
    %8741 = vperm.xlu0 %8740, %v7417
    %v8742 = vpop.permute.xlu0 %8741
    %8745 = vset.pattern.permute.xlu0 0
    %8746 = vperm.xlu0 %8745, %v7418
    %v8747 = vpop.permute.xlu0 %8746
    %8750 = vset.pattern.permute.xlu0 0
    %8751 = vperm.xlu0 %8750, %v7419
    %v8752 = vpop.permute.xlu0 %8751
    %8755 = vset.pattern.permute.xlu0 0
    %8756 = vperm.xlu0 %8755, %v7420
    %v8757 = vpop.permute.xlu0 %8756
    %8760 = vset.pattern.permute.xlu0 0
    %8761 = vperm.xlu0 %8760, %v7421
    %v8762 = vpop.permute.xlu0 %8761
    %8765 = vset.pattern.permute.xlu0 0
    %8766 = vperm.xlu0 %8765, %v7422
    %v8767 = vpop.permute.xlu0 %8766
    %8770 = vset.pattern.permute.xlu0 0
    %8771 = vperm.xlu0 %8770, %v7423
    %v8772 = vpop.permute.xlu0 %8771
    %8775 = vset.pattern.permute.xlu0 0
    %8776 = vperm.xlu0 %8775, %v7424
    %v8777 = vpop.permute.xlu0 %8776
    %8780 = vset.pattern.permute.xlu0 0
    %8781 = vperm.xlu0 %8780, %v7425
    %v8782 = vpop.permute.xlu0 %8781
    %8785 = vset.pattern.permute.xlu0 0
    %8786 = vperm.xlu0 %8785, %v7426
    %v8787 = vpop.permute.xlu0 %8786
    %8790 = vset.pattern.permute.xlu0 0
    %8791 = vperm.xlu0 %8790, %v7427
    %v8792 = vpop.permute.xlu0 %8791
    %8795 = vset.pattern.permute.xlu0 0
    %8796 = vperm.xlu0 %8795, %v7428
    %v8797 = vpop.permute.xlu0 %8796
    %8800 = vset.pattern.permute.xlu0 0
    %8801 = vperm.xlu0 %8800, %v7429
    %v8802 = vpop.permute.xlu0 %8801
    %8805 = vset.pattern.permute.xlu0 0
    %8806 = vperm.xlu0 %8805, %v7430
    %v8807 = vpop.permute.xlu0 %8806
    %8810 = vset.pattern.permute.xlu0 0
    %8811 = vperm.xlu0 %8810, %v7431
    %v8812 = vpop.permute.xlu0 %8811
    %8815 = vset.pattern.permute.xlu0 0
    %8816 = vperm.xlu0 %8815, %v7432
    %v8817 = vpop.permute.xlu0 %8816
    %8820 = vset.pattern.permute.xlu0 0
    %8821 = vperm.xlu0 %8820, %v7433
    %v8822 = vpop.permute.xlu0 %8821
    %8825 = vset.pattern.permute.xlu0 0
    %8826 = vperm.xlu0 %8825, %v7434
    %v8827 = vpop.permute.xlu0 %8826
    %8830 = vset.pattern.permute.xlu0 0
    %8831 = vperm.xlu0 %8830, %v7435
    %v8832 = vpop.permute.xlu0 %8831
    %8835 = vset.pattern.permute.xlu0 0
    %8836 = vperm.xlu0 %8835, %v7436
    %v8837 = vpop.permute.xlu0 %8836
    %8840 = vset.pattern.permute.xlu0 0
    %8841 = vperm.xlu0 %8840, %v7437
    %v8842 = vpop.permute.xlu0 %8841
    %8845 = vset.pattern.permute.xlu0 0
    %8846 = vperm.xlu0 %8845, %v7438
    %v8847 = vpop.permute.xlu0 %8846
    %8850 = vset.pattern.permute.xlu0 0
    %8851 = vperm.xlu0 %8850, %v7439
    %v8852 = vpop.permute.xlu0 %8851
    %8855 = vset.pattern.permute.xlu0 0
    %8856 = vperm.xlu0 %8855, %v7440
    %v8857 = vpop.permute.xlu0 %8856
    %8860 = vset.pattern.permute.xlu0 0
    %8861 = vperm.xlu0 %8860, %v7441
    %v8862 = vpop.permute.xlu0 %8861
    %8865 = vset.pattern.permute.xlu0 0
    %8866 = vperm.xlu0 %8865, %v7442
    %v8867 = vpop.permute.xlu0 %8866
    %8870 = vset.pattern.permute.xlu0 0
    %8871 = vperm.xlu0 %8870, %v7443
    %v8872 = vpop.permute.xlu0 %8871
    %8875 = vset.pattern.permute.xlu0 0
    %8876 = vperm.xlu0 %8875, %v7444
    %v8877 = vpop.permute.xlu0 %8876
    %8880 = vset.pattern.permute.xlu0 0
    %8881 = vperm.xlu0 %8880, %v7445
    %v8882 = vpop.permute.xlu0 %8881
    %8885 = vset.pattern.permute.xlu0 0
    %8886 = vperm.xlu0 %8885, %v7446
    %v8887 = vpop.permute.xlu0 %8886
    %8890 = vset.pattern.permute.xlu0 0
    %8891 = vperm.xlu0 %8890, %v7447
    %v8892 = vpop.permute.xlu0 %8891
    %8895 = vset.pattern.permute.xlu0 0
    %8896 = vperm.xlu0 %8895, %v7448
    %v8897 = vpop.permute.xlu0 %8896
    %8900 = vset.pattern.permute.xlu0 0
    %8901 = vperm.xlu0 %8900, %v7449
    %v8902 = vpop.permute.xlu0 %8901
    %8905 = vset.pattern.permute.xlu0 0
    %8906 = vperm.xlu0 %8905, %v7450
    %v8907 = vpop.permute.xlu0 %8906
    %8910 = vset.pattern.permute.xlu0 0
    %8911 = vperm.xlu0 %8910, %v7451
    %v8912 = vpop.permute.xlu0 %8911
    %8915 = vset.pattern.permute.xlu0 0
    %8916 = vperm.xlu0 %8915, %v7452
    %v8917 = vpop.permute.xlu0 %8916
    %8920 = vset.pattern.permute.xlu0 0
    %8921 = vperm.xlu0 %8920, %v7453
    %v8922 = vpop.permute.xlu0 %8921
    %8925 = vset.pattern.permute.xlu0 0
    %8926 = vperm.xlu0 %8925, %v7454
    %v8927 = vpop.permute.xlu0 %8926
    %8930 = vset.pattern.permute.xlu0 0
    %8931 = vperm.xlu0 %8930, %v7455
    %v8932 = vpop.permute.xlu0 %8931
    %8935 = vset.pattern.permute.xlu0 0
    %8936 = vperm.xlu0 %8935, %v7456
    %v8937 = vpop.permute.xlu0 %8936
    %8940 = vset.pattern.permute.xlu0 0
    %8941 = vperm.xlu0 %8940, %v7457
    %v8942 = vpop.permute.xlu0 %8941
    %8945 = vset.pattern.permute.xlu0 0
    %8946 = vperm.xlu0 %8945, %v7458
    %v8947 = vpop.permute.xlu0 %8946
    %8950 = vset.pattern.permute.xlu0 0
    %8951 = vperm.xlu0 %8950, %v7459
    %v8952 = vpop.permute.xlu0 %8951
    %8955 = vset.pattern.permute.xlu0 0
    %8956 = vperm.xlu0 %8955, %v7460
    %v8957 = vpop.permute.xlu0 %8956
    %8960 = vset.pattern.permute.xlu0 0
    %8961 = vperm.xlu0 %8960, %v7461
    %v8962 = vpop.permute.xlu0 %8961
    %8965 = vset.pattern.permute.xlu0 0
    %8966 = vperm.xlu0 %8965, %v7462
    %v8967 = vpop.permute.xlu0 %8966
    %8970 = vset.pattern.permute.xlu0 0
    %8971 = vperm.xlu0 %8970, %v7463
    %v8972 = vpop.permute.xlu0 %8971
    %8975 = vset.pattern.permute.xlu0 0
    %8976 = vperm.xlu0 %8975, %v7464
    %v8977 = vpop.permute.xlu0 %8976
    %8980 = vset.pattern.permute.xlu0 0
    %8981 = vperm.xlu0 %8980, %v7465
    %v8982 = vpop.permute.xlu0 %8981
    %8985 = vset.pattern.permute.xlu0 0
    %8986 = vperm.xlu0 %8985, %v7466
    %v8987 = vpop.permute.xlu0 %8986
    %8990 = vset.pattern.permute.xlu0 0
    %8991 = vperm.xlu0 %8990, %v7467
    %v8992 = vpop.permute.xlu0 %8991
    %8995 = vset.pattern.permute.xlu0 0
    %8996 = vperm.xlu0 %8995, %v7468
    %v8997 = vpop.permute.xlu0 %8996
    %9000 = vset.pattern.permute.xlu0 0
    %9001 = vperm.xlu0 %9000, %v7469
    %v9002 = vpop.permute.xlu0 %9001
    %9005 = vset.pattern.permute.xlu0 0
    %9006 = vperm.xlu0 %9005, %v7470
    %v9007 = vpop.permute.xlu0 %9006
    %9010 = vset.pattern.permute.xlu0 0
    %9011 = vperm.xlu0 %9010, %v7471
    %v9012 = vpop.permute.xlu0 %9011
    %v9014 = vmul.f32 %v7472, %v7732
    %v9015 = vmul.f32 %v7473, %v7737
    %v9016 = vmul.f32 %v7474, %v7742
    %v9017 = vmul.f32 %v7475, %v7747
    %v9018 = vmul.f32 %v7476, %v7752
    %v9019 = vmul.f32 %v7477, %v7757
    %v9020 = vmul.f32 %v7478, %v7762
    %v9021 = vmul.f32 %v7479, %v7767
    %v9022 = vmul.f32 %v7480, %v7772
    %v9023 = vmul.f32 %v7481, %v7777
    %v9024 = vmul.f32 %v7482, %v7782
    %v9025 = vmul.f32 %v7483, %v7787
    %v9026 = vmul.f32 %v7484, %v7792
    %v9027 = vmul.f32 %v7485, %v7797
    %v9028 = vmul.f32 %v7486, %v7802
    %v9029 = vmul.f32 %v7487, %v7807
    %v9030 = vmul.f32 %v7488, %v7812
    %v9031 = vmul.f32 %v7489, %v7817
    %v9032 = vmul.f32 %v7490, %v7822
    %v9033 = vmul.f32 %v7491, %v7827
    %v9034 = vmul.f32 %v7492, %v7832
    %v9035 = vmul.f32 %v7493, %v7837
    %v9036 = vmul.f32 %v7494, %v7842
    %v9037 = vmul.f32 %v7495, %v7847
    %v9038 = vmul.f32 %v7496, %v7852
    %v9039 = vmul.f32 %v7497, %v7857
    %v9040 = vmul.f32 %v7498, %v7862
    %v9041 = vmul.f32 %v7499, %v7867
    %v9042 = vmul.f32 %v7500, %v7872
    %v9043 = vmul.f32 %v7501, %v7877
    %v9044 = vmul.f32 %v7502, %v7882
    %v9045 = vmul.f32 %v7503, %v7887
    %v9046 = vmul.f32 %v7504, %v7892
    %v9047 = vmul.f32 %v7505, %v7897
    %v9048 = vmul.f32 %v7506, %v7902
    %v9049 = vmul.f32 %v7507, %v7907
    %v9050 = vmul.f32 %v7508, %v7912
    %v9051 = vmul.f32 %v7509, %v7917
    %v9052 = vmul.f32 %v7510, %v7922
    %v9053 = vmul.f32 %v7511, %v7927
    %v9054 = vmul.f32 %v7512, %v7932
    %v9055 = vmul.f32 %v7513, %v7937
    %v9056 = vmul.f32 %v7514, %v7942
    %v9057 = vmul.f32 %v7515, %v7947
    %v9058 = vmul.f32 %v7516, %v7952
    %v9059 = vmul.f32 %v7517, %v7957
    %v9060 = vmul.f32 %v7518, %v7962
    %v9061 = vmul.f32 %v7519, %v7967
    %v9062 = vmul.f32 %v7520, %v7972
    %v9063 = vmul.f32 %v7521, %v7977
    %v9064 = vmul.f32 %v7522, %v7982
    %v9065 = vmul.f32 %v7523, %v7987
    %v9066 = vmul.f32 %v7524, %v7992
    %v9067 = vmul.f32 %v7525, %v7997
    %v9068 = vmul.f32 %v7526, %v8002
    %v9069 = vmul.f32 %v7527, %v8007
    %v9070 = vmul.f32 %v7528, %v8012
    %v9071 = vmul.f32 %v7529, %v8017
    %v9072 = vmul.f32 %v7530, %v8022
    %v9073 = vmul.f32 %v7531, %v8027
    %v9074 = vmul.f32 %v7532, %v8032
    %v9075 = vmul.f32 %v7533, %v8037
    %v9076 = vmul.f32 %v7534, %v8042
    %v9077 = vmul.f32 %v7535, %v8047
    %v9078 = vmul.f32 %v7536, %v8052
    %v9079 = vmul.f32 %v7537, %v8057
    %v9080 = vmul.f32 %v7538, %v8062
    %v9081 = vmul.f32 %v7539, %v8067
    %v9082 = vmul.f32 %v7540, %v8072
    %v9083 = vmul.f32 %v7541, %v8077
    %v9084 = vmul.f32 %v7542, %v8082
    %v9085 = vmul.f32 %v7543, %v8087
    %v9086 = vmul.f32 %v7544, %v8092
    %v9087 = vmul.f32 %v7545, %v8097
    %v9088 = vmul.f32 %v7546, %v8102
    %v9089 = vmul.f32 %v7547, %v8107
    %v9090 = vmul.f32 %v7548, %v8112
    %v9091 = vmul.f32 %v7549, %v8117
    %v9092 = vmul.f32 %v7550, %v8122
    %v9093 = vmul.f32 %v7551, %v8127
    %v9094 = vmul.f32 %v7552, %v8132
    %v9095 = vmul.f32 %v7553, %v8137
    %v9096 = vmul.f32 %v7554, %v8142
    %v9097 = vmul.f32 %v7555, %v8147
    %v9098 = vmul.f32 %v7556, %v8152
    %v9099 = vmul.f32 %v7557, %v8157
    %v9100 = vmul.f32 %v7558, %v8162
    %v9101 = vmul.f32 %v7559, %v8167
    %v9102 = vmul.f32 %v7560, %v8172
    %v9103 = vmul.f32 %v7561, %v8177
    %v9104 = vmul.f32 %v7562, %v8182
    %v9105 = vmul.f32 %v7563, %v8187
    %v9106 = vmul.f32 %v7564, %v8192
    %v9107 = vmul.f32 %v7565, %v8197
    %v9108 = vmul.f32 %v7566, %v8202
    %v9109 = vmul.f32 %v7567, %v8207
    %v9110 = vmul.f32 %v7568, %v8212
    %v9111 = vmul.f32 %v7569, %v8217
    %v9112 = vmul.f32 %v7570, %v8222
    %v9113 = vmul.f32 %v7571, %v8227
    %v9114 = vmul.f32 %v7572, %v8232
    %v9115 = vmul.f32 %v7573, %v8237
    %v9116 = vmul.f32 %v7574, %v8242
    %v9117 = vmul.f32 %v7575, %v8247
    %v9118 = vmul.f32 %v7576, %v8252
    %v9119 = vmul.f32 %v7577, %v8257
    %v9120 = vmul.f32 %v7578, %v8262
    %v9121 = vmul.f32 %v7579, %v8267
    %v9122 = vmul.f32 %v7580, %v8272
    %v9123 = vmul.f32 %v7581, %v8277
    %v9124 = vmul.f32 %v7582, %v8282
    %v9125 = vmul.f32 %v7583, %v8287
    %v9126 = vmul.f32 %v7584, %v8292
    %v9127 = vmul.f32 %v7585, %v8297
    %v9128 = vmul.f32 %v7586, %v8302
    %v9129 = vmul.f32 %v7587, %v8307
    %v9130 = vmul.f32 %v7588, %v8312
    %v9131 = vmul.f32 %v7589, %v8317
    %v9132 = vmul.f32 %v7590, %v8322
    %v9133 = vmul.f32 %v7591, %v8327
    %v9134 = vmul.f32 %v7592, %v8332
    %v9135 = vmul.f32 %v7593, %v8337
    %v9136 = vmul.f32 %v7594, %v8342
    %v9137 = vmul.f32 %v7595, %v8347
    %v9138 = vmul.f32 %v7596, %v8352
    %v9139 = vmul.f32 %v7597, %v8357
    %v9140 = vmul.f32 %v7598, %v8362
    %v9141 = vmul.f32 %v7599, %v8367
    %v9142 = vmul.f32 %v7600, %v8372
    %v9143 = vmul.f32 %v7601, %v8377
    %v9144 = vmul.f32 %v7602, %v8382
    %v9145 = vmul.f32 %v7603, %v8387
    %v9146 = vmul.f32 %v7604, %v8392
    %v9147 = vmul.f32 %v7605, %v8397
    %v9148 = vmul.f32 %v7606, %v8402
    %v9149 = vmul.f32 %v7607, %v8407
    %v9150 = vmul.f32 %v7608, %v8412
    %v9151 = vmul.f32 %v7609, %v8417
    %v9152 = vmul.f32 %v7610, %v8422
    %v9153 = vmul.f32 %v7611, %v8427
    %v9154 = vmul.f32 %v7612, %v8432
    %v9155 = vmul.f32 %v7613, %v8437
    %v9156 = vmul.f32 %v7614, %v8442
    %v9157 = vmul.f32 %v7615, %v8447
    %v9158 = vmul.f32 %v7616, %v8452
    %v9159 = vmul.f32 %v7617, %v8457
    %v9160 = vmul.f32 %v7618, %v8462
    %v9161 = vmul.f32 %v7619, %v8467
    %v9162 = vmul.f32 %v7620, %v8472
    %v9163 = vmul.f32 %v7621, %v8477
    %v9164 = vmul.f32 %v7622, %v8482
    %v9165 = vmul.f32 %v7623, %v8487
    %v9166 = vmul.f32 %v7624, %v8492
    %v9167 = vmul.f32 %v7625, %v8497
    %v9168 = vmul.f32 %v7626, %v8502
    %v9169 = vmul.f32 %v7627, %v8507
    %v9170 = vmul.f32 %v7628, %v8512
    %v9171 = vmul.f32 %v7629, %v8517
    %v9172 = vmul.f32 %v7630, %v8522
    %v9173 = vmul.f32 %v7631, %v8527
    %v9174 = vmul.f32 %v7632, %v8532
    %v9175 = vmul.f32 %v7633, %v8537
    %v9176 = vmul.f32 %v7634, %v8542
    %v9177 = vmul.f32 %v7635, %v8547
    %v9178 = vmul.f32 %v7636, %v8552
    %v9179 = vmul.f32 %v7637, %v8557
    %v9180 = vmul.f32 %v7638, %v8562
    %v9181 = vmul.f32 %v7639, %v8567
    %v9182 = vmul.f32 %v7640, %v8572
    %v9183 = vmul.f32 %v7641, %v8577
    %v9184 = vmul.f32 %v7642, %v8582
    %v9185 = vmul.f32 %v7643, %v8587
    %v9186 = vmul.f32 %v7644, %v8592
    %v9187 = vmul.f32 %v7645, %v8597
    %v9188 = vmul.f32 %v7646, %v8602
    %v9189 = vmul.f32 %v7647, %v8607
    %v9190 = vmul.f32 %v7648, %v8612
    %v9191 = vmul.f32 %v7649, %v8617
    %v9192 = vmul.f32 %v7650, %v8622
    %v9193 = vmul.f32 %v7651, %v8627
    %v9194 = vmul.f32 %v7652, %v8632
    %v9195 = vmul.f32 %v7653, %v8637
    %v9196 = vmul.f32 %v7654, %v8642
    %v9197 = vmul.f32 %v7655, %v8647
    %v9198 = vmul.f32 %v7656, %v8652
    %v9199 = vmul.f32 %v7657, %v8657
    %v9200 = vmul.f32 %v7658, %v8662
    %v9201 = vmul.f32 %v7659, %v8667
    %v9202 = vmul.f32 %v7660, %v8672
    %v9203 = vmul.f32 %v7661, %v8677
    %v9204 = vmul.f32 %v7662, %v8682
    %v9205 = vmul.f32 %v7663, %v8687
    %v9206 = vmul.f32 %v7664, %v8692
    %v9207 = vmul.f32 %v7665, %v8697
    %v9208 = vmul.f32 %v7666, %v8702
    %v9209 = vmul.f32 %v7667, %v8707
    %v9210 = vmul.f32 %v7668, %v8712
    %v9211 = vmul.f32 %v7669, %v8717
    %v9212 = vmul.f32 %v7670, %v8722
    %v9213 = vmul.f32 %v7671, %v8727
    %v9214 = vmul.f32 %v7672, %v8732
    %v9215 = vmul.f32 %v7673, %v8737
    %v9216 = vmul.f32 %v7674, %v8742
    %v9217 = vmul.f32 %v7675, %v8747
    %v9218 = vmul.f32 %v7676, %v8752
    %v9219 = vmul.f32 %v7677, %v8757
    %v9220 = vmul.f32 %v7678, %v8762
    %v9221 = vmul.f32 %v7679, %v8767
    %v9222 = vmul.f32 %v7680, %v8772
    %v9223 = vmul.f32 %v7681, %v8777
    %v9224 = vmul.f32 %v7682, %v8782
    %v9225 = vmul.f32 %v7683, %v8787
    %v9226 = vmul.f32 %v7684, %v8792
    %v9227 = vmul.f32 %v7685, %v8797
    %v9228 = vmul.f32 %v7686, %v8802
    %v9229 = vmul.f32 %v7687, %v8807
    %v9230 = vmul.f32 %v7688, %v8812
    %v9231 = vmul.f32 %v7689, %v8817
    %v9232 = vmul.f32 %v7690, %v8822
    %v9233 = vmul.f32 %v7691, %v8827
    %v9234 = vmul.f32 %v7692, %v8832
    %v9235 = vmul.f32 %v7693, %v8837
    %v9236 = vmul.f32 %v7694, %v8842
    %v9237 = vmul.f32 %v7695, %v8847
    %v9238 = vmul.f32 %v7696, %v8852
    %v9239 = vmul.f32 %v7697, %v8857
    %v9240 = vmul.f32 %v7698, %v8862
    %v9241 = vmul.f32 %v7699, %v8867
    %v9242 = vmul.f32 %v7700, %v8872
    %v9243 = vmul.f32 %v7701, %v8877
    %v9244 = vmul.f32 %v7702, %v8882
    %v9245 = vmul.f32 %v7703, %v8887
    %v9246 = vmul.f32 %v7704, %v8892
    %v9247 = vmul.f32 %v7705, %v8897
    %v9248 = vmul.f32 %v7706, %v8902
    %v9249 = vmul.f32 %v7707, %v8907
    %v9250 = vmul.f32 %v7708, %v8912
    %v9251 = vmul.f32 %v7709, %v8917
    %v9252 = vmul.f32 %v7710, %v8922
    %v9253 = vmul.f32 %v7711, %v8927
    %v9254 = vmul.f32 %v7712, %v8932
    %v9255 = vmul.f32 %v7713, %v8937
    %v9256 = vmul.f32 %v7714, %v8942
    %v9257 = vmul.f32 %v7715, %v8947
    %v9258 = vmul.f32 %v7716, %v8952
    %v9259 = vmul.f32 %v7717, %v8957
    %v9260 = vmul.f32 %v7718, %v8962
    %v9261 = vmul.f32 %v7719, %v8967
    %v9262 = vmul.f32 %v7720, %v8972
    %v9263 = vmul.f32 %v7721, %v8977
    %v9264 = vmul.f32 %v7722, %v8982
    %v9265 = vmul.f32 %v7723, %v8987
    %v9266 = vmul.f32 %v7724, %v8992
    %v9267 = vmul.f32 %v7725, %v8997
    %v9268 = vmul.f32 %v7726, %v9002
    %v9269 = vmul.f32 %v7727, %v9007
    %v9270 = vmul.f32 %v7728, %v9012
    %v9271 = vsel %vm275, %v9014, 0.0
    %v9272 = vsel %vm275, %v9015, 0.0
    %v9273 = vadd.f32 %v9271, %v9272
    %v9274 = vsel %vm275, %v9016, 0.0
    %v9275 = vadd.f32 %v9273, %v9274
    %v9276 = vsel %vm275, %v9017, 0.0
    %v9277 = vadd.f32 %v9275, %v9276
    %v9278 = vsel %vm275, %v9018, 0.0
    %v9279 = vadd.f32 %v9277, %v9278
    %v9280 = vsel %vm275, %v9019, 0.0
    %v9281 = vadd.f32 %v9279, %v9280
    %v9282 = vsel %vm275, %v9020, 0.0
    %v9283 = vadd.f32 %v9281, %v9282
    %v9284 = vsel %vm275, %v9021, 0.0
    %v9285 = vadd.f32 %v9283, %v9284
    %v9286 = vsel %vm275, %v9022, 0.0
    %v9287 = vadd.f32 %v9285, %v9286
    %v9288 = vsel %vm275, %v9023, 0.0
    %v9289 = vadd.f32 %v9287, %v9288
    %v9290 = vsel %vm275, %v9024, 0.0
    %v9291 = vadd.f32 %v9289, %v9290
    %v9292 = vsel %vm275, %v9025, 0.0
    %v9293 = vadd.f32 %v9291, %v9292
    %v9294 = vsel %vm275, %v9026, 0.0
    %v9295 = vadd.f32 %v9293, %v9294
    %v9296 = vsel %vm275, %v9027, 0.0
    %v9297 = vadd.f32 %v9295, %v9296
    %v9298 = vsel %vm275, %v9028, 0.0
    %v9299 = vadd.f32 %v9297, %v9298
    %v9300 = vsel %vm275, %v9029, 0.0
    %v9301 = vadd.f32 %v9299, %v9300
    %v9302 = vsel %vm275, %v9030, 0.0
    %v9303 = vadd.f32 %v9301, %v9302
    %v9304 = vsel %vm275, %v9031, 0.0
    %v9305 = vadd.f32 %v9303, %v9304
    %v9306 = vsel %vm275, %v9032, 0.0
    %v9307 = vadd.f32 %v9305, %v9306
    %v9308 = vsel %vm275, %v9033, 0.0
    %v9309 = vadd.f32 %v9307, %v9308
    %v9310 = vsel %vm275, %v9034, 0.0
    %v9311 = vadd.f32 %v9309, %v9310
    %v9312 = vsel %vm275, %v9035, 0.0
    %v9313 = vadd.f32 %v9311, %v9312
    %v9314 = vsel %vm275, %v9036, 0.0
    %v9315 = vadd.f32 %v9313, %v9314
    %v9316 = vsel %vm275, %v9037, 0.0
    %v9317 = vadd.f32 %v9315, %v9316
    %v9318 = vsel %vm275, %v9038, 0.0
    %v9319 = vadd.f32 %v9317, %v9318
    %v9320 = vsel %vm275, %v9039, 0.0
    %v9321 = vadd.f32 %v9319, %v9320
    %v9322 = vsel %vm275, %v9040, 0.0
    %v9323 = vadd.f32 %v9321, %v9322
    %v9324 = vsel %vm275, %v9041, 0.0
    %v9325 = vadd.f32 %v9323, %v9324
    %v9326 = vsel %vm275, %v9042, 0.0
    %v9327 = vadd.f32 %v9325, %v9326
    %v9328 = vsel %vm275, %v9043, 0.0
    %v9329 = vadd.f32 %v9327, %v9328
    %v9330 = vsel %vm275, %v9044, 0.0
    %v9331 = vadd.f32 %v9329, %v9330
    %v9332 = vsel %vm275, %v9045, 0.0
    %v9333 = vadd.f32 %v9331, %v9332
    %v9334 = vsel %vm275, %v9046, 0.0
    %v9335 = vadd.f32 %v9333, %v9334
    %v9336 = vsel %vm275, %v9047, 0.0
    %v9337 = vadd.f32 %v9335, %v9336
    %v9338 = vsel %vm275, %v9048, 0.0
    %v9339 = vadd.f32 %v9337, %v9338
    %v9340 = vsel %vm275, %v9049, 0.0
    %v9341 = vadd.f32 %v9339, %v9340
    %v9342 = vsel %vm275, %v9050, 0.0
    %v9343 = vadd.f32 %v9341, %v9342
    %v9344 = vsel %vm275, %v9051, 0.0
    %v9345 = vadd.f32 %v9343, %v9344
    %v9346 = vsel %vm275, %v9052, 0.0
    %v9347 = vadd.f32 %v9345, %v9346
    %v9348 = vsel %vm275, %v9053, 0.0
    %v9349 = vadd.f32 %v9347, %v9348
    %v9350 = vsel %vm275, %v9054, 0.0
    %v9351 = vadd.f32 %v9349, %v9350
    %v9352 = vsel %vm275, %v9055, 0.0
    %v9353 = vadd.f32 %v9351, %v9352
    %v9354 = vsel %vm275, %v9056, 0.0
    %v9355 = vadd.f32 %v9353, %v9354
    %v9356 = vsel %vm275, %v9057, 0.0
    %v9357 = vadd.f32 %v9355, %v9356
    %v9358 = vsel %vm275, %v9058, 0.0
    %v9359 = vadd.f32 %v9357, %v9358
    %v9360 = vsel %vm275, %v9059, 0.0
    %v9361 = vadd.f32 %v9359, %v9360
    %v9362 = vsel %vm275, %v9060, 0.0
    %v9363 = vadd.f32 %v9361, %v9362
    %v9364 = vsel %vm275, %v9061, 0.0
    %v9365 = vadd.f32 %v9363, %v9364
    %v9366 = vsel %vm275, %v9062, 0.0
    %v9367 = vadd.f32 %v9365, %v9366
    %v9368 = vsel %vm275, %v9063, 0.0
    %v9369 = vadd.f32 %v9367, %v9368
    %v9370 = vsel %vm275, %v9064, 0.0
    %v9371 = vadd.f32 %v9369, %v9370
    %v9372 = vsel %vm275, %v9065, 0.0
    %v9373 = vadd.f32 %v9371, %v9372
    %v9374 = vsel %vm275, %v9066, 0.0
    %v9375 = vadd.f32 %v9373, %v9374
    %v9376 = vsel %vm275, %v9067, 0.0
    %v9377 = vadd.f32 %v9375, %v9376
    %v9378 = vsel %vm275, %v9068, 0.0
    %v9379 = vadd.f32 %v9377, %v9378
    %v9380 = vsel %vm275, %v9069, 0.0
    %v9381 = vadd.f32 %v9379, %v9380
    %v9382 = vsel %vm275, %v9070, 0.0
    %v9383 = vadd.f32 %v9381, %v9382
    %v9384 = vsel %vm275, %v9071, 0.0
    %v9385 = vadd.f32 %v9383, %v9384
    %v9386 = vsel %vm275, %v9072, 0.0
    %v9387 = vadd.f32 %v9385, %v9386
    %v9388 = vsel %vm275, %v9073, 0.0
    %v9389 = vadd.f32 %v9387, %v9388
    %v9390 = vsel %vm275, %v9074, 0.0
    %v9391 = vadd.f32 %v9389, %v9390
    %v9392 = vsel %vm275, %v9075, 0.0
    %v9393 = vadd.f32 %v9391, %v9392
    %v9394 = vsel %vm275, %v9076, 0.0
    %v9395 = vadd.f32 %v9393, %v9394
    %v9396 = vsel %vm275, %v9077, 0.0
    %v9397 = vadd.f32 %v9395, %v9396
    %v9398 = vsel %vm275, %v9078, 0.0
    %v9399 = vadd.f32 %v9397, %v9398
    %v9400 = vsel %vm275, %v9079, 0.0
    %v9401 = vadd.f32 %v9399, %v9400
    %v9402 = vsel %vm275, %v9080, 0.0
    %v9403 = vadd.f32 %v9401, %v9402
    %v9404 = vsel %vm275, %v9081, 0.0
    %v9405 = vadd.f32 %v9403, %v9404
    %v9406 = vsel %vm275, %v9082, 0.0
    %v9407 = vadd.f32 %v9405, %v9406
    %v9408 = vsel %vm275, %v9083, 0.0
    %v9409 = vadd.f32 %v9407, %v9408
    %v9410 = vsel %vm275, %v9084, 0.0
    %v9411 = vadd.f32 %v9409, %v9410
    %v9412 = vsel %vm275, %v9085, 0.0
    %v9413 = vadd.f32 %v9411, %v9412
    %v9414 = vsel %vm275, %v9086, 0.0
    %v9415 = vadd.f32 %v9413, %v9414
    %v9416 = vsel %vm275, %v9087, 0.0
    %v9417 = vadd.f32 %v9415, %v9416
    %v9418 = vsel %vm275, %v9088, 0.0
    %v9419 = vadd.f32 %v9417, %v9418
    %v9420 = vsel %vm275, %v9089, 0.0
    %v9421 = vadd.f32 %v9419, %v9420
    %v9422 = vsel %vm275, %v9090, 0.0
    %v9423 = vadd.f32 %v9421, %v9422
    %v9424 = vsel %vm275, %v9091, 0.0
    %v9425 = vadd.f32 %v9423, %v9424
    %v9426 = vsel %vm275, %v9092, 0.0
    %v9427 = vadd.f32 %v9425, %v9426
    %v9428 = vsel %vm275, %v9093, 0.0
    %v9429 = vadd.f32 %v9427, %v9428
    %v9430 = vsel %vm275, %v9094, 0.0
    %v9431 = vadd.f32 %v9429, %v9430
    %v9432 = vsel %vm275, %v9095, 0.0
    %v9433 = vadd.f32 %v9431, %v9432
    %v9434 = vsel %vm275, %v9096, 0.0
    %v9435 = vadd.f32 %v9433, %v9434
    %v9436 = vsel %vm275, %v9097, 0.0
    %v9437 = vadd.f32 %v9435, %v9436
    %v9438 = vsel %vm275, %v9098, 0.0
    %v9439 = vadd.f32 %v9437, %v9438
    %v9440 = vsel %vm275, %v9099, 0.0
    %v9441 = vadd.f32 %v9439, %v9440
    %v9442 = vsel %vm275, %v9100, 0.0
    %v9443 = vadd.f32 %v9441, %v9442
    %v9444 = vsel %vm275, %v9101, 0.0
    %v9445 = vadd.f32 %v9443, %v9444
    %v9446 = vsel %vm275, %v9102, 0.0
    %v9447 = vadd.f32 %v9445, %v9446
    %v9448 = vsel %vm275, %v9103, 0.0
    %v9449 = vadd.f32 %v9447, %v9448
    %v9450 = vsel %vm275, %v9104, 0.0
    %v9451 = vadd.f32 %v9449, %v9450
    %v9452 = vsel %vm275, %v9105, 0.0
    %v9453 = vadd.f32 %v9451, %v9452
    %v9454 = vsel %vm275, %v9106, 0.0
    %v9455 = vadd.f32 %v9453, %v9454
    %v9456 = vsel %vm275, %v9107, 0.0
    %v9457 = vadd.f32 %v9455, %v9456
    %v9458 = vsel %vm275, %v9108, 0.0
    %v9459 = vadd.f32 %v9457, %v9458
    %v9460 = vsel %vm275, %v9109, 0.0
    %v9461 = vadd.f32 %v9459, %v9460
    %v9462 = vsel %vm275, %v9110, 0.0
    %v9463 = vadd.f32 %v9461, %v9462
    %v9464 = vsel %vm275, %v9111, 0.0
    %v9465 = vadd.f32 %v9463, %v9464
    %v9466 = vsel %vm275, %v9112, 0.0
    %v9467 = vadd.f32 %v9465, %v9466
    %v9468 = vsel %vm275, %v9113, 0.0
    %v9469 = vadd.f32 %v9467, %v9468
    %v9470 = vsel %vm275, %v9114, 0.0
    %v9471 = vadd.f32 %v9469, %v9470
    %v9472 = vsel %vm275, %v9115, 0.0
    %v9473 = vadd.f32 %v9471, %v9472
    %v9474 = vsel %vm275, %v9116, 0.0
    %v9475 = vadd.f32 %v9473, %v9474
    %v9476 = vsel %vm275, %v9117, 0.0
    %v9477 = vadd.f32 %v9475, %v9476
    %v9478 = vsel %vm275, %v9118, 0.0
    %v9479 = vadd.f32 %v9477, %v9478
    %v9480 = vsel %vm275, %v9119, 0.0
    %v9481 = vadd.f32 %v9479, %v9480
    %v9482 = vsel %vm275, %v9120, 0.0
    %v9483 = vadd.f32 %v9481, %v9482
    %v9484 = vsel %vm275, %v9121, 0.0
    %v9485 = vadd.f32 %v9483, %v9484
    %v9486 = vsel %vm275, %v9122, 0.0
    %v9487 = vadd.f32 %v9485, %v9486
    %v9488 = vsel %vm275, %v9123, 0.0
    %v9489 = vadd.f32 %v9487, %v9488
    %v9490 = vsel %vm275, %v9124, 0.0
    %v9491 = vadd.f32 %v9489, %v9490
    %v9492 = vsel %vm275, %v9125, 0.0
    %v9493 = vadd.f32 %v9491, %v9492
    %v9494 = vsel %vm275, %v9126, 0.0
    %v9495 = vadd.f32 %v9493, %v9494
    %v9496 = vsel %vm275, %v9127, 0.0
    %v9497 = vadd.f32 %v9495, %v9496
    %v9498 = vsel %vm275, %v9128, 0.0
    %v9499 = vadd.f32 %v9497, %v9498
    %v9500 = vsel %vm275, %v9129, 0.0
    %v9501 = vadd.f32 %v9499, %v9500
    %v9502 = vsel %vm275, %v9130, 0.0
    %v9503 = vadd.f32 %v9501, %v9502
    %v9504 = vsel %vm275, %v9131, 0.0
    %v9505 = vadd.f32 %v9503, %v9504
    %v9506 = vsel %vm275, %v9132, 0.0
    %v9507 = vadd.f32 %v9505, %v9506
    %v9508 = vsel %vm275, %v9133, 0.0
    %v9509 = vadd.f32 %v9507, %v9508
    %v9510 = vsel %vm275, %v9134, 0.0
    %v9511 = vadd.f32 %v9509, %v9510
    %v9512 = vsel %vm275, %v9135, 0.0
    %v9513 = vadd.f32 %v9511, %v9512
    %v9514 = vsel %vm275, %v9136, 0.0
    %v9515 = vadd.f32 %v9513, %v9514
    %v9516 = vsel %vm275, %v9137, 0.0
    %v9517 = vadd.f32 %v9515, %v9516
    %v9518 = vsel %vm275, %v9138, 0.0
    %v9519 = vadd.f32 %v9517, %v9518
    %v9520 = vsel %vm275, %v9139, 0.0
    %v9521 = vadd.f32 %v9519, %v9520
    %v9522 = vsel %vm275, %v9140, 0.0
    %v9523 = vadd.f32 %v9521, %v9522
    %v9524 = vsel %vm275, %v9141, 0.0
    %v9525 = vadd.f32 %v9523, %v9524
    %v9526 = vsel %vm275, %v9142, 0.0
    %v9527 = vadd.f32 %v9525, %v9526
    %v9528 = vsel %vm275, %v9143, 0.0
    %v9529 = vadd.f32 %v9527, %v9528
    %v9530 = vsel %vm275, %v9144, 0.0
    %v9531 = vadd.f32 %v9529, %v9530
    %v9532 = vsel %vm275, %v9145, 0.0
    %v9533 = vadd.f32 %v9531, %v9532
    %v9534 = vsel %vm275, %v9146, 0.0
    %v9535 = vadd.f32 %v9533, %v9534
    %v9536 = vsel %vm275, %v9147, 0.0
    %v9537 = vadd.f32 %v9535, %v9536
    %v9538 = vsel %vm275, %v9148, 0.0
    %v9539 = vadd.f32 %v9537, %v9538
    %v9540 = vsel %vm275, %v9149, 0.0
    %v9541 = vadd.f32 %v9539, %v9540
    %v9542 = vsel %vm275, %v9150, 0.0
    %v9543 = vadd.f32 %v9541, %v9542
    %v9544 = vsel %vm275, %v9151, 0.0
    %v9545 = vadd.f32 %v9543, %v9544
    %v9546 = vsel %vm275, %v9152, 0.0
    %v9547 = vadd.f32 %v9545, %v9546
    %v9548 = vsel %vm275, %v9153, 0.0
    %v9549 = vadd.f32 %v9547, %v9548
    %v9550 = vsel %vm275, %v9154, 0.0
    %v9551 = vadd.f32 %v9549, %v9550
    %v9552 = vsel %vm275, %v9155, 0.0
    %v9553 = vadd.f32 %v9551, %v9552
    %v9554 = vsel %vm275, %v9156, 0.0
    %v9555 = vadd.f32 %v9553, %v9554
    %v9556 = vsel %vm275, %v9157, 0.0
    %v9557 = vadd.f32 %v9555, %v9556
    %v9558 = vsel %vm275, %v9158, 0.0
    %v9559 = vadd.f32 %v9557, %v9558
    %v9560 = vsel %vm275, %v9159, 0.0
    %v9561 = vadd.f32 %v9559, %v9560
    %v9562 = vsel %vm275, %v9160, 0.0
    %v9563 = vadd.f32 %v9561, %v9562
    %v9564 = vsel %vm275, %v9161, 0.0
    %v9565 = vadd.f32 %v9563, %v9564
    %v9566 = vsel %vm275, %v9162, 0.0
    %v9567 = vadd.f32 %v9565, %v9566
    %v9568 = vsel %vm275, %v9163, 0.0
    %v9569 = vadd.f32 %v9567, %v9568
    %v9570 = vsel %vm275, %v9164, 0.0
    %v9571 = vadd.f32 %v9569, %v9570
    %v9572 = vsel %vm275, %v9165, 0.0
    %v9573 = vadd.f32 %v9571, %v9572
    %v9574 = vsel %vm275, %v9166, 0.0
    %v9575 = vadd.f32 %v9573, %v9574
    %v9576 = vsel %vm275, %v9167, 0.0
    %v9577 = vadd.f32 %v9575, %v9576
    %v9578 = vsel %vm275, %v9168, 0.0
    %v9579 = vadd.f32 %v9577, %v9578
    %v9580 = vsel %vm275, %v9169, 0.0
    %v9581 = vadd.f32 %v9579, %v9580
    %v9582 = vsel %vm275, %v9170, 0.0
    %v9583 = vadd.f32 %v9581, %v9582
    %v9584 = vsel %vm275, %v9171, 0.0
    %v9585 = vadd.f32 %v9583, %v9584
    %v9586 = vsel %vm275, %v9172, 0.0
    %v9587 = vadd.f32 %v9585, %v9586
    %v9588 = vsel %vm275, %v9173, 0.0
    %v9589 = vadd.f32 %v9587, %v9588
    %v9590 = vsel %vm275, %v9174, 0.0
    %v9591 = vadd.f32 %v9589, %v9590
    %v9592 = vsel %vm275, %v9175, 0.0
    %v9593 = vadd.f32 %v9591, %v9592
    %v9594 = vsel %vm275, %v9176, 0.0
    %v9595 = vadd.f32 %v9593, %v9594
    %v9596 = vsel %vm275, %v9177, 0.0
    %v9597 = vadd.f32 %v9595, %v9596
    %v9598 = vsel %vm275, %v9178, 0.0
    %v9599 = vadd.f32 %v9597, %v9598
    %v9600 = vsel %vm275, %v9179, 0.0
    %v9601 = vadd.f32 %v9599, %v9600
    %v9602 = vsel %vm275, %v9180, 0.0
    %v9603 = vadd.f32 %v9601, %v9602
    %v9604 = vsel %vm275, %v9181, 0.0
    %v9605 = vadd.f32 %v9603, %v9604
    %v9606 = vsel %vm275, %v9182, 0.0
    %v9607 = vadd.f32 %v9605, %v9606
    %v9608 = vsel %vm275, %v9183, 0.0
    %v9609 = vadd.f32 %v9607, %v9608
    %v9610 = vsel %vm275, %v9184, 0.0
    %v9611 = vadd.f32 %v9609, %v9610
    %v9612 = vsel %vm275, %v9185, 0.0
    %v9613 = vadd.f32 %v9611, %v9612
    %v9614 = vsel %vm275, %v9186, 0.0
    %v9615 = vadd.f32 %v9613, %v9614
    %v9616 = vsel %vm275, %v9187, 0.0
    %v9617 = vadd.f32 %v9615, %v9616
    %v9618 = vsel %vm275, %v9188, 0.0
    %v9619 = vadd.f32 %v9617, %v9618
    %v9620 = vsel %vm275, %v9189, 0.0
    %v9621 = vadd.f32 %v9619, %v9620
    %v9622 = vsel %vm275, %v9190, 0.0
    %v9623 = vadd.f32 %v9621, %v9622
    %v9624 = vsel %vm275, %v9191, 0.0
    %v9625 = vadd.f32 %v9623, %v9624
    %v9626 = vsel %vm275, %v9192, 0.0
    %v9627 = vadd.f32 %v9625, %v9626
    %v9628 = vsel %vm275, %v9193, 0.0
    %v9629 = vadd.f32 %v9627, %v9628
    %v9630 = vsel %vm275, %v9194, 0.0
    %v9631 = vadd.f32 %v9629, %v9630
    %v9632 = vsel %vm275, %v9195, 0.0
    %v9633 = vadd.f32 %v9631, %v9632
    %v9634 = vsel %vm275, %v9196, 0.0
    %v9635 = vadd.f32 %v9633, %v9634
    %v9636 = vsel %vm275, %v9197, 0.0
    %v9637 = vadd.f32 %v9635, %v9636
    %v9638 = vsel %vm275, %v9198, 0.0
    %v9639 = vadd.f32 %v9637, %v9638
    %v9640 = vsel %vm275, %v9199, 0.0
    %v9641 = vadd.f32 %v9639, %v9640
    %v9642 = vsel %vm275, %v9200, 0.0
    %v9643 = vadd.f32 %v9641, %v9642
    %v9644 = vsel %vm275, %v9201, 0.0
    %v9645 = vadd.f32 %v9643, %v9644
    %v9646 = vsel %vm275, %v9202, 0.0
    %v9647 = vadd.f32 %v9645, %v9646
    %v9648 = vsel %vm275, %v9203, 0.0
    %v9649 = vadd.f32 %v9647, %v9648
    %v9650 = vsel %vm275, %v9204, 0.0
    %v9651 = vadd.f32 %v9649, %v9650
    %v9652 = vsel %vm275, %v9205, 0.0
    %v9653 = vadd.f32 %v9651, %v9652
    %v9654 = vsel %vm275, %v9206, 0.0
    %v9655 = vadd.f32 %v9653, %v9654
    %v9656 = vsel %vm275, %v9207, 0.0
    %v9657 = vadd.f32 %v9655, %v9656
    %v9658 = vsel %vm275, %v9208, 0.0
    %v9659 = vadd.f32 %v9657, %v9658
    %v9660 = vsel %vm275, %v9209, 0.0
    %v9661 = vadd.f32 %v9659, %v9660
    %v9662 = vsel %vm275, %v9210, 0.0
    %v9663 = vadd.f32 %v9661, %v9662
    %v9664 = vsel %vm275, %v9211, 0.0
    %v9665 = vadd.f32 %v9663, %v9664
    %v9666 = vsel %vm275, %v9212, 0.0
    %v9667 = vadd.f32 %v9665, %v9666
    %v9668 = vsel %vm275, %v9213, 0.0
    %v9669 = vadd.f32 %v9667, %v9668
    %v9670 = vsel %vm275, %v9214, 0.0
    %v9671 = vadd.f32 %v9669, %v9670
    %v9672 = vsel %vm275, %v9215, 0.0
    %v9673 = vadd.f32 %v9671, %v9672
    %v9674 = vsel %vm275, %v9216, 0.0
    %v9675 = vadd.f32 %v9673, %v9674
    %v9676 = vsel %vm275, %v9217, 0.0
    %v9677 = vadd.f32 %v9675, %v9676
    %v9678 = vsel %vm275, %v9218, 0.0
    %v9679 = vadd.f32 %v9677, %v9678
    %v9680 = vsel %vm275, %v9219, 0.0
    %v9681 = vadd.f32 %v9679, %v9680
    %v9682 = vsel %vm275, %v9220, 0.0
    %v9683 = vadd.f32 %v9681, %v9682
    %v9684 = vsel %vm275, %v9221, 0.0
    %v9685 = vadd.f32 %v9683, %v9684
    %v9686 = vsel %vm275, %v9222, 0.0
    %v9687 = vadd.f32 %v9685, %v9686
    %v9688 = vsel %vm275, %v9223, 0.0
    %v9689 = vadd.f32 %v9687, %v9688
    %v9690 = vsel %vm275, %v9224, 0.0
    %v9691 = vadd.f32 %v9689, %v9690
    %v9692 = vsel %vm275, %v9225, 0.0
    %v9693 = vadd.f32 %v9691, %v9692
    %v9694 = vsel %vm275, %v9226, 0.0
    %v9695 = vadd.f32 %v9693, %v9694
    %v9696 = vsel %vm275, %v9227, 0.0
    %v9697 = vadd.f32 %v9695, %v9696
    %v9698 = vsel %vm275, %v9228, 0.0
    %v9699 = vadd.f32 %v9697, %v9698
    %v9700 = vsel %vm275, %v9229, 0.0
    %v9701 = vadd.f32 %v9699, %v9700
    %v9702 = vsel %vm275, %v9230, 0.0
    %v9703 = vadd.f32 %v9701, %v9702
    %v9704 = vsel %vm275, %v9231, 0.0
    %v9705 = vadd.f32 %v9703, %v9704
    %v9706 = vsel %vm275, %v9232, 0.0
    %v9707 = vadd.f32 %v9705, %v9706
    %v9708 = vsel %vm275, %v9233, 0.0
    %v9709 = vadd.f32 %v9707, %v9708
    %v9710 = vsel %vm275, %v9234, 0.0
    %v9711 = vadd.f32 %v9709, %v9710
    %v9712 = vsel %vm275, %v9235, 0.0
    %v9713 = vadd.f32 %v9711, %v9712
    %v9714 = vsel %vm275, %v9236, 0.0
    %v9715 = vadd.f32 %v9713, %v9714
    %v9716 = vsel %vm275, %v9237, 0.0
    %v9717 = vadd.f32 %v9715, %v9716
    %v9718 = vsel %vm275, %v9238, 0.0
    %v9719 = vadd.f32 %v9717, %v9718
    %v9720 = vsel %vm275, %v9239, 0.0
    %v9721 = vadd.f32 %v9719, %v9720
    %v9722 = vsel %vm275, %v9240, 0.0
    %v9723 = vadd.f32 %v9721, %v9722
    %v9724 = vsel %vm275, %v9241, 0.0
    %v9725 = vadd.f32 %v9723, %v9724
    %v9726 = vsel %vm275, %v9242, 0.0
    %v9727 = vadd.f32 %v9725, %v9726
    %v9728 = vsel %vm275, %v9243, 0.0
    %v9729 = vadd.f32 %v9727, %v9728
    %v9730 = vsel %vm275, %v9244, 0.0
    %v9731 = vadd.f32 %v9729, %v9730
    %v9732 = vsel %vm275, %v9245, 0.0
    %v9733 = vadd.f32 %v9731, %v9732
    %v9734 = vsel %vm275, %v9246, 0.0
    %v9735 = vadd.f32 %v9733, %v9734
    %v9736 = vsel %vm275, %v9247, 0.0
    %v9737 = vadd.f32 %v9735, %v9736
    %v9738 = vsel %vm275, %v9248, 0.0
    %v9739 = vadd.f32 %v9737, %v9738
    %v9740 = vsel %vm275, %v9249, 0.0
    %v9741 = vadd.f32 %v9739, %v9740
    %v9742 = vsel %vm275, %v9250, 0.0
    %v9743 = vadd.f32 %v9741, %v9742
    %v9744 = vsel %vm275, %v9251, 0.0
    %v9745 = vadd.f32 %v9743, %v9744
    %v9746 = vsel %vm275, %v9252, 0.0
    %v9747 = vadd.f32 %v9745, %v9746
    %v9748 = vsel %vm275, %v9253, 0.0
    %v9749 = vadd.f32 %v9747, %v9748
    %v9750 = vsel %vm275, %v9254, 0.0
    %v9751 = vadd.f32 %v9749, %v9750
    %v9752 = vsel %vm275, %v9255, 0.0
    %v9753 = vadd.f32 %v9751, %v9752
    %v9754 = vsel %vm275, %v9256, 0.0
    %v9755 = vadd.f32 %v9753, %v9754
    %v9756 = vsel %vm275, %v9257, 0.0
    %v9757 = vadd.f32 %v9755, %v9756
    %v9758 = vsel %vm275, %v9258, 0.0
    %v9759 = vadd.f32 %v9757, %v9758
    %v9760 = vsel %vm275, %v9259, 0.0
    %v9761 = vadd.f32 %v9759, %v9760
    %v9762 = vsel %vm275, %v9260, 0.0
    %v9763 = vadd.f32 %v9761, %v9762
    %v9764 = vsel %vm275, %v9261, 0.0
    %v9765 = vadd.f32 %v9763, %v9764
    %v9766 = vsel %vm275, %v9262, 0.0
    %v9767 = vadd.f32 %v9765, %v9766
    %v9768 = vsel %vm275, %v9263, 0.0
    %v9769 = vadd.f32 %v9767, %v9768
    %v9770 = vsel %vm275, %v9264, 0.0
    %v9771 = vadd.f32 %v9769, %v9770
    %v9772 = vsel %vm275, %v9265, 0.0
    %v9773 = vadd.f32 %v9771, %v9772
    %v9774 = vsel %vm275, %v9266, 0.0
    %v9775 = vadd.f32 %v9773, %v9774
    %v9776 = vsel %vm275, %v9267, 0.0
    %v9777 = vadd.f32 %v9775, %v9776
    %v9778 = vsel %vm275, %v9268, 0.0
    %v9779 = vadd.f32 %v9777, %v9778
    %v9780 = vsel %vm275, %v9269, 0.0
    %v9781 = vadd.f32 %v9779, %v9780
    %v9782 = vsel %vm275, %v9270, 0.0
    %v9783 = vadd.f32 %v9781, %v9782
    %v9784 = vld [vmem:[%s2] sm:$0x1]
    %v9786 = vperm.slane %v9784, 0
    %v9788 = vmul.f32 %v9783, %v9786
    %v9789 = vld [vmem:[%s3] sm:$0x1]
    %v9791 = vperm.slane %v9789, 0
    %v9793 = vadd.f32 %v9788, %v9791
    %9794 = vst.msk [vmem:[#allocation2] sm:$0x3] %vm275, %v9793
    // Predicated region
    $region18: #{prompt_generator_forward.1} parent=1 // pred_check
      _
    $region19: #{prompt_generator_forward.1} parent=1 // pred_check_branch
      %9796 = sbr.rel (0) target = $region21
    $region20: #{prompt_generator_forward.1} parent=1 // pred_region
      %9798 = vsyncadd [#allocation3], 0
      %s9800 = sshll.u32 [#allocation2], 4
      %s9801 = int_to_ptr.vmem [resolvable:$true] %s9800
      %s9802 = sshll.u32 %s4, 4
      %s9803 = int_to_ptr.hbm [resolvable:$true] %s9802
      %9805 = dma.vmem_to_hbm [thread:$0]  %s9801, 32, %s9803, [#allocation3]
    $region21: #{prompt_generator_forward.1} parent=1 // pred_fallthru
      _
    // Predicated region
    $region22: #{prompt_generator_forward.1} parent=1 // pred_check
      _
    $region23: #{prompt_generator_forward.1} parent=1 // pred_check_branch
      %9807 = sbr.rel (0) target = $region25
    $region24: #{prompt_generator_forward.1} parent=1 // pred_region
      %9809 = dma.done [#allocation3], 32
    $region25: #{prompt_generator_forward.1} parent=1 // pred_fallthru
      _
    %9810 = vsyncpa [#allocation3], 1

</llo_original>
